<compile_context>
chip_gen: v7x
topology: tpu7x:2x2x1
jax: 0.10.0
libtpu: 0.0.40
codegen_flags: <defaults>
</compile_context>

<pallas_src>
import functools

import jax
import jax.numpy as jnp
from jax.experimental import pallas as pl
from jax.experimental.pallas import tpu as pltpu


def _round_up(x, m):
    return (x + m - 1) // m * m


def _pick_batch_tile(B, block_b, sub):
    """Batch tile (multiple of `sub`) and padded batch; >=2 grid steps when possible."""
    bmin = _round_up(B, sub)
    if bmin <= 2 * sub:
        tb = bmin                                  # tiny batch: one small tile
    elif bmin <= 2 * block_b:
        tb = _round_up((bmin + 1) // 2, sub)       # two grid steps -> both v7x TCs busy
    else:
        tb = block_b
    bpad = _round_up(bmin, tb)
    return tb, bpad


# ---------------------------------------------------------------------------
# Fused kernel: one batch tile of TB images.
# ---------------------------------------------------------------------------
def _cnn_fused_kernel(x_ref, m1_ref, b1_ref, m2_ref, b2_ref,
                      wf1_ref, bf1_ref, wf2_ref, bf2_ref,
                      o_ref, p1_ref, flat_ref, *, compute_dtype):
    """
    x_ref   : (TB, 28*128) images; row r of the image lives in lanes [r*128, r*128+28)
    m1_ref  : (640, 256)   conv1, 5 taps K-stacked; row = ki*128 + w_in,
                           col = (j%2)*128 + (j//2)*10 + oc
    b1_ref  : (1, 128)     conv1 bias tiled over pooled col (f32)
    m2_ref  : (640, 256)   conv2, 5 taps K-stacked; row = ki*128 + (w_pos*10 + c),
                           col = (j%2)*128 + (j//2)*20 + oc
    b2_ref  : (1, 128)     conv2 bias tiled over pooled col (f32)
    wf1_ref : (512, 128)   fc1 weight, rows permuted to the flat layout, cols padded
    wf2_ref : (128, 128)   fc2 weight, zero padded
    o_ref   : (TB, 128)    logits, cols 0..9 valid (f32)
    p1_ref  : (TB, 12*128) scratch: conv1 pooled activation, one 128-lane slab per row
    flat_ref: (TB, 4*128)  scratch: conv2 pooled activation == fc1 input
    """
    f32 = jnp.float32

    # ---- conv1 (one K=640 dot per conv row) + 2x2 max-pool + bias + ReLU ----
    for r in range(12):                               # pooled row index
        # The two conv rows being H-pooled; each dot result is consumed immediately.
        r0 = jnp.dot(x_ref[:, (2 * r) * 128:(2 * r + 5) * 128], m1_ref[...],
                     preferred_element_type=f32)      # (TB, 256)
        r1 = jnp.dot(x_ref[:, (2 * r + 1) * 128:(2 * r + 6) * 128], m1_ref[...],
                     preferred_element_type=f32)      # (TB, 256)
        m = jnp.maximum(r0, r1)                       # pool over H
        m = jnp.maximum(m[:, :128], m[:, 128:])       # pool over W (even/odd halves)
        m = jnp.maximum(m + b1_ref[...], 0.0)         # bias + ReLU
        p1_ref[:, r * 128:(r + 1) * 128] = m.astype(compute_dtype)

    # ---- conv2 (one K=640 dot per conv row) + 2x2 max-pool + bias + ReLU ----
    for r in range(4):
        r0 = jnp.dot(p1_ref[:, (2 * r) * 128:(2 * r + 5) * 128], m2_ref[...],
                     preferred_element_type=f32)      # (TB, 256)
        r1 = jnp.dot(p1_ref[:, (2 * r + 1) * 128:(2 * r + 6) * 128], m2_ref[...],
                     preferred_element_type=f32)      # (TB, 256)
        m = jnp.maximum(r0, r1)
        m = jnp.maximum(m[:, :128], m[:, 128:])
        m = jnp.maximum(m + b2_ref[...], 0.0)
        flat_ref[:, r * 128:(r + 1) * 128] = m.astype(compute_dtype)

    # ---- fc1 + ReLU, fc2 ----------------------------------------------------
    h3 = jnp.dot(flat_ref[...], wf1_ref[...], preferred_element_type=f32) + bf1_ref[...]
    h3 = jnp.maximum(h3, 0.0).astype(compute_dtype)
    out = jnp.dot(h3, wf2_ref[...], preferred_element_type=f32) + bf2_ref[...]
    o_ref[...] = out.astype(o_ref.dtype)


# ---------------------------------------------------------------------------
# Trace-time weight preparation: folds im2col, the even/odd-column pooling split,
# the NCHW flatten permutation, K-stacking of the 5 taps, and lane padding.
# ---------------------------------------------------------------------------
def _prepare_params(p, compute_dtype):
    f32 = jnp.float32

    # conv1 (10,1,5,5) -> M1 (640, 256):
    #   M1[ki*128 + w_in, (j%2)*128 + (j//2)*10 + oc] = w_conv1[oc, 0, ki, w_in - j]
    wk1 = jnp.transpose(p["w_conv1"][:, 0, :, :], (1, 2, 0))    # (ki, kj, oc)
    m1 = jnp.zeros((5, 128, 24, 10), f32)                       # (ki, w_in, j, oc)
    for j in range(24):
        m1 = m1.at[:, j:j + 5, j, :].set(wk1)
    m1 = m1.reshape(5, 128, 12, 2, 10)                          # (ki, w_in, j//2, j%2, oc)
    m1 = jnp.transpose(m1, (0, 1, 3, 2, 4))                     # (ki, w_in, j%2, j//2, oc)
    m1 = jnp.pad(m1.reshape(5, 128, 2, 120), ((0, 0), (0, 0), (0, 0), (0, 8)))
    m1 = m1.reshape(640, 256)

    # conv2 (20,10,5,5) -> M2 (640, 256):
    #   M2[ki*128 + w_pos*10 + c, (j%2)*128 + (j//2)*20 + oc] = w_conv2[oc, c, ki, w_pos - j]
    wk2 = jnp.transpose(p["w_conv2"], (2, 3, 1, 0))             # (ki, kj, c, oc)
    m2 = jnp.zeros((5, 12, 10, 8, 20), f32)                     # (ki, w_pos, c, j, oc)
    for j in range(8):
        m2 = m2.at[:, j:j + 5, :, j, :].set(wk2)
    m2 = m2.reshape(5, 12, 10, 4, 2, 20)                        # (ki, w_pos, c, j//2, j%2, oc)
    m2 = jnp.transpose(m2, (0, 1, 2, 4, 3, 5))                  # (ki, w_pos, c, j%2, j//2, oc)
    m2 = m2.reshape(5, 120, 2, 80)
    m2 = jnp.pad(m2, ((0, 0), (0, 8), (0, 0), (0, 48)))
    m2 = m2.reshape(640, 256)

    # biases, tiled to the pooled column order (spatial-col major, channel minor)
    b1 = jnp.pad(jnp.tile(p["b_conv1"], 12), (0, 8)).reshape(1, 128)
    b2 = jnp.pad(jnp.tile(p["b_conv2"], 4), (0, 48)).reshape(1, 128)

    # fc1 (50, 320): PyTorch flatten index is oc*16 + r*4 + j2; ours is
    # r*128 + j2*20 + oc  ->  permute rows, pad cols 50 -> 128.
    wf1 = p["w_fc1"].reshape(50, 20, 4, 4)                      # (n, oc, r, j2)
    wf1 = jnp.transpose(wf1, (2, 3, 1, 0))                      # (r, j2, oc, n)
    wf1 = jnp.pad(wf1.reshape(4, 80, 50), ((0, 0), (0, 48), (0, 0)))
    wf1 = jnp.pad(wf1.reshape(512, 50), ((0, 0), (0, 78)))
    bf1 = jnp.pad(p["b_fc1"], (0, 78)).reshape(1, 128)

    # fc2 (10, 50): pad to (128, 128)
    wf2 = jnp.zeros((128, 128), f32).at[:50, :10].set(p["w_fc2"].T)
    bf2 = jnp.pad(p["b_fc2"], (0, 118)).reshape(1, 128)

    cd = compute_dtype
    return dict(m1=m1.astype(cd), b1=b1, m2=m2.astype(cd), b2=b2,
                wf1=wf1.astype(cd), bf1=bf1, wf2=wf2.astype(cd), bf2=bf2)


# ---------------------------------------------------------------------------
# Wrapper
# ---------------------------------------------------------------------------
def cnn_forward(x_nchw, params, *, block_b=256, compute_dtype=jnp.bfloat16):
    """x_nchw: (B, 1, 28, 28) f32 -> (B, 10) f32 logits (matches the PyTorch CNN)."""
    B = x_nchw.shape[0]
    assert x_nchw.shape[1:] == (1, 28, 28), "architecture requires 1x28x28 input"
    w = _prepare_params(params, compute_dtype)

    itemsize = jnp.dtype(compute_dtype).itemsize
    sub = 16 if itemsize == 2 else 8                 # bf16 native sublane tile is 16
    tb, bpad = _pick_batch_tile(B, block_b, sub)
    nb = bpad // tb

    # (B,1,28,28) -> (Bpad, 28*128): each 28-pixel image row zero-padded to its own
    # 128-lane slab so the 5 conv1 taps are a contiguous K=640 window.
    x = x_nchw[:, 0, :, :]
    x = jnp.pad(x, ((0, bpad - B), (0, 0), (0, 100)))           # (Bpad, 28, 128)
    x = x.reshape(bpad, 28 * 128).astype(compute_dtype)

    flops = bpad * ((24 + 8) * 2 * 640 * 256 + 2 * 512 * 128 + 2 * 128 * 128)
    bytes_accessed = (x.size * itemsize + bpad * 128 * 4
                      + (2 * 640 * 256 + 512 * 128 + 128 * 128) * itemsize
                      + 4 * 128 * 4)

    out = pl.pallas_call(
        functools.partial(_cnn_fused_kernel, compute_dtype=compute_dtype),
        out_shape=jax.ShapeDtypeStruct((bpad, 128), jnp.float32),
        grid_spec=pltpu.PrefetchScalarGridSpec(
            num_scalar_prefetch=0,
            grid=(nb,),
            in_specs=[
                pl.BlockSpec((tb, 28 * 128), lambda i: (i, 0)),   # x (batch-tiled)
                pl.BlockSpec((640, 256), lambda i: (0, 0)),       # m1 (resident)
                pl.BlockSpec((1, 128), lambda i: (0, 0)),         # b1
                pl.BlockSpec((640, 256), lambda i: (0, 0)),       # m2 (resident)
                pl.BlockSpec((1, 128), lambda i: (0, 0)),         # b2
                pl.BlockSpec((512, 128), lambda i: (0, 0)),       # wf1
                pl.BlockSpec((1, 128), lambda i: (0, 0)),         # bf1
                pl.BlockSpec((128, 128), lambda i: (0, 0)),       # wf2
                pl.BlockSpec((1, 128), lambda i: (0, 0)),         # bf2
            ],
            out_specs=pl.BlockSpec((tb, 128), lambda i: (i, 0)),
            scratch_shapes=[pltpu.VMEM((tb, 12 * 128), compute_dtype),   # pooled conv1
                            pltpu.VMEM((tb, 4 * 128), compute_dtype)],   # pooled conv2 / fc1 in
        ),
        compiler_params=pltpu.CompilerParams(
            dimension_semantics=("parallel",)),
        cost_estimate=pl.CostEstimate(flops=flops, transcendentals=0,
                                      bytes_accessed=bytes_accessed),
    )(x, w["m1"], w["b1"], w["m2"], w["b2"],
      w["wf1"], w["bf1"], w["wf2"], w["bf2"])

    return out[:B, :10]


# ---------------------------------------------------------------------------
# Plain-JAX reference (matches the PyTorch module) for validation.
# ---------------------------------------------------------------------------
def _cnn_reference(x_nchw, p):
    hp = jax.lax.Precision.HIGHEST
    y = jax.lax.conv_general_dilated(x_nchw, p["w_conv1"], (1, 1), "VALID",
                                     dimension_numbers=("NCHW", "OIHW", "NCHW"),
                                     precision=hp)
    y = y + p["b_conv1"][None, :, None, None]
    b, c, h, w_ = y.shape
    y = y.reshape(b, c, h // 2, 2, w_ // 2, 2).max(axis=(3, 5))
    y = jnp.maximum(y, 0.0)
    y = jax.lax.conv_general_dilated(y, p["w_conv2"], (1, 1), "VALID",
                                     dimension_numbers=("NCHW", "OIHW", "NCHW"),
                                     precision=hp)
    y = y + p["b_conv2"][None, :, None, None]
    b, c, h, w_ = y.shape
    y = y.reshape(b, c, h // 2, 2, w_ // 2, 2).max(axis=(3, 5))
    y = jnp.maximum(y, 0.0)
    y = y.reshape(b, -1)                                        # NCHW flatten -> (B, 320)
    y = jnp.maximum(jnp.dot(y, p["w_fc1"].T, precision=hp) + p["b_fc1"], 0.0)
    return jnp.dot(y, p["w_fc2"].T, precision=hp) + p["b_fc2"]


def init_params(key):
    ks = jax.random.split(key, 8)
    s = 0.1
    p = {}
    # conv1: (10, 1, 5, 5), conv2: (20, 10, 5, 5)  (PyTorch OIHW)
    p["w_conv1"] = s * jax.random.normal(ks[0], (10, 1, 5, 5), jnp.float32)
    p["b_conv1"] = s * jax.random.normal(ks[1], (10,), jnp.float32)
    p["w_conv2"] = s * jax.random.normal(ks[2], (20, 10, 5, 5), jnp.float32)
    p["b_conv2"] = s * jax.random.normal(ks[3], (20,), jnp.float32)
    # fc1: (50, 320), fc2: (10, 50)  (PyTorch (out, in))
    p["w_fc1"] = s * jax.random.normal(ks[4], (50, 320), jnp.float32)
    p["b_fc1"] = s * jax.random.normal(ks[5], (50,), jnp.float32)
    p["w_fc2"] = s * jax.random.normal(ks[6], (10, 50), jnp.float32)
    p["b_fc2"] = s * jax.random.normal(ks[7], (10,), jnp.float32)
    return p


if __name__ == "__main__":
    # MNIST-sized input is required by the architecture (flatten -> 320).
    B = 2
    key = jax.random.PRNGKey(0)
    k_x, k_p = jax.random.split(key)
    x = jax.random.normal(k_x, (B, 1, 28, 28), jnp.float32)
    params = init_params(k_p)

    fwd = jax.jit(cnn_forward, static_argnames=("block_b", "compute_dtype"))
    ref = _cnn_reference(x, params)

    # float32-compute path: validates the folded im2col / pooling-split / flatten
    # permutation against the plain-JAX reference.
    out_f32 = jax.block_until_ready(fwd(x, params, compute_dtype=jnp.float32))
    err_f32 = float(jnp.max(jnp.abs(out_f32 - ref)))
    assert out_f32.shape == (B, 10), out_f32.shape
    assert err_f32 < 2e-2, f"f32 kernel vs reference mismatch: {err_f32}"

    # default bf16-compute path (production).
    out = jax.block_until_ready(fwd(x, params))
    assert out.shape == (B, 10) and out.dtype == jnp.float32
    err_bf16 = float(jnp.max(jnp.abs(out - ref)))
    assert err_bf16 < 0.25, f"bf16 kernel vs reference mismatch: {err_bf16}"

    print("KERNEL_OK")
</pallas_src>

<mosaic_0001>
module attributes {stable_mosaic.version = 11 : i64} {
  func.func @_cnn_fused_kernel(%arg0: i32, %arg1: memref<8x3584xf32, #tpu.memory_space<vmem>>, %arg2: memref<640x256xf32, #tpu.memory_space<vmem>>, %arg3: memref<1x128xf32, #tpu.memory_space<vmem>>, %arg4: memref<640x256xf32, #tpu.memory_space<vmem>>, %arg5: memref<1x128xf32, #tpu.memory_space<vmem>>, %arg6: memref<512x128xf32, #tpu.memory_space<vmem>>, %arg7: memref<1x128xf32, #tpu.memory_space<vmem>>, %arg8: memref<128x128xf32, #tpu.memory_space<vmem>>, %arg9: memref<1x128xf32, #tpu.memory_space<vmem>>, %arg10: memref<8x128xf32, #tpu.memory_space<vmem>>, %arg11: memref<8x1536xf32, #tpu.memory_space<vmem>>, %arg12: memref<8x512xf32, #tpu.memory_space<vmem>>) attributes {dimension_semantics = [#tpu.dimension_semantics<parallel>], iteration_bounds = array<i64: 1>, scalar_prefetch = 0 : i64, scratch_operands = 2 : i64, tpu.core_type = #tpu.core_type<tc>, window_params = [{transform_indices = @transform_0, window_bounds = array<i64: 8, 3584>}, {pipeline_mode = #tpu.pipeline_mode<synchronous>, transform_indices = @transform_1, window_bounds = array<i64: 640, 256>}, {pipeline_mode = #tpu.pipeline_mode<synchronous>, transform_indices = @transform_2, window_bounds = array<i64: 1, 128>}, {pipeline_mode = #tpu.pipeline_mode<synchronous>, transform_indices = @transform_3, window_bounds = array<i64: 640, 256>}, {pipeline_mode = #tpu.pipeline_mode<synchronous>, transform_indices = @transform_4, window_bounds = array<i64: 1, 128>}, {pipeline_mode = #tpu.pipeline_mode<synchronous>, transform_indices = @transform_5, window_bounds = array<i64: 512, 128>}, {pipeline_mode = #tpu.pipeline_mode<synchronous>, transform_indices = @transform_6, window_bounds = array<i64: 1, 128>}, {pipeline_mode = #tpu.pipeline_mode<synchronous>, transform_indices = @transform_7, window_bounds = array<i64: 128, 128>}, {pipeline_mode = #tpu.pipeline_mode<synchronous>, transform_indices = @transform_8, window_bounds = array<i64: 1, 128>}, {transform_indices = @transform_9, window_bounds = array<i64: 8, 128>}]} {
    %c0 = arith.constant 0 : index
    %c0_0 = arith.constant 0 : index
    %0 = vector.load %arg1[%c0, %c0_0] : memref<8x3584xf32, #tpu.memory_space<vmem>>, vector<8x640xf32>
    %c0_1 = arith.constant 0 : index
    %c0_2 = arith.constant 0 : index
    %1 = vector.load %arg2[%c0_1, %c0_2] : memref<640x256xf32, #tpu.memory_space<vmem>>, vector<640x256xf32>
    %cst = arith.constant dense<0.000000e+00> : vector<8x256xf32>
    %2 = tpu.matmul %0, %1, %cst {dimension_numbers = #tpu.dot_dimension_numbers<[1], [0], [0], [1], [0, 0, 1, 1], [], []>} : vector<8x640xf32>, vector<640x256xf32>, vector<8x256xf32> -> vector<8x256xf32>
    %c0_3 = arith.constant 0 : index
    %c128 = arith.constant 128 : index
    %3 = vector.load %arg1[%c0_3, %c128] : memref<8x3584xf32, #tpu.memory_space<vmem>>, vector<8x640xf32>
    %c0_4 = arith.constant 0 : index
    %c0_5 = arith.constant 0 : index
    %4 = vector.load %arg2[%c0_4, %c0_5] : memref<640x256xf32, #tpu.memory_space<vmem>>, vector<640x256xf32>
    %cst_6 = arith.constant dense<0.000000e+00> : vector<8x256xf32>
    %5 = tpu.matmul %3, %4, %cst_6 {dimension_numbers = #tpu.dot_dimension_numbers<[1], [0], [0], [1], [0, 0, 1, 1], [], []>} : vector<8x640xf32>, vector<640x256xf32>, vector<8x256xf32> -> vector<8x256xf32>
    %6 = arith.maximumf %2, %5 : vector<8x256xf32>
    %7 = vector.extract_strided_slice %6 {offsets = [0, 0], sizes = [8, 128], strides = [1, 1]} : vector<8x256xf32> to vector<8x128xf32>
    %8 = vector.extract_strided_slice %6 {offsets = [0, 128], sizes = [8, 128], strides = [1, 1]} : vector<8x256xf32> to vector<8x128xf32>
    %9 = arith.maximumf %7, %8 : vector<8x128xf32>
    %c0_7 = arith.constant 0 : index
    %c0_8 = arith.constant 0 : index
    %10 = vector.load %arg3[%c0_7, %c0_8] : memref<1x128xf32, #tpu.memory_space<vmem>>, vector<1x128xf32>
    %11 = vector.broadcast %10 : vector<1x128xf32> to vector<8x128xf32>
    %12 = arith.addf %9, %11 : vector<8x128xf32>
    %cst_9 = arith.constant 0.000000e+00 : f32
    %13 = vector.broadcast %cst_9 : f32 to vector<8x128xf32>
    %14 = arith.maximumf %12, %13 : vector<8x128xf32>
    %c0_10 = arith.constant 0 : index
    %c0_11 = arith.constant 0 : index
    %15 = vector.load %arg11[%c0_10, %c0_11] : memref<8x1536xf32, #tpu.memory_space<vmem>>, vector<8x128xf32>
    tpu.vector_store %arg11[%c0_10, %c0_11], %14 {strides = array<i32>} : memref<8x1536xf32, #tpu.memory_space<vmem>>, vector<8x128xf32>,
    %c0_12 = arith.constant 0 : index
    %c256 = arith.constant 256 : index
    %16 = vector.load %arg1[%c0_12, %c256] : memref<8x3584xf32, #tpu.memory_space<vmem>>, vector<8x640xf32>
    %c0_13 = arith.constant 0 : index
    %c0_14 = arith.constant 0 : index
    %17 = vector.load %arg2[%c0_13, %c0_14] : memref<640x256xf32, #tpu.memory_space<vmem>>, vector<640x256xf32>
    %cst_15 = arith.constant dense<0.000000e+00> : vector<8x256xf32>
    %18 = tpu.matmul %16, %17, %cst_15 {dimension_numbers = #tpu.dot_dimension_numbers<[1], [0], [0], [1], [0, 0, 1, 1], [], []>} : vector<8x640xf32>, vector<640x256xf32>, vector<8x256xf32> -> vector<8x256xf32>
    %c0_16 = arith.constant 0 : index
    %c384 = arith.constant 384 : index
    %19 = vector.load %arg1[%c0_16, %c384] : memref<8x3584xf32, #tpu.memory_space<vmem>>, vector<8x640xf32>
    %c0_17 = arith.constant 0 : index
    %c0_18 = arith.constant 0 : index
    %20 = vector.load %arg2[%c0_17, %c0_18] : memref<640x256xf32, #tpu.memory_space<vmem>>, vector<640x256xf32>
    %cst_19 = arith.constant dense<0.000000e+00> : vector<8x256xf32>
    %21 = tpu.matmul %19, %20, %cst_19 {dimension_numbers = #tpu.dot_dimension_numbers<[1], [0], [0], [1], [0, 0, 1, 1], [], []>} : vector<8x640xf32>, vector<640x256xf32>, vector<8x256xf32> -> vector<8x256xf32>
    %22 = arith.maximumf %18, %21 : vector<8x256xf32>
    %23 = vector.extract_strided_slice %22 {offsets = [0, 0], sizes = [8, 128], strides = [1, 1]} : vector<8x256xf32> to vector<8x128xf32>
    %24 = vector.extract_strided_slice %22 {offsets = [0, 128], sizes = [8, 128], strides = [1, 1]} : vector<8x256xf32> to vector<8x128xf32>
    %25 = arith.maximumf %23, %24 : vector<8x128xf32>
    %c0_20 = arith.constant 0 : index
    %c0_21 = arith.constant 0 : index
    %26 = vector.load %arg3[%c0_20, %c0_21] : memref<1x128xf32, #tpu.memory_space<vmem>>, vector<1x128xf32>
    %27 = vector.broadcast %26 : vector<1x128xf32> to vector<8x128xf32>
    %28 = arith.addf %25, %27 : vector<8x128xf32>
    %cst_22 = arith.constant 0.000000e+00 : f32
    %29 = vector.broadcast %cst_22 : f32 to vector<8x128xf32>
    %30 = arith.maximumf %28, %29 : vector<8x128xf32>
    %c0_23 = arith.constant 0 : index
    %c128_24 = arith.constant 128 : index
    %31 = vector.load %arg11[%c0_23, %c128_24] : memref<8x1536xf32, #tpu.memory_space<vmem>>, vector<8x128xf32>
    tpu.vector_store %arg11[%c0_23, %c128_24], %30 {strides = array<i32>} : memref<8x1536xf32, #tpu.memory_space<vmem>>, vector<8x128xf32>,
    %c0_25 = arith.constant 0 : index
    %c512 = arith.constant 512 : index
    %32 = vector.load %arg1[%c0_25, %c512] : memref<8x3584xf32, #tpu.memory_space<vmem>>, vector<8x640xf32>
    %c0_26 = arith.constant 0 : index
    %c0_27 = arith.constant 0 : index
    %33 = vector.load %arg2[%c0_26, %c0_27] : memref<640x256xf32, #tpu.memory_space<vmem>>, vector<640x256xf32>
    %cst_28 = arith.constant dense<0.000000e+00> : vector<8x256xf32>
    %34 = tpu.matmul %32, %33, %cst_28 {dimension_numbers = #tpu.dot_dimension_numbers<[1], [0], [0], [1], [0, 0, 1, 1], [], []>} : vector<8x640xf32>, vector<640x256xf32>, vector<8x256xf32> -> vector<8x256xf32>
    %c0_29 = arith.constant 0 : index
    %c640 = arith.constant 640 : index
    %35 = vector.load %arg1[%c0_29, %c640] : memref<8x3584xf32, #tpu.memory_space<vmem>>, vector<8x640xf32>
    %c0_30 = arith.constant 0 : index
    %c0_31 = arith.constant 0 : index
    %36 = vector.load %arg2[%c0_30, %c0_31] : memref<640x256xf32, #tpu.memory_space<vmem>>, vector<640x256xf32>
    %cst_32 = arith.constant dense<0.000000e+00> : vector<8x256xf32>
    %37 = tpu.matmul %35, %36, %cst_32 {dimension_numbers = #tpu.dot_dimension_numbers<[1], [0], [0], [1], [0, 0, 1, 1], [], []>} : vector<8x640xf32>, vector<640x256xf32>, vector<8x256xf32> -> vector<8x256xf32>
    %38 = arith.maximumf %34, %37 : vector<8x256xf32>
    %39 = vector.extract_strided_slice %38 {offsets = [0, 0], sizes = [8, 128], strides = [1, 1]} : vector<8x256xf32> to vector<8x128xf32>
    %40 = vector.extract_strided_slice %38 {offsets = [0, 128], sizes = [8, 128], strides = [1, 1]} : vector<8x256xf32> to vector<8x128xf32>
    %41 = arith.maximumf %39, %40 : vector<8x128xf32>
    %c0_33 = arith.constant 0 : index
    %c0_34 = arith.constant 0 : index
    %42 = vector.load %arg3[%c0_33, %c0_34] : memref<1x128xf32, #tpu.memory_space<vmem>>, vector<1x128xf32>
    %43 = vector.broadcast %42 : vector<1x128xf32> to vector<8x128xf32>
    %44 = arith.addf %41, %43 : vector<8x128xf32>
    %cst_35 = arith.constant 0.000000e+00 : f32
    %45 = vector.broadcast %cst_35 : f32 to vector<8x128xf32>
    %46 = arith.maximumf %44, %45 : vector<8x128xf32>
    %c0_36 = arith.constant 0 : index
    %c256_37 = arith.constant 256 : index
    %47 = vector.load %arg11[%c0_36, %c256_37] : memref<8x1536xf32, #tpu.memory_space<vmem>>, vector<8x128xf32>
    tpu.vector_store %arg11[%c0_36, %c256_37], %46 {strides = array<i32>} : memref<8x1536xf32, #tpu.memory_space<vmem>>, vector<8x128xf32>,
    %c0_38 = arith.constant 0 : index
    %c768 = arith.constant 768 : index
    %48 = vector.load %arg1[%c0_38, %c768] : memref<8x3584xf32, #tpu.memory_space<vmem>>, vector<8x640xf32>
    %c0_39 = arith.constant 0 : index
    %c0_40 = arith.constant 0 : index
    %49 = vector.load %arg2[%c0_39, %c0_40] : memref<640x256xf32, #tpu.memory_space<vmem>>, vector<640x256xf32>
    %cst_41 = arith.constant dense<0.000000e+00> : vector<8x256xf32>
    %50 = tpu.matmul %48, %49, %cst_41 {dimension_numbers = #tpu.dot_dimension_numbers<[1], [0], [0], [1], [0, 0, 1, 1], [], []>} : vector<8x640xf32>, vector<640x256xf32>, vector<8x256xf32> -> vector<8x256xf32>
    %c0_42 = arith.constant 0 : index
    %c896 = arith.constant 896 : index
    %51 = vector.load %arg1[%c0_42, %c896] : memref<8x3584xf32, #tpu.memory_space<vmem>>, vector<8x640xf32>
    %c0_43 = arith.constant 0 : index
    %c0_44 = arith.constant 0 : index
    %52 = vector.load %arg2[%c0_43, %c0_44] : memref<640x256xf32, #tpu.memory_space<vmem>>, vector<640x256xf32>
    %cst_45 = arith.constant dense<0.000000e+00> : vector<8x256xf32>
    %53 = tpu.matmul %51, %52, %cst_45 {dimension_numbers = #tpu.dot_dimension_numbers<[1], [0], [0], [1], [0, 0, 1, 1], [], []>} : vector<8x640xf32>, vector<640x256xf32>, vector<8x256xf32> -> vector<8x256xf32>
    %54 = arith.maximumf %50, %53 : vector<8x256xf32>
    %55 = vector.extract_strided_slice %54 {offsets = [0, 0], sizes = [8, 128], strides = [1, 1]} : vector<8x256xf32> to vector<8x128xf32>
    %56 = vector.extract_strided_slice %54 {offsets = [0, 128], sizes = [8, 128], strides = [1, 1]} : vector<8x256xf32> to vector<8x128xf32>
    %57 = arith.maximumf %55, %56 : vector<8x128xf32>
    %c0_46 = arith.constant 0 : index
    %c0_47 = arith.constant 0 : index
    %58 = vector.load %arg3[%c0_46, %c0_47] : memref<1x128xf32, #tpu.memory_space<vmem>>, vector<1x128xf32>
    %59 = vector.broadcast %58 : vector<1x128xf32> to vector<8x128xf32>
    %60 = arith.addf %57, %59 : vector<8x128xf32>
    %cst_48 = arith.constant 0.000000e+00 : f32
    %61 = vector.broadcast %cst_48 : f32 to vector<8x128xf32>
    %62 = arith.maximumf %60, %61 : vector<8x128xf32>
    %c0_49 = arith.constant 0 : index
    %c384_50 = arith.constant 384 : index
    %63 = vector.load %arg11[%c0_49, %c384_50] : memref<8x1536xf32, #tpu.memory_space<vmem>>, vector<8x128xf32>
    tpu.vector_store %arg11[%c0_49, %c384_50], %62 {strides = array<i32>} : memref<8x1536xf32, #tpu.memory_space<vmem>>, vector<8x128xf32>,
    %c0_51 = arith.constant 0 : index
    %c1024 = arith.constant 1024 : index
    %64 = vector.load %arg1[%c0_51, %c1024] : memref<8x3584xf32, #tpu.memory_space<vmem>>, vector<8x640xf32>
    %c0_52 = arith.constant 0 : index
    %c0_53 = arith.constant 0 : index
    %65 = vector.load %arg2[%c0_52, %c0_53] : memref<640x256xf32, #tpu.memory_space<vmem>>, vector<640x256xf32>
    %cst_54 = arith.constant dense<0.000000e+00> : vector<8x256xf32>
    %66 = tpu.matmul %64, %65, %cst_54 {dimension_numbers = #tpu.dot_dimension_numbers<[1], [0], [0], [1], [0, 0, 1, 1], [], []>} : vector<8x640xf32>, vector<640x256xf32>, vector<8x256xf32> -> vector<8x256xf32>
    %c0_55 = arith.constant 0 : index
    %c1152 = arith.constant 1152 : index
    %67 = vector.load %arg1[%c0_55, %c1152] : memref<8x3584xf32, #tpu.memory_space<vmem>>, vector<8x640xf32>
    %c0_56 = arith.constant 0 : index
    %c0_57 = arith.constant 0 : index
    %68 = vector.load %arg2[%c0_56, %c0_57] : memref<640x256xf32, #tpu.memory_space<vmem>>, vector<640x256xf32>
    %cst_58 = arith.constant dense<0.000000e+00> : vector<8x256xf32>
    %69 = tpu.matmul %67, %68, %cst_58 {dimension_numbers = #tpu.dot_dimension_numbers<[1], [0], [0], [1], [0, 0, 1, 1], [], []>} : vector<8x640xf32>, vector<640x256xf32>, vector<8x256xf32> -> vector<8x256xf32>
    %70 = arith.maximumf %66, %69 : vector<8x256xf32>
    %71 = vector.extract_strided_slice %70 {offsets = [0, 0], sizes = [8, 128], strides = [1, 1]} : vector<8x256xf32> to vector<8x128xf32>
    %72 = vector.extract_strided_slice %70 {offsets = [0, 128], sizes = [8, 128], strides = [1, 1]} : vector<8x256xf32> to vector<8x128xf32>
    %73 = arith.maximumf %71, %72 : vector<8x128xf32>
    %c0_59 = arith.constant 0 : index
    %c0_60 = arith.constant 0 : index
    %74 = vector.load %arg3[%c0_59, %c0_60] : memref<1x128xf32, #tpu.memory_space<vmem>>, vector<1x128xf32>
    %75 = vector.broadcast %74 : vector<1x128xf32> to vector<8x128xf32>
    %76 = arith.addf %73, %75 : vector<8x128xf32>
    %cst_61 = arith.constant 0.000000e+00 : f32
    %77 = vector.broadcast %cst_61 : f32 to vector<8x128xf32>
    %78 = arith.maximumf %76, %77 : vector<8x128xf32>
    %c0_62 = arith.constant 0 : index
    %c512_63 = arith.constant 512 : index
    %79 = vector.load %arg11[%c0_62, %c512_63] : memref<8x1536xf32, #tpu.memory_space<vmem>>, vector<8x128xf32>
    tpu.vector_store %arg11[%c0_62, %c512_63], %78 {strides = array<i32>} : memref<8x1536xf32, #tpu.memory_space<vmem>>, vector<8x128xf32>,
    %c0_64 = arith.constant 0 : index
    %c1280 = arith.constant 1280 : index
    %80 = vector.load %arg1[%c0_64, %c1280] : memref<8x3584xf32, #tpu.memory_space<vmem>>, vector<8x640xf32>
    %c0_65 = arith.constant 0 : index
    %c0_66 = arith.constant 0 : index
    %81 = vector.load %arg2[%c0_65, %c0_66] : memref<640x256xf32, #tpu.memory_space<vmem>>, vector<640x256xf32>
    %cst_67 = arith.constant dense<0.000000e+00> : vector<8x256xf32>
    %82 = tpu.matmul %80, %81, %cst_67 {dimension_numbers = #tpu.dot_dimension_numbers<[1], [0], [0], [1], [0, 0, 1, 1], [], []>} : vector<8x640xf32>, vector<640x256xf32>, vector<8x256xf32> -> vector<8x256xf32>
    %c0_68 = arith.constant 0 : index
    %c1408 = arith.constant 1408 : index
    %83 = vector.load %arg1[%c0_68, %c1408] : memref<8x3584xf32, #tpu.memory_space<vmem>>, vector<8x640xf32>
    %c0_69 = arith.constant 0 : index
    %c0_70 = arith.constant 0 : index
    %84 = vector.load %arg2[%c0_69, %c0_70] : memref<640x256xf32, #tpu.memory_space<vmem>>, vector<640x256xf32>
    %cst_71 = arith.constant dense<0.000000e+00> : vector<8x256xf32>
    %85 = tpu.matmul %83, %84, %cst_71 {dimension_numbers = #tpu.dot_dimension_numbers<[1], [0], [0], [1], [0, 0, 1, 1], [], []>} : vector<8x640xf32>, vector<640x256xf32>, vector<8x256xf32> -> vector<8x256xf32>
    %86 = arith.maximumf %82, %85 : vector<8x256xf32>
    %87 = vector.extract_strided_slice %86 {offsets = [0, 0], sizes = [8, 128], strides = [1, 1]} : vector<8x256xf32> to vector<8x128xf32>
    %88 = vector.extract_strided_slice %86 {offsets = [0, 128], sizes = [8, 128], strides = [1, 1]} : vector<8x256xf32> to vector<8x128xf32>
    %89 = arith.maximumf %87, %88 : vector<8x128xf32>
    %c0_72 = arith.constant 0 : index
    %c0_73 = arith.constant 0 : index
    %90 = vector.load %arg3[%c0_72, %c0_73] : memref<1x128xf32, #tpu.memory_space<vmem>>, vector<1x128xf32>
    %91 = vector.broadcast %90 : vector<1x128xf32> to vector<8x128xf32>
    %92 = arith.addf %89, %91 : vector<8x128xf32>
    %cst_74 = arith.constant 0.000000e+00 : f32
    %93 = vector.broadcast %cst_74 : f32 to vector<8x128xf32>
    %94 = arith.maximumf %92, %93 : vector<8x128xf32>
    %c0_75 = arith.constant 0 : index
    %c640_76 = arith.constant 640 : index
    %95 = vector.load %arg11[%c0_75, %c640_76] : memref<8x1536xf32, #tpu.memory_space<vmem>>, vector<8x128xf32>
    tpu.vector_store %arg11[%c0_75, %c640_76], %94 {strides = array<i32>} : memref<8x1536xf32, #tpu.memory_space<vmem>>, vector<8x128xf32>,
    %c0_77 = arith.constant 0 : index
    %c1536 = arith.constant 1536 : index
    %96 = vector.load %arg1[%c0_77, %c1536] : memref<8x3584xf32, #tpu.memory_space<vmem>>, vector<8x640xf32>
    %c0_78 = arith.constant 0 : index
    %c0_79 = arith.constant 0 : index
    %97 = vector.load %arg2[%c0_78, %c0_79] : memref<640x256xf32, #tpu.memory_space<vmem>>, vector<640x256xf32>
    %cst_80 = arith.constant dense<0.000000e+00> : vector<8x256xf32>
    %98 = tpu.matmul %96, %97, %cst_80 {dimension_numbers = #tpu.dot_dimension_numbers<[1], [0], [0], [1], [0, 0, 1, 1], [], []>} : vector<8x640xf32>, vector<640x256xf32>, vector<8x256xf32> -> vector<8x256xf32>
    %c0_81 = arith.constant 0 : index
    %c1664 = arith.constant 1664 : index
    %99 = vector.load %arg1[%c0_81, %c1664] : memref<8x3584xf32, #tpu.memory_space<vmem>>, vector<8x640xf32>
    %c0_82 = arith.constant 0 : index
    %c0_83 = arith.constant 0 : index
    %100 = vector.load %arg2[%c0_82, %c0_83] : memref<640x256xf32, #tpu.memory_space<vmem>>, vector<640x256xf32>
    %cst_84 = arith.constant dense<0.000000e+00> : vector<8x256xf32>
    %101 = tpu.matmul %99, %100, %cst_84 {dimension_numbers = #tpu.dot_dimension_numbers<[1], [0], [0], [1], [0, 0, 1, 1], [], []>} : vector<8x640xf32>, vector<640x256xf32>, vector<8x256xf32> -> vector<8x256xf32>
    %102 = arith.maximumf %98, %101 : vector<8x256xf32>
    %103 = vector.extract_strided_slice %102 {offsets = [0, 0], sizes = [8, 128], strides = [1, 1]} : vector<8x256xf32> to vector<8x128xf32>
    %104 = vector.extract_strided_slice %102 {offsets = [0, 128], sizes = [8, 128], strides = [1, 1]} : vector<8x256xf32> to vector<8x128xf32>
    %105 = arith.maximumf %103, %104 : vector<8x128xf32>
    %c0_85 = arith.constant 0 : index
    %c0_86 = arith.constant 0 : index
    %106 = vector.load %arg3[%c0_85, %c0_86] : memref<1x128xf32, #tpu.memory_space<vmem>>, vector<1x128xf32>
    %107 = vector.broadcast %106 : vector<1x128xf32> to vector<8x128xf32>
    %108 = arith.addf %105, %107 : vector<8x128xf32>
    %cst_87 = arith.constant 0.000000e+00 : f32
    %109 = vector.broadcast %cst_87 : f32 to vector<8x128xf32>
    %110 = arith.maximumf %108, %109 : vector<8x128xf32>
    %c0_88 = arith.constant 0 : index
    %c768_89 = arith.constant 768 : index
    %111 = vector.load %arg11[%c0_88, %c768_89] : memref<8x1536xf32, #tpu.memory_space<vmem>>, vector<8x128xf32>
    tpu.vector_store %arg11[%c0_88, %c768_89], %110 {strides = array<i32>} : memref<8x1536xf32, #tpu.memory_space<vmem>>, vector<8x128xf32>,
    %c0_90 = arith.constant 0 : index
    %c1792 = arith.constant 1792 : index
    %112 = vector.load %arg1[%c0_90, %c1792] : memref<8x3584xf32, #tpu.memory_space<vmem>>, vector<8x640xf32>
    %c0_91 = arith.constant 0 : index
    %c0_92 = arith.constant 0 : index
    %113 = vector.load %arg2[%c0_91, %c0_92] : memref<640x256xf32, #tpu.memory_space<vmem>>, vector<640x256xf32>
    %cst_93 = arith.constant dense<0.000000e+00> : vector<8x256xf32>
    %114 = tpu.matmul %112, %113, %cst_93 {dimension_numbers = #tpu.dot_dimension_numbers<[1], [0], [0], [1], [0, 0, 1, 1], [], []>} : vector<8x640xf32>, vector<640x256xf32>, vector<8x256xf32> -> vector<8x256xf32>
    %c0_94 = arith.constant 0 : index
    %c1920 = arith.constant 1920 : index
    %115 = vector.load %arg1[%c0_94, %c1920] : memref<8x3584xf32, #tpu.memory_space<vmem>>, vector<8x640xf32>
    %c0_95 = arith.constant 0 : index
    %c0_96 = arith.constant 0 : index
    %116 = vector.load %arg2[%c0_95, %c0_96] : memref<640x256xf32, #tpu.memory_space<vmem>>, vector<640x256xf32>
    %cst_97 = arith.constant dense<0.000000e+00> : vector<8x256xf32>
    %117 = tpu.matmul %115, %116, %cst_97 {dimension_numbers = #tpu.dot_dimension_numbers<[1], [0], [0], [1], [0, 0, 1, 1], [], []>} : vector<8x640xf32>, vector<640x256xf32>, vector<8x256xf32> -> vector<8x256xf32>
    %118 = arith.maximumf %114, %117 : vector<8x256xf32>
    %119 = vector.extract_strided_slice %118 {offsets = [0, 0], sizes = [8, 128], strides = [1, 1]} : vector<8x256xf32> to vector<8x128xf32>
    %120 = vector.extract_strided_slice %118 {offsets = [0, 128], sizes = [8, 128], strides = [1, 1]} : vector<8x256xf32> to vector<8x128xf32>
    %121 = arith.maximumf %119, %120 : vector<8x128xf32>
    %c0_98 = arith.constant 0 : index
    %c0_99 = arith.constant 0 : index
    %122 = vector.load %arg3[%c0_98, %c0_99] : memref<1x128xf32, #tpu.memory_space<vmem>>, vector<1x128xf32>
    %123 = vector.broadcast %122 : vector<1x128xf32> to vector<8x128xf32>
    %124 = arith.addf %121, %123 : vector<8x128xf32>
    %cst_100 = arith.constant 0.000000e+00 : f32
    %125 = vector.broadcast %cst_100 : f32 to vector<8x128xf32>
    %126 = arith.maximumf %124, %125 : vector<8x128xf32>
    %c0_101 = arith.constant 0 : index
    %c896_102 = arith.constant 896 : index
    %127 = vector.load %arg11[%c0_101, %c896_102] : memref<8x1536xf32, #tpu.memory_space<vmem>>, vector<8x128xf32>
    tpu.vector_store %arg11[%c0_101, %c896_102], %126 {strides = array<i32>} : memref<8x1536xf32, #tpu.memory_space<vmem>>, vector<8x128xf32>,
    %c0_103 = arith.constant 0 : index
    %c2048 = arith.constant 2048 : index
    %128 = vector.load %arg1[%c0_103, %c2048] : memref<8x3584xf32, #tpu.memory_space<vmem>>, vector<8x640xf32>
    %c0_104 = arith.constant 0 : index
    %c0_105 = arith.constant 0 : index
    %129 = vector.load %arg2[%c0_104, %c0_105] : memref<640x256xf32, #tpu.memory_space<vmem>>, vector<640x256xf32>
    %cst_106 = arith.constant dense<0.000000e+00> : vector<8x256xf32>
    %130 = tpu.matmul %128, %129, %cst_106 {dimension_numbers = #tpu.dot_dimension_numbers<[1], [0], [0], [1], [0, 0, 1, 1], [], []>} : vector<8x640xf32>, vector<640x256xf32>, vector<8x256xf32> -> vector<8x256xf32>
    %c0_107 = arith.constant 0 : index
    %c2176 = arith.constant 2176 : index
    %131 = vector.load %arg1[%c0_107, %c2176] : memref<8x3584xf32, #tpu.memory_space<vmem>>, vector<8x640xf32>
    %c0_108 = arith.constant 0 : index
    %c0_109 = arith.constant 0 : index
    %132 = vector.load %arg2[%c0_108, %c0_109] : memref<640x256xf32, #tpu.memory_space<vmem>>, vector<640x256xf32>
    %cst_110 = arith.constant dense<0.000000e+00> : vector<8x256xf32>
    %133 = tpu.matmul %131, %132, %cst_110 {dimension_numbers = #tpu.dot_dimension_numbers<[1], [0], [0], [1], [0, 0, 1, 1], [], []>} : vector<8x640xf32>, vector<640x256xf32>, vector<8x256xf32> -> vector<8x256xf32>
    %134 = arith.maximumf %130, %133 : vector<8x256xf32>
    %135 = vector.extract_strided_slice %134 {offsets = [0, 0], sizes = [8, 128], strides = [1, 1]} : vector<8x256xf32> to vector<8x128xf32>
    %136 = vector.extract_strided_slice %134 {offsets = [0, 128], sizes = [8, 128], strides = [1, 1]} : vector<8x256xf32> to vector<8x128xf32>
    %137 = arith.maximumf %135, %136 : vector<8x128xf32>
    %c0_111 = arith.constant 0 : index
    %c0_112 = arith.constant 0 : index
    %138 = vector.load %arg3[%c0_111, %c0_112] : memref<1x128xf32, #tpu.memory_space<vmem>>, vector<1x128xf32>
    %139 = vector.broadcast %138 : vector<1x128xf32> to vector<8x128xf32>
    %140 = arith.addf %137, %139 : vector<8x128xf32>
    %cst_113 = arith.constant 0.000000e+00 : f32
    %141 = vector.broadcast %cst_113 : f32 to vector<8x128xf32>
    %142 = arith.maximumf %140, %141 : vector<8x128xf32>
    %c0_114 = arith.constant 0 : index
    %c1024_115 = arith.constant 1024 : index
    %143 = vector.load %arg11[%c0_114, %c1024_115] : memref<8x1536xf32, #tpu.memory_space<vmem>>, vector<8x128xf32>
    tpu.vector_store %arg11[%c0_114, %c1024_115], %142 {strides = array<i32>} : memref<8x1536xf32, #tpu.memory_space<vmem>>, vector<8x128xf32>,
    %c0_116 = arith.constant 0 : index
    %c2304 = arith.constant 2304 : index
    %144 = vector.load %arg1[%c0_116, %c2304] : memref<8x3584xf32, #tpu.memory_space<vmem>>, vector<8x640xf32>
    %c0_117 = arith.constant 0 : index
    %c0_118 = arith.constant 0 : index
    %145 = vector.load %arg2[%c0_117, %c0_118] : memref<640x256xf32, #tpu.memory_space<vmem>>, vector<640x256xf32>
    %cst_119 = arith.constant dense<0.000000e+00> : vector<8x256xf32>
    %146 = tpu.matmul %144, %145, %cst_119 {dimension_numbers = #tpu.dot_dimension_numbers<[1], [0], [0], [1], [0, 0, 1, 1], [], []>} : vector<8x640xf32>, vector<640x256xf32>, vector<8x256xf32> -> vector<8x256xf32>
    %c0_120 = arith.constant 0 : index
    %c2432 = arith.constant 2432 : index
    %147 = vector.load %arg1[%c0_120, %c2432] : memref<8x3584xf32, #tpu.memory_space<vmem>>, vector<8x640xf32>
    %c0_121 = arith.constant 0 : index
    %c0_122 = arith.constant 0 : index
    %148 = vector.load %arg2[%c0_121, %c0_122] : memref<640x256xf32, #tpu.memory_space<vmem>>, vector<640x256xf32>
    %cst_123 = arith.constant dense<0.000000e+00> : vector<8x256xf32>
    %149 = tpu.matmul %147, %148, %cst_123 {dimension_numbers = #tpu.dot_dimension_numbers<[1], [0], [0], [1], [0, 0, 1, 1], [], []>} : vector<8x640xf32>, vector<640x256xf32>, vector<8x256xf32> -> vector<8x256xf32>
    %150 = arith.maximumf %146, %149 : vector<8x256xf32>
    %151 = vector.extract_strided_slice %150 {offsets = [0, 0], sizes = [8, 128], strides = [1, 1]} : vector<8x256xf32> to vector<8x128xf32>
    %152 = vector.extract_strided_slice %150 {offsets = [0, 128], sizes = [8, 128], strides = [1, 1]} : vector<8x256xf32> to vector<8x128xf32>
    %153 = arith.maximumf %151, %152 : vector<8x128xf32>
    %c0_124 = arith.constant 0 : index
    %c0_125 = arith.constant 0 : index
    %154 = vector.load %arg3[%c0_124, %c0_125] : memref<1x128xf32, #tpu.memory_space<vmem>>, vector<1x128xf32>
    %155 = vector.broadcast %154 : vector<1x128xf32> to vector<8x128xf32>
    %156 = arith.addf %153, %155 : vector<8x128xf32>
    %cst_126 = arith.constant 0.000000e+00 : f32
    %157 = vector.broadcast %cst_126 : f32 to vector<8x128xf32>
    %158 = arith.maximumf %156, %157 : vector<8x128xf32>
    %c0_127 = arith.constant 0 : index
    %c1152_128 = arith.constant 1152 : index
    %159 = vector.load %arg11[%c0_127, %c1152_128] : memref<8x1536xf32, #tpu.memory_space<vmem>>, vector<8x128xf32>
    tpu.vector_store %arg11[%c0_127, %c1152_128], %158 {strides = array<i32>} : memref<8x1536xf32, #tpu.memory_space<vmem>>, vector<8x128xf32>,
    %c0_129 = arith.constant 0 : index
    %c2560 = arith.constant 2560 : index
    %160 = vector.load %arg1[%c0_129, %c2560] : memref<8x3584xf32, #tpu.memory_space<vmem>>, vector<8x640xf32>
    %c0_130 = arith.constant 0 : index
    %c0_131 = arith.constant 0 : index
    %161 = vector.load %arg2[%c0_130, %c0_131] : memref<640x256xf32, #tpu.memory_space<vmem>>, vector<640x256xf32>
    %cst_132 = arith.constant dense<0.000000e+00> : vector<8x256xf32>
    %162 = tpu.matmul %160, %161, %cst_132 {dimension_numbers = #tpu.dot_dimension_numbers<[1], [0], [0], [1], [0, 0, 1, 1], [], []>} : vector<8x640xf32>, vector<640x256xf32>, vector<8x256xf32> -> vector<8x256xf32>
    %c0_133 = arith.constant 0 : index
    %c2688 = arith.constant 2688 : index
    %163 = vector.load %arg1[%c0_133, %c2688] : memref<8x3584xf32, #tpu.memory_space<vmem>>, vector<8x640xf32>
    %c0_134 = arith.constant 0 : index
    %c0_135 = arith.constant 0 : index
    %164 = vector.load %arg2[%c0_134, %c0_135] : memref<640x256xf32, #tpu.memory_space<vmem>>, vector<640x256xf32>
    %cst_136 = arith.constant dense<0.000000e+00> : vector<8x256xf32>
    %165 = tpu.matmul %163, %164, %cst_136 {dimension_numbers = #tpu.dot_dimension_numbers<[1], [0], [0], [1], [0, 0, 1, 1], [], []>} : vector<8x640xf32>, vector<640x256xf32>, vector<8x256xf32> -> vector<8x256xf32>
    %166 = arith.maximumf %162, %165 : vector<8x256xf32>
    %167 = vector.extract_strided_slice %166 {offsets = [0, 0], sizes = [8, 128], strides = [1, 1]} : vector<8x256xf32> to vector<8x128xf32>
    %168 = vector.extract_strided_slice %166 {offsets = [0, 128], sizes = [8, 128], strides = [1, 1]} : vector<8x256xf32> to vector<8x128xf32>
    %169 = arith.maximumf %167, %168 : vector<8x128xf32>
    %c0_137 = arith.constant 0 : index
    %c0_138 = arith.constant 0 : index
    %170 = vector.load %arg3[%c0_137, %c0_138] : memref<1x128xf32, #tpu.memory_space<vmem>>, vector<1x128xf32>
    %171 = vector.broadcast %170 : vector<1x128xf32> to vector<8x128xf32>
    %172 = arith.addf %169, %171 : vector<8x128xf32>
    %cst_139 = arith.constant 0.000000e+00 : f32
    %173 = vector.broadcast %cst_139 : f32 to vector<8x128xf32>
    %174 = arith.maximumf %172, %173 : vector<8x128xf32>
    %c0_140 = arith.constant 0 : index
    %c1280_141 = arith.constant 1280 : index
    %175 = vector.load %arg11[%c0_140, %c1280_141] : memref<8x1536xf32, #tpu.memory_space<vmem>>, vector<8x128xf32>
    tpu.vector_store %arg11[%c0_140, %c1280_141], %174 {strides = array<i32>} : memref<8x1536xf32, #tpu.memory_space<vmem>>, vector<8x128xf32>,
    %c0_142 = arith.constant 0 : index
    %c2816 = arith.constant 2816 : index
    %176 = vector.load %arg1[%c0_142, %c2816] : memref<8x3584xf32, #tpu.memory_space<vmem>>, vector<8x640xf32>
    %c0_143 = arith.constant 0 : index
    %c0_144 = arith.constant 0 : index
    %177 = vector.load %arg2[%c0_143, %c0_144] : memref<640x256xf32, #tpu.memory_space<vmem>>, vector<640x256xf32>
    %cst_145 = arith.constant dense<0.000000e+00> : vector<8x256xf32>
    %178 = tpu.matmul %176, %177, %cst_145 {dimension_numbers = #tpu.dot_dimension_numbers<[1], [0], [0], [1], [0, 0, 1, 1], [], []>} : vector<8x640xf32>, vector<640x256xf32>, vector<8x256xf32> -> vector<8x256xf32>
    %c0_146 = arith.constant 0 : index
    %c2944 = arith.constant 2944 : index
    %179 = vector.load %arg1[%c0_146, %c2944] : memref<8x3584xf32, #tpu.memory_space<vmem>>, vector<8x640xf32>
    %c0_147 = arith.constant 0 : index
    %c0_148 = arith.constant 0 : index
    %180 = vector.load %arg2[%c0_147, %c0_148] : memref<640x256xf32, #tpu.memory_space<vmem>>, vector<640x256xf32>
    %cst_149 = arith.constant dense<0.000000e+00> : vector<8x256xf32>
    %181 = tpu.matmul %179, %180, %cst_149 {dimension_numbers = #tpu.dot_dimension_numbers<[1], [0], [0], [1], [0, 0, 1, 1], [], []>} : vector<8x640xf32>, vector<640x256xf32>, vector<8x256xf32> -> vector<8x256xf32>
    %182 = arith.maximumf %178, %181 : vector<8x256xf32>
    %183 = vector.extract_strided_slice %182 {offsets = [0, 0], sizes = [8, 128], strides = [1, 1]} : vector<8x256xf32> to vector<8x128xf32>
    %184 = vector.extract_strided_slice %182 {offsets = [0, 128], sizes = [8, 128], strides = [1, 1]} : vector<8x256xf32> to vector<8x128xf32>
    %185 = arith.maximumf %183, %184 : vector<8x128xf32>
    %c0_150 = arith.constant 0 : index
    %c0_151 = arith.constant 0 : index
    %186 = vector.load %arg3[%c0_150, %c0_151] : memref<1x128xf32, #tpu.memory_space<vmem>>, vector<1x128xf32>
    %187 = vector.broadcast %186 : vector<1x128xf32> to vector<8x128xf32>
    %188 = arith.addf %185, %187 : vector<8x128xf32>
    %cst_152 = arith.constant 0.000000e+00 : f32
    %189 = vector.broadcast %cst_152 : f32 to vector<8x128xf32>
    %190 = arith.maximumf %188, %189 : vector<8x128xf32>
    %c0_153 = arith.constant 0 : index
    %c1408_154 = arith.constant 1408 : index
    %191 = vector.load %arg11[%c0_153, %c1408_154] : memref<8x1536xf32, #tpu.memory_space<vmem>>, vector<8x128xf32>
    tpu.vector_store %arg11[%c0_153, %c1408_154], %190 {strides = array<i32>} : memref<8x1536xf32, #tpu.memory_space<vmem>>, vector<8x128xf32>,
    %c0_155 = arith.constant 0 : index
    %c0_156 = arith.constant 0 : index
    %192 = vector.load %arg11[%c0_155, %c0_156] : memref<8x1536xf32, #tpu.memory_space<vmem>>, vector<8x640xf32>
    %c0_157 = arith.constant 0 : index
    %c0_158 = arith.constant 0 : index
    %193 = vector.load %arg4[%c0_157, %c0_158] : memref<640x256xf32, #tpu.memory_space<vmem>>, vector<640x256xf32>
    %cst_159 = arith.constant dense<0.000000e+00> : vector<8x256xf32>
    %194 = tpu.matmul %192, %193, %cst_159 {dimension_numbers = #tpu.dot_dimension_numbers<[1], [0], [0], [1], [0, 0, 1, 1], [], []>} : vector<8x640xf32>, vector<640x256xf32>, vector<8x256xf32> -> vector<8x256xf32>
    %c0_160 = arith.constant 0 : index
    %c128_161 = arith.constant 128 : index
    %195 = vector.load %arg11[%c0_160, %c128_161] : memref<8x1536xf32, #tpu.memory_space<vmem>>, vector<8x640xf32>
    %c0_162 = arith.constant 0 : index
    %c0_163 = arith.constant 0 : index
    %196 = vector.load %arg4[%c0_162, %c0_163] : memref<640x256xf32, #tpu.memory_space<vmem>>, vector<640x256xf32>
    %cst_164 = arith.constant dense<0.000000e+00> : vector<8x256xf32>
    %197 = tpu.matmul %195, %196, %cst_164 {dimension_numbers = #tpu.dot_dimension_numbers<[1], [0], [0], [1], [0, 0, 1, 1], [], []>} : vector<8x640xf32>, vector<640x256xf32>, vector<8x256xf32> -> vector<8x256xf32>
    %198 = arith.maximumf %194, %197 : vector<8x256xf32>
    %199 = vector.extract_strided_slice %198 {offsets = [0, 0], sizes = [8, 128], strides = [1, 1]} : vector<8x256xf32> to vector<8x128xf32>
    %200 = vector.extract_strided_slice %198 {offsets = [0, 128], sizes = [8, 128], strides = [1, 1]} : vector<8x256xf32> to vector<8x128xf32>
    %201 = arith.maximumf %199, %200 : vector<8x128xf32>
    %c0_165 = arith.constant 0 : index
    %c0_166 = arith.constant 0 : index
    %202 = vector.load %arg5[%c0_165, %c0_166] : memref<1x128xf32, #tpu.memory_space<vmem>>, vector<1x128xf32>
    %203 = vector.broadcast %202 : vector<1x128xf32> to vector<8x128xf32>
    %204 = arith.addf %201, %203 : vector<8x128xf32>
    %cst_167 = arith.constant 0.000000e+00 : f32
    %205 = vector.broadcast %cst_167 : f32 to vector<8x128xf32>
    %206 = arith.maximumf %204, %205 : vector<8x128xf32>
    %c0_168 = arith.constant 0 : index
    %c0_169 = arith.constant 0 : index
    %207 = vector.load %arg12[%c0_168, %c0_169] : memref<8x512xf32, #tpu.memory_space<vmem>>, vector<8x128xf32>
    tpu.vector_store %arg12[%c0_168, %c0_169], %206 {strides = array<i32>} : memref<8x512xf32, #tpu.memory_space<vmem>>, vector<8x128xf32>,
    %c0_170 = arith.constant 0 : index
    %c256_171 = arith.constant 256 : index
    %208 = vector.load %arg11[%c0_170, %c256_171] : memref<8x1536xf32, #tpu.memory_space<vmem>>, vector<8x640xf32>
    %c0_172 = arith.constant 0 : index
    %c0_173 = arith.constant 0 : index
    %209 = vector.load %arg4[%c0_172, %c0_173] : memref<640x256xf32, #tpu.memory_space<vmem>>, vector<640x256xf32>
    %cst_174 = arith.constant dense<0.000000e+00> : vector<8x256xf32>
    %210 = tpu.matmul %208, %209, %cst_174 {dimension_numbers = #tpu.dot_dimension_numbers<[1], [0], [0], [1], [0, 0, 1, 1], [], []>} : vector<8x640xf32>, vector<640x256xf32>, vector<8x256xf32> -> vector<8x256xf32>
    %c0_175 = arith.constant 0 : index
    %c384_176 = arith.constant 384 : index
    %211 = vector.load %arg11[%c0_175, %c384_176] : memref<8x1536xf32, #tpu.memory_space<vmem>>, vector<8x640xf32>
    %c0_177 = arith.constant 0 : index
    %c0_178 = arith.constant 0 : index
    %212 = vector.load %arg4[%c0_177, %c0_178] : memref<640x256xf32, #tpu.memory_space<vmem>>, vector<640x256xf32>
    %cst_179 = arith.constant dense<0.000000e+00> : vector<8x256xf32>
    %213 = tpu.matmul %211, %212, %cst_179 {dimension_numbers = #tpu.dot_dimension_numbers<[1], [0], [0], [1], [0, 0, 1, 1], [], []>} : vector<8x640xf32>, vector<640x256xf32>, vector<8x256xf32> -> vector<8x256xf32>
    %214 = arith.maximumf %210, %213 : vector<8x256xf32>
    %215 = vector.extract_strided_slice %214 {offsets = [0, 0], sizes = [8, 128], strides = [1, 1]} : vector<8x256xf32> to vector<8x128xf32>
    %216 = vector.extract_strided_slice %214 {offsets = [0, 128], sizes = [8, 128], strides = [1, 1]} : vector<8x256xf32> to vector<8x128xf32>
    %217 = arith.maximumf %215, %216 : vector<8x128xf32>
    %c0_180 = arith.constant 0 : index
    %c0_181 = arith.constant 0 : index
    %218 = vector.load %arg5[%c0_180, %c0_181] : memref<1x128xf32, #tpu.memory_space<vmem>>, vector<1x128xf32>
    %219 = vector.broadcast %218 : vector<1x128xf32> to vector<8x128xf32>
    %220 = arith.addf %217, %219 : vector<8x128xf32>
    %cst_182 = arith.constant 0.000000e+00 : f32
    %221 = vector.broadcast %cst_182 : f32 to vector<8x128xf32>
    %222 = arith.maximumf %220, %221 : vector<8x128xf32>
    %c0_183 = arith.constant 0 : index
    %c128_184 = arith.constant 128 : index
    %223 = vector.load %arg12[%c0_183, %c128_184] : memref<8x512xf32, #tpu.memory_space<vmem>>, vector<8x128xf32>
    tpu.vector_store %arg12[%c0_183, %c128_184], %222 {strides = array<i32>} : memref<8x512xf32, #tpu.memory_space<vmem>>, vector<8x128xf32>,
    %c0_185 = arith.constant 0 : index
    %c512_186 = arith.constant 512 : index
    %224 = vector.load %arg11[%c0_185, %c512_186] : memref<8x1536xf32, #tpu.memory_space<vmem>>, vector<8x640xf32>
    %c0_187 = arith.constant 0 : index
    %c0_188 = arith.constant 0 : index
    %225 = vector.load %arg4[%c0_187, %c0_188] : memref<640x256xf32, #tpu.memory_space<vmem>>, vector<640x256xf32>
    %cst_189 = arith.constant dense<0.000000e+00> : vector<8x256xf32>
    %226 = tpu.matmul %224, %225, %cst_189 {dimension_numbers = #tpu.dot_dimension_numbers<[1], [0], [0], [1], [0, 0, 1, 1], [], []>} : vector<8x640xf32>, vector<640x256xf32>, vector<8x256xf32> -> vector<8x256xf32>
    %c0_190 = arith.constant 0 : index
    %c640_191 = arith.constant 640 : index
    %227 = vector.load %arg11[%c0_190, %c640_191] : memref<8x1536xf32, #tpu.memory_space<vmem>>, vector<8x640xf32>
    %c0_192 = arith.constant 0 : index
    %c0_193 = arith.constant 0 : index
    %228 = vector.load %arg4[%c0_192, %c0_193] : memref<640x256xf32, #tpu.memory_space<vmem>>, vector<640x256xf32>
    %cst_194 = arith.constant dense<0.000000e+00> : vector<8x256xf32>
    %229 = tpu.matmul %227, %228, %cst_194 {dimension_numbers = #tpu.dot_dimension_numbers<[1], [0], [0], [1], [0, 0, 1, 1], [], []>} : vector<8x640xf32>, vector<640x256xf32>, vector<8x256xf32> -> vector<8x256xf32>
    %230 = arith.maximumf %226, %229 : vector<8x256xf32>
    %231 = vector.extract_strided_slice %230 {offsets = [0, 0], sizes = [8, 128], strides = [1, 1]} : vector<8x256xf32> to vector<8x128xf32>
    %232 = vector.extract_strided_slice %230 {offsets = [0, 128], sizes = [8, 128], strides = [1, 1]} : vector<8x256xf32> to vector<8x128xf32>
    %233 = arith.maximumf %231, %232 : vector<8x128xf32>
    %c0_195 = arith.constant 0 : index
    %c0_196 = arith.constant 0 : index
    %234 = vector.load %arg5[%c0_195, %c0_196] : memref<1x128xf32, #tpu.memory_space<vmem>>, vector<1x128xf32>
    %235 = vector.broadcast %234 : vector<1x128xf32> to vector<8x128xf32>
    %236 = arith.addf %233, %235 : vector<8x128xf32>
    %cst_197 = arith.constant 0.000000e+00 : f32
    %237 = vector.broadcast %cst_197 : f32 to vector<8x128xf32>
    %238 = arith.maximumf %236, %237 : vector<8x128xf32>
    %c0_198 = arith.constant 0 : index
    %c256_199 = arith.constant 256 : index
    %239 = vector.load %arg12[%c0_198, %c256_199] : memref<8x512xf32, #tpu.memory_space<vmem>>, vector<8x128xf32>
    tpu.vector_store %arg12[%c0_198, %c256_199], %238 {strides = array<i32>} : memref<8x512xf32, #tpu.memory_space<vmem>>, vector<8x128xf32>,
    %c0_200 = arith.constant 0 : index
    %c768_201 = arith.constant 768 : index
    %240 = vector.load %arg11[%c0_200, %c768_201] : memref<8x1536xf32, #tpu.memory_space<vmem>>, vector<8x640xf32>
    %c0_202 = arith.constant 0 : index
    %c0_203 = arith.constant 0 : index
    %241 = vector.load %arg4[%c0_202, %c0_203] : memref<640x256xf32, #tpu.memory_space<vmem>>, vector<640x256xf32>
    %cst_204 = arith.constant dense<0.000000e+00> : vector<8x256xf32>
    %242 = tpu.matmul %240, %241, %cst_204 {dimension_numbers = #tpu.dot_dimension_numbers<[1], [0], [0], [1], [0, 0, 1, 1], [], []>} : vector<8x640xf32>, vector<640x256xf32>, vector<8x256xf32> -> vector<8x256xf32>
    %c0_205 = arith.constant 0 : index
    %c896_206 = arith.constant 896 : index
    %243 = vector.load %arg11[%c0_205, %c896_206] : memref<8x1536xf32, #tpu.memory_space<vmem>>, vector<8x640xf32>
    %c0_207 = arith.constant 0 : index
    %c0_208 = arith.constant 0 : index
    %244 = vector.load %arg4[%c0_207, %c0_208] : memref<640x256xf32, #tpu.memory_space<vmem>>, vector<640x256xf32>
    %cst_209 = arith.constant dense<0.000000e+00> : vector<8x256xf32>
    %245 = tpu.matmul %243, %244, %cst_209 {dimension_numbers = #tpu.dot_dimension_numbers<[1], [0], [0], [1], [0, 0, 1, 1], [], []>} : vector<8x640xf32>, vector<640x256xf32>, vector<8x256xf32> -> vector<8x256xf32>
    %246 = arith.maximumf %242, %245 : vector<8x256xf32>
    %247 = vector.extract_strided_slice %246 {offsets = [0, 0], sizes = [8, 128], strides = [1, 1]} : vector<8x256xf32> to vector<8x128xf32>
    %248 = vector.extract_strided_slice %246 {offsets = [0, 128], sizes = [8, 128], strides = [1, 1]} : vector<8x256xf32> to vector<8x128xf32>
    %249 = arith.maximumf %247, %248 : vector<8x128xf32>
    %c0_210 = arith.constant 0 : index
    %c0_211 = arith.constant 0 : index
    %250 = vector.load %arg5[%c0_210, %c0_211] : memref<1x128xf32, #tpu.memory_space<vmem>>, vector<1x128xf32>
    %251 = vector.broadcast %250 : vector<1x128xf32> to vector<8x128xf32>
    %252 = arith.addf %249, %251 : vector<8x128xf32>
    %cst_212 = arith.constant 0.000000e+00 : f32
    %253 = vector.broadcast %cst_212 : f32 to vector<8x128xf32>
    %254 = arith.maximumf %252, %253 : vector<8x128xf32>
    %c0_213 = arith.constant 0 : index
    %c384_214 = arith.constant 384 : index
    %255 = vector.load %arg12[%c0_213, %c384_214] : memref<8x512xf32, #tpu.memory_space<vmem>>, vector<8x128xf32>
    tpu.vector_store %arg12[%c0_213, %c384_214], %254 {strides = array<i32>} : memref<8x512xf32, #tpu.memory_space<vmem>>, vector<8x128xf32>,
    %c0_215 = arith.constant 0 : index
    %c0_216 = arith.constant 0 : index
    %256 = vector.load %arg12[%c0_215, %c0_216] : memref<8x512xf32, #tpu.memory_space<vmem>>, vector<8x512xf32>
    %c0_217 = arith.constant 0 : index
    %c0_218 = arith.constant 0 : index
    %257 = vector.load %arg6[%c0_217, %c0_218] : memref<512x128xf32, #tpu.memory_space<vmem>>, vector<512x128xf32>
    %cst_219 = arith.constant dense<0.000000e+00> : vector<8x128xf32>
    %258 = tpu.matmul %256, %257, %cst_219 {dimension_numbers = #tpu.dot_dimension_numbers<[1], [0], [0], [1], [0, 0, 1, 1], [], []>} : vector<8x512xf32>, vector<512x128xf32>, vector<8x128xf32> -> vector<8x128xf32>
    %c0_220 = arith.constant 0 : index
    %c0_221 = arith.constant 0 : index
    %259 = vector.load %arg7[%c0_220, %c0_221] : memref<1x128xf32, #tpu.memory_space<vmem>>, vector<1x128xf32>
    %260 = vector.broadcast %259 : vector<1x128xf32> to vector<8x128xf32>
    %261 = arith.addf %258, %260 : vector<8x128xf32>
    %cst_222 = arith.constant 0.000000e+00 : f32
    %262 = vector.broadcast %cst_222 : f32 to vector<8x128xf32>
    %263 = arith.maximumf %261, %262 : vector<8x128xf32>
    %c0_223 = arith.constant 0 : index
    %c0_224 = arith.constant 0 : index
    %264 = vector.load %arg8[%c0_223, %c0_224] : memref<128x128xf32, #tpu.memory_space<vmem>>, vector<128x128xf32>
    %cst_225 = arith.constant dense<0.000000e+00> : vector<8x128xf32>
    %265 = tpu.matmul %263, %264, %cst_225 {dimension_numbers = #tpu.dot_dimension_numbers<[1], [0], [0], [1], [0, 0, 1, 1], [], []>} : vector<8x128xf32>, vector<128x128xf32>, vector<8x128xf32> -> vector<8x128xf32>
    %c0_226 = arith.constant 0 : index
    %c0_227 = arith.constant 0 : index
    %266 = vector.load %arg9[%c0_226, %c0_227] : memref<1x128xf32, #tpu.memory_space<vmem>>, vector<1x128xf32>
    %267 = vector.broadcast %266 : vector<1x128xf32> to vector<8x128xf32>
    %268 = arith.addf %265, %267 : vector<8x128xf32>
    %c0_228 = arith.constant 0 : index
    %c0_229 = arith.constant 0 : index
    %269 = vector.load %arg10[%c0_228, %c0_229] : memref<8x128xf32, #tpu.memory_space<vmem>>, vector<8x128xf32>
    tpu.vector_store %arg10[%c0_228, %c0_229], %268 {strides = array<i32>} : memref<8x128xf32, #tpu.memory_space<vmem>>, vector<8x128xf32>,
    return
  }
  func.func @transform_0(%arg0: i32) -> (i32, i32) {
    %c0_i32 = arith.constant 0 : i32
    %c0_i32_0 = arith.constant 0 : i32
    return %arg0, %c0_i32 : i32, i32
  }
  func.func @transform_1(%arg0: i32) -> (i32, i32) {
    %c0_i32 = arith.constant 0 : i32
    %c0_i32_0 = arith.constant 0 : i32
    %c0_i32_1 = arith.constant 0 : i32
    return %c0_i32, %c0_i32_0 : i32, i32
  }
  func.func @transform_2(%arg0: i32) -> (i32, i32) {
    %c0_i32 = arith.constant 0 : i32
    %c0_i32_0 = arith.constant 0 : i32
    %c0_i32_1 = arith.constant 0 : i32
    return %c0_i32, %c0_i32_0 : i32, i32
  }
  func.func @transform_3(%arg0: i32) -> (i32, i32) {
    %c0_i32 = arith.constant 0 : i32
    %c0_i32_0 = arith.constant 0 : i32
    %c0_i32_1 = arith.constant 0 : i32
    return %c0_i32, %c0_i32_0 : i32, i32
  }
  func.func @transform_4(%arg0: i32) -> (i32, i32) {
    %c0_i32 = arith.constant 0 : i32
    %c0_i32_0 = arith.constant 0 : i32
    %c0_i32_1 = arith.constant 0 : i32
    return %c0_i32, %c0_i32_0 : i32, i32
  }
  func.func @transform_5(%arg0: i32) -> (i32, i32) {
    %c0_i32 = arith.constant 0 : i32
    %c0_i32_0 = arith.constant 0 : i32
    %c0_i32_1 = arith.constant 0 : i32
    return %c0_i32, %c0_i32_0 : i32, i32
  }
  func.func @transform_6(%arg0: i32) -> (i32, i32) {
    %c0_i32 = arith.constant 0 : i32
    %c0_i32_0 = arith.constant 0 : i32
    %c0_i32_1 = arith.constant 0 : i32
    return %c0_i32, %c0_i32_0 : i32, i32
  }
  func.func @transform_7(%arg0: i32) -> (i32, i32) {
    %c0_i32 = arith.constant 0 : i32
    %c0_i32_0 = arith.constant 0 : i32
    %c0_i32_1 = arith.constant 0 : i32
    return %c0_i32, %c0_i32_0 : i32, i32
  }
  func.func @transform_8(%arg0: i32) -> (i32, i32) {
    %c0_i32 = arith.constant 0 : i32
    %c0_i32_0 = arith.constant 0 : i32
    %c0_i32_1 = arith.constant 0 : i32
    return %c0_i32, %c0_i32_0 : i32, i32
  }
  func.func @transform_9(%arg0: i32) -> (i32, i32) {
    %c0_i32 = arith.constant 0 : i32
    %c0_i32_0 = arith.constant 0 : i32
    return %arg0, %c0_i32 : i32, i32
  }
}

</mosaic_0001>

<llo_original>
// kernel: tile.13
$region0: #{tile.13}
  #allocation0 [shape = 's32[1]{0}', space=sflag, size = 0x4, scoped, tag = 'scoped memory for tile.13']
  %s0 = inlined_call_operand.vmem [shape: f32[10], index: 0, kind: input, shape index: {}]
  %s1 = inlined_call_operand.vmem [shape: f32[12,10], index: 1, kind: output, shape index: {}]
  // Predicated region
  $region2: #{tile.13} parent=0 // pred_check
    _
  $region3: #{tile.13} parent=0 // pred_check_branch
    %3 = sbr.rel (0) target = $region5
  $region4: #{tile.13} parent=0 // pred_region
    _
  $region5: #{tile.13} parent=0 // pred_fallthru
    _
  %v4 = vld [vmem:[%s0] ss:$0 sm:$0xff]
  %5 = vst [vmem:[%s1] sm:$0xff] %v4
  %s6 = scalar_lea.vmem %s1, 8
  %7 = vst [vmem:[%s6] sm:$0xff] %v4

// kernel: tile.14
$region0: #{tile.14}
  %s0 = inlined_call_operand.vmem [shape: f32[12,10], index: 0, kind: input, shape index: {}]
  %s1 = inlined_call_operand.vmem [shape: f32[120], index: 1, kind: output, shape index: {}]
  $region1: #{tile.14} parent=0
    #allocation0 [shape = 'u8[4096]{0}', space=vmem, size = 0x1000, scoped, tag = 'scoped mem for output reshape']
    %v2 = vld [vmem:[%s0] sm:$0x1]
    %vm3 = vcmask 80896
    %4 = vst.msk [vmem:[#allocation0] sm:$0x1] %vm3, %v2
    %s5 = scalar_lea.vmem %s0, 11
    %v6 = vld [vmem:[%s5] sm:$0x1]
    %7 = vrot.lane.b32.xlu0 %v6, 110
    %v8 = vpop.permute.xlu0 %7
    %vm9 = vcmask 982896
    %10 = vst.msk [vmem:[#allocation0] sm:$0x1] %vm9, %v8
    %s11 = scalar_lea.vmem %s0, 10
    %v12 = vld [vmem:[%s11] sm:$0x1]
    %13 = vrot.lane.b32.xlu0 %v12, 100
    %v14 = vpop.permute.xlu0 %13
    %vm15 = vcmask 900896
    %16 = vst.msk [vmem:[#allocation0] sm:$0x1] %vm15, %v14
    %s17 = scalar_lea.vmem %s0, 9
    %v18 = vld [vmem:[%s17] sm:$0x1]
    %19 = vrot.lane.b32.xlu0 %v18, 90
    %v20 = vpop.permute.xlu0 %19
    %vm21 = vcmask 818896
    %22 = vst.msk [vmem:[#allocation0] sm:$0x1] %vm21, %v20
    %s23 = scalar_lea.vmem %s0, 8
    %v24 = vld [vmem:[%s23] sm:$0x1]
    %25 = vrot.lane.b32.xlu0 %v24, 80
    %v26 = vpop.permute.xlu0 %25
    %vm27 = vcmask 736896
    %28 = vst.msk [vmem:[#allocation0] sm:$0x1] %vm27, %v26
    %s29 = scalar_lea.vmem %s0, 7
    %v30 = vld [vmem:[%s29] sm:$0x1]
    %31 = vrot.lane.b32.xlu0 %v30, 70
    %v32 = vpop.permute.xlu0 %31
    %vm33 = vcmask 654896
    %34 = vst.msk [vmem:[#allocation0] sm:$0x1] %vm33, %v32
    %s35 = scalar_lea.vmem %s0, 6
    %v36 = vld [vmem:[%s35] sm:$0x1]
    %37 = vrot.lane.b32.xlu0 %v36, 60
    %v38 = vpop.permute.xlu0 %37
    %vm39 = vcmask 572896
    %40 = vst.msk [vmem:[#allocation0] sm:$0x1] %vm39, %v38
    %s41 = scalar_lea.vmem %s0, 5
    %v42 = vld [vmem:[%s41] sm:$0x1]
    %43 = vrot.lane.b32.xlu0 %v42, 50
    %v44 = vpop.permute.xlu0 %43
    %vm45 = vcmask 490896
    %46 = vst.msk [vmem:[#allocation0] sm:$0x1] %vm45, %v44
    %s47 = scalar_lea.vmem %s0, 4
    %v48 = vld [vmem:[%s47] sm:$0x1]
    %49 = vrot.lane.b32.xlu0 %v48, 40
    %v50 = vpop.permute.xlu0 %49
    %vm51 = vcmask 408896
    %52 = vst.msk [vmem:[#allocation0] sm:$0x1] %vm51, %v50
    %s53 = scalar_lea.vmem %s0, 3
    %v54 = vld [vmem:[%s53] sm:$0x1]
    %55 = vrot.lane.b32.xlu0 %v54, 30
    %v56 = vpop.permute.xlu0 %55
    %vm57 = vcmask 326896
    %58 = vst.msk [vmem:[#allocation0] sm:$0x1] %vm57, %v56
    %s59 = scalar_lea.vmem %s0, 2
    %v60 = vld [vmem:[%s59] sm:$0x1]
    %61 = vrot.lane.b32.xlu0 %v60, 20
    %v62 = vpop.permute.xlu0 %61
    %vm63 = vcmask 244896
    %64 = vst.msk [vmem:[#allocation0] sm:$0x1] %vm63, %v62
    %s65 = scalar_lea.vmem %s0, 1
    %v66 = vld [vmem:[%s65] sm:$0x1]
    %67 = vrot.lane.b32.xlu0 %v66, 10
    %v68 = vpop.permute.xlu0 %67
    %vm69 = vcmask 162896
    %70 = vst.msk [vmem:[#allocation0] sm:$0x1] %vm69, %v68
    %s72 = sshllo.u32 0, 1
    %v74 = vld [vmem:[#allocation0] sm:%s72]
    %s75 = sshllo.u32 0, 1
    %76 = vst [vmem:[%s1] sm:%s75] %v74

// kernel: tile.18
$region0: #{tile.18}
  #allocation0 [shape = 's32[1]{0}', space=sflag, size = 0x4, scoped, tag = 'scoped memory for tile.18']
  %s0 = inlined_call_operand.vmem [shape: f32[20], index: 0, kind: input, shape index: {}]
  %s1 = inlined_call_operand.vmem [shape: f32[4,20], index: 1, kind: output, shape index: {}]
  // Predicated region
  $region2: #{tile.18} parent=0 // pred_check
    _
  $region3: #{tile.18} parent=0 // pred_check_branch
    %3 = sbr.rel (0) target = $region5
  $region4: #{tile.18} parent=0 // pred_region
    _
  $region5: #{tile.18} parent=0 // pred_fallthru
    _
  %v4 = vld [vmem:[%s0] ss:$0 sm:$0xff]
  %5 = vst [vmem:[%s1] sm:$0xf] %v4

// kernel: tile.19
$region0: #{tile.19}
  %s0 = inlined_call_operand.vmem [shape: f32[4,20], index: 0, kind: input, shape index: {}]
  %s1 = inlined_call_operand.vmem [shape: f32[80], index: 1, kind: output, shape index: {}]
  $region1: #{tile.19} parent=0
    #allocation0 [shape = 'u8[4096]{0}', space=vmem, size = 0x1000, scoped, tag = 'scoped mem for output reshape']
    #allocation1 [shape = 'u8[4096]{0}', space=vmem, size = 0x1000, scoped, tag = 'scoped mem for input reshape']
    %s3 = sshllo.u32 0, 4
    %v4 = vld [vmem:[%s0] sm:%s3]
    %5 = vst [vmem:[#allocation1] sm:%s3] %v4
    %v6 = vld [vmem:[#allocation1] sm:$0x1]
    %vm7 = vcmask 162816
    %8 = vst.msk [vmem:[#allocation0] sm:$0x1] %vm7, %v6
    %s9 = scalar_lea.vmem [#allocation1], 3
    %v10 = vld [vmem:[%s9] sm:$0x1]
    %11 = vrot.lane.b32.xlu0 %v10, 60
    %v12 = vpop.permute.xlu0 %11
    %vm13 = vcmask 654816
    %14 = vst.msk [vmem:[#allocation0] sm:$0x1] %vm13, %v12
    %s15 = scalar_lea.vmem [#allocation1], 2
    %v16 = vld [vmem:[%s15] sm:$0x1]
    %17 = vrot.lane.b32.xlu0 %v16, 40
    %v18 = vpop.permute.xlu0 %17
    %vm19 = vcmask 490816
    %20 = vst.msk [vmem:[#allocation0] sm:$0x1] %vm19, %v18
    %s21 = scalar_lea.vmem [#allocation1], 1
    %v22 = vld [vmem:[%s21] sm:$0x1]
    %23 = vrot.lane.b32.xlu0 %v22, 20
    %v24 = vpop.permute.xlu0 %23
    %vm25 = vcmask 326816
    %26 = vst.msk [vmem:[#allocation0] sm:$0x1] %vm25, %v24
    %s28 = sshllo.u32 0, 1
    %v30 = vld [vmem:[#allocation0] sm:%s28]
    %s31 = sshllo.u32 0, 1
    %32 = vst [vmem:[%s1] sm:%s31] %v30

// kernel: cnn_forward.1
$region0: #{cnn_forward.1}
  #allocation0 [shape = 'u32[]', space=smem, size = 0x4, offset = 0x4, fixed_abs, tag = 'smem constant byte address 0x4 - core index']
  #allocation1 [shape = 'u32[144,128]{1,0:T(1,128)}', space=vmem, size = 0x12000, scoped, tag = 'internal scratch']
  #allocation2 [shape = 'f32[8,1536]{1,0:T(8,128)}', space=vmem, size = 0xc000, scoped, tag = 'scratch operand']
  #allocation3 [shape = 'f32[8,512]{1,0:T(8,128)}', space=vmem, size = 0x4000, scoped, tag = 'scratch operand']
  %s0 = inlined_call_operand.vmem [shape: f32[8,3584], index: 0, kind: input, shape index: {}]
  %s1 = inlined_call_operand.vmem [shape: f32[640,256], index: 1, kind: input, shape index: {}]
  %s2 = inlined_call_operand.vmem [shape: f32[1,128], index: 2, kind: input, shape index: {}]
  %s3 = inlined_call_operand.vmem [shape: f32[640,256], index: 3, kind: input, shape index: {}]
  %s4 = inlined_call_operand.vmem [shape: f32[1,128], index: 4, kind: input, shape index: {}]
  %s5 = inlined_call_operand.vmem [shape: f32[512,128], index: 5, kind: input, shape index: {}]
  %s6 = inlined_call_operand.vmem [shape: f32[1,128], index: 6, kind: input, shape index: {}]
  %s7 = inlined_call_operand.vmem [shape: f32[128,128], index: 7, kind: input, shape index: {}]
  %s8 = inlined_call_operand.vmem [shape: f32[1,128], index: 8, kind: input, shape index: {}]
  %s9 = inlined_call_operand.vmem [shape: f32[8,128], index: 9, kind: output, shape index: {}]
  %s10 = sld [smem:[#allocation0]]
  $region46: #{cnn_forward.1} parent=0
    _
  %s12 = ssub.s32 1, %s10
  %s13 = scalar_select 0, %s12, %s10
  // Predicated region
  $region2: #{cnn_forward.1} parent=0 // pred_check
    _
  $region3: #{cnn_forward.1} parent=0 // pred_check_branch
    %15 = sbr.rel (0) target = $region5
  $region4: #{cnn_forward.1} parent=0 // pred_region
    _
  $region5: #{cnn_forward.1} parent=0 // pred_fallthru
    _
  // Predicated region
  $region6: #{cnn_forward.1} parent=0 // pred_check
    _
  $region7: #{cnn_forward.1} parent=0 // pred_check_branch
    %17 = sbr.rel (0) target = $region9
  $region8: #{cnn_forward.1} parent=0 // pred_region
    _
  $region9: #{cnn_forward.1} parent=0 // pred_fallthru
    _
  // Predicated region
  $region10: #{cnn_forward.1} parent=0 // pred_check
    _
  $region11: #{cnn_forward.1} parent=0 // pred_check_branch
    %19 = sbr.rel (0) target = $region13
  $region12: #{cnn_forward.1} parent=0 // pred_region
    _
  $region13: #{cnn_forward.1} parent=0 // pred_fallthru
    _
  // Predicated region
  $region14: #{cnn_forward.1} parent=0 // pred_check
    _
  $region15: #{cnn_forward.1} parent=0 // pred_check_branch
    %21 = sbr.rel (0) target = $region17
  $region16: #{cnn_forward.1} parent=0 // pred_region
    _
  $region17: #{cnn_forward.1} parent=0 // pred_fallthru
    _
  // Predicated region
  $region18: #{cnn_forward.1} parent=0 // pred_check
    _
  $region19: #{cnn_forward.1} parent=0 // pred_check_branch
    %23 = sbr.rel (0) target = $region21
  $region20: #{cnn_forward.1} parent=0 // pred_region
    _
  $region21: #{cnn_forward.1} parent=0 // pred_fallthru
    _
  // Predicated region
  $region22: #{cnn_forward.1} parent=0 // pred_check
    _
  $region23: #{cnn_forward.1} parent=0 // pred_check_branch
    %25 = sbr.rel (0) target = $region25
  $region24: #{cnn_forward.1} parent=0 // pred_region
    _
  $region25: #{cnn_forward.1} parent=0 // pred_fallthru
    _
  // Predicated region
  $region26: #{cnn_forward.1} parent=0 // pred_check
    _
  $region27: #{cnn_forward.1} parent=0 // pred_check_branch
    %27 = sbr.rel (0) target = $region29
  $region28: #{cnn_forward.1} parent=0 // pred_region
    _
  $region29: #{cnn_forward.1} parent=0 // pred_fallthru
    _
  // Predicated region
  $region30: #{cnn_forward.1} parent=0 // pred_check
    _
  $region31: #{cnn_forward.1} parent=0 // pred_check_branch
    %29 = sbr.rel (0) target = $region33
  $region32: #{cnn_forward.1} parent=0 // pred_region
    _
  $region33: #{cnn_forward.1} parent=0 // pred_fallthru
    _
  // Predicated region
  $region34: #{cnn_forward.1} parent=0 // pred_check
    _
  $region35: #{cnn_forward.1} parent=0 // pred_check_branch
    %31 = sbr.rel (0) target = $region37
  $region36: #{cnn_forward.1} parent=0 // pred_region
    _
  $region37: #{cnn_forward.1} parent=0 // pred_fallthru
    _
  %v32 = vld [vmem:[%s0] sm:$0xff]
  %v33 = vld [vmem:[%s0 + $0x8] sm:$0xff]
  %v34 = vld [vmem:[%s0 + $0x10] sm:$0xff]
  %v35 = vld [vmem:[%s0 + $0x18] sm:$0xff]
  %v36 = vld [vmem:[%s0 + $0x20] sm:$0xff]
  %v37 = vld [vmem:[%s1] sm:$0xff]
  %v38 = vld [vmem:[%s1 + $0x8] sm:$0xff]
  %v39 = vld [vmem:[%s1 + $0x10] sm:$0xff]
  %v40 = vld [vmem:[%s1 + $0x18] sm:$0xff]
  %v41 = vld [vmem:[%s1 + $0x20] sm:$0xff]
  %v42 = vld [vmem:[%s1 + $0x28] sm:$0xff]
  %v43 = vld [vmem:[%s1 + $0x30] sm:$0xff]
  %v44 = vld [vmem:[%s1 + $0x38] sm:$0xff]
  %v45 = vld [vmem:[%s1 + $0x40] sm:$0xff]
  %v46 = vld [vmem:[%s1 + $0x48] sm:$0xff]
  %v47 = vld [vmem:[%s1 + $0x50] sm:$0xff]
  %v48 = vld [vmem:[%s1 + $0x58] sm:$0xff]
  %v49 = vld [vmem:[%s1 + $0x60] sm:$0xff]
  %v50 = vld [vmem:[%s1 + $0x68] sm:$0xff]
  %v51 = vld [vmem:[%s1 + $0x70] sm:$0xff]
  %v52 = vld [vmem:[%s1 + $0x78] sm:$0xff]
  %v53 = vld [vmem:[%s1 + $0x80] sm:$0xff]
  %v54 = vld [vmem:[%s1 + $0x88] sm:$0xff]
  %v55 = vld [vmem:[%s1 + $0x90] sm:$0xff]
  %v56 = vld [vmem:[%s1 + $0x98] sm:$0xff]
  %v57 = vld [vmem:[%s1 + $0xa0] sm:$0xff]
  %v58 = vld [vmem:[%s1 + $0xa8] sm:$0xff]
  %v59 = vld [vmem:[%s1 + $0xb0] sm:$0xff]
  %v60 = vld [vmem:[%s1 + $0xb8] sm:$0xff]
  %v61 = vld [vmem:[%s1 + $0xc0] sm:$0xff]
  %v62 = vld [vmem:[%s1 + $0xc8] sm:$0xff]
  %v63 = vld [vmem:[%s1 + $0xd0] sm:$0xff]
  %v64 = vld [vmem:[%s1 + $0xd8] sm:$0xff]
  %v65 = vld [vmem:[%s1 + $0xe0] sm:$0xff]
  %v66 = vld [vmem:[%s1 + $0xe8] sm:$0xff]
  %v67 = vld [vmem:[%s1 + $0xf0] sm:$0xff]
  %v68 = vld [vmem:[%s1 + $0xf8] sm:$0xff]
  %v69 = vld [vmem:[%s1 + $0x100] sm:$0xff]
  %v70 = vld [vmem:[%s1 + $0x108] sm:$0xff]
  %v71 = vld [vmem:[%s1 + $0x110] sm:$0xff]
  %v72 = vld [vmem:[%s1 + $0x118] sm:$0xff]
  %v73 = vld [vmem:[%s1 + $0x120] sm:$0xff]
  %v74 = vld [vmem:[%s1 + $0x128] sm:$0xff]
  %v75 = vld [vmem:[%s1 + $0x130] sm:$0xff]
  %v76 = vld [vmem:[%s1 + $0x138] sm:$0xff]
  %v77 = vld [vmem:[%s1 + $0x140] sm:$0xff]
  %v78 = vld [vmem:[%s1 + $0x148] sm:$0xff]
  %v79 = vld [vmem:[%s1 + $0x150] sm:$0xff]
  %v80 = vld [vmem:[%s1 + $0x158] sm:$0xff]
  %v81 = vld [vmem:[%s1 + $0x160] sm:$0xff]
  %v82 = vld [vmem:[%s1 + $0x168] sm:$0xff]
  %v83 = vld [vmem:[%s1 + $0x170] sm:$0xff]
  %v84 = vld [vmem:[%s1 + $0x178] sm:$0xff]
  %v85 = vld [vmem:[%s1 + $0x180] sm:$0xff]
  %v86 = vld [vmem:[%s1 + $0x188] sm:$0xff]
  %v87 = vld [vmem:[%s1 + $0x190] sm:$0xff]
  %v88 = vld [vmem:[%s1 + $0x198] sm:$0xff]
  %v89 = vld [vmem:[%s1 + $0x1a0] sm:$0xff]
  %v90 = vld [vmem:[%s1 + $0x1a8] sm:$0xff]
  %v91 = vld [vmem:[%s1 + $0x1b0] sm:$0xff]
  %v92 = vld [vmem:[%s1 + $0x1b8] sm:$0xff]
  %v93 = vld [vmem:[%s1 + $0x1c0] sm:$0xff]
  %v94 = vld [vmem:[%s1 + $0x1c8] sm:$0xff]
  %v95 = vld [vmem:[%s1 + $0x1d0] sm:$0xff]
  %v96 = vld [vmem:[%s1 + $0x1d8] sm:$0xff]
  %v97 = vld [vmem:[%s1 + $0x1e0] sm:$0xff]
  %v98 = vld [vmem:[%s1 + $0x1e8] sm:$0xff]
  %v99 = vld [vmem:[%s1 + $0x1f0] sm:$0xff]
  %v100 = vld [vmem:[%s1 + $0x1f8] sm:$0xff]
  %v101 = vld [vmem:[%s1 + $0x200] sm:$0xff]
  %v102 = vld [vmem:[%s1 + $0x208] sm:$0xff]
  %v103 = vld [vmem:[%s1 + $0x210] sm:$0xff]
  %v104 = vld [vmem:[%s1 + $0x218] sm:$0xff]
  %v105 = vld [vmem:[%s1 + $0x220] sm:$0xff]
  %v106 = vld [vmem:[%s1 + $0x228] sm:$0xff]
  %v107 = vld [vmem:[%s1 + $0x230] sm:$0xff]
  %v108 = vld [vmem:[%s1 + $0x238] sm:$0xff]
  %v109 = vld [vmem:[%s1 + $0x240] sm:$0xff]
  %v110 = vld [vmem:[%s1 + $0x248] sm:$0xff]
  %v111 = vld [vmem:[%s1 + $0x250] sm:$0xff]
  %v112 = vld [vmem:[%s1 + $0x258] sm:$0xff]
  %v113 = vld [vmem:[%s1 + $0x260] sm:$0xff]
  %v114 = vld [vmem:[%s1 + $0x268] sm:$0xff]
  %v115 = vld [vmem:[%s1 + $0x270] sm:$0xff]
  %v116 = vld [vmem:[%s1 + $0x278] sm:$0xff]
  %v117 = vld [vmem:[%s1 + $0x280] sm:$0xff]
  %v118 = vld [vmem:[%s1 + $0x288] sm:$0xff]
  %v119 = vld [vmem:[%s1 + $0x290] sm:$0xff]
  %v120 = vld [vmem:[%s1 + $0x298] sm:$0xff]
  %v121 = vld [vmem:[%s1 + $0x2a0] sm:$0xff]
  %v122 = vld [vmem:[%s1 + $0x2a8] sm:$0xff]
  %v123 = vld [vmem:[%s1 + $0x2b0] sm:$0xff]
  %v124 = vld [vmem:[%s1 + $0x2b8] sm:$0xff]
  %v125 = vld [vmem:[%s1 + $0x2c0] sm:$0xff]
  %v126 = vld [vmem:[%s1 + $0x2c8] sm:$0xff]
  %v127 = vld [vmem:[%s1 + $0x2d0] sm:$0xff]
  %v128 = vld [vmem:[%s1 + $0x2d8] sm:$0xff]
  %v129 = vld [vmem:[%s1 + $0x2e0] sm:$0xff]
  %v130 = vld [vmem:[%s1 + $0x2e8] sm:$0xff]
  %v131 = vld [vmem:[%s1 + $0x2f0] sm:$0xff]
  %v132 = vld [vmem:[%s1 + $0x2f8] sm:$0xff]
  %v133 = vld [vmem:[%s1 + $0x300] sm:$0xff]
  %v134 = vld [vmem:[%s1 + $0x308] sm:$0xff]
  %v135 = vld [vmem:[%s1 + $0x310] sm:$0xff]
  %v136 = vld [vmem:[%s1 + $0x318] sm:$0xff]
  %v137 = vld [vmem:[%s1 + $0x320] sm:$0xff]
  %v138 = vld [vmem:[%s1 + $0x328] sm:$0xff]
  %v139 = vld [vmem:[%s1 + $0x330] sm:$0xff]
  %v140 = vld [vmem:[%s1 + $0x338] sm:$0xff]
  %v141 = vld [vmem:[%s1 + $0x340] sm:$0xff]
  %v142 = vld [vmem:[%s1 + $0x348] sm:$0xff]
  %v143 = vld [vmem:[%s1 + $0x350] sm:$0xff]
  %v144 = vld [vmem:[%s1 + $0x358] sm:$0xff]
  %v145 = vld [vmem:[%s1 + $0x360] sm:$0xff]
  %v146 = vld [vmem:[%s1 + $0x368] sm:$0xff]
  %v147 = vld [vmem:[%s1 + $0x370] sm:$0xff]
  %v148 = vld [vmem:[%s1 + $0x378] sm:$0xff]
  %v149 = vld [vmem:[%s1 + $0x380] sm:$0xff]
  %v150 = vld [vmem:[%s1 + $0x388] sm:$0xff]
  %v151 = vld [vmem:[%s1 + $0x390] sm:$0xff]
  %v152 = vld [vmem:[%s1 + $0x398] sm:$0xff]
  %v153 = vld [vmem:[%s1 + $0x3a0] sm:$0xff]
  %v154 = vld [vmem:[%s1 + $0x3a8] sm:$0xff]
  %v155 = vld [vmem:[%s1 + $0x3b0] sm:$0xff]
  %v156 = vld [vmem:[%s1 + $0x3b8] sm:$0xff]
  %v157 = vld [vmem:[%s1 + $0x3c0] sm:$0xff]
  %v158 = vld [vmem:[%s1 + $0x3c8] sm:$0xff]
  %v159 = vld [vmem:[%s1 + $0x3d0] sm:$0xff]
  %v160 = vld [vmem:[%s1 + $0x3d8] sm:$0xff]
  %v161 = vld [vmem:[%s1 + $0x3e0] sm:$0xff]
  %v162 = vld [vmem:[%s1 + $0x3e8] sm:$0xff]
  %v163 = vld [vmem:[%s1 + $0x3f0] sm:$0xff]
  %v164 = vld [vmem:[%s1 + $0x3f8] sm:$0xff]
  %v165 = vld [vmem:[%s1 + $0x400] sm:$0xff]
  %v166 = vld [vmem:[%s1 + $0x408] sm:$0xff]
  %v167 = vld [vmem:[%s1 + $0x410] sm:$0xff]
  %v168 = vld [vmem:[%s1 + $0x418] sm:$0xff]
  %v169 = vld [vmem:[%s1 + $0x420] sm:$0xff]
  %v170 = vld [vmem:[%s1 + $0x428] sm:$0xff]
  %v171 = vld [vmem:[%s1 + $0x430] sm:$0xff]
  %v172 = vld [vmem:[%s1 + $0x438] sm:$0xff]
  %v173 = vld [vmem:[%s1 + $0x440] sm:$0xff]
  %v174 = vld [vmem:[%s1 + $0x448] sm:$0xff]
  %v175 = vld [vmem:[%s1 + $0x450] sm:$0xff]
  %v176 = vld [vmem:[%s1 + $0x458] sm:$0xff]
  %v177 = vld [vmem:[%s1 + $0x460] sm:$0xff]
  %v178 = vld [vmem:[%s1 + $0x468] sm:$0xff]
  %v179 = vld [vmem:[%s1 + $0x470] sm:$0xff]
  %v180 = vld [vmem:[%s1 + $0x478] sm:$0xff]
  %v181 = vld [vmem:[%s1 + $0x480] sm:$0xff]
  %v182 = vld [vmem:[%s1 + $0x488] sm:$0xff]
  %v183 = vld [vmem:[%s1 + $0x490] sm:$0xff]
  %v184 = vld [vmem:[%s1 + $0x498] sm:$0xff]
  %v185 = vld [vmem:[%s1 + $0x4a0] sm:$0xff]
  %v186 = vld [vmem:[%s1 + $0x4a8] sm:$0xff]
  %v187 = vld [vmem:[%s1 + $0x4b0] sm:$0xff]
  %v188 = vld [vmem:[%s1 + $0x4b8] sm:$0xff]
  %v189 = vld [vmem:[%s1 + $0x4c0] sm:$0xff]
  %v190 = vld [vmem:[%s1 + $0x4c8] sm:$0xff]
  %v191 = vld [vmem:[%s1 + $0x4d0] sm:$0xff]
  %v192 = vld [vmem:[%s1 + $0x4d8] sm:$0xff]
  %v193 = vld [vmem:[%s1 + $0x4e0] sm:$0xff]
  %v194 = vld [vmem:[%s1 + $0x4e8] sm:$0xff]
  %v195 = vld [vmem:[%s1 + $0x4f0] sm:$0xff]
  %v196 = vld [vmem:[%s1 + $0x4f8] sm:$0xff]
  %197 = vmatprep.subr.mxu0 %v38
  %198 = vmatpush1.msra.mxu0 %v37
  %199 = vmatprep.subr.mxu0 %v40
  %200 = vmatpush1.msra.mxu0 %v39
  %201 = vmatprep.subr.mxu0 %v42
  %202 = vmatpush1.msra.mxu0 %v41
  %203 = vmatprep.subr.mxu0 %v44
  %204 = vmatpush1.msra.mxu0 %v43
  %205 = vmatprep.subr.mxu0 %v46
  %206 = vmatpush1.msra.mxu0 %v45
  %207 = vmatprep.subr.mxu0 %v48
  %208 = vmatpush1.msra.mxu0 %v47
  %209 = vmatprep.subr.mxu0 %v50
  %210 = vmatpush1.msra.mxu0 %v49
  %211 = vmatprep.subr.mxu0 %v52
  %212 = vmatpush1.msra.mxu0 %v51
  %213 = vmatprep.subr.mxu0 %v54
  %214 = vmatpush1.msra.mxu0 %v53
  %215 = vmatprep.subr.mxu0 %v56
  %216 = vmatpush1.msra.mxu0 %v55
  %217 = vmatprep.subr.mxu0 %v58
  %218 = vmatpush1.msra.mxu0 %v57
  %219 = vmatprep.subr.mxu0 %v60
  %220 = vmatpush1.msra.mxu0 %v59
  %221 = vmatprep.subr.mxu0 %v62
  %222 = vmatpush1.msra.mxu0 %v61
  %223 = vmatprep.subr.mxu0 %v64
  %224 = vmatpush1.msra.mxu0 %v63
  %225 = vmatprep.subr.mxu0 %v66
  %226 = vmatpush1.msra.mxu0 %v65
  %227 = vmatprep.subr.mxu0 %v68
  %228 = vmatpush1.msra.mxu0 %v67
  %229 = vmatprep.subr.mxu0 %v70
  %230 = vmatpush1.msra.mxu0 %v69
  %231 = vmatprep.subr.mxu0 %v72
  %232 = vmatpush1.msra.mxu0 %v71
  %233 = vmatprep.subr.mxu0 %v74
  %234 = vmatpush1.msra.mxu0 %v73
  %235 = vmatprep.subr.mxu0 %v76
  %236 = vmatpush1.msra.mxu0 %v75
  %237 = vmatprep.subr.mxu0 %v78
  %238 = vmatpush1.msra.mxu0 %v77
  %239 = vmatprep.subr.mxu0 %v80
  %240 = vmatpush1.msra.mxu0 %v79
  %241 = vmatprep.subr.mxu0 %v82
  %242 = vmatpush1.msra.mxu0 %v81
  %243 = vmatprep.subr.mxu0 %v84
  %244 = vmatpush1.msra.mxu0 %v83
  %245 = vmatprep.subr.mxu0 %v86
  %246 = vmatpush1.msra.mxu0 %v85
  %247 = vmatprep.subr.mxu0 %v88
  %248 = vmatpush1.msra.mxu0 %v87
  %249 = vmatprep.subr.mxu0 %v90
  %250 = vmatpush1.msra.mxu0 %v89
  %251 = vmatprep.subr.mxu0 %v92
  %252 = vmatpush1.msra.mxu0 %v91
  %253 = vmatprep.subr.mxu0 %v94
  %254 = vmatpush1.msra.mxu0 %v93
  %255 = vmatprep.subr.mxu0 %v96
  %256 = vmatpush1.msra.mxu0 %v95
  %257 = vmatprep.subr.mxu0 %v98
  %258 = vmatpush1.msra.mxu0 %v97
  %259 = vmatprep.subr.mxu0 %v100
  %260 = vmatpush1.msra.mxu0 %v99
  %261 = vmatprep.mubr.f32.mxu0 %v33
  %262 = vmatmul.mubr.f32.gmra.mrb[0].mxu0 %v32
  %v263 = vpop.f32.mrb[0].mxu0
  %v264 = vadd.f32 0.0, %v263
  %v265 = vpop.f32.mrb[0].mxu0
  %v266 = vadd.f32 0.0, %v265
  %267 = vdwg.mxu0
  %268 = vmatprep.subr.mxu0 %v102
  %269 = vmatpush1.msra.mxu0 %v101
  %270 = vmatprep.subr.mxu0 %v104
  %271 = vmatpush1.msra.mxu0 %v103
  %272 = vmatprep.subr.mxu0 %v106
  %273 = vmatpush1.msra.mxu0 %v105
  %274 = vmatprep.subr.mxu0 %v108
  %275 = vmatpush1.msra.mxu0 %v107
  %276 = vmatprep.subr.mxu0 %v110
  %277 = vmatpush1.msra.mxu0 %v109
  %278 = vmatprep.subr.mxu0 %v112
  %279 = vmatpush1.msra.mxu0 %v111
  %280 = vmatprep.subr.mxu0 %v114
  %281 = vmatpush1.msra.mxu0 %v113
  %282 = vmatprep.subr.mxu0 %v116
  %283 = vmatpush1.msra.mxu0 %v115
  %284 = vmatprep.subr.mxu0 %v118
  %285 = vmatpush1.msra.mxu0 %v117
  %286 = vmatprep.subr.mxu0 %v120
  %287 = vmatpush1.msra.mxu0 %v119
  %288 = vmatprep.subr.mxu0 %v122
  %289 = vmatpush1.msra.mxu0 %v121
  %290 = vmatprep.subr.mxu0 %v124
  %291 = vmatpush1.msra.mxu0 %v123
  %292 = vmatprep.subr.mxu0 %v126
  %293 = vmatpush1.msra.mxu0 %v125
  %294 = vmatprep.subr.mxu0 %v128
  %295 = vmatpush1.msra.mxu0 %v127
  %296 = vmatprep.subr.mxu0 %v130
  %297 = vmatpush1.msra.mxu0 %v129
  %298 = vmatprep.subr.mxu0 %v132
  %299 = vmatpush1.msra.mxu0 %v131
  %300 = vmatprep.subr.mxu0 %v134
  %301 = vmatpush1.msra.mxu0 %v133
  %302 = vmatprep.subr.mxu0 %v136
  %303 = vmatpush1.msra.mxu0 %v135
  %304 = vmatprep.subr.mxu0 %v138
  %305 = vmatpush1.msra.mxu0 %v137
  %306 = vmatprep.subr.mxu0 %v140
  %307 = vmatpush1.msra.mxu0 %v139
  %308 = vmatprep.subr.mxu0 %v142
  %309 = vmatpush1.msra.mxu0 %v141
  %310 = vmatprep.subr.mxu0 %v144
  %311 = vmatpush1.msra.mxu0 %v143
  %312 = vmatprep.subr.mxu0 %v146
  %313 = vmatpush1.msra.mxu0 %v145
  %314 = vmatprep.subr.mxu0 %v148
  %315 = vmatpush1.msra.mxu0 %v147
  %316 = vmatprep.subr.mxu0 %v150
  %317 = vmatpush1.msra.mxu0 %v149
  %318 = vmatprep.subr.mxu0 %v152
  %319 = vmatpush1.msra.mxu0 %v151
  %320 = vmatprep.subr.mxu0 %v154
  %321 = vmatpush1.msra.mxu0 %v153
  %322 = vmatprep.subr.mxu0 %v156
  %323 = vmatpush1.msra.mxu0 %v155
  %324 = vmatprep.subr.mxu0 %v158
  %325 = vmatpush1.msra.mxu0 %v157
  %326 = vmatprep.subr.mxu0 %v160
  %327 = vmatpush1.msra.mxu0 %v159
  %328 = vmatprep.subr.mxu0 %v162
  %329 = vmatpush1.msra.mxu0 %v161
  %330 = vmatprep.subr.mxu0 %v164
  %331 = vmatpush1.msra.mxu0 %v163
  %332 = vmatprep.mubr.f32.mxu0 %v35
  %333 = vmatmul.mubr.f32.gmra.mrb[0].mxu0 %v34
  %v334 = vpop.f32.mrb[0].mxu0
  %v335 = vadd.f32 %v264, %v334
  %v336 = vpop.f32.mrb[0].mxu0
  %v337 = vadd.f32 %v266, %v336
  %338 = vdwg.mxu0
  %339 = vmatprep.subr.mxu0 %v166
  %340 = vmatpush1.msra.mxu0 %v165
  %341 = vmatprep.subr.mxu0 %v168
  %342 = vmatpush1.msra.mxu0 %v167
  %343 = vmatprep.subr.mxu0 %v170
  %344 = vmatpush1.msra.mxu0 %v169
  %345 = vmatprep.subr.mxu0 %v172
  %346 = vmatpush1.msra.mxu0 %v171
  %347 = vmatprep.subr.mxu0 %v174
  %348 = vmatpush1.msra.mxu0 %v173
  %349 = vmatprep.subr.mxu0 %v176
  %350 = vmatpush1.msra.mxu0 %v175
  %351 = vmatprep.subr.mxu0 %v178
  %352 = vmatpush1.msra.mxu0 %v177
  %353 = vmatprep.subr.mxu0 %v180
  %354 = vmatpush1.msra.mxu0 %v179
  %355 = vmatprep.subr.mxu0 %v182
  %356 = vmatpush1.msra.mxu0 %v181
  %357 = vmatprep.subr.mxu0 %v184
  %358 = vmatpush1.msra.mxu0 %v183
  %359 = vmatprep.subr.mxu0 %v186
  %360 = vmatpush1.msra.mxu0 %v185
  %361 = vmatprep.subr.mxu0 %v188
  %362 = vmatpush1.msra.mxu0 %v187
  %363 = vmatprep.subr.mxu0 %v190
  %364 = vmatpush1.msra.mxu0 %v189
  %365 = vmatprep.subr.mxu0 %v192
  %366 = vmatpush1.msra.mxu0 %v191
  %367 = vmatprep.subr.mxu0 %v194
  %368 = vmatpush1.msra.mxu0 %v193
  %369 = vmatprep.subr.mxu0 %v196
  %370 = vmatpush1.msra.mxu0 %v195
  %371 = vmatprep.subr.mxu0 0.0
  %372 = vmatpush1.msra.mxu0 0.0
  %373 = vmatprep.subr.mxu0 0.0
  %374 = vmatpush1.msra.mxu0 0.0
  %375 = vmatprep.subr.mxu0 0.0
  %376 = vmatpush1.msra.mxu0 0.0
  %377 = vmatprep.subr.mxu0 0.0
  %378 = vmatpush1.msra.mxu0 0.0
  %379 = vmatprep.subr.mxu0 0.0
  %380 = vmatpush1.msra.mxu0 0.0
  %381 = vmatprep.subr.mxu0 0.0
  %382 = vmatpush1.msra.mxu0 0.0
  %383 = vmatprep.subr.mxu0 0.0
  %384 = vmatpush1.msra.mxu0 0.0
  %385 = vmatprep.subr.mxu0 0.0
  %386 = vmatpush1.msra.mxu0 0.0
  %387 = vmatprep.subr.mxu0 0.0
  %388 = vmatpush1.msra.mxu0 0.0
  %389 = vmatprep.subr.mxu0 0.0
  %390 = vmatpush1.msra.mxu0 0.0
  %391 = vmatprep.subr.mxu0 0.0
  %392 = vmatpush1.msra.mxu0 0.0
  %393 = vmatprep.subr.mxu0 0.0
  %394 = vmatpush1.msra.mxu0 0.0
  %395 = vmatprep.subr.mxu0 0.0
  %396 = vmatpush1.msra.mxu0 0.0
  %397 = vmatprep.subr.mxu0 0.0
  %398 = vmatpush1.msra.mxu0 0.0
  %399 = vmatprep.subr.mxu0 0.0
  %400 = vmatpush1.msra.mxu0 0.0
  %401 = vmatprep.subr.mxu0 0.0
  %402 = vmatpush1.msra.mxu0 0.0
  %403 = vmatprep.mubr.f32.mxu0 0.0
  %404 = vmatmul.mubr.f32.gmra.mrb[0].mxu0 %v36
  %v405 = vpop.f32.mrb[0].mxu0
  %v406 = vadd.f32 %v335, %v405
  %v407 = vpop.f32.mrb[0].mxu0
  %v408 = vadd.f32 %v337, %v407
  %409 = vdwg.mxu0
  %v410 = vld [vmem:[%s0 + $0x8] sm:$0xff]
  %v411 = vld [vmem:[%s0 + $0x10] sm:$0xff]
  %v412 = vld [vmem:[%s0 + $0x18] sm:$0xff]
  %v413 = vld [vmem:[%s0 + $0x20] sm:$0xff]
  %v414 = vld [vmem:[%s0 + $0x28] sm:$0xff]
  %415 = vmatprep.subr.mxu0 %v38
  %416 = vmatpush1.msra.mxu0 %v37
  %417 = vmatprep.subr.mxu0 %v40
  %418 = vmatpush1.msra.mxu0 %v39
  %419 = vmatprep.subr.mxu0 %v42
  %420 = vmatpush1.msra.mxu0 %v41
  %421 = vmatprep.subr.mxu0 %v44
  %422 = vmatpush1.msra.mxu0 %v43
  %423 = vmatprep.subr.mxu0 %v46
  %424 = vmatpush1.msra.mxu0 %v45
  %425 = vmatprep.subr.mxu0 %v48
  %426 = vmatpush1.msra.mxu0 %v47
  %427 = vmatprep.subr.mxu0 %v50
  %428 = vmatpush1.msra.mxu0 %v49
  %429 = vmatprep.subr.mxu0 %v52
  %430 = vmatpush1.msra.mxu0 %v51
  %431 = vmatprep.subr.mxu0 %v54
  %432 = vmatpush1.msra.mxu0 %v53
  %433 = vmatprep.subr.mxu0 %v56
  %434 = vmatpush1.msra.mxu0 %v55
  %435 = vmatprep.subr.mxu0 %v58
  %436 = vmatpush1.msra.mxu0 %v57
  %437 = vmatprep.subr.mxu0 %v60
  %438 = vmatpush1.msra.mxu0 %v59
  %439 = vmatprep.subr.mxu0 %v62
  %440 = vmatpush1.msra.mxu0 %v61
  %441 = vmatprep.subr.mxu0 %v64
  %442 = vmatpush1.msra.mxu0 %v63
  %443 = vmatprep.subr.mxu0 %v66
  %444 = vmatpush1.msra.mxu0 %v65
  %445 = vmatprep.subr.mxu0 %v68
  %446 = vmatpush1.msra.mxu0 %v67
  %447 = vmatprep.subr.mxu0 %v70
  %448 = vmatpush1.msra.mxu0 %v69
  %449 = vmatprep.subr.mxu0 %v72
  %450 = vmatpush1.msra.mxu0 %v71
  %451 = vmatprep.subr.mxu0 %v74
  %452 = vmatpush1.msra.mxu0 %v73
  %453 = vmatprep.subr.mxu0 %v76
  %454 = vmatpush1.msra.mxu0 %v75
  %455 = vmatprep.subr.mxu0 %v78
  %456 = vmatpush1.msra.mxu0 %v77
  %457 = vmatprep.subr.mxu0 %v80
  %458 = vmatpush1.msra.mxu0 %v79
  %459 = vmatprep.subr.mxu0 %v82
  %460 = vmatpush1.msra.mxu0 %v81
  %461 = vmatprep.subr.mxu0 %v84
  %462 = vmatpush1.msra.mxu0 %v83
  %463 = vmatprep.subr.mxu0 %v86
  %464 = vmatpush1.msra.mxu0 %v85
  %465 = vmatprep.subr.mxu0 %v88
  %466 = vmatpush1.msra.mxu0 %v87
  %467 = vmatprep.subr.mxu0 %v90
  %468 = vmatpush1.msra.mxu0 %v89
  %469 = vmatprep.subr.mxu0 %v92
  %470 = vmatpush1.msra.mxu0 %v91
  %471 = vmatprep.subr.mxu0 %v94
  %472 = vmatpush1.msra.mxu0 %v93
  %473 = vmatprep.subr.mxu0 %v96
  %474 = vmatpush1.msra.mxu0 %v95
  %475 = vmatprep.subr.mxu0 %v98
  %476 = vmatpush1.msra.mxu0 %v97
  %477 = vmatprep.subr.mxu0 %v100
  %478 = vmatpush1.msra.mxu0 %v99
  %479 = vmatprep.mubr.f32.mxu0 %v411
  %480 = vmatmul.mubr.f32.gmra.mrb[0].mxu0 %v410
  %v481 = vpop.f32.mrb[0].mxu0
  %v482 = vadd.f32 0.0, %v481
  %v483 = vpop.f32.mrb[0].mxu0
  %v484 = vadd.f32 0.0, %v483
  %485 = vdwg.mxu0
  %486 = vmatprep.subr.mxu0 %v102
  %487 = vmatpush1.msra.mxu0 %v101
  %488 = vmatprep.subr.mxu0 %v104
  %489 = vmatpush1.msra.mxu0 %v103
  %490 = vmatprep.subr.mxu0 %v106
  %491 = vmatpush1.msra.mxu0 %v105
  %492 = vmatprep.subr.mxu0 %v108
  %493 = vmatpush1.msra.mxu0 %v107
  %494 = vmatprep.subr.mxu0 %v110
  %495 = vmatpush1.msra.mxu0 %v109
  %496 = vmatprep.subr.mxu0 %v112
  %497 = vmatpush1.msra.mxu0 %v111
  %498 = vmatprep.subr.mxu0 %v114
  %499 = vmatpush1.msra.mxu0 %v113
  %500 = vmatprep.subr.mxu0 %v116
  %501 = vmatpush1.msra.mxu0 %v115
  %502 = vmatprep.subr.mxu0 %v118
  %503 = vmatpush1.msra.mxu0 %v117
  %504 = vmatprep.subr.mxu0 %v120
  %505 = vmatpush1.msra.mxu0 %v119
  %506 = vmatprep.subr.mxu0 %v122
  %507 = vmatpush1.msra.mxu0 %v121
  %508 = vmatprep.subr.mxu0 %v124
  %509 = vmatpush1.msra.mxu0 %v123
  %510 = vmatprep.subr.mxu0 %v126
  %511 = vmatpush1.msra.mxu0 %v125
  %512 = vmatprep.subr.mxu0 %v128
  %513 = vmatpush1.msra.mxu0 %v127
  %514 = vmatprep.subr.mxu0 %v130
  %515 = vmatpush1.msra.mxu0 %v129
  %516 = vmatprep.subr.mxu0 %v132
  %517 = vmatpush1.msra.mxu0 %v131
  %518 = vmatprep.subr.mxu0 %v134
  %519 = vmatpush1.msra.mxu0 %v133
  %520 = vmatprep.subr.mxu0 %v136
  %521 = vmatpush1.msra.mxu0 %v135
  %522 = vmatprep.subr.mxu0 %v138
  %523 = vmatpush1.msra.mxu0 %v137
  %524 = vmatprep.subr.mxu0 %v140
  %525 = vmatpush1.msra.mxu0 %v139
  %526 = vmatprep.subr.mxu0 %v142
  %527 = vmatpush1.msra.mxu0 %v141
  %528 = vmatprep.subr.mxu0 %v144
  %529 = vmatpush1.msra.mxu0 %v143
  %530 = vmatprep.subr.mxu0 %v146
  %531 = vmatpush1.msra.mxu0 %v145
  %532 = vmatprep.subr.mxu0 %v148
  %533 = vmatpush1.msra.mxu0 %v147
  %534 = vmatprep.subr.mxu0 %v150
  %535 = vmatpush1.msra.mxu0 %v149
  %536 = vmatprep.subr.mxu0 %v152
  %537 = vmatpush1.msra.mxu0 %v151
  %538 = vmatprep.subr.mxu0 %v154
  %539 = vmatpush1.msra.mxu0 %v153
  %540 = vmatprep.subr.mxu0 %v156
  %541 = vmatpush1.msra.mxu0 %v155
  %542 = vmatprep.subr.mxu0 %v158
  %543 = vmatpush1.msra.mxu0 %v157
  %544 = vmatprep.subr.mxu0 %v160
  %545 = vmatpush1.msra.mxu0 %v159
  %546 = vmatprep.subr.mxu0 %v162
  %547 = vmatpush1.msra.mxu0 %v161
  %548 = vmatprep.subr.mxu0 %v164
  %549 = vmatpush1.msra.mxu0 %v163
  %550 = vmatprep.mubr.f32.mxu0 %v413
  %551 = vmatmul.mubr.f32.gmra.mrb[0].mxu0 %v412
  %v552 = vpop.f32.mrb[0].mxu0
  %v553 = vadd.f32 %v482, %v552
  %v554 = vpop.f32.mrb[0].mxu0
  %v555 = vadd.f32 %v484, %v554
  %556 = vdwg.mxu0
  %557 = vmatprep.subr.mxu0 %v166
  %558 = vmatpush1.msra.mxu0 %v165
  %559 = vmatprep.subr.mxu0 %v168
  %560 = vmatpush1.msra.mxu0 %v167
  %561 = vmatprep.subr.mxu0 %v170
  %562 = vmatpush1.msra.mxu0 %v169
  %563 = vmatprep.subr.mxu0 %v172
  %564 = vmatpush1.msra.mxu0 %v171
  %565 = vmatprep.subr.mxu0 %v174
  %566 = vmatpush1.msra.mxu0 %v173
  %567 = vmatprep.subr.mxu0 %v176
  %568 = vmatpush1.msra.mxu0 %v175
  %569 = vmatprep.subr.mxu0 %v178
  %570 = vmatpush1.msra.mxu0 %v177
  %571 = vmatprep.subr.mxu0 %v180
  %572 = vmatpush1.msra.mxu0 %v179
  %573 = vmatprep.subr.mxu0 %v182
  %574 = vmatpush1.msra.mxu0 %v181
  %575 = vmatprep.subr.mxu0 %v184
  %576 = vmatpush1.msra.mxu0 %v183
  %577 = vmatprep.subr.mxu0 %v186
  %578 = vmatpush1.msra.mxu0 %v185
  %579 = vmatprep.subr.mxu0 %v188
  %580 = vmatpush1.msra.mxu0 %v187
  %581 = vmatprep.subr.mxu0 %v190
  %582 = vmatpush1.msra.mxu0 %v189
  %583 = vmatprep.subr.mxu0 %v192
  %584 = vmatpush1.msra.mxu0 %v191
  %585 = vmatprep.subr.mxu0 %v194
  %586 = vmatpush1.msra.mxu0 %v193
  %587 = vmatprep.subr.mxu0 %v196
  %588 = vmatpush1.msra.mxu0 %v195
  %589 = vmatprep.subr.mxu0 0.0
  %590 = vmatpush1.msra.mxu0 0.0
  %591 = vmatprep.subr.mxu0 0.0
  %592 = vmatpush1.msra.mxu0 0.0
  %593 = vmatprep.subr.mxu0 0.0
  %594 = vmatpush1.msra.mxu0 0.0
  %595 = vmatprep.subr.mxu0 0.0
  %596 = vmatpush1.msra.mxu0 0.0
  %597 = vmatprep.subr.mxu0 0.0
  %598 = vmatpush1.msra.mxu0 0.0
  %599 = vmatprep.subr.mxu0 0.0
  %600 = vmatpush1.msra.mxu0 0.0
  %601 = vmatprep.subr.mxu0 0.0
  %602 = vmatpush1.msra.mxu0 0.0
  %603 = vmatprep.subr.mxu0 0.0
  %604 = vmatpush1.msra.mxu0 0.0
  %605 = vmatprep.subr.mxu0 0.0
  %606 = vmatpush1.msra.mxu0 0.0
  %607 = vmatprep.subr.mxu0 0.0
  %608 = vmatpush1.msra.mxu0 0.0
  %609 = vmatprep.subr.mxu0 0.0
  %610 = vmatpush1.msra.mxu0 0.0
  %611 = vmatprep.subr.mxu0 0.0
  %612 = vmatpush1.msra.mxu0 0.0
  %613 = vmatprep.subr.mxu0 0.0
  %614 = vmatpush1.msra.mxu0 0.0
  %615 = vmatprep.subr.mxu0 0.0
  %616 = vmatpush1.msra.mxu0 0.0
  %617 = vmatprep.subr.mxu0 0.0
  %618 = vmatpush1.msra.mxu0 0.0
  %619 = vmatprep.subr.mxu0 0.0
  %620 = vmatpush1.msra.mxu0 0.0
  %621 = vmatprep.mubr.f32.mxu0 0.0
  %622 = vmatmul.mubr.f32.gmra.mrb[0].mxu0 %v414
  %v623 = vpop.f32.mrb[0].mxu0
  %v624 = vadd.f32 %v553, %v623
  %v625 = vpop.f32.mrb[0].mxu0
  %v626 = vadd.f32 %v555, %v625
  %627 = vdwg.mxu0
  %v628 = vmax.f32 %v406, %v624
  %v629 = vmax.f32 %v408, %v626
  %v630 = vmax.f32 %v628, %v629
  %v631 = vld [vmem:[%s2] sm:$0x1]
  %v633 = vlaneseq
  %v634 = vshrl.u32 %v633, 7
  %v635 = vsub.s32 0, %v634
  %v636 = vrot.slane %v631, %v635
  %v638 = vadd.f32 %v630, %v636
  %v639 = vmax.f32 %v638, 0.0
  %640 = vst [vmem:[#allocation2] sm:$0xff] %v639
  %v641 = vld [vmem:[%s0 + $0x10] sm:$0xff]
  %v642 = vld [vmem:[%s0 + $0x18] sm:$0xff]
  %v643 = vld [vmem:[%s0 + $0x20] sm:$0xff]
  %v644 = vld [vmem:[%s0 + $0x28] sm:$0xff]
  %v645 = vld [vmem:[%s0 + $0x30] sm:$0xff]
  %v646 = vld [vmem:[%s1] sm:$0xff]
  %v647 = vld [vmem:[%s1 + $0x8] sm:$0xff]
  %v648 = vld [vmem:[%s1 + $0x10] sm:$0xff]
  %v649 = vld [vmem:[%s1 + $0x18] sm:$0xff]
  %v650 = vld [vmem:[%s1 + $0x20] sm:$0xff]
  %v651 = vld [vmem:[%s1 + $0x28] sm:$0xff]
  %v652 = vld [vmem:[%s1 + $0x30] sm:$0xff]
  %v653 = vld [vmem:[%s1 + $0x38] sm:$0xff]
  %v654 = vld [vmem:[%s1 + $0x40] sm:$0xff]
  %v655 = vld [vmem:[%s1 + $0x48] sm:$0xff]
  %v656 = vld [vmem:[%s1 + $0x50] sm:$0xff]
  %v657 = vld [vmem:[%s1 + $0x58] sm:$0xff]
  %v658 = vld [vmem:[%s1 + $0x60] sm:$0xff]
  %v659 = vld [vmem:[%s1 + $0x68] sm:$0xff]
  %v660 = vld [vmem:[%s1 + $0x70] sm:$0xff]
  %v661 = vld [vmem:[%s1 + $0x78] sm:$0xff]
  %v662 = vld [vmem:[%s1 + $0x80] sm:$0xff]
  %v663 = vld [vmem:[%s1 + $0x88] sm:$0xff]
  %v664 = vld [vmem:[%s1 + $0x90] sm:$0xff]
  %v665 = vld [vmem:[%s1 + $0x98] sm:$0xff]
  %v666 = vld [vmem:[%s1 + $0xa0] sm:$0xff]
  %v667 = vld [vmem:[%s1 + $0xa8] sm:$0xff]
  %v668 = vld [vmem:[%s1 + $0xb0] sm:$0xff]
  %v669 = vld [vmem:[%s1 + $0xb8] sm:$0xff]
  %v670 = vld [vmem:[%s1 + $0xc0] sm:$0xff]
  %v671 = vld [vmem:[%s1 + $0xc8] sm:$0xff]
  %v672 = vld [vmem:[%s1 + $0xd0] sm:$0xff]
  %v673 = vld [vmem:[%s1 + $0xd8] sm:$0xff]
  %v674 = vld [vmem:[%s1 + $0xe0] sm:$0xff]
  %v675 = vld [vmem:[%s1 + $0xe8] sm:$0xff]
  %v676 = vld [vmem:[%s1 + $0xf0] sm:$0xff]
  %v677 = vld [vmem:[%s1 + $0xf8] sm:$0xff]
  %v678 = vld [vmem:[%s1 + $0x100] sm:$0xff]
  %v679 = vld [vmem:[%s1 + $0x108] sm:$0xff]
  %v680 = vld [vmem:[%s1 + $0x110] sm:$0xff]
  %v681 = vld [vmem:[%s1 + $0x118] sm:$0xff]
  %v682 = vld [vmem:[%s1 + $0x120] sm:$0xff]
  %v683 = vld [vmem:[%s1 + $0x128] sm:$0xff]
  %v684 = vld [vmem:[%s1 + $0x130] sm:$0xff]
  %v685 = vld [vmem:[%s1 + $0x138] sm:$0xff]
  %v686 = vld [vmem:[%s1 + $0x140] sm:$0xff]
  %v687 = vld [vmem:[%s1 + $0x148] sm:$0xff]
  %v688 = vld [vmem:[%s1 + $0x150] sm:$0xff]
  %v689 = vld [vmem:[%s1 + $0x158] sm:$0xff]
  %v690 = vld [vmem:[%s1 + $0x160] sm:$0xff]
  %v691 = vld [vmem:[%s1 + $0x168] sm:$0xff]
  %v692 = vld [vmem:[%s1 + $0x170] sm:$0xff]
  %v693 = vld [vmem:[%s1 + $0x178] sm:$0xff]
  %v694 = vld [vmem:[%s1 + $0x180] sm:$0xff]
  %v695 = vld [vmem:[%s1 + $0x188] sm:$0xff]
  %v696 = vld [vmem:[%s1 + $0x190] sm:$0xff]
  %v697 = vld [vmem:[%s1 + $0x198] sm:$0xff]
  %v698 = vld [vmem:[%s1 + $0x1a0] sm:$0xff]
  %v699 = vld [vmem:[%s1 + $0x1a8] sm:$0xff]
  %v700 = vld [vmem:[%s1 + $0x1b0] sm:$0xff]
  %v701 = vld [vmem:[%s1 + $0x1b8] sm:$0xff]
  %v702 = vld [vmem:[%s1 + $0x1c0] sm:$0xff]
  %v703 = vld [vmem:[%s1 + $0x1c8] sm:$0xff]
  %v704 = vld [vmem:[%s1 + $0x1d0] sm:$0xff]
  %v705 = vld [vmem:[%s1 + $0x1d8] sm:$0xff]
  %v706 = vld [vmem:[%s1 + $0x1e0] sm:$0xff]
  %v707 = vld [vmem:[%s1 + $0x1e8] sm:$0xff]
  %v708 = vld [vmem:[%s1 + $0x1f0] sm:$0xff]
  %v709 = vld [vmem:[%s1 + $0x1f8] sm:$0xff]
  %v710 = vld [vmem:[%s1 + $0x200] sm:$0xff]
  %v711 = vld [vmem:[%s1 + $0x208] sm:$0xff]
  %v712 = vld [vmem:[%s1 + $0x210] sm:$0xff]
  %v713 = vld [vmem:[%s1 + $0x218] sm:$0xff]
  %v714 = vld [vmem:[%s1 + $0x220] sm:$0xff]
  %v715 = vld [vmem:[%s1 + $0x228] sm:$0xff]
  %v716 = vld [vmem:[%s1 + $0x230] sm:$0xff]
  %v717 = vld [vmem:[%s1 + $0x238] sm:$0xff]
  %v718 = vld [vmem:[%s1 + $0x240] sm:$0xff]
  %v719 = vld [vmem:[%s1 + $0x248] sm:$0xff]
  %v720 = vld [vmem:[%s1 + $0x250] sm:$0xff]
  %v721 = vld [vmem:[%s1 + $0x258] sm:$0xff]
  %v722 = vld [vmem:[%s1 + $0x260] sm:$0xff]
  %v723 = vld [vmem:[%s1 + $0x268] sm:$0xff]
  %v724 = vld [vmem:[%s1 + $0x270] sm:$0xff]
  %v725 = vld [vmem:[%s1 + $0x278] sm:$0xff]
  %v726 = vld [vmem:[%s1 + $0x280] sm:$0xff]
  %v727 = vld [vmem:[%s1 + $0x288] sm:$0xff]
  %v728 = vld [vmem:[%s1 + $0x290] sm:$0xff]
  %v729 = vld [vmem:[%s1 + $0x298] sm:$0xff]
  %v730 = vld [vmem:[%s1 + $0x2a0] sm:$0xff]
  %v731 = vld [vmem:[%s1 + $0x2a8] sm:$0xff]
  %v732 = vld [vmem:[%s1 + $0x2b0] sm:$0xff]
  %v733 = vld [vmem:[%s1 + $0x2b8] sm:$0xff]
  %v734 = vld [vmem:[%s1 + $0x2c0] sm:$0xff]
  %v735 = vld [vmem:[%s1 + $0x2c8] sm:$0xff]
  %v736 = vld [vmem:[%s1 + $0x2d0] sm:$0xff]
  %v737 = vld [vmem:[%s1 + $0x2d8] sm:$0xff]
  %v738 = vld [vmem:[%s1 + $0x2e0] sm:$0xff]
  %v739 = vld [vmem:[%s1 + $0x2e8] sm:$0xff]
  %v740 = vld [vmem:[%s1 + $0x2f0] sm:$0xff]
  %v741 = vld [vmem:[%s1 + $0x2f8] sm:$0xff]
  %v742 = vld [vmem:[%s1 + $0x300] sm:$0xff]
  %v743 = vld [vmem:[%s1 + $0x308] sm:$0xff]
  %v744 = vld [vmem:[%s1 + $0x310] sm:$0xff]
  %v745 = vld [vmem:[%s1 + $0x318] sm:$0xff]
  %v746 = vld [vmem:[%s1 + $0x320] sm:$0xff]
  %v747 = vld [vmem:[%s1 + $0x328] sm:$0xff]
  %v748 = vld [vmem:[%s1 + $0x330] sm:$0xff]
  %v749 = vld [vmem:[%s1 + $0x338] sm:$0xff]
  %v750 = vld [vmem:[%s1 + $0x340] sm:$0xff]
  %v751 = vld [vmem:[%s1 + $0x348] sm:$0xff]
  %v752 = vld [vmem:[%s1 + $0x350] sm:$0xff]
  %v753 = vld [vmem:[%s1 + $0x358] sm:$0xff]
  %v754 = vld [vmem:[%s1 + $0x360] sm:$0xff]
  %v755 = vld [vmem:[%s1 + $0x368] sm:$0xff]
  %v756 = vld [vmem:[%s1 + $0x370] sm:$0xff]
  %v757 = vld [vmem:[%s1 + $0x378] sm:$0xff]
  %v758 = vld [vmem:[%s1 + $0x380] sm:$0xff]
  %v759 = vld [vmem:[%s1 + $0x388] sm:$0xff]
  %v760 = vld [vmem:[%s1 + $0x390] sm:$0xff]
  %v761 = vld [vmem:[%s1 + $0x398] sm:$0xff]
  %v762 = vld [vmem:[%s1 + $0x3a0] sm:$0xff]
  %v763 = vld [vmem:[%s1 + $0x3a8] sm:$0xff]
  %v764 = vld [vmem:[%s1 + $0x3b0] sm:$0xff]
  %v765 = vld [vmem:[%s1 + $0x3b8] sm:$0xff]
  %v766 = vld [vmem:[%s1 + $0x3c0] sm:$0xff]
  %v767 = vld [vmem:[%s1 + $0x3c8] sm:$0xff]
  %v768 = vld [vmem:[%s1 + $0x3d0] sm:$0xff]
  %v769 = vld [vmem:[%s1 + $0x3d8] sm:$0xff]
  %v770 = vld [vmem:[%s1 + $0x3e0] sm:$0xff]
  %v771 = vld [vmem:[%s1 + $0x3e8] sm:$0xff]
  %v772 = vld [vmem:[%s1 + $0x3f0] sm:$0xff]
  %v773 = vld [vmem:[%s1 + $0x3f8] sm:$0xff]
  %v774 = vld [vmem:[%s1 + $0x400] sm:$0xff]
  %v775 = vld [vmem:[%s1 + $0x408] sm:$0xff]
  %v776 = vld [vmem:[%s1 + $0x410] sm:$0xff]
  %v777 = vld [vmem:[%s1 + $0x418] sm:$0xff]
  %v778 = vld [vmem:[%s1 + $0x420] sm:$0xff]
  %v779 = vld [vmem:[%s1 + $0x428] sm:$0xff]
  %v780 = vld [vmem:[%s1 + $0x430] sm:$0xff]
  %v781 = vld [vmem:[%s1 + $0x438] sm:$0xff]
  %v782 = vld [vmem:[%s1 + $0x440] sm:$0xff]
  %v783 = vld [vmem:[%s1 + $0x448] sm:$0xff]
  %v784 = vld [vmem:[%s1 + $0x450] sm:$0xff]
  %v785 = vld [vmem:[%s1 + $0x458] sm:$0xff]
  %v786 = vld [vmem:[%s1 + $0x460] sm:$0xff]
  %v787 = vld [vmem:[%s1 + $0x468] sm:$0xff]
  %v788 = vld [vmem:[%s1 + $0x470] sm:$0xff]
  %v789 = vld [vmem:[%s1 + $0x478] sm:$0xff]
  %v790 = vld [vmem:[%s1 + $0x480] sm:$0xff]
  %v791 = vld [vmem:[%s1 + $0x488] sm:$0xff]
  %v792 = vld [vmem:[%s1 + $0x490] sm:$0xff]
  %v793 = vld [vmem:[%s1 + $0x498] sm:$0xff]
  %v794 = vld [vmem:[%s1 + $0x4a0] sm:$0xff]
  %v795 = vld [vmem:[%s1 + $0x4a8] sm:$0xff]
  %v796 = vld [vmem:[%s1 + $0x4b0] sm:$0xff]
  %v797 = vld [vmem:[%s1 + $0x4b8] sm:$0xff]
  %v798 = vld [vmem:[%s1 + $0x4c0] sm:$0xff]
  %v799 = vld [vmem:[%s1 + $0x4c8] sm:$0xff]
  %v800 = vld [vmem:[%s1 + $0x4d0] sm:$0xff]
  %v801 = vld [vmem:[%s1 + $0x4d8] sm:$0xff]
  %v802 = vld [vmem:[%s1 + $0x4e0] sm:$0xff]
  %v803 = vld [vmem:[%s1 + $0x4e8] sm:$0xff]
  %v804 = vld [vmem:[%s1 + $0x4f0] sm:$0xff]
  %v805 = vld [vmem:[%s1 + $0x4f8] sm:$0xff]
  %806 = vmatprep.subr.mxu0 %v647
  %807 = vmatpush1.msra.mxu0 %v646
  %808 = vmatprep.subr.mxu0 %v649
  %809 = vmatpush1.msra.mxu0 %v648
  %810 = vmatprep.subr.mxu0 %v651
  %811 = vmatpush1.msra.mxu0 %v650
  %812 = vmatprep.subr.mxu0 %v653
  %813 = vmatpush1.msra.mxu0 %v652
  %814 = vmatprep.subr.mxu0 %v655
  %815 = vmatpush1.msra.mxu0 %v654
  %816 = vmatprep.subr.mxu0 %v657
  %817 = vmatpush1.msra.mxu0 %v656
  %818 = vmatprep.subr.mxu0 %v659
  %819 = vmatpush1.msra.mxu0 %v658
  %820 = vmatprep.subr.mxu0 %v661
  %821 = vmatpush1.msra.mxu0 %v660
  %822 = vmatprep.subr.mxu0 %v663
  %823 = vmatpush1.msra.mxu0 %v662
  %824 = vmatprep.subr.mxu0 %v665
  %825 = vmatpush1.msra.mxu0 %v664
  %826 = vmatprep.subr.mxu0 %v667
  %827 = vmatpush1.msra.mxu0 %v666
  %828 = vmatprep.subr.mxu0 %v669
  %829 = vmatpush1.msra.mxu0 %v668
  %830 = vmatprep.subr.mxu0 %v671
  %831 = vmatpush1.msra.mxu0 %v670
  %832 = vmatprep.subr.mxu0 %v673
  %833 = vmatpush1.msra.mxu0 %v672
  %834 = vmatprep.subr.mxu0 %v675
  %835 = vmatpush1.msra.mxu0 %v674
  %836 = vmatprep.subr.mxu0 %v677
  %837 = vmatpush1.msra.mxu0 %v676
  %838 = vmatprep.subr.mxu0 %v679
  %839 = vmatpush1.msra.mxu0 %v678
  %840 = vmatprep.subr.mxu0 %v681
  %841 = vmatpush1.msra.mxu0 %v680
  %842 = vmatprep.subr.mxu0 %v683
  %843 = vmatpush1.msra.mxu0 %v682
  %844 = vmatprep.subr.mxu0 %v685
  %845 = vmatpush1.msra.mxu0 %v684
  %846 = vmatprep.subr.mxu0 %v687
  %847 = vmatpush1.msra.mxu0 %v686
  %848 = vmatprep.subr.mxu0 %v689
  %849 = vmatpush1.msra.mxu0 %v688
  %850 = vmatprep.subr.mxu0 %v691
  %851 = vmatpush1.msra.mxu0 %v690
  %852 = vmatprep.subr.mxu0 %v693
  %853 = vmatpush1.msra.mxu0 %v692
  %854 = vmatprep.subr.mxu0 %v695
  %855 = vmatpush1.msra.mxu0 %v694
  %856 = vmatprep.subr.mxu0 %v697
  %857 = vmatpush1.msra.mxu0 %v696
  %858 = vmatprep.subr.mxu0 %v699
  %859 = vmatpush1.msra.mxu0 %v698
  %860 = vmatprep.subr.mxu0 %v701
  %861 = vmatpush1.msra.mxu0 %v700
  %862 = vmatprep.subr.mxu0 %v703
  %863 = vmatpush1.msra.mxu0 %v702
  %864 = vmatprep.subr.mxu0 %v705
  %865 = vmatpush1.msra.mxu0 %v704
  %866 = vmatprep.subr.mxu0 %v707
  %867 = vmatpush1.msra.mxu0 %v706
  %868 = vmatprep.subr.mxu0 %v709
  %869 = vmatpush1.msra.mxu0 %v708
  %870 = vmatprep.mubr.f32.mxu0 %v642
  %871 = vmatmul.mubr.f32.gmra.mrb[0].mxu0 %v641
  %v872 = vpop.f32.mrb[0].mxu0
  %v873 = vadd.f32 0.0, %v872
  %v874 = vpop.f32.mrb[0].mxu0
  %v875 = vadd.f32 0.0, %v874
  %876 = vdwg.mxu0
  %877 = vmatprep.subr.mxu0 %v711
  %878 = vmatpush1.msra.mxu0 %v710
  %879 = vmatprep.subr.mxu0 %v713
  %880 = vmatpush1.msra.mxu0 %v712
  %881 = vmatprep.subr.mxu0 %v715
  %882 = vmatpush1.msra.mxu0 %v714
  %883 = vmatprep.subr.mxu0 %v717
  %884 = vmatpush1.msra.mxu0 %v716
  %885 = vmatprep.subr.mxu0 %v719
  %886 = vmatpush1.msra.mxu0 %v718
  %887 = vmatprep.subr.mxu0 %v721
  %888 = vmatpush1.msra.mxu0 %v720
  %889 = vmatprep.subr.mxu0 %v723
  %890 = vmatpush1.msra.mxu0 %v722
  %891 = vmatprep.subr.mxu0 %v725
  %892 = vmatpush1.msra.mxu0 %v724
  %893 = vmatprep.subr.mxu0 %v727
  %894 = vmatpush1.msra.mxu0 %v726
  %895 = vmatprep.subr.mxu0 %v729
  %896 = vmatpush1.msra.mxu0 %v728
  %897 = vmatprep.subr.mxu0 %v731
  %898 = vmatpush1.msra.mxu0 %v730
  %899 = vmatprep.subr.mxu0 %v733
  %900 = vmatpush1.msra.mxu0 %v732
  %901 = vmatprep.subr.mxu0 %v735
  %902 = vmatpush1.msra.mxu0 %v734
  %903 = vmatprep.subr.mxu0 %v737
  %904 = vmatpush1.msra.mxu0 %v736
  %905 = vmatprep.subr.mxu0 %v739
  %906 = vmatpush1.msra.mxu0 %v738
  %907 = vmatprep.subr.mxu0 %v741
  %908 = vmatpush1.msra.mxu0 %v740
  %909 = vmatprep.subr.mxu0 %v743
  %910 = vmatpush1.msra.mxu0 %v742
  %911 = vmatprep.subr.mxu0 %v745
  %912 = vmatpush1.msra.mxu0 %v744
  %913 = vmatprep.subr.mxu0 %v747
  %914 = vmatpush1.msra.mxu0 %v746
  %915 = vmatprep.subr.mxu0 %v749
  %916 = vmatpush1.msra.mxu0 %v748
  %917 = vmatprep.subr.mxu0 %v751
  %918 = vmatpush1.msra.mxu0 %v750
  %919 = vmatprep.subr.mxu0 %v753
  %920 = vmatpush1.msra.mxu0 %v752
  %921 = vmatprep.subr.mxu0 %v755
  %922 = vmatpush1.msra.mxu0 %v754
  %923 = vmatprep.subr.mxu0 %v757
  %924 = vmatpush1.msra.mxu0 %v756
  %925 = vmatprep.subr.mxu0 %v759
  %926 = vmatpush1.msra.mxu0 %v758
  %927 = vmatprep.subr.mxu0 %v761
  %928 = vmatpush1.msra.mxu0 %v760
  %929 = vmatprep.subr.mxu0 %v763
  %930 = vmatpush1.msra.mxu0 %v762
  %931 = vmatprep.subr.mxu0 %v765
  %932 = vmatpush1.msra.mxu0 %v764
  %933 = vmatprep.subr.mxu0 %v767
  %934 = vmatpush1.msra.mxu0 %v766
  %935 = vmatprep.subr.mxu0 %v769
  %936 = vmatpush1.msra.mxu0 %v768
  %937 = vmatprep.subr.mxu0 %v771
  %938 = vmatpush1.msra.mxu0 %v770
  %939 = vmatprep.subr.mxu0 %v773
  %940 = vmatpush1.msra.mxu0 %v772
  %941 = vmatprep.mubr.f32.mxu0 %v644
  %942 = vmatmul.mubr.f32.gmra.mrb[0].mxu0 %v643
  %v943 = vpop.f32.mrb[0].mxu0
  %v944 = vadd.f32 %v873, %v943
  %v945 = vpop.f32.mrb[0].mxu0
  %v946 = vadd.f32 %v875, %v945
  %947 = vdwg.mxu0
  %948 = vmatprep.subr.mxu0 %v775
  %949 = vmatpush1.msra.mxu0 %v774
  %950 = vmatprep.subr.mxu0 %v777
  %951 = vmatpush1.msra.mxu0 %v776
  %952 = vmatprep.subr.mxu0 %v779
  %953 = vmatpush1.msra.mxu0 %v778
  %954 = vmatprep.subr.mxu0 %v781
  %955 = vmatpush1.msra.mxu0 %v780
  %956 = vmatprep.subr.mxu0 %v783
  %957 = vmatpush1.msra.mxu0 %v782
  %958 = vmatprep.subr.mxu0 %v785
  %959 = vmatpush1.msra.mxu0 %v784
  %960 = vmatprep.subr.mxu0 %v787
  %961 = vmatpush1.msra.mxu0 %v786
  %962 = vmatprep.subr.mxu0 %v789
  %963 = vmatpush1.msra.mxu0 %v788
  %964 = vmatprep.subr.mxu0 %v791
  %965 = vmatpush1.msra.mxu0 %v790
  %966 = vmatprep.subr.mxu0 %v793
  %967 = vmatpush1.msra.mxu0 %v792
  %968 = vmatprep.subr.mxu0 %v795
  %969 = vmatpush1.msra.mxu0 %v794
  %970 = vmatprep.subr.mxu0 %v797
  %971 = vmatpush1.msra.mxu0 %v796
  %972 = vmatprep.subr.mxu0 %v799
  %973 = vmatpush1.msra.mxu0 %v798
  %974 = vmatprep.subr.mxu0 %v801
  %975 = vmatpush1.msra.mxu0 %v800
  %976 = vmatprep.subr.mxu0 %v803
  %977 = vmatpush1.msra.mxu0 %v802
  %978 = vmatprep.subr.mxu0 %v805
  %979 = vmatpush1.msra.mxu0 %v804
  %980 = vmatprep.subr.mxu0 0.0
  %981 = vmatpush1.msra.mxu0 0.0
  %982 = vmatprep.subr.mxu0 0.0
  %983 = vmatpush1.msra.mxu0 0.0
  %984 = vmatprep.subr.mxu0 0.0
  %985 = vmatpush1.msra.mxu0 0.0
  %986 = vmatprep.subr.mxu0 0.0
  %987 = vmatpush1.msra.mxu0 0.0
  %988 = vmatprep.subr.mxu0 0.0
  %989 = vmatpush1.msra.mxu0 0.0
  %990 = vmatprep.subr.mxu0 0.0
  %991 = vmatpush1.msra.mxu0 0.0
  %992 = vmatprep.subr.mxu0 0.0
  %993 = vmatpush1.msra.mxu0 0.0
  %994 = vmatprep.subr.mxu0 0.0
  %995 = vmatpush1.msra.mxu0 0.0
  %996 = vmatprep.subr.mxu0 0.0
  %997 = vmatpush1.msra.mxu0 0.0
  %998 = vmatprep.subr.mxu0 0.0
  %999 = vmatpush1.msra.mxu0 0.0
  %1000 = vmatprep.subr.mxu0 0.0
  %1001 = vmatpush1.msra.mxu0 0.0
  %1002 = vmatprep.subr.mxu0 0.0
  %1003 = vmatpush1.msra.mxu0 0.0
  %1004 = vmatprep.subr.mxu0 0.0
  %1005 = vmatpush1.msra.mxu0 0.0
  %1006 = vmatprep.subr.mxu0 0.0
  %1007 = vmatpush1.msra.mxu0 0.0
  %1008 = vmatprep.subr.mxu0 0.0
  %1009 = vmatpush1.msra.mxu0 0.0
  %1010 = vmatprep.subr.mxu0 0.0
  %1011 = vmatpush1.msra.mxu0 0.0
  %1012 = vmatprep.mubr.f32.mxu0 0.0
  %1013 = vmatmul.mubr.f32.gmra.mrb[0].mxu0 %v645
  %v1014 = vpop.f32.mrb[0].mxu0
  %v1015 = vadd.f32 %v944, %v1014
  %v1016 = vpop.f32.mrb[0].mxu0
  %v1017 = vadd.f32 %v946, %v1016
  %1018 = vdwg.mxu0
  %v1019 = vld [vmem:[%s0 + $0x18] sm:$0xff]
  %v1020 = vld [vmem:[%s0 + $0x20] sm:$0xff]
  %v1021 = vld [vmem:[%s0 + $0x28] sm:$0xff]
  %v1022 = vld [vmem:[%s0 + $0x30] sm:$0xff]
  %v1023 = vld [vmem:[%s0 + $0x38] sm:$0xff]
  %1024 = vmatprep.subr.mxu0 %v647
  %1025 = vmatpush1.msra.mxu0 %v646
  %1026 = vmatprep.subr.mxu0 %v649
  %1027 = vmatpush1.msra.mxu0 %v648
  %1028 = vmatprep.subr.mxu0 %v651
  %1029 = vmatpush1.msra.mxu0 %v650
  %1030 = vmatprep.subr.mxu0 %v653
  %1031 = vmatpush1.msra.mxu0 %v652
  %1032 = vmatprep.subr.mxu0 %v655
  %1033 = vmatpush1.msra.mxu0 %v654
  %1034 = vmatprep.subr.mxu0 %v657
  %1035 = vmatpush1.msra.mxu0 %v656
  %1036 = vmatprep.subr.mxu0 %v659
  %1037 = vmatpush1.msra.mxu0 %v658
  %1038 = vmatprep.subr.mxu0 %v661
  %1039 = vmatpush1.msra.mxu0 %v660
  %1040 = vmatprep.subr.mxu0 %v663
  %1041 = vmatpush1.msra.mxu0 %v662
  %1042 = vmatprep.subr.mxu0 %v665
  %1043 = vmatpush1.msra.mxu0 %v664
  %1044 = vmatprep.subr.mxu0 %v667
  %1045 = vmatpush1.msra.mxu0 %v666
  %1046 = vmatprep.subr.mxu0 %v669
  %1047 = vmatpush1.msra.mxu0 %v668
  %1048 = vmatprep.subr.mxu0 %v671
  %1049 = vmatpush1.msra.mxu0 %v670
  %1050 = vmatprep.subr.mxu0 %v673
  %1051 = vmatpush1.msra.mxu0 %v672
  %1052 = vmatprep.subr.mxu0 %v675
  %1053 = vmatpush1.msra.mxu0 %v674
  %1054 = vmatprep.subr.mxu0 %v677
  %1055 = vmatpush1.msra.mxu0 %v676
  %1056 = vmatprep.subr.mxu0 %v679
  %1057 = vmatpush1.msra.mxu0 %v678
  %1058 = vmatprep.subr.mxu0 %v681
  %1059 = vmatpush1.msra.mxu0 %v680
  %1060 = vmatprep.subr.mxu0 %v683
  %1061 = vmatpush1.msra.mxu0 %v682
  %1062 = vmatprep.subr.mxu0 %v685
  %1063 = vmatpush1.msra.mxu0 %v684
  %1064 = vmatprep.subr.mxu0 %v687
  %1065 = vmatpush1.msra.mxu0 %v686
  %1066 = vmatprep.subr.mxu0 %v689
  %1067 = vmatpush1.msra.mxu0 %v688
  %1068 = vmatprep.subr.mxu0 %v691
  %1069 = vmatpush1.msra.mxu0 %v690
  %1070 = vmatprep.subr.mxu0 %v693
  %1071 = vmatpush1.msra.mxu0 %v692
  %1072 = vmatprep.subr.mxu0 %v695
  %1073 = vmatpush1.msra.mxu0 %v694
  %1074 = vmatprep.subr.mxu0 %v697
  %1075 = vmatpush1.msra.mxu0 %v696
  %1076 = vmatprep.subr.mxu0 %v699
  %1077 = vmatpush1.msra.mxu0 %v698
  %1078 = vmatprep.subr.mxu0 %v701
  %1079 = vmatpush1.msra.mxu0 %v700
  %1080 = vmatprep.subr.mxu0 %v703
  %1081 = vmatpush1.msra.mxu0 %v702
  %1082 = vmatprep.subr.mxu0 %v705
  %1083 = vmatpush1.msra.mxu0 %v704
  %1084 = vmatprep.subr.mxu0 %v707
  %1085 = vmatpush1.msra.mxu0 %v706
  %1086 = vmatprep.subr.mxu0 %v709
  %1087 = vmatpush1.msra.mxu0 %v708
  %1088 = vmatprep.mubr.f32.mxu0 %v1020
  %1089 = vmatmul.mubr.f32.gmra.mrb[0].mxu0 %v1019
  %v1090 = vpop.f32.mrb[0].mxu0
  %v1091 = vadd.f32 0.0, %v1090
  %v1092 = vpop.f32.mrb[0].mxu0
  %v1093 = vadd.f32 0.0, %v1092
  %1094 = vdwg.mxu0
  %1095 = vmatprep.subr.mxu0 %v711
  %1096 = vmatpush1.msra.mxu0 %v710
  %1097 = vmatprep.subr.mxu0 %v713
  %1098 = vmatpush1.msra.mxu0 %v712
  %1099 = vmatprep.subr.mxu0 %v715
  %1100 = vmatpush1.msra.mxu0 %v714
  %1101 = vmatprep.subr.mxu0 %v717
  %1102 = vmatpush1.msra.mxu0 %v716
  %1103 = vmatprep.subr.mxu0 %v719
  %1104 = vmatpush1.msra.mxu0 %v718
  %1105 = vmatprep.subr.mxu0 %v721
  %1106 = vmatpush1.msra.mxu0 %v720
  %1107 = vmatprep.subr.mxu0 %v723
  %1108 = vmatpush1.msra.mxu0 %v722
  %1109 = vmatprep.subr.mxu0 %v725
  %1110 = vmatpush1.msra.mxu0 %v724
  %1111 = vmatprep.subr.mxu0 %v727
  %1112 = vmatpush1.msra.mxu0 %v726
  %1113 = vmatprep.subr.mxu0 %v729
  %1114 = vmatpush1.msra.mxu0 %v728
  %1115 = vmatprep.subr.mxu0 %v731
  %1116 = vmatpush1.msra.mxu0 %v730
  %1117 = vmatprep.subr.mxu0 %v733
  %1118 = vmatpush1.msra.mxu0 %v732
  %1119 = vmatprep.subr.mxu0 %v735
  %1120 = vmatpush1.msra.mxu0 %v734
  %1121 = vmatprep.subr.mxu0 %v737
  %1122 = vmatpush1.msra.mxu0 %v736
  %1123 = vmatprep.subr.mxu0 %v739
  %1124 = vmatpush1.msra.mxu0 %v738
  %1125 = vmatprep.subr.mxu0 %v741
  %1126 = vmatpush1.msra.mxu0 %v740
  %1127 = vmatprep.subr.mxu0 %v743
  %1128 = vmatpush1.msra.mxu0 %v742
  %1129 = vmatprep.subr.mxu0 %v745
  %1130 = vmatpush1.msra.mxu0 %v744
  %1131 = vmatprep.subr.mxu0 %v747
  %1132 = vmatpush1.msra.mxu0 %v746
  %1133 = vmatprep.subr.mxu0 %v749
  %1134 = vmatpush1.msra.mxu0 %v748
  %1135 = vmatprep.subr.mxu0 %v751
  %1136 = vmatpush1.msra.mxu0 %v750
  %1137 = vmatprep.subr.mxu0 %v753
  %1138 = vmatpush1.msra.mxu0 %v752
  %1139 = vmatprep.subr.mxu0 %v755
  %1140 = vmatpush1.msra.mxu0 %v754
  %1141 = vmatprep.subr.mxu0 %v757
  %1142 = vmatpush1.msra.mxu0 %v756
  %1143 = vmatprep.subr.mxu0 %v759
  %1144 = vmatpush1.msra.mxu0 %v758
  %1145 = vmatprep.subr.mxu0 %v761
  %1146 = vmatpush1.msra.mxu0 %v760
  %1147 = vmatprep.subr.mxu0 %v763
  %1148 = vmatpush1.msra.mxu0 %v762
  %1149 = vmatprep.subr.mxu0 %v765
  %1150 = vmatpush1.msra.mxu0 %v764
  %1151 = vmatprep.subr.mxu0 %v767
  %1152 = vmatpush1.msra.mxu0 %v766
  %1153 = vmatprep.subr.mxu0 %v769
  %1154 = vmatpush1.msra.mxu0 %v768
  %1155 = vmatprep.subr.mxu0 %v771
  %1156 = vmatpush1.msra.mxu0 %v770
  %1157 = vmatprep.subr.mxu0 %v773
  %1158 = vmatpush1.msra.mxu0 %v772
  %1159 = vmatprep.mubr.f32.mxu0 %v1022
  %1160 = vmatmul.mubr.f32.gmra.mrb[0].mxu0 %v1021
  %v1161 = vpop.f32.mrb[0].mxu0
  %v1162 = vadd.f32 %v1091, %v1161
  %v1163 = vpop.f32.mrb[0].mxu0
  %v1164 = vadd.f32 %v1093, %v1163
  %1165 = vdwg.mxu0
  %1166 = vmatprep.subr.mxu0 %v775
  %1167 = vmatpush1.msra.mxu0 %v774
  %1168 = vmatprep.subr.mxu0 %v777
  %1169 = vmatpush1.msra.mxu0 %v776
  %1170 = vmatprep.subr.mxu0 %v779
  %1171 = vmatpush1.msra.mxu0 %v778
  %1172 = vmatprep.subr.mxu0 %v781
  %1173 = vmatpush1.msra.mxu0 %v780
  %1174 = vmatprep.subr.mxu0 %v783
  %1175 = vmatpush1.msra.mxu0 %v782
  %1176 = vmatprep.subr.mxu0 %v785
  %1177 = vmatpush1.msra.mxu0 %v784
  %1178 = vmatprep.subr.mxu0 %v787
  %1179 = vmatpush1.msra.mxu0 %v786
  %1180 = vmatprep.subr.mxu0 %v789
  %1181 = vmatpush1.msra.mxu0 %v788
  %1182 = vmatprep.subr.mxu0 %v791
  %1183 = vmatpush1.msra.mxu0 %v790
  %1184 = vmatprep.subr.mxu0 %v793
  %1185 = vmatpush1.msra.mxu0 %v792
  %1186 = vmatprep.subr.mxu0 %v795
  %1187 = vmatpush1.msra.mxu0 %v794
  %1188 = vmatprep.subr.mxu0 %v797
  %1189 = vmatpush1.msra.mxu0 %v796
  %1190 = vmatprep.subr.mxu0 %v799
  %1191 = vmatpush1.msra.mxu0 %v798
  %1192 = vmatprep.subr.mxu0 %v801
  %1193 = vmatpush1.msra.mxu0 %v800
  %1194 = vmatprep.subr.mxu0 %v803
  %1195 = vmatpush1.msra.mxu0 %v802
  %1196 = vmatprep.subr.mxu0 %v805
  %1197 = vmatpush1.msra.mxu0 %v804
  %1198 = vmatprep.subr.mxu0 0.0
  %1199 = vmatpush1.msra.mxu0 0.0
  %1200 = vmatprep.subr.mxu0 0.0
  %1201 = vmatpush1.msra.mxu0 0.0
  %1202 = vmatprep.subr.mxu0 0.0
  %1203 = vmatpush1.msra.mxu0 0.0
  %1204 = vmatprep.subr.mxu0 0.0
  %1205 = vmatpush1.msra.mxu0 0.0
  %1206 = vmatprep.subr.mxu0 0.0
  %1207 = vmatpush1.msra.mxu0 0.0
  %1208 = vmatprep.subr.mxu0 0.0
  %1209 = vmatpush1.msra.mxu0 0.0
  %1210 = vmatprep.subr.mxu0 0.0
  %1211 = vmatpush1.msra.mxu0 0.0
  %1212 = vmatprep.subr.mxu0 0.0
  %1213 = vmatpush1.msra.mxu0 0.0
  %1214 = vmatprep.subr.mxu0 0.0
  %1215 = vmatpush1.msra.mxu0 0.0
  %1216 = vmatprep.subr.mxu0 0.0
  %1217 = vmatpush1.msra.mxu0 0.0
  %1218 = vmatprep.subr.mxu0 0.0
  %1219 = vmatpush1.msra.mxu0 0.0
  %1220 = vmatprep.subr.mxu0 0.0
  %1221 = vmatpush1.msra.mxu0 0.0
  %1222 = vmatprep.subr.mxu0 0.0
  %1223 = vmatpush1.msra.mxu0 0.0
  %1224 = vmatprep.subr.mxu0 0.0
  %1225 = vmatpush1.msra.mxu0 0.0
  %1226 = vmatprep.subr.mxu0 0.0
  %1227 = vmatpush1.msra.mxu0 0.0
  %1228 = vmatprep.subr.mxu0 0.0
  %1229 = vmatpush1.msra.mxu0 0.0
  %1230 = vmatprep.mubr.f32.mxu0 0.0
  %1231 = vmatmul.mubr.f32.gmra.mrb[0].mxu0 %v1023
  %v1232 = vpop.f32.mrb[0].mxu0
  %v1233 = vadd.f32 %v1162, %v1232
  %v1234 = vpop.f32.mrb[0].mxu0
  %v1235 = vadd.f32 %v1164, %v1234
  %1236 = vdwg.mxu0
  %v1237 = vmax.f32 %v1015, %v1233
  %v1238 = vmax.f32 %v1017, %v1235
  %v1239 = vmax.f32 %v1237, %v1238
  %v1240 = vld [vmem:[%s2] sm:$0x1]
  %v1242 = vlaneseq
  %v1243 = vshrl.u32 %v1242, 7
  %v1244 = vsub.s32 0, %v1243
  %v1245 = vrot.slane %v1240, %v1244
  %v1247 = vadd.f32 %v1239, %v1245
  %v1248 = vmax.f32 %v1247, 0.0
  %1249 = vst [vmem:[#allocation2 + $0x8] sm:$0xff] %v1248
  %v1250 = vld [vmem:[%s0 + $0x20] sm:$0xff]
  %v1251 = vld [vmem:[%s0 + $0x28] sm:$0xff]
  %v1252 = vld [vmem:[%s0 + $0x30] sm:$0xff]
  %v1253 = vld [vmem:[%s0 + $0x38] sm:$0xff]
  %v1254 = vld [vmem:[%s0 + $0x40] sm:$0xff]
  %v1255 = vld [vmem:[%s1] sm:$0xff]
  %v1256 = vld [vmem:[%s1 + $0x8] sm:$0xff]
  %v1257 = vld [vmem:[%s1 + $0x10] sm:$0xff]
  %v1258 = vld [vmem:[%s1 + $0x18] sm:$0xff]
  %v1259 = vld [vmem:[%s1 + $0x20] sm:$0xff]
  %v1260 = vld [vmem:[%s1 + $0x28] sm:$0xff]
  %v1261 = vld [vmem:[%s1 + $0x30] sm:$0xff]
  %v1262 = vld [vmem:[%s1 + $0x38] sm:$0xff]
  %v1263 = vld [vmem:[%s1 + $0x40] sm:$0xff]
  %v1264 = vld [vmem:[%s1 + $0x48] sm:$0xff]
  %v1265 = vld [vmem:[%s1 + $0x50] sm:$0xff]
  %v1266 = vld [vmem:[%s1 + $0x58] sm:$0xff]
  %v1267 = vld [vmem:[%s1 + $0x60] sm:$0xff]
  %v1268 = vld [vmem:[%s1 + $0x68] sm:$0xff]
  %v1269 = vld [vmem:[%s1 + $0x70] sm:$0xff]
  %v1270 = vld [vmem:[%s1 + $0x78] sm:$0xff]
  %v1271 = vld [vmem:[%s1 + $0x80] sm:$0xff]
  %v1272 = vld [vmem:[%s1 + $0x88] sm:$0xff]
  %v1273 = vld [vmem:[%s1 + $0x90] sm:$0xff]
  %v1274 = vld [vmem:[%s1 + $0x98] sm:$0xff]
  %v1275 = vld [vmem:[%s1 + $0xa0] sm:$0xff]
  %v1276 = vld [vmem:[%s1 + $0xa8] sm:$0xff]
  %v1277 = vld [vmem:[%s1 + $0xb0] sm:$0xff]
  %v1278 = vld [vmem:[%s1 + $0xb8] sm:$0xff]
  %v1279 = vld [vmem:[%s1 + $0xc0] sm:$0xff]
  %v1280 = vld [vmem:[%s1 + $0xc8] sm:$0xff]
  %v1281 = vld [vmem:[%s1 + $0xd0] sm:$0xff]
  %v1282 = vld [vmem:[%s1 + $0xd8] sm:$0xff]
  %v1283 = vld [vmem:[%s1 + $0xe0] sm:$0xff]
  %v1284 = vld [vmem:[%s1 + $0xe8] sm:$0xff]
  %v1285 = vld [vmem:[%s1 + $0xf0] sm:$0xff]
  %v1286 = vld [vmem:[%s1 + $0xf8] sm:$0xff]
  %v1287 = vld [vmem:[%s1 + $0x100] sm:$0xff]
  %v1288 = vld [vmem:[%s1 + $0x108] sm:$0xff]
  %v1289 = vld [vmem:[%s1 + $0x110] sm:$0xff]
  %v1290 = vld [vmem:[%s1 + $0x118] sm:$0xff]
  %v1291 = vld [vmem:[%s1 + $0x120] sm:$0xff]
  %v1292 = vld [vmem:[%s1 + $0x128] sm:$0xff]
  %v1293 = vld [vmem:[%s1 + $0x130] sm:$0xff]
  %v1294 = vld [vmem:[%s1 + $0x138] sm:$0xff]
  %v1295 = vld [vmem:[%s1 + $0x140] sm:$0xff]
  %v1296 = vld [vmem:[%s1 + $0x148] sm:$0xff]
  %v1297 = vld [vmem:[%s1 + $0x150] sm:$0xff]
  %v1298 = vld [vmem:[%s1 + $0x158] sm:$0xff]
  %v1299 = vld [vmem:[%s1 + $0x160] sm:$0xff]
  %v1300 = vld [vmem:[%s1 + $0x168] sm:$0xff]
  %v1301 = vld [vmem:[%s1 + $0x170] sm:$0xff]
  %v1302 = vld [vmem:[%s1 + $0x178] sm:$0xff]
  %v1303 = vld [vmem:[%s1 + $0x180] sm:$0xff]
  %v1304 = vld [vmem:[%s1 + $0x188] sm:$0xff]
  %v1305 = vld [vmem:[%s1 + $0x190] sm:$0xff]
  %v1306 = vld [vmem:[%s1 + $0x198] sm:$0xff]
  %v1307 = vld [vmem:[%s1 + $0x1a0] sm:$0xff]
  %v1308 = vld [vmem:[%s1 + $0x1a8] sm:$0xff]
  %v1309 = vld [vmem:[%s1 + $0x1b0] sm:$0xff]
  %v1310 = vld [vmem:[%s1 + $0x1b8] sm:$0xff]
  %v1311 = vld [vmem:[%s1 + $0x1c0] sm:$0xff]
  %v1312 = vld [vmem:[%s1 + $0x1c8] sm:$0xff]
  %v1313 = vld [vmem:[%s1 + $0x1d0] sm:$0xff]
  %v1314 = vld [vmem:[%s1 + $0x1d8] sm:$0xff]
  %v1315 = vld [vmem:[%s1 + $0x1e0] sm:$0xff]
  %v1316 = vld [vmem:[%s1 + $0x1e8] sm:$0xff]
  %v1317 = vld [vmem:[%s1 + $0x1f0] sm:$0xff]
  %v1318 = vld [vmem:[%s1 + $0x1f8] sm:$0xff]
  %v1319 = vld [vmem:[%s1 + $0x200] sm:$0xff]
  %v1320 = vld [vmem:[%s1 + $0x208] sm:$0xff]
  %v1321 = vld [vmem:[%s1 + $0x210] sm:$0xff]
  %v1322 = vld [vmem:[%s1 + $0x218] sm:$0xff]
  %v1323 = vld [vmem:[%s1 + $0x220] sm:$0xff]
  %v1324 = vld [vmem:[%s1 + $0x228] sm:$0xff]
  %v1325 = vld [vmem:[%s1 + $0x230] sm:$0xff]
  %v1326 = vld [vmem:[%s1 + $0x238] sm:$0xff]
  %v1327 = vld [vmem:[%s1 + $0x240] sm:$0xff]
  %v1328 = vld [vmem:[%s1 + $0x248] sm:$0xff]
  %v1329 = vld [vmem:[%s1 + $0x250] sm:$0xff]
  %v1330 = vld [vmem:[%s1 + $0x258] sm:$0xff]
  %v1331 = vld [vmem:[%s1 + $0x260] sm:$0xff]
  %v1332 = vld [vmem:[%s1 + $0x268] sm:$0xff]
  %v1333 = vld [vmem:[%s1 + $0x270] sm:$0xff]
  %v1334 = vld [vmem:[%s1 + $0x278] sm:$0xff]
  %v1335 = vld [vmem:[%s1 + $0x280] sm:$0xff]
  %v1336 = vld [vmem:[%s1 + $0x288] sm:$0xff]
  %v1337 = vld [vmem:[%s1 + $0x290] sm:$0xff]
  %v1338 = vld [vmem:[%s1 + $0x298] sm:$0xff]
  %v1339 = vld [vmem:[%s1 + $0x2a0] sm:$0xff]
  %v1340 = vld [vmem:[%s1 + $0x2a8] sm:$0xff]
  %v1341 = vld [vmem:[%s1 + $0x2b0] sm:$0xff]
  %v1342 = vld [vmem:[%s1 + $0x2b8] sm:$0xff]
  %v1343 = vld [vmem:[%s1 + $0x2c0] sm:$0xff]
  %v1344 = vld [vmem:[%s1 + $0x2c8] sm:$0xff]
  %v1345 = vld [vmem:[%s1 + $0x2d0] sm:$0xff]
  %v1346 = vld [vmem:[%s1 + $0x2d8] sm:$0xff]
  %v1347 = vld [vmem:[%s1 + $0x2e0] sm:$0xff]
  %v1348 = vld [vmem:[%s1 + $0x2e8] sm:$0xff]
  %v1349 = vld [vmem:[%s1 + $0x2f0] sm:$0xff]
  %v1350 = vld [vmem:[%s1 + $0x2f8] sm:$0xff]
  %v1351 = vld [vmem:[%s1 + $0x300] sm:$0xff]
  %v1352 = vld [vmem:[%s1 + $0x308] sm:$0xff]
  %v1353 = vld [vmem:[%s1 + $0x310] sm:$0xff]
  %v1354 = vld [vmem:[%s1 + $0x318] sm:$0xff]
  %v1355 = vld [vmem:[%s1 + $0x320] sm:$0xff]
  %v1356 = vld [vmem:[%s1 + $0x328] sm:$0xff]
  %v1357 = vld [vmem:[%s1 + $0x330] sm:$0xff]
  %v1358 = vld [vmem:[%s1 + $0x338] sm:$0xff]
  %v1359 = vld [vmem:[%s1 + $0x340] sm:$0xff]
  %v1360 = vld [vmem:[%s1 + $0x348] sm:$0xff]
  %v1361 = vld [vmem:[%s1 + $0x350] sm:$0xff]
  %v1362 = vld [vmem:[%s1 + $0x358] sm:$0xff]
  %v1363 = vld [vmem:[%s1 + $0x360] sm:$0xff]
  %v1364 = vld [vmem:[%s1 + $0x368] sm:$0xff]
  %v1365 = vld [vmem:[%s1 + $0x370] sm:$0xff]
  %v1366 = vld [vmem:[%s1 + $0x378] sm:$0xff]
  %v1367 = vld [vmem:[%s1 + $0x380] sm:$0xff]
  %v1368 = vld [vmem:[%s1 + $0x388] sm:$0xff]
  %v1369 = vld [vmem:[%s1 + $0x390] sm:$0xff]
  %v1370 = vld [vmem:[%s1 + $0x398] sm:$0xff]
  %v1371 = vld [vmem:[%s1 + $0x3a0] sm:$0xff]
  %v1372 = vld [vmem:[%s1 + $0x3a8] sm:$0xff]
  %v1373 = vld [vmem:[%s1 + $0x3b0] sm:$0xff]
  %v1374 = vld [vmem:[%s1 + $0x3b8] sm:$0xff]
  %v1375 = vld [vmem:[%s1 + $0x3c0] sm:$0xff]
  %v1376 = vld [vmem:[%s1 + $0x3c8] sm:$0xff]
  %v1377 = vld [vmem:[%s1 + $0x3d0] sm:$0xff]
  %v1378 = vld [vmem:[%s1 + $0x3d8] sm:$0xff]
  %v1379 = vld [vmem:[%s1 + $0x3e0] sm:$0xff]
  %v1380 = vld [vmem:[%s1 + $0x3e8] sm:$0xff]
  %v1381 = vld [vmem:[%s1 + $0x3f0] sm:$0xff]
  %v1382 = vld [vmem:[%s1 + $0x3f8] sm:$0xff]
  %v1383 = vld [vmem:[%s1 + $0x400] sm:$0xff]
  %v1384 = vld [vmem:[%s1 + $0x408] sm:$0xff]
  %v1385 = vld [vmem:[%s1 + $0x410] sm:$0xff]
  %v1386 = vld [vmem:[%s1 + $0x418] sm:$0xff]
  %v1387 = vld [vmem:[%s1 + $0x420] sm:$0xff]
  %v1388 = vld [vmem:[%s1 + $0x428] sm:$0xff]
  %v1389 = vld [vmem:[%s1 + $0x430] sm:$0xff]
  %v1390 = vld [vmem:[%s1 + $0x438] sm:$0xff]
  %v1391 = vld [vmem:[%s1 + $0x440] sm:$0xff]
  %v1392 = vld [vmem:[%s1 + $0x448] sm:$0xff]
  %v1393 = vld [vmem:[%s1 + $0x450] sm:$0xff]
  %v1394 = vld [vmem:[%s1 + $0x458] sm:$0xff]
  %v1395 = vld [vmem:[%s1 + $0x460] sm:$0xff]
  %v1396 = vld [vmem:[%s1 + $0x468] sm:$0xff]
  %v1397 = vld [vmem:[%s1 + $0x470] sm:$0xff]
  %v1398 = vld [vmem:[%s1 + $0x478] sm:$0xff]
  %v1399 = vld [vmem:[%s1 + $0x480] sm:$0xff]
  %v1400 = vld [vmem:[%s1 + $0x488] sm:$0xff]
  %v1401 = vld [vmem:[%s1 + $0x490] sm:$0xff]
  %v1402 = vld [vmem:[%s1 + $0x498] sm:$0xff]
  %v1403 = vld [vmem:[%s1 + $0x4a0] sm:$0xff]
  %v1404 = vld [vmem:[%s1 + $0x4a8] sm:$0xff]
  %v1405 = vld [vmem:[%s1 + $0x4b0] sm:$0xff]
  %v1406 = vld [vmem:[%s1 + $0x4b8] sm:$0xff]
  %v1407 = vld [vmem:[%s1 + $0x4c0] sm:$0xff]
  %v1408 = vld [vmem:[%s1 + $0x4c8] sm:$0xff]
  %v1409 = vld [vmem:[%s1 + $0x4d0] sm:$0xff]
  %v1410 = vld [vmem:[%s1 + $0x4d8] sm:$0xff]
  %v1411 = vld [vmem:[%s1 + $0x4e0] sm:$0xff]
  %v1412 = vld [vmem:[%s1 + $0x4e8] sm:$0xff]
  %v1413 = vld [vmem:[%s1 + $0x4f0] sm:$0xff]
  %v1414 = vld [vmem:[%s1 + $0x4f8] sm:$0xff]
  %1415 = vmatprep.subr.mxu0 %v1256
  %1416 = vmatpush1.msra.mxu0 %v1255
  %1417 = vmatprep.subr.mxu0 %v1258
  %1418 = vmatpush1.msra.mxu0 %v1257
  %1419 = vmatprep.subr.mxu0 %v1260
  %1420 = vmatpush1.msra.mxu0 %v1259
  %1421 = vmatprep.subr.mxu0 %v1262
  %1422 = vmatpush1.msra.mxu0 %v1261
  %1423 = vmatprep.subr.mxu0 %v1264
  %1424 = vmatpush1.msra.mxu0 %v1263
  %1425 = vmatprep.subr.mxu0 %v1266
  %1426 = vmatpush1.msra.mxu0 %v1265
  %1427 = vmatprep.subr.mxu0 %v1268
  %1428 = vmatpush1.msra.mxu0 %v1267
  %1429 = vmatprep.subr.mxu0 %v1270
  %1430 = vmatpush1.msra.mxu0 %v1269
  %1431 = vmatprep.subr.mxu0 %v1272
  %1432 = vmatpush1.msra.mxu0 %v1271
  %1433 = vmatprep.subr.mxu0 %v1274
  %1434 = vmatpush1.msra.mxu0 %v1273
  %1435 = vmatprep.subr.mxu0 %v1276
  %1436 = vmatpush1.msra.mxu0 %v1275
  %1437 = vmatprep.subr.mxu0 %v1278
  %1438 = vmatpush1.msra.mxu0 %v1277
  %1439 = vmatprep.subr.mxu0 %v1280
  %1440 = vmatpush1.msra.mxu0 %v1279
  %1441 = vmatprep.subr.mxu0 %v1282
  %1442 = vmatpush1.msra.mxu0 %v1281
  %1443 = vmatprep.subr.mxu0 %v1284
  %1444 = vmatpush1.msra.mxu0 %v1283
  %1445 = vmatprep.subr.mxu0 %v1286
  %1446 = vmatpush1.msra.mxu0 %v1285
  %1447 = vmatprep.subr.mxu0 %v1288
  %1448 = vmatpush1.msra.mxu0 %v1287
  %1449 = vmatprep.subr.mxu0 %v1290
  %1450 = vmatpush1.msra.mxu0 %v1289
  %1451 = vmatprep.subr.mxu0 %v1292
  %1452 = vmatpush1.msra.mxu0 %v1291
  %1453 = vmatprep.subr.mxu0 %v1294
  %1454 = vmatpush1.msra.mxu0 %v1293
  %1455 = vmatprep.subr.mxu0 %v1296
  %1456 = vmatpush1.msra.mxu0 %v1295
  %1457 = vmatprep.subr.mxu0 %v1298
  %1458 = vmatpush1.msra.mxu0 %v1297
  %1459 = vmatprep.subr.mxu0 %v1300
  %1460 = vmatpush1.msra.mxu0 %v1299
  %1461 = vmatprep.subr.mxu0 %v1302
  %1462 = vmatpush1.msra.mxu0 %v1301
  %1463 = vmatprep.subr.mxu0 %v1304
  %1464 = vmatpush1.msra.mxu0 %v1303
  %1465 = vmatprep.subr.mxu0 %v1306
  %1466 = vmatpush1.msra.mxu0 %v1305
  %1467 = vmatprep.subr.mxu0 %v1308
  %1468 = vmatpush1.msra.mxu0 %v1307
  %1469 = vmatprep.subr.mxu0 %v1310
  %1470 = vmatpush1.msra.mxu0 %v1309
  %1471 = vmatprep.subr.mxu0 %v1312
  %1472 = vmatpush1.msra.mxu0 %v1311
  %1473 = vmatprep.subr.mxu0 %v1314
  %1474 = vmatpush1.msra.mxu0 %v1313
  %1475 = vmatprep.subr.mxu0 %v1316
  %1476 = vmatpush1.msra.mxu0 %v1315
  %1477 = vmatprep.subr.mxu0 %v1318
  %1478 = vmatpush1.msra.mxu0 %v1317
  %1479 = vmatprep.mubr.f32.mxu0 %v1251
  %1480 = vmatmul.mubr.f32.gmra.mrb[0].mxu0 %v1250
  %v1481 = vpop.f32.mrb[0].mxu0
  %v1482 = vadd.f32 0.0, %v1481
  %v1483 = vpop.f32.mrb[0].mxu0
  %v1484 = vadd.f32 0.0, %v1483
  %1485 = vdwg.mxu0
  %1486 = vmatprep.subr.mxu0 %v1320
  %1487 = vmatpush1.msra.mxu0 %v1319
  %1488 = vmatprep.subr.mxu0 %v1322
  %1489 = vmatpush1.msra.mxu0 %v1321
  %1490 = vmatprep.subr.mxu0 %v1324
  %1491 = vmatpush1.msra.mxu0 %v1323
  %1492 = vmatprep.subr.mxu0 %v1326
  %1493 = vmatpush1.msra.mxu0 %v1325
  %1494 = vmatprep.subr.mxu0 %v1328
  %1495 = vmatpush1.msra.mxu0 %v1327
  %1496 = vmatprep.subr.mxu0 %v1330
  %1497 = vmatpush1.msra.mxu0 %v1329
  %1498 = vmatprep.subr.mxu0 %v1332
  %1499 = vmatpush1.msra.mxu0 %v1331
  %1500 = vmatprep.subr.mxu0 %v1334
  %1501 = vmatpush1.msra.mxu0 %v1333
  %1502 = vmatprep.subr.mxu0 %v1336
  %1503 = vmatpush1.msra.mxu0 %v1335
  %1504 = vmatprep.subr.mxu0 %v1338
  %1505 = vmatpush1.msra.mxu0 %v1337
  %1506 = vmatprep.subr.mxu0 %v1340
  %1507 = vmatpush1.msra.mxu0 %v1339
  %1508 = vmatprep.subr.mxu0 %v1342
  %1509 = vmatpush1.msra.mxu0 %v1341
  %1510 = vmatprep.subr.mxu0 %v1344
  %1511 = vmatpush1.msra.mxu0 %v1343
  %1512 = vmatprep.subr.mxu0 %v1346
  %1513 = vmatpush1.msra.mxu0 %v1345
  %1514 = vmatprep.subr.mxu0 %v1348
  %1515 = vmatpush1.msra.mxu0 %v1347
  %1516 = vmatprep.subr.mxu0 %v1350
  %1517 = vmatpush1.msra.mxu0 %v1349
  %1518 = vmatprep.subr.mxu0 %v1352
  %1519 = vmatpush1.msra.mxu0 %v1351
  %1520 = vmatprep.subr.mxu0 %v1354
  %1521 = vmatpush1.msra.mxu0 %v1353
  %1522 = vmatprep.subr.mxu0 %v1356
  %1523 = vmatpush1.msra.mxu0 %v1355
  %1524 = vmatprep.subr.mxu0 %v1358
  %1525 = vmatpush1.msra.mxu0 %v1357
  %1526 = vmatprep.subr.mxu0 %v1360
  %1527 = vmatpush1.msra.mxu0 %v1359
  %1528 = vmatprep.subr.mxu0 %v1362
  %1529 = vmatpush1.msra.mxu0 %v1361
  %1530 = vmatprep.subr.mxu0 %v1364
  %1531 = vmatpush1.msra.mxu0 %v1363
  %1532 = vmatprep.subr.mxu0 %v1366
  %1533 = vmatpush1.msra.mxu0 %v1365
  %1534 = vmatprep.subr.mxu0 %v1368
  %1535 = vmatpush1.msra.mxu0 %v1367
  %1536 = vmatprep.subr.mxu0 %v1370
  %1537 = vmatpush1.msra.mxu0 %v1369
  %1538 = vmatprep.subr.mxu0 %v1372
  %1539 = vmatpush1.msra.mxu0 %v1371
  %1540 = vmatprep.subr.mxu0 %v1374
  %1541 = vmatpush1.msra.mxu0 %v1373
  %1542 = vmatprep.subr.mxu0 %v1376
  %1543 = vmatpush1.msra.mxu0 %v1375
  %1544 = vmatprep.subr.mxu0 %v1378
  %1545 = vmatpush1.msra.mxu0 %v1377
  %1546 = vmatprep.subr.mxu0 %v1380
  %1547 = vmatpush1.msra.mxu0 %v1379
  %1548 = vmatprep.subr.mxu0 %v1382
  %1549 = vmatpush1.msra.mxu0 %v1381
  %1550 = vmatprep.mubr.f32.mxu0 %v1253
  %1551 = vmatmul.mubr.f32.gmra.mrb[0].mxu0 %v1252
  %v1552 = vpop.f32.mrb[0].mxu0
  %v1553 = vadd.f32 %v1482, %v1552
  %v1554 = vpop.f32.mrb[0].mxu0
  %v1555 = vadd.f32 %v1484, %v1554
  %1556 = vdwg.mxu0
  %1557 = vmatprep.subr.mxu0 %v1384
  %1558 = vmatpush1.msra.mxu0 %v1383
  %1559 = vmatprep.subr.mxu0 %v1386
  %1560 = vmatpush1.msra.mxu0 %v1385
  %1561 = vmatprep.subr.mxu0 %v1388
  %1562 = vmatpush1.msra.mxu0 %v1387
  %1563 = vmatprep.subr.mxu0 %v1390
  %1564 = vmatpush1.msra.mxu0 %v1389
  %1565 = vmatprep.subr.mxu0 %v1392
  %1566 = vmatpush1.msra.mxu0 %v1391
  %1567 = vmatprep.subr.mxu0 %v1394
  %1568 = vmatpush1.msra.mxu0 %v1393
  %1569 = vmatprep.subr.mxu0 %v1396
  %1570 = vmatpush1.msra.mxu0 %v1395
  %1571 = vmatprep.subr.mxu0 %v1398
  %1572 = vmatpush1.msra.mxu0 %v1397
  %1573 = vmatprep.subr.mxu0 %v1400
  %1574 = vmatpush1.msra.mxu0 %v1399
  %1575 = vmatprep.subr.mxu0 %v1402
  %1576 = vmatpush1.msra.mxu0 %v1401
  %1577 = vmatprep.subr.mxu0 %v1404
  %1578 = vmatpush1.msra.mxu0 %v1403
  %1579 = vmatprep.subr.mxu0 %v1406
  %1580 = vmatpush1.msra.mxu0 %v1405
  %1581 = vmatprep.subr.mxu0 %v1408
  %1582 = vmatpush1.msra.mxu0 %v1407
  %1583 = vmatprep.subr.mxu0 %v1410
  %1584 = vmatpush1.msra.mxu0 %v1409
  %1585 = vmatprep.subr.mxu0 %v1412
  %1586 = vmatpush1.msra.mxu0 %v1411
  %1587 = vmatprep.subr.mxu0 %v1414
  %1588 = vmatpush1.msra.mxu0 %v1413
  %1589 = vmatprep.subr.mxu0 0.0
  %1590 = vmatpush1.msra.mxu0 0.0
  %1591 = vmatprep.subr.mxu0 0.0
  %1592 = vmatpush1.msra.mxu0 0.0
  %1593 = vmatprep.subr.mxu0 0.0
  %1594 = vmatpush1.msra.mxu0 0.0
  %1595 = vmatprep.subr.mxu0 0.0
  %1596 = vmatpush1.msra.mxu0 0.0
  %1597 = vmatprep.subr.mxu0 0.0
  %1598 = vmatpush1.msra.mxu0 0.0
  %1599 = vmatprep.subr.mxu0 0.0
  %1600 = vmatpush1.msra.mxu0 0.0
  %1601 = vmatprep.subr.mxu0 0.0
  %1602 = vmatpush1.msra.mxu0 0.0
  %1603 = vmatprep.subr.mxu0 0.0
  %1604 = vmatpush1.msra.mxu0 0.0
  %1605 = vmatprep.subr.mxu0 0.0
  %1606 = vmatpush1.msra.mxu0 0.0
  %1607 = vmatprep.subr.mxu0 0.0
  %1608 = vmatpush1.msra.mxu0 0.0
  %1609 = vmatprep.subr.mxu0 0.0
  %1610 = vmatpush1.msra.mxu0 0.0
  %1611 = vmatprep.subr.mxu0 0.0
  %1612 = vmatpush1.msra.mxu0 0.0
  %1613 = vmatprep.subr.mxu0 0.0
  %1614 = vmatpush1.msra.mxu0 0.0
  %1615 = vmatprep.subr.mxu0 0.0
  %1616 = vmatpush1.msra.mxu0 0.0
  %1617 = vmatprep.subr.mxu0 0.0
  %1618 = vmatpush1.msra.mxu0 0.0
  %1619 = vmatprep.subr.mxu0 0.0
  %1620 = vmatpush1.msra.mxu0 0.0
  %1621 = vmatprep.mubr.f32.mxu0 0.0
  %1622 = vmatmul.mubr.f32.gmra.mrb[0].mxu0 %v1254
  %v1623 = vpop.f32.mrb[0].mxu0
  %v1624 = vadd.f32 %v1553, %v1623
  %v1625 = vpop.f32.mrb[0].mxu0
  %v1626 = vadd.f32 %v1555, %v1625
  %1627 = vdwg.mxu0
  %v1628 = vld [vmem:[%s0 + $0x28] sm:$0xff]
  %v1629 = vld [vmem:[%s0 + $0x30] sm:$0xff]
  %v1630 = vld [vmem:[%s0 + $0x38] sm:$0xff]
  %v1631 = vld [vmem:[%s0 + $0x40] sm:$0xff]
  %v1632 = vld [vmem:[%s0 + $0x48] sm:$0xff]
  %1633 = vmatprep.subr.mxu0 %v1256
  %1634 = vmatpush1.msra.mxu0 %v1255
  %1635 = vmatprep.subr.mxu0 %v1258
  %1636 = vmatpush1.msra.mxu0 %v1257
  %1637 = vmatprep.subr.mxu0 %v1260
  %1638 = vmatpush1.msra.mxu0 %v1259
  %1639 = vmatprep.subr.mxu0 %v1262
  %1640 = vmatpush1.msra.mxu0 %v1261
  %1641 = vmatprep.subr.mxu0 %v1264
  %1642 = vmatpush1.msra.mxu0 %v1263
  %1643 = vmatprep.subr.mxu0 %v1266
  %1644 = vmatpush1.msra.mxu0 %v1265
  %1645 = vmatprep.subr.mxu0 %v1268
  %1646 = vmatpush1.msra.mxu0 %v1267
  %1647 = vmatprep.subr.mxu0 %v1270
  %1648 = vmatpush1.msra.mxu0 %v1269
  %1649 = vmatprep.subr.mxu0 %v1272
  %1650 = vmatpush1.msra.mxu0 %v1271
  %1651 = vmatprep.subr.mxu0 %v1274
  %1652 = vmatpush1.msra.mxu0 %v1273
  %1653 = vmatprep.subr.mxu0 %v1276
  %1654 = vmatpush1.msra.mxu0 %v1275
  %1655 = vmatprep.subr.mxu0 %v1278
  %1656 = vmatpush1.msra.mxu0 %v1277
  %1657 = vmatprep.subr.mxu0 %v1280
  %1658 = vmatpush1.msra.mxu0 %v1279
  %1659 = vmatprep.subr.mxu0 %v1282
  %1660 = vmatpush1.msra.mxu0 %v1281
  %1661 = vmatprep.subr.mxu0 %v1284
  %1662 = vmatpush1.msra.mxu0 %v1283
  %1663 = vmatprep.subr.mxu0 %v1286
  %1664 = vmatpush1.msra.mxu0 %v1285
  %1665 = vmatprep.subr.mxu0 %v1288
  %1666 = vmatpush1.msra.mxu0 %v1287
  %1667 = vmatprep.subr.mxu0 %v1290
  %1668 = vmatpush1.msra.mxu0 %v1289
  %1669 = vmatprep.subr.mxu0 %v1292
  %1670 = vmatpush1.msra.mxu0 %v1291
  %1671 = vmatprep.subr.mxu0 %v1294
  %1672 = vmatpush1.msra.mxu0 %v1293
  %1673 = vmatprep.subr.mxu0 %v1296
  %1674 = vmatpush1.msra.mxu0 %v1295
  %1675 = vmatprep.subr.mxu0 %v1298
  %1676 = vmatpush1.msra.mxu0 %v1297
  %1677 = vmatprep.subr.mxu0 %v1300
  %1678 = vmatpush1.msra.mxu0 %v1299
  %1679 = vmatprep.subr.mxu0 %v1302
  %1680 = vmatpush1.msra.mxu0 %v1301
  %1681 = vmatprep.subr.mxu0 %v1304
  %1682 = vmatpush1.msra.mxu0 %v1303
  %1683 = vmatprep.subr.mxu0 %v1306
  %1684 = vmatpush1.msra.mxu0 %v1305
  %1685 = vmatprep.subr.mxu0 %v1308
  %1686 = vmatpush1.msra.mxu0 %v1307
  %1687 = vmatprep.subr.mxu0 %v1310
  %1688 = vmatpush1.msra.mxu0 %v1309
  %1689 = vmatprep.subr.mxu0 %v1312
  %1690 = vmatpush1.msra.mxu0 %v1311
  %1691 = vmatprep.subr.mxu0 %v1314
  %1692 = vmatpush1.msra.mxu0 %v1313
  %1693 = vmatprep.subr.mxu0 %v1316
  %1694 = vmatpush1.msra.mxu0 %v1315
  %1695 = vmatprep.subr.mxu0 %v1318
  %1696 = vmatpush1.msra.mxu0 %v1317
  %1697 = vmatprep.mubr.f32.mxu0 %v1629
  %1698 = vmatmul.mubr.f32.gmra.mrb[0].mxu0 %v1628
  %v1699 = vpop.f32.mrb[0].mxu0
  %v1700 = vadd.f32 0.0, %v1699
  %v1701 = vpop.f32.mrb[0].mxu0
  %v1702 = vadd.f32 0.0, %v1701
  %1703 = vdwg.mxu0
  %1704 = vmatprep.subr.mxu0 %v1320
  %1705 = vmatpush1.msra.mxu0 %v1319
  %1706 = vmatprep.subr.mxu0 %v1322
  %1707 = vmatpush1.msra.mxu0 %v1321
  %1708 = vmatprep.subr.mxu0 %v1324
  %1709 = vmatpush1.msra.mxu0 %v1323
  %1710 = vmatprep.subr.mxu0 %v1326
  %1711 = vmatpush1.msra.mxu0 %v1325
  %1712 = vmatprep.subr.mxu0 %v1328
  %1713 = vmatpush1.msra.mxu0 %v1327
  %1714 = vmatprep.subr.mxu0 %v1330
  %1715 = vmatpush1.msra.mxu0 %v1329
  %1716 = vmatprep.subr.mxu0 %v1332
  %1717 = vmatpush1.msra.mxu0 %v1331
  %1718 = vmatprep.subr.mxu0 %v1334
  %1719 = vmatpush1.msra.mxu0 %v1333
  %1720 = vmatprep.subr.mxu0 %v1336
  %1721 = vmatpush1.msra.mxu0 %v1335
  %1722 = vmatprep.subr.mxu0 %v1338
  %1723 = vmatpush1.msra.mxu0 %v1337
  %1724 = vmatprep.subr.mxu0 %v1340
  %1725 = vmatpush1.msra.mxu0 %v1339
  %1726 = vmatprep.subr.mxu0 %v1342
  %1727 = vmatpush1.msra.mxu0 %v1341
  %1728 = vmatprep.subr.mxu0 %v1344
  %1729 = vmatpush1.msra.mxu0 %v1343
  %1730 = vmatprep.subr.mxu0 %v1346
  %1731 = vmatpush1.msra.mxu0 %v1345
  %1732 = vmatprep.subr.mxu0 %v1348
  %1733 = vmatpush1.msra.mxu0 %v1347
  %1734 = vmatprep.subr.mxu0 %v1350
  %1735 = vmatpush1.msra.mxu0 %v1349
  %1736 = vmatprep.subr.mxu0 %v1352
  %1737 = vmatpush1.msra.mxu0 %v1351
  %1738 = vmatprep.subr.mxu0 %v1354
  %1739 = vmatpush1.msra.mxu0 %v1353
  %1740 = vmatprep.subr.mxu0 %v1356
  %1741 = vmatpush1.msra.mxu0 %v1355
  %1742 = vmatprep.subr.mxu0 %v1358
  %1743 = vmatpush1.msra.mxu0 %v1357
  %1744 = vmatprep.subr.mxu0 %v1360
  %1745 = vmatpush1.msra.mxu0 %v1359
  %1746 = vmatprep.subr.mxu0 %v1362
  %1747 = vmatpush1.msra.mxu0 %v1361
  %1748 = vmatprep.subr.mxu0 %v1364
  %1749 = vmatpush1.msra.mxu0 %v1363
  %1750 = vmatprep.subr.mxu0 %v1366
  %1751 = vmatpush1.msra.mxu0 %v1365
  %1752 = vmatprep.subr.mxu0 %v1368
  %1753 = vmatpush1.msra.mxu0 %v1367
  %1754 = vmatprep.subr.mxu0 %v1370
  %1755 = vmatpush1.msra.mxu0 %v1369
  %1756 = vmatprep.subr.mxu0 %v1372
  %1757 = vmatpush1.msra.mxu0 %v1371
  %1758 = vmatprep.subr.mxu0 %v1374
  %1759 = vmatpush1.msra.mxu0 %v1373
  %1760 = vmatprep.subr.mxu0 %v1376
  %1761 = vmatpush1.msra.mxu0 %v1375
  %1762 = vmatprep.subr.mxu0 %v1378
  %1763 = vmatpush1.msra.mxu0 %v1377
  %1764 = vmatprep.subr.mxu0 %v1380
  %1765 = vmatpush1.msra.mxu0 %v1379
  %1766 = vmatprep.subr.mxu0 %v1382
  %1767 = vmatpush1.msra.mxu0 %v1381
  %1768 = vmatprep.mubr.f32.mxu0 %v1631
  %1769 = vmatmul.mubr.f32.gmra.mrb[0].mxu0 %v1630
  %v1770 = vpop.f32.mrb[0].mxu0
  %v1771 = vadd.f32 %v1700, %v1770
  %v1772 = vpop.f32.mrb[0].mxu0
  %v1773 = vadd.f32 %v1702, %v1772
  %1774 = vdwg.mxu0
  %1775 = vmatprep.subr.mxu0 %v1384
  %1776 = vmatpush1.msra.mxu0 %v1383
  %1777 = vmatprep.subr.mxu0 %v1386
  %1778 = vmatpush1.msra.mxu0 %v1385
  %1779 = vmatprep.subr.mxu0 %v1388
  %1780 = vmatpush1.msra.mxu0 %v1387
  %1781 = vmatprep.subr.mxu0 %v1390
  %1782 = vmatpush1.msra.mxu0 %v1389
  %1783 = vmatprep.subr.mxu0 %v1392
  %1784 = vmatpush1.msra.mxu0 %v1391
  %1785 = vmatprep.subr.mxu0 %v1394
  %1786 = vmatpush1.msra.mxu0 %v1393
  %1787 = vmatprep.subr.mxu0 %v1396
  %1788 = vmatpush1.msra.mxu0 %v1395
  %1789 = vmatprep.subr.mxu0 %v1398
  %1790 = vmatpush1.msra.mxu0 %v1397
  %1791 = vmatprep.subr.mxu0 %v1400
  %1792 = vmatpush1.msra.mxu0 %v1399
  %1793 = vmatprep.subr.mxu0 %v1402
  %1794 = vmatpush1.msra.mxu0 %v1401
  %1795 = vmatprep.subr.mxu0 %v1404
  %1796 = vmatpush1.msra.mxu0 %v1403
  %1797 = vmatprep.subr.mxu0 %v1406
  %1798 = vmatpush1.msra.mxu0 %v1405
  %1799 = vmatprep.subr.mxu0 %v1408
  %1800 = vmatpush1.msra.mxu0 %v1407
  %1801 = vmatprep.subr.mxu0 %v1410
  %1802 = vmatpush1.msra.mxu0 %v1409
  %1803 = vmatprep.subr.mxu0 %v1412
  %1804 = vmatpush1.msra.mxu0 %v1411
  %1805 = vmatprep.subr.mxu0 %v1414
  %1806 = vmatpush1.msra.mxu0 %v1413
  %1807 = vmatprep.subr.mxu0 0.0
  %1808 = vmatpush1.msra.mxu0 0.0
  %1809 = vmatprep.subr.mxu0 0.0
  %1810 = vmatpush1.msra.mxu0 0.0
  %1811 = vmatprep.subr.mxu0 0.0
  %1812 = vmatpush1.msra.mxu0 0.0
  %1813 = vmatprep.subr.mxu0 0.0
  %1814 = vmatpush1.msra.mxu0 0.0
  %1815 = vmatprep.subr.mxu0 0.0
  %1816 = vmatpush1.msra.mxu0 0.0
  %1817 = vmatprep.subr.mxu0 0.0
  %1818 = vmatpush1.msra.mxu0 0.0
  %1819 = vmatprep.subr.mxu0 0.0
  %1820 = vmatpush1.msra.mxu0 0.0
  %1821 = vmatprep.subr.mxu0 0.0
  %1822 = vmatpush1.msra.mxu0 0.0
  %1823 = vmatprep.subr.mxu0 0.0
  %1824 = vmatpush1.msra.mxu0 0.0
  %1825 = vmatprep.subr.mxu0 0.0
  %1826 = vmatpush1.msra.mxu0 0.0
  %1827 = vmatprep.subr.mxu0 0.0
  %1828 = vmatpush1.msra.mxu0 0.0
  %1829 = vmatprep.subr.mxu0 0.0
  %1830 = vmatpush1.msra.mxu0 0.0
  %1831 = vmatprep.subr.mxu0 0.0
  %1832 = vmatpush1.msra.mxu0 0.0
  %1833 = vmatprep.subr.mxu0 0.0
  %1834 = vmatpush1.msra.mxu0 0.0
  %1835 = vmatprep.subr.mxu0 0.0
  %1836 = vmatpush1.msra.mxu0 0.0
  %1837 = vmatprep.subr.mxu0 0.0
  %1838 = vmatpush1.msra.mxu0 0.0
  %1839 = vmatprep.mubr.f32.mxu0 0.0
  %1840 = vmatmul.mubr.f32.gmra.mrb[0].mxu0 %v1632
  %v1841 = vpop.f32.mrb[0].mxu0
  %v1842 = vadd.f32 %v1771, %v1841
  %v1843 = vpop.f32.mrb[0].mxu0
  %v1844 = vadd.f32 %v1773, %v1843
  %1845 = vdwg.mxu0
  %v1846 = vmax.f32 %v1624, %v1842
  %v1847 = vmax.f32 %v1626, %v1844
  %v1848 = vmax.f32 %v1846, %v1847
  %v1849 = vld [vmem:[%s2] sm:$0x1]
  %v1851 = vlaneseq
  %v1852 = vshrl.u32 %v1851, 7
  %v1853 = vsub.s32 0, %v1852
  %v1854 = vrot.slane %v1849, %v1853
  %v1856 = vadd.f32 %v1848, %v1854
  %v1857 = vmax.f32 %v1856, 0.0
  %1858 = vst [vmem:[#allocation2 + $0x10] sm:$0xff] %v1857
  %v1859 = vld [vmem:[%s0 + $0x30] sm:$0xff]
  %v1860 = vld [vmem:[%s0 + $0x38] sm:$0xff]
  %v1861 = vld [vmem:[%s0 + $0x40] sm:$0xff]
  %v1862 = vld [vmem:[%s0 + $0x48] sm:$0xff]
  %v1863 = vld [vmem:[%s0 + $0x50] sm:$0xff]
  %v1864 = vld [vmem:[%s1] sm:$0xff]
  %v1865 = vld [vmem:[%s1 + $0x8] sm:$0xff]
  %v1866 = vld [vmem:[%s1 + $0x10] sm:$0xff]
  %v1867 = vld [vmem:[%s1 + $0x18] sm:$0xff]
  %v1868 = vld [vmem:[%s1 + $0x20] sm:$0xff]
  %v1869 = vld [vmem:[%s1 + $0x28] sm:$0xff]
  %v1870 = vld [vmem:[%s1 + $0x30] sm:$0xff]
  %v1871 = vld [vmem:[%s1 + $0x38] sm:$0xff]
  %v1872 = vld [vmem:[%s1 + $0x40] sm:$0xff]
  %v1873 = vld [vmem:[%s1 + $0x48] sm:$0xff]
  %v1874 = vld [vmem:[%s1 + $0x50] sm:$0xff]
  %v1875 = vld [vmem:[%s1 + $0x58] sm:$0xff]
  %v1876 = vld [vmem:[%s1 + $0x60] sm:$0xff]
  %v1877 = vld [vmem:[%s1 + $0x68] sm:$0xff]
  %v1878 = vld [vmem:[%s1 + $0x70] sm:$0xff]
  %v1879 = vld [vmem:[%s1 + $0x78] sm:$0xff]
  %v1880 = vld [vmem:[%s1 + $0x80] sm:$0xff]
  %v1881 = vld [vmem:[%s1 + $0x88] sm:$0xff]
  %v1882 = vld [vmem:[%s1 + $0x90] sm:$0xff]
  %v1883 = vld [vmem:[%s1 + $0x98] sm:$0xff]
  %v1884 = vld [vmem:[%s1 + $0xa0] sm:$0xff]
  %v1885 = vld [vmem:[%s1 + $0xa8] sm:$0xff]
  %v1886 = vld [vmem:[%s1 + $0xb0] sm:$0xff]
  %v1887 = vld [vmem:[%s1 + $0xb8] sm:$0xff]
  %v1888 = vld [vmem:[%s1 + $0xc0] sm:$0xff]
  %v1889 = vld [vmem:[%s1 + $0xc8] sm:$0xff]
  %v1890 = vld [vmem:[%s1 + $0xd0] sm:$0xff]
  %v1891 = vld [vmem:[%s1 + $0xd8] sm:$0xff]
  %v1892 = vld [vmem:[%s1 + $0xe0] sm:$0xff]
  %v1893 = vld [vmem:[%s1 + $0xe8] sm:$0xff]
  %v1894 = vld [vmem:[%s1 + $0xf0] sm:$0xff]
  %v1895 = vld [vmem:[%s1 + $0xf8] sm:$0xff]
  %v1896 = vld [vmem:[%s1 + $0x100] sm:$0xff]
  %v1897 = vld [vmem:[%s1 + $0x108] sm:$0xff]
  %v1898 = vld [vmem:[%s1 + $0x110] sm:$0xff]
  %v1899 = vld [vmem:[%s1 + $0x118] sm:$0xff]
  %v1900 = vld [vmem:[%s1 + $0x120] sm:$0xff]
  %v1901 = vld [vmem:[%s1 + $0x128] sm:$0xff]
  %v1902 = vld [vmem:[%s1 + $0x130] sm:$0xff]
  %v1903 = vld [vmem:[%s1 + $0x138] sm:$0xff]
  %v1904 = vld [vmem:[%s1 + $0x140] sm:$0xff]
  %v1905 = vld [vmem:[%s1 + $0x148] sm:$0xff]
  %v1906 = vld [vmem:[%s1 + $0x150] sm:$0xff]
  %v1907 = vld [vmem:[%s1 + $0x158] sm:$0xff]
  %v1908 = vld [vmem:[%s1 + $0x160] sm:$0xff]
  %v1909 = vld [vmem:[%s1 + $0x168] sm:$0xff]
  %v1910 = vld [vmem:[%s1 + $0x170] sm:$0xff]
  %v1911 = vld [vmem:[%s1 + $0x178] sm:$0xff]
  %v1912 = vld [vmem:[%s1 + $0x180] sm:$0xff]
  %v1913 = vld [vmem:[%s1 + $0x188] sm:$0xff]
  %v1914 = vld [vmem:[%s1 + $0x190] sm:$0xff]
  %v1915 = vld [vmem:[%s1 + $0x198] sm:$0xff]
  %v1916 = vld [vmem:[%s1 + $0x1a0] sm:$0xff]
  %v1917 = vld [vmem:[%s1 + $0x1a8] sm:$0xff]
  %v1918 = vld [vmem:[%s1 + $0x1b0] sm:$0xff]
  %v1919 = vld [vmem:[%s1 + $0x1b8] sm:$0xff]
  %v1920 = vld [vmem:[%s1 + $0x1c0] sm:$0xff]
  %v1921 = vld [vmem:[%s1 + $0x1c8] sm:$0xff]
  %v1922 = vld [vmem:[%s1 + $0x1d0] sm:$0xff]
  %v1923 = vld [vmem:[%s1 + $0x1d8] sm:$0xff]
  %v1924 = vld [vmem:[%s1 + $0x1e0] sm:$0xff]
  %v1925 = vld [vmem:[%s1 + $0x1e8] sm:$0xff]
  %v1926 = vld [vmem:[%s1 + $0x1f0] sm:$0xff]
  %v1927 = vld [vmem:[%s1 + $0x1f8] sm:$0xff]
  %v1928 = vld [vmem:[%s1 + $0x200] sm:$0xff]
  %v1929 = vld [vmem:[%s1 + $0x208] sm:$0xff]
  %v1930 = vld [vmem:[%s1 + $0x210] sm:$0xff]
  %v1931 = vld [vmem:[%s1 + $0x218] sm:$0xff]
  %v1932 = vld [vmem:[%s1 + $0x220] sm:$0xff]
  %v1933 = vld [vmem:[%s1 + $0x228] sm:$0xff]
  %v1934 = vld [vmem:[%s1 + $0x230] sm:$0xff]
  %v1935 = vld [vmem:[%s1 + $0x238] sm:$0xff]
  %v1936 = vld [vmem:[%s1 + $0x240] sm:$0xff]
  %v1937 = vld [vmem:[%s1 + $0x248] sm:$0xff]
  %v1938 = vld [vmem:[%s1 + $0x250] sm:$0xff]
  %v1939 = vld [vmem:[%s1 + $0x258] sm:$0xff]
  %v1940 = vld [vmem:[%s1 + $0x260] sm:$0xff]
  %v1941 = vld [vmem:[%s1 + $0x268] sm:$0xff]
  %v1942 = vld [vmem:[%s1 + $0x270] sm:$0xff]
  %v1943 = vld [vmem:[%s1 + $0x278] sm:$0xff]
  %v1944 = vld [vmem:[%s1 + $0x280] sm:$0xff]
  %v1945 = vld [vmem:[%s1 + $0x288] sm:$0xff]
  %v1946 = vld [vmem:[%s1 + $0x290] sm:$0xff]
  %v1947 = vld [vmem:[%s1 + $0x298] sm:$0xff]
  %v1948 = vld [vmem:[%s1 + $0x2a0] sm:$0xff]
  %v1949 = vld [vmem:[%s1 + $0x2a8] sm:$0xff]
  %v1950 = vld [vmem:[%s1 + $0x2b0] sm:$0xff]
  %v1951 = vld [vmem:[%s1 + $0x2b8] sm:$0xff]
  %v1952 = vld [vmem:[%s1 + $0x2c0] sm:$0xff]
  %v1953 = vld [vmem:[%s1 + $0x2c8] sm:$0xff]
  %v1954 = vld [vmem:[%s1 + $0x2d0] sm:$0xff]
  %v1955 = vld [vmem:[%s1 + $0x2d8] sm:$0xff]
  %v1956 = vld [vmem:[%s1 + $0x2e0] sm:$0xff]
  %v1957 = vld [vmem:[%s1 + $0x2e8] sm:$0xff]
  %v1958 = vld [vmem:[%s1 + $0x2f0] sm:$0xff]
  %v1959 = vld [vmem:[%s1 + $0x2f8] sm:$0xff]
  %v1960 = vld [vmem:[%s1 + $0x300] sm:$0xff]
  %v1961 = vld [vmem:[%s1 + $0x308] sm:$0xff]
  %v1962 = vld [vmem:[%s1 + $0x310] sm:$0xff]
  %v1963 = vld [vmem:[%s1 + $0x318] sm:$0xff]
  %v1964 = vld [vmem:[%s1 + $0x320] sm:$0xff]
  %v1965 = vld [vmem:[%s1 + $0x328] sm:$0xff]
  %v1966 = vld [vmem:[%s1 + $0x330] sm:$0xff]
  %v1967 = vld [vmem:[%s1 + $0x338] sm:$0xff]
  %v1968 = vld [vmem:[%s1 + $0x340] sm:$0xff]
  %v1969 = vld [vmem:[%s1 + $0x348] sm:$0xff]
  %v1970 = vld [vmem:[%s1 + $0x350] sm:$0xff]
  %v1971 = vld [vmem:[%s1 + $0x358] sm:$0xff]
  %v1972 = vld [vmem:[%s1 + $0x360] sm:$0xff]
  %v1973 = vld [vmem:[%s1 + $0x368] sm:$0xff]
  %v1974 = vld [vmem:[%s1 + $0x370] sm:$0xff]
  %v1975 = vld [vmem:[%s1 + $0x378] sm:$0xff]
  %v1976 = vld [vmem:[%s1 + $0x380] sm:$0xff]
  %v1977 = vld [vmem:[%s1 + $0x388] sm:$0xff]
  %v1978 = vld [vmem:[%s1 + $0x390] sm:$0xff]
  %v1979 = vld [vmem:[%s1 + $0x398] sm:$0xff]
  %v1980 = vld [vmem:[%s1 + $0x3a0] sm:$0xff]
  %v1981 = vld [vmem:[%s1 + $0x3a8] sm:$0xff]
  %v1982 = vld [vmem:[%s1 + $0x3b0] sm:$0xff]
  %v1983 = vld [vmem:[%s1 + $0x3b8] sm:$0xff]
  %v1984 = vld [vmem:[%s1 + $0x3c0] sm:$0xff]
  %v1985 = vld [vmem:[%s1 + $0x3c8] sm:$0xff]
  %v1986 = vld [vmem:[%s1 + $0x3d0] sm:$0xff]
  %v1987 = vld [vmem:[%s1 + $0x3d8] sm:$0xff]
  %v1988 = vld [vmem:[%s1 + $0x3e0] sm:$0xff]
  %v1989 = vld [vmem:[%s1 + $0x3e8] sm:$0xff]
  %v1990 = vld [vmem:[%s1 + $0x3f0] sm:$0xff]
  %v1991 = vld [vmem:[%s1 + $0x3f8] sm:$0xff]
  %v1992 = vld [vmem:[%s1 + $0x400] sm:$0xff]
  %v1993 = vld [vmem:[%s1 + $0x408] sm:$0xff]
  %v1994 = vld [vmem:[%s1 + $0x410] sm:$0xff]
  %v1995 = vld [vmem:[%s1 + $0x418] sm:$0xff]
  %v1996 = vld [vmem:[%s1 + $0x420] sm:$0xff]
  %v1997 = vld [vmem:[%s1 + $0x428] sm:$0xff]
  %v1998 = vld [vmem:[%s1 + $0x430] sm:$0xff]
  %v1999 = vld [vmem:[%s1 + $0x438] sm:$0xff]
  %v2000 = vld [vmem:[%s1 + $0x440] sm:$0xff]
  %v2001 = vld [vmem:[%s1 + $0x448] sm:$0xff]
  %v2002 = vld [vmem:[%s1 + $0x450] sm:$0xff]
  %v2003 = vld [vmem:[%s1 + $0x458] sm:$0xff]
  %v2004 = vld [vmem:[%s1 + $0x460] sm:$0xff]
  %v2005 = vld [vmem:[%s1 + $0x468] sm:$0xff]
  %v2006 = vld [vmem:[%s1 + $0x470] sm:$0xff]
  %v2007 = vld [vmem:[%s1 + $0x478] sm:$0xff]
  %v2008 = vld [vmem:[%s1 + $0x480] sm:$0xff]
  %v2009 = vld [vmem:[%s1 + $0x488] sm:$0xff]
  %v2010 = vld [vmem:[%s1 + $0x490] sm:$0xff]
  %v2011 = vld [vmem:[%s1 + $0x498] sm:$0xff]
  %v2012 = vld [vmem:[%s1 + $0x4a0] sm:$0xff]
  %v2013 = vld [vmem:[%s1 + $0x4a8] sm:$0xff]
  %v2014 = vld [vmem:[%s1 + $0x4b0] sm:$0xff]
  %v2015 = vld [vmem:[%s1 + $0x4b8] sm:$0xff]
  %v2016 = vld [vmem:[%s1 + $0x4c0] sm:$0xff]
  %v2017 = vld [vmem:[%s1 + $0x4c8] sm:$0xff]
  %v2018 = vld [vmem:[%s1 + $0x4d0] sm:$0xff]
  %v2019 = vld [vmem:[%s1 + $0x4d8] sm:$0xff]
  %v2020 = vld [vmem:[%s1 + $0x4e0] sm:$0xff]
  %v2021 = vld [vmem:[%s1 + $0x4e8] sm:$0xff]
  %v2022 = vld [vmem:[%s1 + $0x4f0] sm:$0xff]
  %v2023 = vld [vmem:[%s1 + $0x4f8] sm:$0xff]
  %2024 = vmatprep.subr.mxu0 %v1865
  %2025 = vmatpush1.msra.mxu0 %v1864
  %2026 = vmatprep.subr.mxu0 %v1867
  %2027 = vmatpush1.msra.mxu0 %v1866
  %2028 = vmatprep.subr.mxu0 %v1869
  %2029 = vmatpush1.msra.mxu0 %v1868
  %2030 = vmatprep.subr.mxu0 %v1871
  %2031 = vmatpush1.msra.mxu0 %v1870
  %2032 = vmatprep.subr.mxu0 %v1873
  %2033 = vmatpush1.msra.mxu0 %v1872
  %2034 = vmatprep.subr.mxu0 %v1875
  %2035 = vmatpush1.msra.mxu0 %v1874
  %2036 = vmatprep.subr.mxu0 %v1877
  %2037 = vmatpush1.msra.mxu0 %v1876
  %2038 = vmatprep.subr.mxu0 %v1879
  %2039 = vmatpush1.msra.mxu0 %v1878
  %2040 = vmatprep.subr.mxu0 %v1881
  %2041 = vmatpush1.msra.mxu0 %v1880
  %2042 = vmatprep.subr.mxu0 %v1883
  %2043 = vmatpush1.msra.mxu0 %v1882
  %2044 = vmatprep.subr.mxu0 %v1885
  %2045 = vmatpush1.msra.mxu0 %v1884
  %2046 = vmatprep.subr.mxu0 %v1887
  %2047 = vmatpush1.msra.mxu0 %v1886
  %2048 = vmatprep.subr.mxu0 %v1889
  %2049 = vmatpush1.msra.mxu0 %v1888
  %2050 = vmatprep.subr.mxu0 %v1891
  %2051 = vmatpush1.msra.mxu0 %v1890
  %2052 = vmatprep.subr.mxu0 %v1893
  %2053 = vmatpush1.msra.mxu0 %v1892
  %2054 = vmatprep.subr.mxu0 %v1895
  %2055 = vmatpush1.msra.mxu0 %v1894
  %2056 = vmatprep.subr.mxu0 %v1897
  %2057 = vmatpush1.msra.mxu0 %v1896
  %2058 = vmatprep.subr.mxu0 %v1899
  %2059 = vmatpush1.msra.mxu0 %v1898
  %2060 = vmatprep.subr.mxu0 %v1901
  %2061 = vmatpush1.msra.mxu0 %v1900
  %2062 = vmatprep.subr.mxu0 %v1903
  %2063 = vmatpush1.msra.mxu0 %v1902
  %2064 = vmatprep.subr.mxu0 %v1905
  %2065 = vmatpush1.msra.mxu0 %v1904
  %2066 = vmatprep.subr.mxu0 %v1907
  %2067 = vmatpush1.msra.mxu0 %v1906
  %2068 = vmatprep.subr.mxu0 %v1909
  %2069 = vmatpush1.msra.mxu0 %v1908
  %2070 = vmatprep.subr.mxu0 %v1911
  %2071 = vmatpush1.msra.mxu0 %v1910
  %2072 = vmatprep.subr.mxu0 %v1913
  %2073 = vmatpush1.msra.mxu0 %v1912
  %2074 = vmatprep.subr.mxu0 %v1915
  %2075 = vmatpush1.msra.mxu0 %v1914
  %2076 = vmatprep.subr.mxu0 %v1917
  %2077 = vmatpush1.msra.mxu0 %v1916
  %2078 = vmatprep.subr.mxu0 %v1919
  %2079 = vmatpush1.msra.mxu0 %v1918
  %2080 = vmatprep.subr.mxu0 %v1921
  %2081 = vmatpush1.msra.mxu0 %v1920
  %2082 = vmatprep.subr.mxu0 %v1923
  %2083 = vmatpush1.msra.mxu0 %v1922
  %2084 = vmatprep.subr.mxu0 %v1925
  %2085 = vmatpush1.msra.mxu0 %v1924
  %2086 = vmatprep.subr.mxu0 %v1927
  %2087 = vmatpush1.msra.mxu0 %v1926
  %2088 = vmatprep.mubr.f32.mxu0 %v1860
  %2089 = vmatmul.mubr.f32.gmra.mrb[0].mxu0 %v1859
  %v2090 = vpop.f32.mrb[0].mxu0
  %v2091 = vadd.f32 0.0, %v2090
  %v2092 = vpop.f32.mrb[0].mxu0
  %v2093 = vadd.f32 0.0, %v2092
  %2094 = vdwg.mxu0
  %2095 = vmatprep.subr.mxu0 %v1929
  %2096 = vmatpush1.msra.mxu0 %v1928
  %2097 = vmatprep.subr.mxu0 %v1931
  %2098 = vmatpush1.msra.mxu0 %v1930
  %2099 = vmatprep.subr.mxu0 %v1933
  %2100 = vmatpush1.msra.mxu0 %v1932
  %2101 = vmatprep.subr.mxu0 %v1935
  %2102 = vmatpush1.msra.mxu0 %v1934
  %2103 = vmatprep.subr.mxu0 %v1937
  %2104 = vmatpush1.msra.mxu0 %v1936
  %2105 = vmatprep.subr.mxu0 %v1939
  %2106 = vmatpush1.msra.mxu0 %v1938
  %2107 = vmatprep.subr.mxu0 %v1941
  %2108 = vmatpush1.msra.mxu0 %v1940
  %2109 = vmatprep.subr.mxu0 %v1943
  %2110 = vmatpush1.msra.mxu0 %v1942
  %2111 = vmatprep.subr.mxu0 %v1945
  %2112 = vmatpush1.msra.mxu0 %v1944
  %2113 = vmatprep.subr.mxu0 %v1947
  %2114 = vmatpush1.msra.mxu0 %v1946
  %2115 = vmatprep.subr.mxu0 %v1949
  %2116 = vmatpush1.msra.mxu0 %v1948
  %2117 = vmatprep.subr.mxu0 %v1951
  %2118 = vmatpush1.msra.mxu0 %v1950
  %2119 = vmatprep.subr.mxu0 %v1953
  %2120 = vmatpush1.msra.mxu0 %v1952
  %2121 = vmatprep.subr.mxu0 %v1955
  %2122 = vmatpush1.msra.mxu0 %v1954
  %2123 = vmatprep.subr.mxu0 %v1957
  %2124 = vmatpush1.msra.mxu0 %v1956
  %2125 = vmatprep.subr.mxu0 %v1959
  %2126 = vmatpush1.msra.mxu0 %v1958
  %2127 = vmatprep.subr.mxu0 %v1961
  %2128 = vmatpush1.msra.mxu0 %v1960
  %2129 = vmatprep.subr.mxu0 %v1963
  %2130 = vmatpush1.msra.mxu0 %v1962
  %2131 = vmatprep.subr.mxu0 %v1965
  %2132 = vmatpush1.msra.mxu0 %v1964
  %2133 = vmatprep.subr.mxu0 %v1967
  %2134 = vmatpush1.msra.mxu0 %v1966
  %2135 = vmatprep.subr.mxu0 %v1969
  %2136 = vmatpush1.msra.mxu0 %v1968
  %2137 = vmatprep.subr.mxu0 %v1971
  %2138 = vmatpush1.msra.mxu0 %v1970
  %2139 = vmatprep.subr.mxu0 %v1973
  %2140 = vmatpush1.msra.mxu0 %v1972
  %2141 = vmatprep.subr.mxu0 %v1975
  %2142 = vmatpush1.msra.mxu0 %v1974
  %2143 = vmatprep.subr.mxu0 %v1977
  %2144 = vmatpush1.msra.mxu0 %v1976
  %2145 = vmatprep.subr.mxu0 %v1979
  %2146 = vmatpush1.msra.mxu0 %v1978
  %2147 = vmatprep.subr.mxu0 %v1981
  %2148 = vmatpush1.msra.mxu0 %v1980
  %2149 = vmatprep.subr.mxu0 %v1983
  %2150 = vmatpush1.msra.mxu0 %v1982
  %2151 = vmatprep.subr.mxu0 %v1985
  %2152 = vmatpush1.msra.mxu0 %v1984
  %2153 = vmatprep.subr.mxu0 %v1987
  %2154 = vmatpush1.msra.mxu0 %v1986
  %2155 = vmatprep.subr.mxu0 %v1989
  %2156 = vmatpush1.msra.mxu0 %v1988
  %2157 = vmatprep.subr.mxu0 %v1991
  %2158 = vmatpush1.msra.mxu0 %v1990
  %2159 = vmatprep.mubr.f32.mxu0 %v1862
  %2160 = vmatmul.mubr.f32.gmra.mrb[0].mxu0 %v1861
  %v2161 = vpop.f32.mrb[0].mxu0
  %v2162 = vadd.f32 %v2091, %v2161
  %v2163 = vpop.f32.mrb[0].mxu0
  %v2164 = vadd.f32 %v2093, %v2163
  %2165 = vdwg.mxu0
  %2166 = vmatprep.subr.mxu0 %v1993
  %2167 = vmatpush1.msra.mxu0 %v1992
  %2168 = vmatprep.subr.mxu0 %v1995
  %2169 = vmatpush1.msra.mxu0 %v1994
  %2170 = vmatprep.subr.mxu0 %v1997
  %2171 = vmatpush1.msra.mxu0 %v1996
  %2172 = vmatprep.subr.mxu0 %v1999
  %2173 = vmatpush1.msra.mxu0 %v1998
  %2174 = vmatprep.subr.mxu0 %v2001
  %2175 = vmatpush1.msra.mxu0 %v2000
  %2176 = vmatprep.subr.mxu0 %v2003
  %2177 = vmatpush1.msra.mxu0 %v2002
  %2178 = vmatprep.subr.mxu0 %v2005
  %2179 = vmatpush1.msra.mxu0 %v2004
  %2180 = vmatprep.subr.mxu0 %v2007
  %2181 = vmatpush1.msra.mxu0 %v2006
  %2182 = vmatprep.subr.mxu0 %v2009
  %2183 = vmatpush1.msra.mxu0 %v2008
  %2184 = vmatprep.subr.mxu0 %v2011
  %2185 = vmatpush1.msra.mxu0 %v2010
  %2186 = vmatprep.subr.mxu0 %v2013
  %2187 = vmatpush1.msra.mxu0 %v2012
  %2188 = vmatprep.subr.mxu0 %v2015
  %2189 = vmatpush1.msra.mxu0 %v2014
  %2190 = vmatprep.subr.mxu0 %v2017
  %2191 = vmatpush1.msra.mxu0 %v2016
  %2192 = vmatprep.subr.mxu0 %v2019
  %2193 = vmatpush1.msra.mxu0 %v2018
  %2194 = vmatprep.subr.mxu0 %v2021
  %2195 = vmatpush1.msra.mxu0 %v2020
  %2196 = vmatprep.subr.mxu0 %v2023
  %2197 = vmatpush1.msra.mxu0 %v2022
  %2198 = vmatprep.subr.mxu0 0.0
  %2199 = vmatpush1.msra.mxu0 0.0
  %2200 = vmatprep.subr.mxu0 0.0
  %2201 = vmatpush1.msra.mxu0 0.0
  %2202 = vmatprep.subr.mxu0 0.0
  %2203 = vmatpush1.msra.mxu0 0.0
  %2204 = vmatprep.subr.mxu0 0.0
  %2205 = vmatpush1.msra.mxu0 0.0
  %2206 = vmatprep.subr.mxu0 0.0
  %2207 = vmatpush1.msra.mxu0 0.0
  %2208 = vmatprep.subr.mxu0 0.0
  %2209 = vmatpush1.msra.mxu0 0.0
  %2210 = vmatprep.subr.mxu0 0.0
  %2211 = vmatpush1.msra.mxu0 0.0
  %2212 = vmatprep.subr.mxu0 0.0
  %2213 = vmatpush1.msra.mxu0 0.0
  %2214 = vmatprep.subr.mxu0 0.0
  %2215 = vmatpush1.msra.mxu0 0.0
  %2216 = vmatprep.subr.mxu0 0.0
  %2217 = vmatpush1.msra.mxu0 0.0
  %2218 = vmatprep.subr.mxu0 0.0
  %2219 = vmatpush1.msra.mxu0 0.0
  %2220 = vmatprep.subr.mxu0 0.0
  %2221 = vmatpush1.msra.mxu0 0.0
  %2222 = vmatprep.subr.mxu0 0.0
  %2223 = vmatpush1.msra.mxu0 0.0
  %2224 = vmatprep.subr.mxu0 0.0
  %2225 = vmatpush1.msra.mxu0 0.0
  %2226 = vmatprep.subr.mxu0 0.0
  %2227 = vmatpush1.msra.mxu0 0.0
  %2228 = vmatprep.subr.mxu0 0.0
  %2229 = vmatpush1.msra.mxu0 0.0
  %2230 = vmatprep.mubr.f32.mxu0 0.0
  %2231 = vmatmul.mubr.f32.gmra.mrb[0].mxu0 %v1863
  %v2232 = vpop.f32.mrb[0].mxu0
  %v2233 = vadd.f32 %v2162, %v2232
  %v2234 = vpop.f32.mrb[0].mxu0
  %v2235 = vadd.f32 %v2164, %v2234
  %2236 = vdwg.mxu0
  %v2237 = vld [vmem:[%s0 + $0x38] sm:$0xff]
  %v2238 = vld [vmem:[%s0 + $0x40] sm:$0xff]
  %v2239 = vld [vmem:[%s0 + $0x48] sm:$0xff]
  %v2240 = vld [vmem:[%s0 + $0x50] sm:$0xff]
  %v2241 = vld [vmem:[%s0 + $0x58] sm:$0xff]
  %2242 = vmatprep.subr.mxu0 %v1865
  %2243 = vmatpush1.msra.mxu0 %v1864
  %2244 = vmatprep.subr.mxu0 %v1867
  %2245 = vmatpush1.msra.mxu0 %v1866
  %2246 = vmatprep.subr.mxu0 %v1869
  %2247 = vmatpush1.msra.mxu0 %v1868
  %2248 = vmatprep.subr.mxu0 %v1871
  %2249 = vmatpush1.msra.mxu0 %v1870
  %2250 = vmatprep.subr.mxu0 %v1873
  %2251 = vmatpush1.msra.mxu0 %v1872
  %2252 = vmatprep.subr.mxu0 %v1875
  %2253 = vmatpush1.msra.mxu0 %v1874
  %2254 = vmatprep.subr.mxu0 %v1877
  %2255 = vmatpush1.msra.mxu0 %v1876
  %2256 = vmatprep.subr.mxu0 %v1879
  %2257 = vmatpush1.msra.mxu0 %v1878
  %2258 = vmatprep.subr.mxu0 %v1881
  %2259 = vmatpush1.msra.mxu0 %v1880
  %2260 = vmatprep.subr.mxu0 %v1883
  %2261 = vmatpush1.msra.mxu0 %v1882
  %2262 = vmatprep.subr.mxu0 %v1885
  %2263 = vmatpush1.msra.mxu0 %v1884
  %2264 = vmatprep.subr.mxu0 %v1887
  %2265 = vmatpush1.msra.mxu0 %v1886
  %2266 = vmatprep.subr.mxu0 %v1889
  %2267 = vmatpush1.msra.mxu0 %v1888
  %2268 = vmatprep.subr.mxu0 %v1891
  %2269 = vmatpush1.msra.mxu0 %v1890
  %2270 = vmatprep.subr.mxu0 %v1893
  %2271 = vmatpush1.msra.mxu0 %v1892
  %2272 = vmatprep.subr.mxu0 %v1895
  %2273 = vmatpush1.msra.mxu0 %v1894
  %2274 = vmatprep.subr.mxu0 %v1897
  %2275 = vmatpush1.msra.mxu0 %v1896
  %2276 = vmatprep.subr.mxu0 %v1899
  %2277 = vmatpush1.msra.mxu0 %v1898
  %2278 = vmatprep.subr.mxu0 %v1901
  %2279 = vmatpush1.msra.mxu0 %v1900
  %2280 = vmatprep.subr.mxu0 %v1903
  %2281 = vmatpush1.msra.mxu0 %v1902
  %2282 = vmatprep.subr.mxu0 %v1905
  %2283 = vmatpush1.msra.mxu0 %v1904
  %2284 = vmatprep.subr.mxu0 %v1907
  %2285 = vmatpush1.msra.mxu0 %v1906
  %2286 = vmatprep.subr.mxu0 %v1909
  %2287 = vmatpush1.msra.mxu0 %v1908
  %2288 = vmatprep.subr.mxu0 %v1911
  %2289 = vmatpush1.msra.mxu0 %v1910
  %2290 = vmatprep.subr.mxu0 %v1913
  %2291 = vmatpush1.msra.mxu0 %v1912
  %2292 = vmatprep.subr.mxu0 %v1915
  %2293 = vmatpush1.msra.mxu0 %v1914
  %2294 = vmatprep.subr.mxu0 %v1917
  %2295 = vmatpush1.msra.mxu0 %v1916
  %2296 = vmatprep.subr.mxu0 %v1919
  %2297 = vmatpush1.msra.mxu0 %v1918
  %2298 = vmatprep.subr.mxu0 %v1921
  %2299 = vmatpush1.msra.mxu0 %v1920
  %2300 = vmatprep.subr.mxu0 %v1923
  %2301 = vmatpush1.msra.mxu0 %v1922
  %2302 = vmatprep.subr.mxu0 %v1925
  %2303 = vmatpush1.msra.mxu0 %v1924
  %2304 = vmatprep.subr.mxu0 %v1927
  %2305 = vmatpush1.msra.mxu0 %v1926
  %2306 = vmatprep.mubr.f32.mxu0 %v2238
  %2307 = vmatmul.mubr.f32.gmra.mrb[0].mxu0 %v2237
  %v2308 = vpop.f32.mrb[0].mxu0
  %v2309 = vadd.f32 0.0, %v2308
  %v2310 = vpop.f32.mrb[0].mxu0
  %v2311 = vadd.f32 0.0, %v2310
  %2312 = vdwg.mxu0
  %2313 = vmatprep.subr.mxu0 %v1929
  %2314 = vmatpush1.msra.mxu0 %v1928
  %2315 = vmatprep.subr.mxu0 %v1931
  %2316 = vmatpush1.msra.mxu0 %v1930
  %2317 = vmatprep.subr.mxu0 %v1933
  %2318 = vmatpush1.msra.mxu0 %v1932
  %2319 = vmatprep.subr.mxu0 %v1935
  %2320 = vmatpush1.msra.mxu0 %v1934
  %2321 = vmatprep.subr.mxu0 %v1937
  %2322 = vmatpush1.msra.mxu0 %v1936
  %2323 = vmatprep.subr.mxu0 %v1939
  %2324 = vmatpush1.msra.mxu0 %v1938
  %2325 = vmatprep.subr.mxu0 %v1941
  %2326 = vmatpush1.msra.mxu0 %v1940
  %2327 = vmatprep.subr.mxu0 %v1943
  %2328 = vmatpush1.msra.mxu0 %v1942
  %2329 = vmatprep.subr.mxu0 %v1945
  %2330 = vmatpush1.msra.mxu0 %v1944
  %2331 = vmatprep.subr.mxu0 %v1947
  %2332 = vmatpush1.msra.mxu0 %v1946
  %2333 = vmatprep.subr.mxu0 %v1949
  %2334 = vmatpush1.msra.mxu0 %v1948
  %2335 = vmatprep.subr.mxu0 %v1951
  %2336 = vmatpush1.msra.mxu0 %v1950
  %2337 = vmatprep.subr.mxu0 %v1953
  %2338 = vmatpush1.msra.mxu0 %v1952
  %2339 = vmatprep.subr.mxu0 %v1955
  %2340 = vmatpush1.msra.mxu0 %v1954
  %2341 = vmatprep.subr.mxu0 %v1957
  %2342 = vmatpush1.msra.mxu0 %v1956
  %2343 = vmatprep.subr.mxu0 %v1959
  %2344 = vmatpush1.msra.mxu0 %v1958
  %2345 = vmatprep.subr.mxu0 %v1961
  %2346 = vmatpush1.msra.mxu0 %v1960
  %2347 = vmatprep.subr.mxu0 %v1963
  %2348 = vmatpush1.msra.mxu0 %v1962
  %2349 = vmatprep.subr.mxu0 %v1965
  %2350 = vmatpush1.msra.mxu0 %v1964
  %2351 = vmatprep.subr.mxu0 %v1967
  %2352 = vmatpush1.msra.mxu0 %v1966
  %2353 = vmatprep.subr.mxu0 %v1969
  %2354 = vmatpush1.msra.mxu0 %v1968
  %2355 = vmatprep.subr.mxu0 %v1971
  %2356 = vmatpush1.msra.mxu0 %v1970
  %2357 = vmatprep.subr.mxu0 %v1973
  %2358 = vmatpush1.msra.mxu0 %v1972
  %2359 = vmatprep.subr.mxu0 %v1975
  %2360 = vmatpush1.msra.mxu0 %v1974
  %2361 = vmatprep.subr.mxu0 %v1977
  %2362 = vmatpush1.msra.mxu0 %v1976
  %2363 = vmatprep.subr.mxu0 %v1979
  %2364 = vmatpush1.msra.mxu0 %v1978
  %2365 = vmatprep.subr.mxu0 %v1981
  %2366 = vmatpush1.msra.mxu0 %v1980
  %2367 = vmatprep.subr.mxu0 %v1983
  %2368 = vmatpush1.msra.mxu0 %v1982
  %2369 = vmatprep.subr.mxu0 %v1985
  %2370 = vmatpush1.msra.mxu0 %v1984
  %2371 = vmatprep.subr.mxu0 %v1987
  %2372 = vmatpush1.msra.mxu0 %v1986
  %2373 = vmatprep.subr.mxu0 %v1989
  %2374 = vmatpush1.msra.mxu0 %v1988
  %2375 = vmatprep.subr.mxu0 %v1991
  %2376 = vmatpush1.msra.mxu0 %v1990
  %2377 = vmatprep.mubr.f32.mxu0 %v2240
  %2378 = vmatmul.mubr.f32.gmra.mrb[0].mxu0 %v2239
  %v2379 = vpop.f32.mrb[0].mxu0
  %v2380 = vadd.f32 %v2309, %v2379
  %v2381 = vpop.f32.mrb[0].mxu0
  %v2382 = vadd.f32 %v2311, %v2381
  %2383 = vdwg.mxu0
  %2384 = vmatprep.subr.mxu0 %v1993
  %2385 = vmatpush1.msra.mxu0 %v1992
  %2386 = vmatprep.subr.mxu0 %v1995
  %2387 = vmatpush1.msra.mxu0 %v1994
  %2388 = vmatprep.subr.mxu0 %v1997
  %2389 = vmatpush1.msra.mxu0 %v1996
  %2390 = vmatprep.subr.mxu0 %v1999
  %2391 = vmatpush1.msra.mxu0 %v1998
  %2392 = vmatprep.subr.mxu0 %v2001
  %2393 = vmatpush1.msra.mxu0 %v2000
  %2394 = vmatprep.subr.mxu0 %v2003
  %2395 = vmatpush1.msra.mxu0 %v2002
  %2396 = vmatprep.subr.mxu0 %v2005
  %2397 = vmatpush1.msra.mxu0 %v2004
  %2398 = vmatprep.subr.mxu0 %v2007
  %2399 = vmatpush1.msra.mxu0 %v2006
  %2400 = vmatprep.subr.mxu0 %v2009
  %2401 = vmatpush1.msra.mxu0 %v2008
  %2402 = vmatprep.subr.mxu0 %v2011
  %2403 = vmatpush1.msra.mxu0 %v2010
  %2404 = vmatprep.subr.mxu0 %v2013
  %2405 = vmatpush1.msra.mxu0 %v2012
  %2406 = vmatprep.subr.mxu0 %v2015
  %2407 = vmatpush1.msra.mxu0 %v2014
  %2408 = vmatprep.subr.mxu0 %v2017
  %2409 = vmatpush1.msra.mxu0 %v2016
  %2410 = vmatprep.subr.mxu0 %v2019
  %2411 = vmatpush1.msra.mxu0 %v2018
  %2412 = vmatprep.subr.mxu0 %v2021
  %2413 = vmatpush1.msra.mxu0 %v2020
  %2414 = vmatprep.subr.mxu0 %v2023
  %2415 = vmatpush1.msra.mxu0 %v2022
  %2416 = vmatprep.subr.mxu0 0.0
  %2417 = vmatpush1.msra.mxu0 0.0
  %2418 = vmatprep.subr.mxu0 0.0
  %2419 = vmatpush1.msra.mxu0 0.0
  %2420 = vmatprep.subr.mxu0 0.0
  %2421 = vmatpush1.msra.mxu0 0.0
  %2422 = vmatprep.subr.mxu0 0.0
  %2423 = vmatpush1.msra.mxu0 0.0
  %2424 = vmatprep.subr.mxu0 0.0
  %2425 = vmatpush1.msra.mxu0 0.0
  %2426 = vmatprep.subr.mxu0 0.0
  %2427 = vmatpush1.msra.mxu0 0.0
  %2428 = vmatprep.subr.mxu0 0.0
  %2429 = vmatpush1.msra.mxu0 0.0
  %2430 = vmatprep.subr.mxu0 0.0
  %2431 = vmatpush1.msra.mxu0 0.0
  %2432 = vmatprep.subr.mxu0 0.0
  %2433 = vmatpush1.msra.mxu0 0.0
  %2434 = vmatprep.subr.mxu0 0.0
  %2435 = vmatpush1.msra.mxu0 0.0
  %2436 = vmatprep.subr.mxu0 0.0
  %2437 = vmatpush1.msra.mxu0 0.0
  %2438 = vmatprep.subr.mxu0 0.0
  %2439 = vmatpush1.msra.mxu0 0.0
  %2440 = vmatprep.subr.mxu0 0.0
  %2441 = vmatpush1.msra.mxu0 0.0
  %2442 = vmatprep.subr.mxu0 0.0
  %2443 = vmatpush1.msra.mxu0 0.0
  %2444 = vmatprep.subr.mxu0 0.0
  %2445 = vmatpush1.msra.mxu0 0.0
  %2446 = vmatprep.subr.mxu0 0.0
  %2447 = vmatpush1.msra.mxu0 0.0
  %2448 = vmatprep.mubr.f32.mxu0 0.0
  %2449 = vmatmul.mubr.f32.gmra.mrb[0].mxu0 %v2241
  %v2450 = vpop.f32.mrb[0].mxu0
  %v2451 = vadd.f32 %v2380, %v2450
  %v2452 = vpop.f32.mrb[0].mxu0
  %v2453 = vadd.f32 %v2382, %v2452
  %2454 = vdwg.mxu0
  %v2455 = vmax.f32 %v2233, %v2451
  %v2456 = vmax.f32 %v2235, %v2453
  %v2457 = vmax.f32 %v2455, %v2456
  %v2458 = vld [vmem:[%s2] sm:$0x1]
  %v2460 = vlaneseq
  %v2461 = vshrl.u32 %v2460, 7
  %v2462 = vsub.s32 0, %v2461
  %v2463 = vrot.slane %v2458, %v2462
  %v2465 = vadd.f32 %v2457, %v2463
  %v2466 = vmax.f32 %v2465, 0.0
  %2467 = vst [vmem:[#allocation2 + $0x18] sm:$0xff] %v2466
  %v2468 = vld [vmem:[%s0 + $0x40] sm:$0xff]
  %v2469 = vld [vmem:[%s0 + $0x48] sm:$0xff]
  %v2470 = vld [vmem:[%s0 + $0x50] sm:$0xff]
  %v2471 = vld [vmem:[%s0 + $0x58] sm:$0xff]
  %v2472 = vld [vmem:[%s0 + $0x60] sm:$0xff]
  %v2473 = vld [vmem:[%s1] sm:$0xff]
  %v2474 = vld [vmem:[%s1 + $0x8] sm:$0xff]
  %v2475 = vld [vmem:[%s1 + $0x10] sm:$0xff]
  %v2476 = vld [vmem:[%s1 + $0x18] sm:$0xff]
  %v2477 = vld [vmem:[%s1 + $0x20] sm:$0xff]
  %v2478 = vld [vmem:[%s1 + $0x28] sm:$0xff]
  %v2479 = vld [vmem:[%s1 + $0x30] sm:$0xff]
  %v2480 = vld [vmem:[%s1 + $0x38] sm:$0xff]
  %v2481 = vld [vmem:[%s1 + $0x40] sm:$0xff]
  %v2482 = vld [vmem:[%s1 + $0x48] sm:$0xff]
  %v2483 = vld [vmem:[%s1 + $0x50] sm:$0xff]
  %v2484 = vld [vmem:[%s1 + $0x58] sm:$0xff]
  %v2485 = vld [vmem:[%s1 + $0x60] sm:$0xff]
  %v2486 = vld [vmem:[%s1 + $0x68] sm:$0xff]
  %v2487 = vld [vmem:[%s1 + $0x70] sm:$0xff]
  %v2488 = vld [vmem:[%s1 + $0x78] sm:$0xff]
  %v2489 = vld [vmem:[%s1 + $0x80] sm:$0xff]
  %v2490 = vld [vmem:[%s1 + $0x88] sm:$0xff]
  %v2491 = vld [vmem:[%s1 + $0x90] sm:$0xff]
  %v2492 = vld [vmem:[%s1 + $0x98] sm:$0xff]
  %v2493 = vld [vmem:[%s1 + $0xa0] sm:$0xff]
  %v2494 = vld [vmem:[%s1 + $0xa8] sm:$0xff]
  %v2495 = vld [vmem:[%s1 + $0xb0] sm:$0xff]
  %v2496 = vld [vmem:[%s1 + $0xb8] sm:$0xff]
  %v2497 = vld [vmem:[%s1 + $0xc0] sm:$0xff]
  %v2498 = vld [vmem:[%s1 + $0xc8] sm:$0xff]
  %v2499 = vld [vmem:[%s1 + $0xd0] sm:$0xff]
  %v2500 = vld [vmem:[%s1 + $0xd8] sm:$0xff]
  %v2501 = vld [vmem:[%s1 + $0xe0] sm:$0xff]
  %v2502 = vld [vmem:[%s1 + $0xe8] sm:$0xff]
  %v2503 = vld [vmem:[%s1 + $0xf0] sm:$0xff]
  %v2504 = vld [vmem:[%s1 + $0xf8] sm:$0xff]
  %v2505 = vld [vmem:[%s1 + $0x100] sm:$0xff]
  %v2506 = vld [vmem:[%s1 + $0x108] sm:$0xff]
  %v2507 = vld [vmem:[%s1 + $0x110] sm:$0xff]
  %v2508 = vld [vmem:[%s1 + $0x118] sm:$0xff]
  %v2509 = vld [vmem:[%s1 + $0x120] sm:$0xff]
  %v2510 = vld [vmem:[%s1 + $0x128] sm:$0xff]
  %v2511 = vld [vmem:[%s1 + $0x130] sm:$0xff]
  %v2512 = vld [vmem:[%s1 + $0x138] sm:$0xff]
  %v2513 = vld [vmem:[%s1 + $0x140] sm:$0xff]
  %v2514 = vld [vmem:[%s1 + $0x148] sm:$0xff]
  %v2515 = vld [vmem:[%s1 + $0x150] sm:$0xff]
  %v2516 = vld [vmem:[%s1 + $0x158] sm:$0xff]
  %v2517 = vld [vmem:[%s1 + $0x160] sm:$0xff]
  %v2518 = vld [vmem:[%s1 + $0x168] sm:$0xff]
  %v2519 = vld [vmem:[%s1 + $0x170] sm:$0xff]
  %v2520 = vld [vmem:[%s1 + $0x178] sm:$0xff]
  %v2521 = vld [vmem:[%s1 + $0x180] sm:$0xff]
  %v2522 = vld [vmem:[%s1 + $0x188] sm:$0xff]
  %v2523 = vld [vmem:[%s1 + $0x190] sm:$0xff]
  %v2524 = vld [vmem:[%s1 + $0x198] sm:$0xff]
  %v2525 = vld [vmem:[%s1 + $0x1a0] sm:$0xff]
  %v2526 = vld [vmem:[%s1 + $0x1a8] sm:$0xff]
  %v2527 = vld [vmem:[%s1 + $0x1b0] sm:$0xff]
  %v2528 = vld [vmem:[%s1 + $0x1b8] sm:$0xff]
  %v2529 = vld [vmem:[%s1 + $0x1c0] sm:$0xff]
  %v2530 = vld [vmem:[%s1 + $0x1c8] sm:$0xff]
  %v2531 = vld [vmem:[%s1 + $0x1d0] sm:$0xff]
  %v2532 = vld [vmem:[%s1 + $0x1d8] sm:$0xff]
  %v2533 = vld [vmem:[%s1 + $0x1e0] sm:$0xff]
  %v2534 = vld [vmem:[%s1 + $0x1e8] sm:$0xff]
  %v2535 = vld [vmem:[%s1 + $0x1f0] sm:$0xff]
  %v2536 = vld [vmem:[%s1 + $0x1f8] sm:$0xff]
  %v2537 = vld [vmem:[%s1 + $0x200] sm:$0xff]
  %v2538 = vld [vmem:[%s1 + $0x208] sm:$0xff]
  %v2539 = vld [vmem:[%s1 + $0x210] sm:$0xff]
  %v2540 = vld [vmem:[%s1 + $0x218] sm:$0xff]
  %v2541 = vld [vmem:[%s1 + $0x220] sm:$0xff]
  %v2542 = vld [vmem:[%s1 + $0x228] sm:$0xff]
  %v2543 = vld [vmem:[%s1 + $0x230] sm:$0xff]
  %v2544 = vld [vmem:[%s1 + $0x238] sm:$0xff]
  %v2545 = vld [vmem:[%s1 + $0x240] sm:$0xff]
  %v2546 = vld [vmem:[%s1 + $0x248] sm:$0xff]
  %v2547 = vld [vmem:[%s1 + $0x250] sm:$0xff]
  %v2548 = vld [vmem:[%s1 + $0x258] sm:$0xff]
  %v2549 = vld [vmem:[%s1 + $0x260] sm:$0xff]
  %v2550 = vld [vmem:[%s1 + $0x268] sm:$0xff]
  %v2551 = vld [vmem:[%s1 + $0x270] sm:$0xff]
  %v2552 = vld [vmem:[%s1 + $0x278] sm:$0xff]
  %v2553 = vld [vmem:[%s1 + $0x280] sm:$0xff]
  %v2554 = vld [vmem:[%s1 + $0x288] sm:$0xff]
  %v2555 = vld [vmem:[%s1 + $0x290] sm:$0xff]
  %v2556 = vld [vmem:[%s1 + $0x298] sm:$0xff]
  %v2557 = vld [vmem:[%s1 + $0x2a0] sm:$0xff]
  %v2558 = vld [vmem:[%s1 + $0x2a8] sm:$0xff]
  %v2559 = vld [vmem:[%s1 + $0x2b0] sm:$0xff]
  %v2560 = vld [vmem:[%s1 + $0x2b8] sm:$0xff]
  %v2561 = vld [vmem:[%s1 + $0x2c0] sm:$0xff]
  %v2562 = vld [vmem:[%s1 + $0x2c8] sm:$0xff]
  %v2563 = vld [vmem:[%s1 + $0x2d0] sm:$0xff]
  %v2564 = vld [vmem:[%s1 + $0x2d8] sm:$0xff]
  %v2565 = vld [vmem:[%s1 + $0x2e0] sm:$0xff]
  %v2566 = vld [vmem:[%s1 + $0x2e8] sm:$0xff]
  %v2567 = vld [vmem:[%s1 + $0x2f0] sm:$0xff]
  %v2568 = vld [vmem:[%s1 + $0x2f8] sm:$0xff]
  %v2569 = vld [vmem:[%s1 + $0x300] sm:$0xff]
  %v2570 = vld [vmem:[%s1 + $0x308] sm:$0xff]
  %v2571 = vld [vmem:[%s1 + $0x310] sm:$0xff]
  %v2572 = vld [vmem:[%s1 + $0x318] sm:$0xff]
  %v2573 = vld [vmem:[%s1 + $0x320] sm:$0xff]
  %v2574 = vld [vmem:[%s1 + $0x328] sm:$0xff]
  %v2575 = vld [vmem:[%s1 + $0x330] sm:$0xff]
  %v2576 = vld [vmem:[%s1 + $0x338] sm:$0xff]
  %v2577 = vld [vmem:[%s1 + $0x340] sm:$0xff]
  %v2578 = vld [vmem:[%s1 + $0x348] sm:$0xff]
  %v2579 = vld [vmem:[%s1 + $0x350] sm:$0xff]
  %v2580 = vld [vmem:[%s1 + $0x358] sm:$0xff]
  %v2581 = vld [vmem:[%s1 + $0x360] sm:$0xff]
  %v2582 = vld [vmem:[%s1 + $0x368] sm:$0xff]
  %v2583 = vld [vmem:[%s1 + $0x370] sm:$0xff]
  %v2584 = vld [vmem:[%s1 + $0x378] sm:$0xff]
  %v2585 = vld [vmem:[%s1 + $0x380] sm:$0xff]
  %v2586 = vld [vmem:[%s1 + $0x388] sm:$0xff]
  %v2587 = vld [vmem:[%s1 + $0x390] sm:$0xff]
  %v2588 = vld [vmem:[%s1 + $0x398] sm:$0xff]
  %v2589 = vld [vmem:[%s1 + $0x3a0] sm:$0xff]
  %v2590 = vld [vmem:[%s1 + $0x3a8] sm:$0xff]
  %v2591 = vld [vmem:[%s1 + $0x3b0] sm:$0xff]
  %v2592 = vld [vmem:[%s1 + $0x3b8] sm:$0xff]
  %v2593 = vld [vmem:[%s1 + $0x3c0] sm:$0xff]
  %v2594 = vld [vmem:[%s1 + $0x3c8] sm:$0xff]
  %v2595 = vld [vmem:[%s1 + $0x3d0] sm:$0xff]
  %v2596 = vld [vmem:[%s1 + $0x3d8] sm:$0xff]
  %v2597 = vld [vmem:[%s1 + $0x3e0] sm:$0xff]
  %v2598 = vld [vmem:[%s1 + $0x3e8] sm:$0xff]
  %v2599 = vld [vmem:[%s1 + $0x3f0] sm:$0xff]
  %v2600 = vld [vmem:[%s1 + $0x3f8] sm:$0xff]
  %v2601 = vld [vmem:[%s1 + $0x400] sm:$0xff]
  %v2602 = vld [vmem:[%s1 + $0x408] sm:$0xff]
  %v2603 = vld [vmem:[%s1 + $0x410] sm:$0xff]
  %v2604 = vld [vmem:[%s1 + $0x418] sm:$0xff]
  %v2605 = vld [vmem:[%s1 + $0x420] sm:$0xff]
  %v2606 = vld [vmem:[%s1 + $0x428] sm:$0xff]
  %v2607 = vld [vmem:[%s1 + $0x430] sm:$0xff]
  %v2608 = vld [vmem:[%s1 + $0x438] sm:$0xff]
  %v2609 = vld [vmem:[%s1 + $0x440] sm:$0xff]
  %v2610 = vld [vmem:[%s1 + $0x448] sm:$0xff]
  %v2611 = vld [vmem:[%s1 + $0x450] sm:$0xff]
  %v2612 = vld [vmem:[%s1 + $0x458] sm:$0xff]
  %v2613 = vld [vmem:[%s1 + $0x460] sm:$0xff]
  %v2614 = vld [vmem:[%s1 + $0x468] sm:$0xff]
  %v2615 = vld [vmem:[%s1 + $0x470] sm:$0xff]
  %v2616 = vld [vmem:[%s1 + $0x478] sm:$0xff]
  %v2617 = vld [vmem:[%s1 + $0x480] sm:$0xff]
  %v2618 = vld [vmem:[%s1 + $0x488] sm:$0xff]
  %v2619 = vld [vmem:[%s1 + $0x490] sm:$0xff]
  %v2620 = vld [vmem:[%s1 + $0x498] sm:$0xff]
  %v2621 = vld [vmem:[%s1 + $0x4a0] sm:$0xff]
  %v2622 = vld [vmem:[%s1 + $0x4a8] sm:$0xff]
  %v2623 = vld [vmem:[%s1 + $0x4b0] sm:$0xff]
  %v2624 = vld [vmem:[%s1 + $0x4b8] sm:$0xff]
  %v2625 = vld [vmem:[%s1 + $0x4c0] sm:$0xff]
  %v2626 = vld [vmem:[%s1 + $0x4c8] sm:$0xff]
  %v2627 = vld [vmem:[%s1 + $0x4d0] sm:$0xff]
  %v2628 = vld [vmem:[%s1 + $0x4d8] sm:$0xff]
  %v2629 = vld [vmem:[%s1 + $0x4e0] sm:$0xff]
  %v2630 = vld [vmem:[%s1 + $0x4e8] sm:$0xff]
  %v2631 = vld [vmem:[%s1 + $0x4f0] sm:$0xff]
  %v2632 = vld [vmem:[%s1 + $0x4f8] sm:$0xff]
  %2633 = vmatprep.subr.mxu0 %v2474
  %2634 = vmatpush1.msra.mxu0 %v2473
  %2635 = vmatprep.subr.mxu0 %v2476
  %2636 = vmatpush1.msra.mxu0 %v2475
  %2637 = vmatprep.subr.mxu0 %v2478
  %2638 = vmatpush1.msra.mxu0 %v2477
  %2639 = vmatprep.subr.mxu0 %v2480
  %2640 = vmatpush1.msra.mxu0 %v2479
  %2641 = vmatprep.subr.mxu0 %v2482
  %2642 = vmatpush1.msra.mxu0 %v2481
  %2643 = vmatprep.subr.mxu0 %v2484
  %2644 = vmatpush1.msra.mxu0 %v2483
  %2645 = vmatprep.subr.mxu0 %v2486
  %2646 = vmatpush1.msra.mxu0 %v2485
  %2647 = vmatprep.subr.mxu0 %v2488
  %2648 = vmatpush1.msra.mxu0 %v2487
  %2649 = vmatprep.subr.mxu0 %v2490
  %2650 = vmatpush1.msra.mxu0 %v2489
  %2651 = vmatprep.subr.mxu0 %v2492
  %2652 = vmatpush1.msra.mxu0 %v2491
  %2653 = vmatprep.subr.mxu0 %v2494
  %2654 = vmatpush1.msra.mxu0 %v2493
  %2655 = vmatprep.subr.mxu0 %v2496
  %2656 = vmatpush1.msra.mxu0 %v2495
  %2657 = vmatprep.subr.mxu0 %v2498
  %2658 = vmatpush1.msra.mxu0 %v2497
  %2659 = vmatprep.subr.mxu0 %v2500
  %2660 = vmatpush1.msra.mxu0 %v2499
  %2661 = vmatprep.subr.mxu0 %v2502
  %2662 = vmatpush1.msra.mxu0 %v2501
  %2663 = vmatprep.subr.mxu0 %v2504
  %2664 = vmatpush1.msra.mxu0 %v2503
  %2665 = vmatprep.subr.mxu0 %v2506
  %2666 = vmatpush1.msra.mxu0 %v2505
  %2667 = vmatprep.subr.mxu0 %v2508
  %2668 = vmatpush1.msra.mxu0 %v2507
  %2669 = vmatprep.subr.mxu0 %v2510
  %2670 = vmatpush1.msra.mxu0 %v2509
  %2671 = vmatprep.subr.mxu0 %v2512
  %2672 = vmatpush1.msra.mxu0 %v2511
  %2673 = vmatprep.subr.mxu0 %v2514
  %2674 = vmatpush1.msra.mxu0 %v2513
  %2675 = vmatprep.subr.mxu0 %v2516
  %2676 = vmatpush1.msra.mxu0 %v2515
  %2677 = vmatprep.subr.mxu0 %v2518
  %2678 = vmatpush1.msra.mxu0 %v2517
  %2679 = vmatprep.subr.mxu0 %v2520
  %2680 = vmatpush1.msra.mxu0 %v2519
  %2681 = vmatprep.subr.mxu0 %v2522
  %2682 = vmatpush1.msra.mxu0 %v2521
  %2683 = vmatprep.subr.mxu0 %v2524
  %2684 = vmatpush1.msra.mxu0 %v2523
  %2685 = vmatprep.subr.mxu0 %v2526
  %2686 = vmatpush1.msra.mxu0 %v2525
  %2687 = vmatprep.subr.mxu0 %v2528
  %2688 = vmatpush1.msra.mxu0 %v2527
  %2689 = vmatprep.subr.mxu0 %v2530
  %2690 = vmatpush1.msra.mxu0 %v2529
  %2691 = vmatprep.subr.mxu0 %v2532
  %2692 = vmatpush1.msra.mxu0 %v2531
  %2693 = vmatprep.subr.mxu0 %v2534
  %2694 = vmatpush1.msra.mxu0 %v2533
  %2695 = vmatprep.subr.mxu0 %v2536
  %2696 = vmatpush1.msra.mxu0 %v2535
  %2697 = vmatprep.mubr.f32.mxu0 %v2469
  %2698 = vmatmul.mubr.f32.gmra.mrb[0].mxu0 %v2468
  %v2699 = vpop.f32.mrb[0].mxu0
  %v2700 = vadd.f32 0.0, %v2699
  %v2701 = vpop.f32.mrb[0].mxu0
  %v2702 = vadd.f32 0.0, %v2701
  %2703 = vdwg.mxu0
  %2704 = vmatprep.subr.mxu0 %v2538
  %2705 = vmatpush1.msra.mxu0 %v2537
  %2706 = vmatprep.subr.mxu0 %v2540
  %2707 = vmatpush1.msra.mxu0 %v2539
  %2708 = vmatprep.subr.mxu0 %v2542
  %2709 = vmatpush1.msra.mxu0 %v2541
  %2710 = vmatprep.subr.mxu0 %v2544
  %2711 = vmatpush1.msra.mxu0 %v2543
  %2712 = vmatprep.subr.mxu0 %v2546
  %2713 = vmatpush1.msra.mxu0 %v2545
  %2714 = vmatprep.subr.mxu0 %v2548
  %2715 = vmatpush1.msra.mxu0 %v2547
  %2716 = vmatprep.subr.mxu0 %v2550
  %2717 = vmatpush1.msra.mxu0 %v2549
  %2718 = vmatprep.subr.mxu0 %v2552
  %2719 = vmatpush1.msra.mxu0 %v2551
  %2720 = vmatprep.subr.mxu0 %v2554
  %2721 = vmatpush1.msra.mxu0 %v2553
  %2722 = vmatprep.subr.mxu0 %v2556
  %2723 = vmatpush1.msra.mxu0 %v2555
  %2724 = vmatprep.subr.mxu0 %v2558
  %2725 = vmatpush1.msra.mxu0 %v2557
  %2726 = vmatprep.subr.mxu0 %v2560
  %2727 = vmatpush1.msra.mxu0 %v2559
  %2728 = vmatprep.subr.mxu0 %v2562
  %2729 = vmatpush1.msra.mxu0 %v2561
  %2730 = vmatprep.subr.mxu0 %v2564
  %2731 = vmatpush1.msra.mxu0 %v2563
  %2732 = vmatprep.subr.mxu0 %v2566
  %2733 = vmatpush1.msra.mxu0 %v2565
  %2734 = vmatprep.subr.mxu0 %v2568
  %2735 = vmatpush1.msra.mxu0 %v2567
  %2736 = vmatprep.subr.mxu0 %v2570
  %2737 = vmatpush1.msra.mxu0 %v2569
  %2738 = vmatprep.subr.mxu0 %v2572
  %2739 = vmatpush1.msra.mxu0 %v2571
  %2740 = vmatprep.subr.mxu0 %v2574
  %2741 = vmatpush1.msra.mxu0 %v2573
  %2742 = vmatprep.subr.mxu0 %v2576
  %2743 = vmatpush1.msra.mxu0 %v2575
  %2744 = vmatprep.subr.mxu0 %v2578
  %2745 = vmatpush1.msra.mxu0 %v2577
  %2746 = vmatprep.subr.mxu0 %v2580
  %2747 = vmatpush1.msra.mxu0 %v2579
  %2748 = vmatprep.subr.mxu0 %v2582
  %2749 = vmatpush1.msra.mxu0 %v2581
  %2750 = vmatprep.subr.mxu0 %v2584
  %2751 = vmatpush1.msra.mxu0 %v2583
  %2752 = vmatprep.subr.mxu0 %v2586
  %2753 = vmatpush1.msra.mxu0 %v2585
  %2754 = vmatprep.subr.mxu0 %v2588
  %2755 = vmatpush1.msra.mxu0 %v2587
  %2756 = vmatprep.subr.mxu0 %v2590
  %2757 = vmatpush1.msra.mxu0 %v2589
  %2758 = vmatprep.subr.mxu0 %v2592
  %2759 = vmatpush1.msra.mxu0 %v2591
  %2760 = vmatprep.subr.mxu0 %v2594
  %2761 = vmatpush1.msra.mxu0 %v2593
  %2762 = vmatprep.subr.mxu0 %v2596
  %2763 = vmatpush1.msra.mxu0 %v2595
  %2764 = vmatprep.subr.mxu0 %v2598
  %2765 = vmatpush1.msra.mxu0 %v2597
  %2766 = vmatprep.subr.mxu0 %v2600
  %2767 = vmatpush1.msra.mxu0 %v2599
  %2768 = vmatprep.mubr.f32.mxu0 %v2471
  %2769 = vmatmul.mubr.f32.gmra.mrb[0].mxu0 %v2470
  %v2770 = vpop.f32.mrb[0].mxu0
  %v2771 = vadd.f32 %v2700, %v2770
  %v2772 = vpop.f32.mrb[0].mxu0
  %v2773 = vadd.f32 %v2702, %v2772
  %2774 = vdwg.mxu0
  %2775 = vmatprep.subr.mxu0 %v2602
  %2776 = vmatpush1.msra.mxu0 %v2601
  %2777 = vmatprep.subr.mxu0 %v2604
  %2778 = vmatpush1.msra.mxu0 %v2603
  %2779 = vmatprep.subr.mxu0 %v2606
  %2780 = vmatpush1.msra.mxu0 %v2605
  %2781 = vmatprep.subr.mxu0 %v2608
  %2782 = vmatpush1.msra.mxu0 %v2607
  %2783 = vmatprep.subr.mxu0 %v2610
  %2784 = vmatpush1.msra.mxu0 %v2609
  %2785 = vmatprep.subr.mxu0 %v2612
  %2786 = vmatpush1.msra.mxu0 %v2611
  %2787 = vmatprep.subr.mxu0 %v2614
  %2788 = vmatpush1.msra.mxu0 %v2613
  %2789 = vmatprep.subr.mxu0 %v2616
  %2790 = vmatpush1.msra.mxu0 %v2615
  %2791 = vmatprep.subr.mxu0 %v2618
  %2792 = vmatpush1.msra.mxu0 %v2617
  %2793 = vmatprep.subr.mxu0 %v2620
  %2794 = vmatpush1.msra.mxu0 %v2619
  %2795 = vmatprep.subr.mxu0 %v2622
  %2796 = vmatpush1.msra.mxu0 %v2621
  %2797 = vmatprep.subr.mxu0 %v2624
  %2798 = vmatpush1.msra.mxu0 %v2623
  %2799 = vmatprep.subr.mxu0 %v2626
  %2800 = vmatpush1.msra.mxu0 %v2625
  %2801 = vmatprep.subr.mxu0 %v2628
  %2802 = vmatpush1.msra.mxu0 %v2627
  %2803 = vmatprep.subr.mxu0 %v2630
  %2804 = vmatpush1.msra.mxu0 %v2629
  %2805 = vmatprep.subr.mxu0 %v2632
  %2806 = vmatpush1.msra.mxu0 %v2631
  %2807 = vmatprep.subr.mxu0 0.0
  %2808 = vmatpush1.msra.mxu0 0.0
  %2809 = vmatprep.subr.mxu0 0.0
  %2810 = vmatpush1.msra.mxu0 0.0
  %2811 = vmatprep.subr.mxu0 0.0
  %2812 = vmatpush1.msra.mxu0 0.0
  %2813 = vmatprep.subr.mxu0 0.0
  %2814 = vmatpush1.msra.mxu0 0.0
  %2815 = vmatprep.subr.mxu0 0.0
  %2816 = vmatpush1.msra.mxu0 0.0
  %2817 = vmatprep.subr.mxu0 0.0
  %2818 = vmatpush1.msra.mxu0 0.0
  %2819 = vmatprep.subr.mxu0 0.0
  %2820 = vmatpush1.msra.mxu0 0.0
  %2821 = vmatprep.subr.mxu0 0.0
  %2822 = vmatpush1.msra.mxu0 0.0
  %2823 = vmatprep.subr.mxu0 0.0
  %2824 = vmatpush1.msra.mxu0 0.0
  %2825 = vmatprep.subr.mxu0 0.0
  %2826 = vmatpush1.msra.mxu0 0.0
  %2827 = vmatprep.subr.mxu0 0.0
  %2828 = vmatpush1.msra.mxu0 0.0
  %2829 = vmatprep.subr.mxu0 0.0
  %2830 = vmatpush1.msra.mxu0 0.0
  %2831 = vmatprep.subr.mxu0 0.0
  %2832 = vmatpush1.msra.mxu0 0.0
  %2833 = vmatprep.subr.mxu0 0.0
  %2834 = vmatpush1.msra.mxu0 0.0
  %2835 = vmatprep.subr.mxu0 0.0
  %2836 = vmatpush1.msra.mxu0 0.0
  %2837 = vmatprep.subr.mxu0 0.0
  %2838 = vmatpush1.msra.mxu0 0.0
  %2839 = vmatprep.mubr.f32.mxu0 0.0
  %2840 = vmatmul.mubr.f32.gmra.mrb[0].mxu0 %v2472
  %v2841 = vpop.f32.mrb[0].mxu0
  %v2842 = vadd.f32 %v2771, %v2841
  %v2843 = vpop.f32.mrb[0].mxu0
  %v2844 = vadd.f32 %v2773, %v2843
  %2845 = vdwg.mxu0
  %v2846 = vld [vmem:[%s0 + $0x48] sm:$0xff]
  %v2847 = vld [vmem:[%s0 + $0x50] sm:$0xff]
  %v2848 = vld [vmem:[%s0 + $0x58] sm:$0xff]
  %v2849 = vld [vmem:[%s0 + $0x60] sm:$0xff]
  %v2850 = vld [vmem:[%s0 + $0x68] sm:$0xff]
  %2851 = vmatprep.subr.mxu0 %v2474
  %2852 = vmatpush1.msra.mxu0 %v2473
  %2853 = vmatprep.subr.mxu0 %v2476
  %2854 = vmatpush1.msra.mxu0 %v2475
  %2855 = vmatprep.subr.mxu0 %v2478
  %2856 = vmatpush1.msra.mxu0 %v2477
  %2857 = vmatprep.subr.mxu0 %v2480
  %2858 = vmatpush1.msra.mxu0 %v2479
  %2859 = vmatprep.subr.mxu0 %v2482
  %2860 = vmatpush1.msra.mxu0 %v2481
  %2861 = vmatprep.subr.mxu0 %v2484
  %2862 = vmatpush1.msra.mxu0 %v2483
  %2863 = vmatprep.subr.mxu0 %v2486
  %2864 = vmatpush1.msra.mxu0 %v2485
  %2865 = vmatprep.subr.mxu0 %v2488
  %2866 = vmatpush1.msra.mxu0 %v2487
  %2867 = vmatprep.subr.mxu0 %v2490
  %2868 = vmatpush1.msra.mxu0 %v2489
  %2869 = vmatprep.subr.mxu0 %v2492
  %2870 = vmatpush1.msra.mxu0 %v2491
  %2871 = vmatprep.subr.mxu0 %v2494
  %2872 = vmatpush1.msra.mxu0 %v2493
  %2873 = vmatprep.subr.mxu0 %v2496
  %2874 = vmatpush1.msra.mxu0 %v2495
  %2875 = vmatprep.subr.mxu0 %v2498
  %2876 = vmatpush1.msra.mxu0 %v2497
  %2877 = vmatprep.subr.mxu0 %v2500
  %2878 = vmatpush1.msra.mxu0 %v2499
  %2879 = vmatprep.subr.mxu0 %v2502
  %2880 = vmatpush1.msra.mxu0 %v2501
  %2881 = vmatprep.subr.mxu0 %v2504
  %2882 = vmatpush1.msra.mxu0 %v2503
  %2883 = vmatprep.subr.mxu0 %v2506
  %2884 = vmatpush1.msra.mxu0 %v2505
  %2885 = vmatprep.subr.mxu0 %v2508
  %2886 = vmatpush1.msra.mxu0 %v2507
  %2887 = vmatprep.subr.mxu0 %v2510
  %2888 = vmatpush1.msra.mxu0 %v2509
  %2889 = vmatprep.subr.mxu0 %v2512
  %2890 = vmatpush1.msra.mxu0 %v2511
  %2891 = vmatprep.subr.mxu0 %v2514
  %2892 = vmatpush1.msra.mxu0 %v2513
  %2893 = vmatprep.subr.mxu0 %v2516
  %2894 = vmatpush1.msra.mxu0 %v2515
  %2895 = vmatprep.subr.mxu0 %v2518
  %2896 = vmatpush1.msra.mxu0 %v2517
  %2897 = vmatprep.subr.mxu0 %v2520
  %2898 = vmatpush1.msra.mxu0 %v2519
  %2899 = vmatprep.subr.mxu0 %v2522
  %2900 = vmatpush1.msra.mxu0 %v2521
  %2901 = vmatprep.subr.mxu0 %v2524
  %2902 = vmatpush1.msra.mxu0 %v2523
  %2903 = vmatprep.subr.mxu0 %v2526
  %2904 = vmatpush1.msra.mxu0 %v2525
  %2905 = vmatprep.subr.mxu0 %v2528
  %2906 = vmatpush1.msra.mxu0 %v2527
  %2907 = vmatprep.subr.mxu0 %v2530
  %2908 = vmatpush1.msra.mxu0 %v2529
  %2909 = vmatprep.subr.mxu0 %v2532
  %2910 = vmatpush1.msra.mxu0 %v2531
  %2911 = vmatprep.subr.mxu0 %v2534
  %2912 = vmatpush1.msra.mxu0 %v2533
  %2913 = vmatprep.subr.mxu0 %v2536
  %2914 = vmatpush1.msra.mxu0 %v2535
  %2915 = vmatprep.mubr.f32.mxu0 %v2847
  %2916 = vmatmul.mubr.f32.gmra.mrb[0].mxu0 %v2846
  %v2917 = vpop.f32.mrb[0].mxu0
  %v2918 = vadd.f32 0.0, %v2917
  %v2919 = vpop.f32.mrb[0].mxu0
  %v2920 = vadd.f32 0.0, %v2919
  %2921 = vdwg.mxu0
  %2922 = vmatprep.subr.mxu0 %v2538
  %2923 = vmatpush1.msra.mxu0 %v2537
  %2924 = vmatprep.subr.mxu0 %v2540
  %2925 = vmatpush1.msra.mxu0 %v2539
  %2926 = vmatprep.subr.mxu0 %v2542
  %2927 = vmatpush1.msra.mxu0 %v2541
  %2928 = vmatprep.subr.mxu0 %v2544
  %2929 = vmatpush1.msra.mxu0 %v2543
  %2930 = vmatprep.subr.mxu0 %v2546
  %2931 = vmatpush1.msra.mxu0 %v2545
  %2932 = vmatprep.subr.mxu0 %v2548
  %2933 = vmatpush1.msra.mxu0 %v2547
  %2934 = vmatprep.subr.mxu0 %v2550
  %2935 = vmatpush1.msra.mxu0 %v2549
  %2936 = vmatprep.subr.mxu0 %v2552
  %2937 = vmatpush1.msra.mxu0 %v2551
  %2938 = vmatprep.subr.mxu0 %v2554
  %2939 = vmatpush1.msra.mxu0 %v2553
  %2940 = vmatprep.subr.mxu0 %v2556
  %2941 = vmatpush1.msra.mxu0 %v2555
  %2942 = vmatprep.subr.mxu0 %v2558
  %2943 = vmatpush1.msra.mxu0 %v2557
  %2944 = vmatprep.subr.mxu0 %v2560
  %2945 = vmatpush1.msra.mxu0 %v2559
  %2946 = vmatprep.subr.mxu0 %v2562
  %2947 = vmatpush1.msra.mxu0 %v2561
  %2948 = vmatprep.subr.mxu0 %v2564
  %2949 = vmatpush1.msra.mxu0 %v2563
  %2950 = vmatprep.subr.mxu0 %v2566
  %2951 = vmatpush1.msra.mxu0 %v2565
  %2952 = vmatprep.subr.mxu0 %v2568
  %2953 = vmatpush1.msra.mxu0 %v2567
  %2954 = vmatprep.subr.mxu0 %v2570
  %2955 = vmatpush1.msra.mxu0 %v2569
  %2956 = vmatprep.subr.mxu0 %v2572
  %2957 = vmatpush1.msra.mxu0 %v2571
  %2958 = vmatprep.subr.mxu0 %v2574
  %2959 = vmatpush1.msra.mxu0 %v2573
  %2960 = vmatprep.subr.mxu0 %v2576
  %2961 = vmatpush1.msra.mxu0 %v2575
  %2962 = vmatprep.subr.mxu0 %v2578
  %2963 = vmatpush1.msra.mxu0 %v2577
  %2964 = vmatprep.subr.mxu0 %v2580
  %2965 = vmatpush1.msra.mxu0 %v2579
  %2966 = vmatprep.subr.mxu0 %v2582
  %2967 = vmatpush1.msra.mxu0 %v2581
  %2968 = vmatprep.subr.mxu0 %v2584
  %2969 = vmatpush1.msra.mxu0 %v2583
  %2970 = vmatprep.subr.mxu0 %v2586
  %2971 = vmatpush1.msra.mxu0 %v2585
  %2972 = vmatprep.subr.mxu0 %v2588
  %2973 = vmatpush1.msra.mxu0 %v2587
  %2974 = vmatprep.subr.mxu0 %v2590
  %2975 = vmatpush1.msra.mxu0 %v2589
  %2976 = vmatprep.subr.mxu0 %v2592
  %2977 = vmatpush1.msra.mxu0 %v2591
  %2978 = vmatprep.subr.mxu0 %v2594
  %2979 = vmatpush1.msra.mxu0 %v2593
  %2980 = vmatprep.subr.mxu0 %v2596
  %2981 = vmatpush1.msra.mxu0 %v2595
  %2982 = vmatprep.subr.mxu0 %v2598
  %2983 = vmatpush1.msra.mxu0 %v2597
  %2984 = vmatprep.subr.mxu0 %v2600
  %2985 = vmatpush1.msra.mxu0 %v2599
  %2986 = vmatprep.mubr.f32.mxu0 %v2849
  %2987 = vmatmul.mubr.f32.gmra.mrb[0].mxu0 %v2848
  %v2988 = vpop.f32.mrb[0].mxu0
  %v2989 = vadd.f32 %v2918, %v2988
  %v2990 = vpop.f32.mrb[0].mxu0
  %v2991 = vadd.f32 %v2920, %v2990
  %2992 = vdwg.mxu0
  %2993 = vmatprep.subr.mxu0 %v2602
  %2994 = vmatpush1.msra.mxu0 %v2601
  %2995 = vmatprep.subr.mxu0 %v2604
  %2996 = vmatpush1.msra.mxu0 %v2603
  %2997 = vmatprep.subr.mxu0 %v2606
  %2998 = vmatpush1.msra.mxu0 %v2605
  %2999 = vmatprep.subr.mxu0 %v2608
  %3000 = vmatpush1.msra.mxu0 %v2607
  %3001 = vmatprep.subr.mxu0 %v2610
  %3002 = vmatpush1.msra.mxu0 %v2609
  %3003 = vmatprep.subr.mxu0 %v2612
  %3004 = vmatpush1.msra.mxu0 %v2611
  %3005 = vmatprep.subr.mxu0 %v2614
  %3006 = vmatpush1.msra.mxu0 %v2613
  %3007 = vmatprep.subr.mxu0 %v2616
  %3008 = vmatpush1.msra.mxu0 %v2615
  %3009 = vmatprep.subr.mxu0 %v2618
  %3010 = vmatpush1.msra.mxu0 %v2617
  %3011 = vmatprep.subr.mxu0 %v2620
  %3012 = vmatpush1.msra.mxu0 %v2619
  %3013 = vmatprep.subr.mxu0 %v2622
  %3014 = vmatpush1.msra.mxu0 %v2621
  %3015 = vmatprep.subr.mxu0 %v2624
  %3016 = vmatpush1.msra.mxu0 %v2623
  %3017 = vmatprep.subr.mxu0 %v2626
  %3018 = vmatpush1.msra.mxu0 %v2625
  %3019 = vmatprep.subr.mxu0 %v2628
  %3020 = vmatpush1.msra.mxu0 %v2627
  %3021 = vmatprep.subr.mxu0 %v2630
  %3022 = vmatpush1.msra.mxu0 %v2629
  %3023 = vmatprep.subr.mxu0 %v2632
  %3024 = vmatpush1.msra.mxu0 %v2631
  %3025 = vmatprep.subr.mxu0 0.0
  %3026 = vmatpush1.msra.mxu0 0.0
  %3027 = vmatprep.subr.mxu0 0.0
  %3028 = vmatpush1.msra.mxu0 0.0
  %3029 = vmatprep.subr.mxu0 0.0
  %3030 = vmatpush1.msra.mxu0 0.0
  %3031 = vmatprep.subr.mxu0 0.0
  %3032 = vmatpush1.msra.mxu0 0.0
  %3033 = vmatprep.subr.mxu0 0.0
  %3034 = vmatpush1.msra.mxu0 0.0
  %3035 = vmatprep.subr.mxu0 0.0
  %3036 = vmatpush1.msra.mxu0 0.0
  %3037 = vmatprep.subr.mxu0 0.0
  %3038 = vmatpush1.msra.mxu0 0.0
  %3039 = vmatprep.subr.mxu0 0.0
  %3040 = vmatpush1.msra.mxu0 0.0
  %3041 = vmatprep.subr.mxu0 0.0
  %3042 = vmatpush1.msra.mxu0 0.0
  %3043 = vmatprep.subr.mxu0 0.0
  %3044 = vmatpush1.msra.mxu0 0.0
  %3045 = vmatprep.subr.mxu0 0.0
  %3046 = vmatpush1.msra.mxu0 0.0
  %3047 = vmatprep.subr.mxu0 0.0
  %3048 = vmatpush1.msra.mxu0 0.0
  %3049 = vmatprep.subr.mxu0 0.0
  %3050 = vmatpush1.msra.mxu0 0.0
  %3051 = vmatprep.subr.mxu0 0.0
  %3052 = vmatpush1.msra.mxu0 0.0
  %3053 = vmatprep.subr.mxu0 0.0
  %3054 = vmatpush1.msra.mxu0 0.0
  %3055 = vmatprep.subr.mxu0 0.0
  %3056 = vmatpush1.msra.mxu0 0.0
  %3057 = vmatprep.mubr.f32.mxu0 0.0
  %3058 = vmatmul.mubr.f32.gmra.mrb[0].mxu0 %v2850
  %v3059 = vpop.f32.mrb[0].mxu0
  %v3060 = vadd.f32 %v2989, %v3059
  %v3061 = vpop.f32.mrb[0].mxu0
  %v3062 = vadd.f32 %v2991, %v3061
  %3063 = vdwg.mxu0
  %v3064 = vmax.f32 %v2842, %v3060
  %v3065 = vmax.f32 %v2844, %v3062
  %v3066 = vmax.f32 %v3064, %v3065
  %v3067 = vld [vmem:[%s2] sm:$0x1]
  %v3069 = vlaneseq
  %v3070 = vshrl.u32 %v3069, 7
  %v3071 = vsub.s32 0, %v3070
  %v3072 = vrot.slane %v3067, %v3071
  %v3074 = vadd.f32 %v3066, %v3072
  %v3075 = vmax.f32 %v3074, 0.0
  %3076 = vst [vmem:[#allocation2 + $0x20] sm:$0xff] %v3075
  %v3077 = vld [vmem:[%s0 + $0x50] sm:$0xff]
  %v3078 = vld [vmem:[%s0 + $0x58] sm:$0xff]
  %v3079 = vld [vmem:[%s0 + $0x60] sm:$0xff]
  %v3080 = vld [vmem:[%s0 + $0x68] sm:$0xff]
  %v3081 = vld [vmem:[%s0 + $0x70] sm:$0xff]
  %v3082 = vld [vmem:[%s1] sm:$0xff]
  %v3083 = vld [vmem:[%s1 + $0x8] sm:$0xff]
  %v3084 = vld [vmem:[%s1 + $0x10] sm:$0xff]
  %v3085 = vld [vmem:[%s1 + $0x18] sm:$0xff]
  %v3086 = vld [vmem:[%s1 + $0x20] sm:$0xff]
  %v3087 = vld [vmem:[%s1 + $0x28] sm:$0xff]
  %v3088 = vld [vmem:[%s1 + $0x30] sm:$0xff]
  %v3089 = vld [vmem:[%s1 + $0x38] sm:$0xff]
  %v3090 = vld [vmem:[%s1 + $0x40] sm:$0xff]
  %v3091 = vld [vmem:[%s1 + $0x48] sm:$0xff]
  %v3092 = vld [vmem:[%s1 + $0x50] sm:$0xff]
  %v3093 = vld [vmem:[%s1 + $0x58] sm:$0xff]
  %v3094 = vld [vmem:[%s1 + $0x60] sm:$0xff]
  %v3095 = vld [vmem:[%s1 + $0x68] sm:$0xff]
  %v3096 = vld [vmem:[%s1 + $0x70] sm:$0xff]
  %v3097 = vld [vmem:[%s1 + $0x78] sm:$0xff]
  %v3098 = vld [vmem:[%s1 + $0x80] sm:$0xff]
  %v3099 = vld [vmem:[%s1 + $0x88] sm:$0xff]
  %v3100 = vld [vmem:[%s1 + $0x90] sm:$0xff]
  %v3101 = vld [vmem:[%s1 + $0x98] sm:$0xff]
  %v3102 = vld [vmem:[%s1 + $0xa0] sm:$0xff]
  %v3103 = vld [vmem:[%s1 + $0xa8] sm:$0xff]
  %v3104 = vld [vmem:[%s1 + $0xb0] sm:$0xff]
  %v3105 = vld [vmem:[%s1 + $0xb8] sm:$0xff]
  %v3106 = vld [vmem:[%s1 + $0xc0] sm:$0xff]
  %v3107 = vld [vmem:[%s1 + $0xc8] sm:$0xff]
  %v3108 = vld [vmem:[%s1 + $0xd0] sm:$0xff]
  %v3109 = vld [vmem:[%s1 + $0xd8] sm:$0xff]
  %v3110 = vld [vmem:[%s1 + $0xe0] sm:$0xff]
  %v3111 = vld [vmem:[%s1 + $0xe8] sm:$0xff]
  %v3112 = vld [vmem:[%s1 + $0xf0] sm:$0xff]
  %v3113 = vld [vmem:[%s1 + $0xf8] sm:$0xff]
  %v3114 = vld [vmem:[%s1 + $0x100] sm:$0xff]
  %v3115 = vld [vmem:[%s1 + $0x108] sm:$0xff]
  %v3116 = vld [vmem:[%s1 + $0x110] sm:$0xff]
  %v3117 = vld [vmem:[%s1 + $0x118] sm:$0xff]
  %v3118 = vld [vmem:[%s1 + $0x120] sm:$0xff]
  %v3119 = vld [vmem:[%s1 + $0x128] sm:$0xff]
  %v3120 = vld [vmem:[%s1 + $0x130] sm:$0xff]
  %v3121 = vld [vmem:[%s1 + $0x138] sm:$0xff]
  %v3122 = vld [vmem:[%s1 + $0x140] sm:$0xff]
  %v3123 = vld [vmem:[%s1 + $0x148] sm:$0xff]
  %v3124 = vld [vmem:[%s1 + $0x150] sm:$0xff]
  %v3125 = vld [vmem:[%s1 + $0x158] sm:$0xff]
  %v3126 = vld [vmem:[%s1 + $0x160] sm:$0xff]
  %v3127 = vld [vmem:[%s1 + $0x168] sm:$0xff]
  %v3128 = vld [vmem:[%s1 + $0x170] sm:$0xff]
  %v3129 = vld [vmem:[%s1 + $0x178] sm:$0xff]
  %v3130 = vld [vmem:[%s1 + $0x180] sm:$0xff]
  %v3131 = vld [vmem:[%s1 + $0x188] sm:$0xff]
  %v3132 = vld [vmem:[%s1 + $0x190] sm:$0xff]
  %v3133 = vld [vmem:[%s1 + $0x198] sm:$0xff]
  %v3134 = vld [vmem:[%s1 + $0x1a0] sm:$0xff]
  %v3135 = vld [vmem:[%s1 + $0x1a8] sm:$0xff]
  %v3136 = vld [vmem:[%s1 + $0x1b0] sm:$0xff]
  %v3137 = vld [vmem:[%s1 + $0x1b8] sm:$0xff]
  %v3138 = vld [vmem:[%s1 + $0x1c0] sm:$0xff]
  %v3139 = vld [vmem:[%s1 + $0x1c8] sm:$0xff]
  %v3140 = vld [vmem:[%s1 + $0x1d0] sm:$0xff]
  %v3141 = vld [vmem:[%s1 + $0x1d8] sm:$0xff]
  %v3142 = vld [vmem:[%s1 + $0x1e0] sm:$0xff]
  %v3143 = vld [vmem:[%s1 + $0x1e8] sm:$0xff]
  %v3144 = vld [vmem:[%s1 + $0x1f0] sm:$0xff]
  %v3145 = vld [vmem:[%s1 + $0x1f8] sm:$0xff]
  %v3146 = vld [vmem:[%s1 + $0x200] sm:$0xff]
  %v3147 = vld [vmem:[%s1 + $0x208] sm:$0xff]
  %v3148 = vld [vmem:[%s1 + $0x210] sm:$0xff]
  %v3149 = vld [vmem:[%s1 + $0x218] sm:$0xff]
  %v3150 = vld [vmem:[%s1 + $0x220] sm:$0xff]
  %v3151 = vld [vmem:[%s1 + $0x228] sm:$0xff]
  %v3152 = vld [vmem:[%s1 + $0x230] sm:$0xff]
  %v3153 = vld [vmem:[%s1 + $0x238] sm:$0xff]
  %v3154 = vld [vmem:[%s1 + $0x240] sm:$0xff]
  %v3155 = vld [vmem:[%s1 + $0x248] sm:$0xff]
  %v3156 = vld [vmem:[%s1 + $0x250] sm:$0xff]
  %v3157 = vld [vmem:[%s1 + $0x258] sm:$0xff]
  %v3158 = vld [vmem:[%s1 + $0x260] sm:$0xff]
  %v3159 = vld [vmem:[%s1 + $0x268] sm:$0xff]
  %v3160 = vld [vmem:[%s1 + $0x270] sm:$0xff]
  %v3161 = vld [vmem:[%s1 + $0x278] sm:$0xff]
  %v3162 = vld [vmem:[%s1 + $0x280] sm:$0xff]
  %v3163 = vld [vmem:[%s1 + $0x288] sm:$0xff]
  %v3164 = vld [vmem:[%s1 + $0x290] sm:$0xff]
  %v3165 = vld [vmem:[%s1 + $0x298] sm:$0xff]
  %v3166 = vld [vmem:[%s1 + $0x2a0] sm:$0xff]
  %v3167 = vld [vmem:[%s1 + $0x2a8] sm:$0xff]
  %v3168 = vld [vmem:[%s1 + $0x2b0] sm:$0xff]
  %v3169 = vld [vmem:[%s1 + $0x2b8] sm:$0xff]
  %v3170 = vld [vmem:[%s1 + $0x2c0] sm:$0xff]
  %v3171 = vld [vmem:[%s1 + $0x2c8] sm:$0xff]
  %v3172 = vld [vmem:[%s1 + $0x2d0] sm:$0xff]
  %v3173 = vld [vmem:[%s1 + $0x2d8] sm:$0xff]
  %v3174 = vld [vmem:[%s1 + $0x2e0] sm:$0xff]
  %v3175 = vld [vmem:[%s1 + $0x2e8] sm:$0xff]
  %v3176 = vld [vmem:[%s1 + $0x2f0] sm:$0xff]
  %v3177 = vld [vmem:[%s1 + $0x2f8] sm:$0xff]
  %v3178 = vld [vmem:[%s1 + $0x300] sm:$0xff]
  %v3179 = vld [vmem:[%s1 + $0x308] sm:$0xff]
  %v3180 = vld [vmem:[%s1 + $0x310] sm:$0xff]
  %v3181 = vld [vmem:[%s1 + $0x318] sm:$0xff]
  %v3182 = vld [vmem:[%s1 + $0x320] sm:$0xff]
  %v3183 = vld [vmem:[%s1 + $0x328] sm:$0xff]
  %v3184 = vld [vmem:[%s1 + $0x330] sm:$0xff]
  %v3185 = vld [vmem:[%s1 + $0x338] sm:$0xff]
  %v3186 = vld [vmem:[%s1 + $0x340] sm:$0xff]
  %v3187 = vld [vmem:[%s1 + $0x348] sm:$0xff]
  %v3188 = vld [vmem:[%s1 + $0x350] sm:$0xff]
  %v3189 = vld [vmem:[%s1 + $0x358] sm:$0xff]
  %v3190 = vld [vmem:[%s1 + $0x360] sm:$0xff]
  %v3191 = vld [vmem:[%s1 + $0x368] sm:$0xff]
  %v3192 = vld [vmem:[%s1 + $0x370] sm:$0xff]
  %v3193 = vld [vmem:[%s1 + $0x378] sm:$0xff]
  %v3194 = vld [vmem:[%s1 + $0x380] sm:$0xff]
  %v3195 = vld [vmem:[%s1 + $0x388] sm:$0xff]
  %v3196 = vld [vmem:[%s1 + $0x390] sm:$0xff]
  %v3197 = vld [vmem:[%s1 + $0x398] sm:$0xff]
  %v3198 = vld [vmem:[%s1 + $0x3a0] sm:$0xff]
  %v3199 = vld [vmem:[%s1 + $0x3a8] sm:$0xff]
  %v3200 = vld [vmem:[%s1 + $0x3b0] sm:$0xff]
  %v3201 = vld [vmem:[%s1 + $0x3b8] sm:$0xff]
  %v3202 = vld [vmem:[%s1 + $0x3c0] sm:$0xff]
  %v3203 = vld [vmem:[%s1 + $0x3c8] sm:$0xff]
  %v3204 = vld [vmem:[%s1 + $0x3d0] sm:$0xff]
  %v3205 = vld [vmem:[%s1 + $0x3d8] sm:$0xff]
  %v3206 = vld [vmem:[%s1 + $0x3e0] sm:$0xff]
  %v3207 = vld [vmem:[%s1 + $0x3e8] sm:$0xff]
  %v3208 = vld [vmem:[%s1 + $0x3f0] sm:$0xff]
  %v3209 = vld [vmem:[%s1 + $0x3f8] sm:$0xff]
  %v3210 = vld [vmem:[%s1 + $0x400] sm:$0xff]
  %v3211 = vld [vmem:[%s1 + $0x408] sm:$0xff]
  %v3212 = vld [vmem:[%s1 + $0x410] sm:$0xff]
  %v3213 = vld [vmem:[%s1 + $0x418] sm:$0xff]
  %v3214 = vld [vmem:[%s1 + $0x420] sm:$0xff]
  %v3215 = vld [vmem:[%s1 + $0x428] sm:$0xff]
  %v3216 = vld [vmem:[%s1 + $0x430] sm:$0xff]
  %v3217 = vld [vmem:[%s1 + $0x438] sm:$0xff]
  %v3218 = vld [vmem:[%s1 + $0x440] sm:$0xff]
  %v3219 = vld [vmem:[%s1 + $0x448] sm:$0xff]
  %v3220 = vld [vmem:[%s1 + $0x450] sm:$0xff]
  %v3221 = vld [vmem:[%s1 + $0x458] sm:$0xff]
  %v3222 = vld [vmem:[%s1 + $0x460] sm:$0xff]
  %v3223 = vld [vmem:[%s1 + $0x468] sm:$0xff]
  %v3224 = vld [vmem:[%s1 + $0x470] sm:$0xff]
  %v3225 = vld [vmem:[%s1 + $0x478] sm:$0xff]
  %v3226 = vld [vmem:[%s1 + $0x480] sm:$0xff]
  %v3227 = vld [vmem:[%s1 + $0x488] sm:$0xff]
  %v3228 = vld [vmem:[%s1 + $0x490] sm:$0xff]
  %v3229 = vld [vmem:[%s1 + $0x498] sm:$0xff]
  %v3230 = vld [vmem:[%s1 + $0x4a0] sm:$0xff]
  %v3231 = vld [vmem:[%s1 + $0x4a8] sm:$0xff]
  %v3232 = vld [vmem:[%s1 + $0x4b0] sm:$0xff]
  %v3233 = vld [vmem:[%s1 + $0x4b8] sm:$0xff]
  %v3234 = vld [vmem:[%s1 + $0x4c0] sm:$0xff]
  %v3235 = vld [vmem:[%s1 + $0x4c8] sm:$0xff]
  %v3236 = vld [vmem:[%s1 + $0x4d0] sm:$0xff]
  %v3237 = vld [vmem:[%s1 + $0x4d8] sm:$0xff]
  %v3238 = vld [vmem:[%s1 + $0x4e0] sm:$0xff]
  %v3239 = vld [vmem:[%s1 + $0x4e8] sm:$0xff]
  %v3240 = vld [vmem:[%s1 + $0x4f0] sm:$0xff]
  %v3241 = vld [vmem:[%s1 + $0x4f8] sm:$0xff]
  %3242 = vmatprep.subr.mxu0 %v3083
  %3243 = vmatpush1.msra.mxu0 %v3082
  %3244 = vmatprep.subr.mxu0 %v3085
  %3245 = vmatpush1.msra.mxu0 %v3084
  %3246 = vmatprep.subr.mxu0 %v3087
  %3247 = vmatpush1.msra.mxu0 %v3086
  %3248 = vmatprep.subr.mxu0 %v3089
  %3249 = vmatpush1.msra.mxu0 %v3088
  %3250 = vmatprep.subr.mxu0 %v3091
  %3251 = vmatpush1.msra.mxu0 %v3090
  %3252 = vmatprep.subr.mxu0 %v3093
  %3253 = vmatpush1.msra.mxu0 %v3092
  %3254 = vmatprep.subr.mxu0 %v3095
  %3255 = vmatpush1.msra.mxu0 %v3094
  %3256 = vmatprep.subr.mxu0 %v3097
  %3257 = vmatpush1.msra.mxu0 %v3096
  %3258 = vmatprep.subr.mxu0 %v3099
  %3259 = vmatpush1.msra.mxu0 %v3098
  %3260 = vmatprep.subr.mxu0 %v3101
  %3261 = vmatpush1.msra.mxu0 %v3100
  %3262 = vmatprep.subr.mxu0 %v3103
  %3263 = vmatpush1.msra.mxu0 %v3102
  %3264 = vmatprep.subr.mxu0 %v3105
  %3265 = vmatpush1.msra.mxu0 %v3104
  %3266 = vmatprep.subr.mxu0 %v3107
  %3267 = vmatpush1.msra.mxu0 %v3106
  %3268 = vmatprep.subr.mxu0 %v3109
  %3269 = vmatpush1.msra.mxu0 %v3108
  %3270 = vmatprep.subr.mxu0 %v3111
  %3271 = vmatpush1.msra.mxu0 %v3110
  %3272 = vmatprep.subr.mxu0 %v3113
  %3273 = vmatpush1.msra.mxu0 %v3112
  %3274 = vmatprep.subr.mxu0 %v3115
  %3275 = vmatpush1.msra.mxu0 %v3114
  %3276 = vmatprep.subr.mxu0 %v3117
  %3277 = vmatpush1.msra.mxu0 %v3116
  %3278 = vmatprep.subr.mxu0 %v3119
  %3279 = vmatpush1.msra.mxu0 %v3118
  %3280 = vmatprep.subr.mxu0 %v3121
  %3281 = vmatpush1.msra.mxu0 %v3120
  %3282 = vmatprep.subr.mxu0 %v3123
  %3283 = vmatpush1.msra.mxu0 %v3122
  %3284 = vmatprep.subr.mxu0 %v3125
  %3285 = vmatpush1.msra.mxu0 %v3124
  %3286 = vmatprep.subr.mxu0 %v3127
  %3287 = vmatpush1.msra.mxu0 %v3126
  %3288 = vmatprep.subr.mxu0 %v3129
  %3289 = vmatpush1.msra.mxu0 %v3128
  %3290 = vmatprep.subr.mxu0 %v3131
  %3291 = vmatpush1.msra.mxu0 %v3130
  %3292 = vmatprep.subr.mxu0 %v3133
  %3293 = vmatpush1.msra.mxu0 %v3132
  %3294 = vmatprep.subr.mxu0 %v3135
  %3295 = vmatpush1.msra.mxu0 %v3134
  %3296 = vmatprep.subr.mxu0 %v3137
  %3297 = vmatpush1.msra.mxu0 %v3136
  %3298 = vmatprep.subr.mxu0 %v3139
  %3299 = vmatpush1.msra.mxu0 %v3138
  %3300 = vmatprep.subr.mxu0 %v3141
  %3301 = vmatpush1.msra.mxu0 %v3140
  %3302 = vmatprep.subr.mxu0 %v3143
  %3303 = vmatpush1.msra.mxu0 %v3142
  %3304 = vmatprep.subr.mxu0 %v3145
  %3305 = vmatpush1.msra.mxu0 %v3144
  %3306 = vmatprep.mubr.f32.mxu0 %v3078
  %3307 = vmatmul.mubr.f32.gmra.mrb[0].mxu0 %v3077
  %v3308 = vpop.f32.mrb[0].mxu0
  %v3309 = vadd.f32 0.0, %v3308
  %v3310 = vpop.f32.mrb[0].mxu0
  %v3311 = vadd.f32 0.0, %v3310
  %3312 = vdwg.mxu0
  %3313 = vmatprep.subr.mxu0 %v3147
  %3314 = vmatpush1.msra.mxu0 %v3146
  %3315 = vmatprep.subr.mxu0 %v3149
  %3316 = vmatpush1.msra.mxu0 %v3148
  %3317 = vmatprep.subr.mxu0 %v3151
  %3318 = vmatpush1.msra.mxu0 %v3150
  %3319 = vmatprep.subr.mxu0 %v3153
  %3320 = vmatpush1.msra.mxu0 %v3152
  %3321 = vmatprep.subr.mxu0 %v3155
  %3322 = vmatpush1.msra.mxu0 %v3154
  %3323 = vmatprep.subr.mxu0 %v3157
  %3324 = vmatpush1.msra.mxu0 %v3156
  %3325 = vmatprep.subr.mxu0 %v3159
  %3326 = vmatpush1.msra.mxu0 %v3158
  %3327 = vmatprep.subr.mxu0 %v3161
  %3328 = vmatpush1.msra.mxu0 %v3160
  %3329 = vmatprep.subr.mxu0 %v3163
  %3330 = vmatpush1.msra.mxu0 %v3162
  %3331 = vmatprep.subr.mxu0 %v3165
  %3332 = vmatpush1.msra.mxu0 %v3164
  %3333 = vmatprep.subr.mxu0 %v3167
  %3334 = vmatpush1.msra.mxu0 %v3166
  %3335 = vmatprep.subr.mxu0 %v3169
  %3336 = vmatpush1.msra.mxu0 %v3168
  %3337 = vmatprep.subr.mxu0 %v3171
  %3338 = vmatpush1.msra.mxu0 %v3170
  %3339 = vmatprep.subr.mxu0 %v3173
  %3340 = vmatpush1.msra.mxu0 %v3172
  %3341 = vmatprep.subr.mxu0 %v3175
  %3342 = vmatpush1.msra.mxu0 %v3174
  %3343 = vmatprep.subr.mxu0 %v3177
  %3344 = vmatpush1.msra.mxu0 %v3176
  %3345 = vmatprep.subr.mxu0 %v3179
  %3346 = vmatpush1.msra.mxu0 %v3178
  %3347 = vmatprep.subr.mxu0 %v3181
  %3348 = vmatpush1.msra.mxu0 %v3180
  %3349 = vmatprep.subr.mxu0 %v3183
  %3350 = vmatpush1.msra.mxu0 %v3182
  %3351 = vmatprep.subr.mxu0 %v3185
  %3352 = vmatpush1.msra.mxu0 %v3184
  %3353 = vmatprep.subr.mxu0 %v3187
  %3354 = vmatpush1.msra.mxu0 %v3186
  %3355 = vmatprep.subr.mxu0 %v3189
  %3356 = vmatpush1.msra.mxu0 %v3188
  %3357 = vmatprep.subr.mxu0 %v3191
  %3358 = vmatpush1.msra.mxu0 %v3190
  %3359 = vmatprep.subr.mxu0 %v3193
  %3360 = vmatpush1.msra.mxu0 %v3192
  %3361 = vmatprep.subr.mxu0 %v3195
  %3362 = vmatpush1.msra.mxu0 %v3194
  %3363 = vmatprep.subr.mxu0 %v3197
  %3364 = vmatpush1.msra.mxu0 %v3196
  %3365 = vmatprep.subr.mxu0 %v3199
  %3366 = vmatpush1.msra.mxu0 %v3198
  %3367 = vmatprep.subr.mxu0 %v3201
  %3368 = vmatpush1.msra.mxu0 %v3200
  %3369 = vmatprep.subr.mxu0 %v3203
  %3370 = vmatpush1.msra.mxu0 %v3202
  %3371 = vmatprep.subr.mxu0 %v3205
  %3372 = vmatpush1.msra.mxu0 %v3204
  %3373 = vmatprep.subr.mxu0 %v3207
  %3374 = vmatpush1.msra.mxu0 %v3206
  %3375 = vmatprep.subr.mxu0 %v3209
  %3376 = vmatpush1.msra.mxu0 %v3208
  %3377 = vmatprep.mubr.f32.mxu0 %v3080
  %3378 = vmatmul.mubr.f32.gmra.mrb[0].mxu0 %v3079
  %v3379 = vpop.f32.mrb[0].mxu0
  %v3380 = vadd.f32 %v3309, %v3379
  %v3381 = vpop.f32.mrb[0].mxu0
  %v3382 = vadd.f32 %v3311, %v3381
  %3383 = vdwg.mxu0
  %3384 = vmatprep.subr.mxu0 %v3211
  %3385 = vmatpush1.msra.mxu0 %v3210
  %3386 = vmatprep.subr.mxu0 %v3213
  %3387 = vmatpush1.msra.mxu0 %v3212
  %3388 = vmatprep.subr.mxu0 %v3215
  %3389 = vmatpush1.msra.mxu0 %v3214
  %3390 = vmatprep.subr.mxu0 %v3217
  %3391 = vmatpush1.msra.mxu0 %v3216
  %3392 = vmatprep.subr.mxu0 %v3219
  %3393 = vmatpush1.msra.mxu0 %v3218
  %3394 = vmatprep.subr.mxu0 %v3221
  %3395 = vmatpush1.msra.mxu0 %v3220
  %3396 = vmatprep.subr.mxu0 %v3223
  %3397 = vmatpush1.msra.mxu0 %v3222
  %3398 = vmatprep.subr.mxu0 %v3225
  %3399 = vmatpush1.msra.mxu0 %v3224
  %3400 = vmatprep.subr.mxu0 %v3227
  %3401 = vmatpush1.msra.mxu0 %v3226
  %3402 = vmatprep.subr.mxu0 %v3229
  %3403 = vmatpush1.msra.mxu0 %v3228
  %3404 = vmatprep.subr.mxu0 %v3231
  %3405 = vmatpush1.msra.mxu0 %v3230
  %3406 = vmatprep.subr.mxu0 %v3233
  %3407 = vmatpush1.msra.mxu0 %v3232
  %3408 = vmatprep.subr.mxu0 %v3235
  %3409 = vmatpush1.msra.mxu0 %v3234
  %3410 = vmatprep.subr.mxu0 %v3237
  %3411 = vmatpush1.msra.mxu0 %v3236
  %3412 = vmatprep.subr.mxu0 %v3239
  %3413 = vmatpush1.msra.mxu0 %v3238
  %3414 = vmatprep.subr.mxu0 %v3241
  %3415 = vmatpush1.msra.mxu0 %v3240
  %3416 = vmatprep.subr.mxu0 0.0
  %3417 = vmatpush1.msra.mxu0 0.0
  %3418 = vmatprep.subr.mxu0 0.0
  %3419 = vmatpush1.msra.mxu0 0.0
  %3420 = vmatprep.subr.mxu0 0.0
  %3421 = vmatpush1.msra.mxu0 0.0
  %3422 = vmatprep.subr.mxu0 0.0
  %3423 = vmatpush1.msra.mxu0 0.0
  %3424 = vmatprep.subr.mxu0 0.0
  %3425 = vmatpush1.msra.mxu0 0.0
  %3426 = vmatprep.subr.mxu0 0.0
  %3427 = vmatpush1.msra.mxu0 0.0
  %3428 = vmatprep.subr.mxu0 0.0
  %3429 = vmatpush1.msra.mxu0 0.0
  %3430 = vmatprep.subr.mxu0 0.0
  %3431 = vmatpush1.msra.mxu0 0.0
  %3432 = vmatprep.subr.mxu0 0.0
  %3433 = vmatpush1.msra.mxu0 0.0
  %3434 = vmatprep.subr.mxu0 0.0
  %3435 = vmatpush1.msra.mxu0 0.0
  %3436 = vmatprep.subr.mxu0 0.0
  %3437 = vmatpush1.msra.mxu0 0.0
  %3438 = vmatprep.subr.mxu0 0.0
  %3439 = vmatpush1.msra.mxu0 0.0
  %3440 = vmatprep.subr.mxu0 0.0
  %3441 = vmatpush1.msra.mxu0 0.0
  %3442 = vmatprep.subr.mxu0 0.0
  %3443 = vmatpush1.msra.mxu0 0.0
  %3444 = vmatprep.subr.mxu0 0.0
  %3445 = vmatpush1.msra.mxu0 0.0
  %3446 = vmatprep.subr.mxu0 0.0
  %3447 = vmatpush1.msra.mxu0 0.0
  %3448 = vmatprep.mubr.f32.mxu0 0.0
  %3449 = vmatmul.mubr.f32.gmra.mrb[0].mxu0 %v3081
  %v3450 = vpop.f32.mrb[0].mxu0
  %v3451 = vadd.f32 %v3380, %v3450
  %v3452 = vpop.f32.mrb[0].mxu0
  %v3453 = vadd.f32 %v3382, %v3452
  %3454 = vdwg.mxu0
  %v3455 = vld [vmem:[%s0 + $0x58] sm:$0xff]
  %v3456 = vld [vmem:[%s0 + $0x60] sm:$0xff]
  %v3457 = vld [vmem:[%s0 + $0x68] sm:$0xff]
  %v3458 = vld [vmem:[%s0 + $0x70] sm:$0xff]
  %v3459 = vld [vmem:[%s0 + $0x78] sm:$0xff]
  %3460 = vmatprep.subr.mxu0 %v3083
  %3461 = vmatpush1.msra.mxu0 %v3082
  %3462 = vmatprep.subr.mxu0 %v3085
  %3463 = vmatpush1.msra.mxu0 %v3084
  %3464 = vmatprep.subr.mxu0 %v3087
  %3465 = vmatpush1.msra.mxu0 %v3086
  %3466 = vmatprep.subr.mxu0 %v3089
  %3467 = vmatpush1.msra.mxu0 %v3088
  %3468 = vmatprep.subr.mxu0 %v3091
  %3469 = vmatpush1.msra.mxu0 %v3090
  %3470 = vmatprep.subr.mxu0 %v3093
  %3471 = vmatpush1.msra.mxu0 %v3092
  %3472 = vmatprep.subr.mxu0 %v3095
  %3473 = vmatpush1.msra.mxu0 %v3094
  %3474 = vmatprep.subr.mxu0 %v3097
  %3475 = vmatpush1.msra.mxu0 %v3096
  %3476 = vmatprep.subr.mxu0 %v3099
  %3477 = vmatpush1.msra.mxu0 %v3098
  %3478 = vmatprep.subr.mxu0 %v3101
  %3479 = vmatpush1.msra.mxu0 %v3100
  %3480 = vmatprep.subr.mxu0 %v3103
  %3481 = vmatpush1.msra.mxu0 %v3102
  %3482 = vmatprep.subr.mxu0 %v3105
  %3483 = vmatpush1.msra.mxu0 %v3104
  %3484 = vmatprep.subr.mxu0 %v3107
  %3485 = vmatpush1.msra.mxu0 %v3106
  %3486 = vmatprep.subr.mxu0 %v3109
  %3487 = vmatpush1.msra.mxu0 %v3108
  %3488 = vmatprep.subr.mxu0 %v3111
  %3489 = vmatpush1.msra.mxu0 %v3110
  %3490 = vmatprep.subr.mxu0 %v3113
  %3491 = vmatpush1.msra.mxu0 %v3112
  %3492 = vmatprep.subr.mxu0 %v3115
  %3493 = vmatpush1.msra.mxu0 %v3114
  %3494 = vmatprep.subr.mxu0 %v3117
  %3495 = vmatpush1.msra.mxu0 %v3116
  %3496 = vmatprep.subr.mxu0 %v3119
  %3497 = vmatpush1.msra.mxu0 %v3118
  %3498 = vmatprep.subr.mxu0 %v3121
  %3499 = vmatpush1.msra.mxu0 %v3120
  %3500 = vmatprep.subr.mxu0 %v3123
  %3501 = vmatpush1.msra.mxu0 %v3122
  %3502 = vmatprep.subr.mxu0 %v3125
  %3503 = vmatpush1.msra.mxu0 %v3124
  %3504 = vmatprep.subr.mxu0 %v3127
  %3505 = vmatpush1.msra.mxu0 %v3126
  %3506 = vmatprep.subr.mxu0 %v3129
  %3507 = vmatpush1.msra.mxu0 %v3128
  %3508 = vmatprep.subr.mxu0 %v3131
  %3509 = vmatpush1.msra.mxu0 %v3130
  %3510 = vmatprep.subr.mxu0 %v3133
  %3511 = vmatpush1.msra.mxu0 %v3132
  %3512 = vmatprep.subr.mxu0 %v3135
  %3513 = vmatpush1.msra.mxu0 %v3134
  %3514 = vmatprep.subr.mxu0 %v3137
  %3515 = vmatpush1.msra.mxu0 %v3136
  %3516 = vmatprep.subr.mxu0 %v3139
  %3517 = vmatpush1.msra.mxu0 %v3138
  %3518 = vmatprep.subr.mxu0 %v3141
  %3519 = vmatpush1.msra.mxu0 %v3140
  %3520 = vmatprep.subr.mxu0 %v3143
  %3521 = vmatpush1.msra.mxu0 %v3142
  %3522 = vmatprep.subr.mxu0 %v3145
  %3523 = vmatpush1.msra.mxu0 %v3144
  %3524 = vmatprep.mubr.f32.mxu0 %v3456
  %3525 = vmatmul.mubr.f32.gmra.mrb[0].mxu0 %v3455
  %v3526 = vpop.f32.mrb[0].mxu0
  %v3527 = vadd.f32 0.0, %v3526
  %v3528 = vpop.f32.mrb[0].mxu0
  %v3529 = vadd.f32 0.0, %v3528
  %3530 = vdwg.mxu0
  %3531 = vmatprep.subr.mxu0 %v3147
  %3532 = vmatpush1.msra.mxu0 %v3146
  %3533 = vmatprep.subr.mxu0 %v3149
  %3534 = vmatpush1.msra.mxu0 %v3148
  %3535 = vmatprep.subr.mxu0 %v3151
  %3536 = vmatpush1.msra.mxu0 %v3150
  %3537 = vmatprep.subr.mxu0 %v3153
  %3538 = vmatpush1.msra.mxu0 %v3152
  %3539 = vmatprep.subr.mxu0 %v3155
  %3540 = vmatpush1.msra.mxu0 %v3154
  %3541 = vmatprep.subr.mxu0 %v3157
  %3542 = vmatpush1.msra.mxu0 %v3156
  %3543 = vmatprep.subr.mxu0 %v3159
  %3544 = vmatpush1.msra.mxu0 %v3158
  %3545 = vmatprep.subr.mxu0 %v3161
  %3546 = vmatpush1.msra.mxu0 %v3160
  %3547 = vmatprep.subr.mxu0 %v3163
  %3548 = vmatpush1.msra.mxu0 %v3162
  %3549 = vmatprep.subr.mxu0 %v3165
  %3550 = vmatpush1.msra.mxu0 %v3164
  %3551 = vmatprep.subr.mxu0 %v3167
  %3552 = vmatpush1.msra.mxu0 %v3166
  %3553 = vmatprep.subr.mxu0 %v3169
  %3554 = vmatpush1.msra.mxu0 %v3168
  %3555 = vmatprep.subr.mxu0 %v3171
  %3556 = vmatpush1.msra.mxu0 %v3170
  %3557 = vmatprep.subr.mxu0 %v3173
  %3558 = vmatpush1.msra.mxu0 %v3172
  %3559 = vmatprep.subr.mxu0 %v3175
  %3560 = vmatpush1.msra.mxu0 %v3174
  %3561 = vmatprep.subr.mxu0 %v3177
  %3562 = vmatpush1.msra.mxu0 %v3176
  %3563 = vmatprep.subr.mxu0 %v3179
  %3564 = vmatpush1.msra.mxu0 %v3178
  %3565 = vmatprep.subr.mxu0 %v3181
  %3566 = vmatpush1.msra.mxu0 %v3180
  %3567 = vmatprep.subr.mxu0 %v3183
  %3568 = vmatpush1.msra.mxu0 %v3182
  %3569 = vmatprep.subr.mxu0 %v3185
  %3570 = vmatpush1.msra.mxu0 %v3184
  %3571 = vmatprep.subr.mxu0 %v3187
  %3572 = vmatpush1.msra.mxu0 %v3186
  %3573 = vmatprep.subr.mxu0 %v3189
  %3574 = vmatpush1.msra.mxu0 %v3188
  %3575 = vmatprep.subr.mxu0 %v3191
  %3576 = vmatpush1.msra.mxu0 %v3190
  %3577 = vmatprep.subr.mxu0 %v3193
  %3578 = vmatpush1.msra.mxu0 %v3192
  %3579 = vmatprep.subr.mxu0 %v3195
  %3580 = vmatpush1.msra.mxu0 %v3194
  %3581 = vmatprep.subr.mxu0 %v3197
  %3582 = vmatpush1.msra.mxu0 %v3196
  %3583 = vmatprep.subr.mxu0 %v3199
  %3584 = vmatpush1.msra.mxu0 %v3198
  %3585 = vmatprep.subr.mxu0 %v3201
  %3586 = vmatpush1.msra.mxu0 %v3200
  %3587 = vmatprep.subr.mxu0 %v3203
  %3588 = vmatpush1.msra.mxu0 %v3202
  %3589 = vmatprep.subr.mxu0 %v3205
  %3590 = vmatpush1.msra.mxu0 %v3204
  %3591 = vmatprep.subr.mxu0 %v3207
  %3592 = vmatpush1.msra.mxu0 %v3206
  %3593 = vmatprep.subr.mxu0 %v3209
  %3594 = vmatpush1.msra.mxu0 %v3208
  %3595 = vmatprep.mubr.f32.mxu0 %v3458
  %3596 = vmatmul.mubr.f32.gmra.mrb[0].mxu0 %v3457
  %v3597 = vpop.f32.mrb[0].mxu0
  %v3598 = vadd.f32 %v3527, %v3597
  %v3599 = vpop.f32.mrb[0].mxu0
  %v3600 = vadd.f32 %v3529, %v3599
  %3601 = vdwg.mxu0
  %3602 = vmatprep.subr.mxu0 %v3211
  %3603 = vmatpush1.msra.mxu0 %v3210
  %3604 = vmatprep.subr.mxu0 %v3213
  %3605 = vmatpush1.msra.mxu0 %v3212
  %3606 = vmatprep.subr.mxu0 %v3215
  %3607 = vmatpush1.msra.mxu0 %v3214
  %3608 = vmatprep.subr.mxu0 %v3217
  %3609 = vmatpush1.msra.mxu0 %v3216
  %3610 = vmatprep.subr.mxu0 %v3219
  %3611 = vmatpush1.msra.mxu0 %v3218
  %3612 = vmatprep.subr.mxu0 %v3221
  %3613 = vmatpush1.msra.mxu0 %v3220
  %3614 = vmatprep.subr.mxu0 %v3223
  %3615 = vmatpush1.msra.mxu0 %v3222
  %3616 = vmatprep.subr.mxu0 %v3225
  %3617 = vmatpush1.msra.mxu0 %v3224
  %3618 = vmatprep.subr.mxu0 %v3227
  %3619 = vmatpush1.msra.mxu0 %v3226
  %3620 = vmatprep.subr.mxu0 %v3229
  %3621 = vmatpush1.msra.mxu0 %v3228
  %3622 = vmatprep.subr.mxu0 %v3231
  %3623 = vmatpush1.msra.mxu0 %v3230
  %3624 = vmatprep.subr.mxu0 %v3233
  %3625 = vmatpush1.msra.mxu0 %v3232
  %3626 = vmatprep.subr.mxu0 %v3235
  %3627 = vmatpush1.msra.mxu0 %v3234
  %3628 = vmatprep.subr.mxu0 %v3237
  %3629 = vmatpush1.msra.mxu0 %v3236
  %3630 = vmatprep.subr.mxu0 %v3239
  %3631 = vmatpush1.msra.mxu0 %v3238
  %3632 = vmatprep.subr.mxu0 %v3241
  %3633 = vmatpush1.msra.mxu0 %v3240
  %3634 = vmatprep.subr.mxu0 0.0
  %3635 = vmatpush1.msra.mxu0 0.0
  %3636 = vmatprep.subr.mxu0 0.0
  %3637 = vmatpush1.msra.mxu0 0.0
  %3638 = vmatprep.subr.mxu0 0.0
  %3639 = vmatpush1.msra.mxu0 0.0
  %3640 = vmatprep.subr.mxu0 0.0
  %3641 = vmatpush1.msra.mxu0 0.0
  %3642 = vmatprep.subr.mxu0 0.0
  %3643 = vmatpush1.msra.mxu0 0.0
  %3644 = vmatprep.subr.mxu0 0.0
  %3645 = vmatpush1.msra.mxu0 0.0
  %3646 = vmatprep.subr.mxu0 0.0
  %3647 = vmatpush1.msra.mxu0 0.0
  %3648 = vmatprep.subr.mxu0 0.0
  %3649 = vmatpush1.msra.mxu0 0.0
  %3650 = vmatprep.subr.mxu0 0.0
  %3651 = vmatpush1.msra.mxu0 0.0
  %3652 = vmatprep.subr.mxu0 0.0
  %3653 = vmatpush1.msra.mxu0 0.0
  %3654 = vmatprep.subr.mxu0 0.0
  %3655 = vmatpush1.msra.mxu0 0.0
  %3656 = vmatprep.subr.mxu0 0.0
  %3657 = vmatpush1.msra.mxu0 0.0
  %3658 = vmatprep.subr.mxu0 0.0
  %3659 = vmatpush1.msra.mxu0 0.0
  %3660 = vmatprep.subr.mxu0 0.0
  %3661 = vmatpush1.msra.mxu0 0.0
  %3662 = vmatprep.subr.mxu0 0.0
  %3663 = vmatpush1.msra.mxu0 0.0
  %3664 = vmatprep.subr.mxu0 0.0
  %3665 = vmatpush1.msra.mxu0 0.0
  %3666 = vmatprep.mubr.f32.mxu0 0.0
  %3667 = vmatmul.mubr.f32.gmra.mrb[0].mxu0 %v3459
  %v3668 = vpop.f32.mrb[0].mxu0
  %v3669 = vadd.f32 %v3598, %v3668
  %v3670 = vpop.f32.mrb[0].mxu0
  %v3671 = vadd.f32 %v3600, %v3670
  %3672 = vdwg.mxu0
  %v3673 = vmax.f32 %v3451, %v3669
  %v3674 = vmax.f32 %v3453, %v3671
  %v3675 = vmax.f32 %v3673, %v3674
  %v3676 = vld [vmem:[%s2] sm:$0x1]
  %v3678 = vlaneseq
  %v3679 = vshrl.u32 %v3678, 7
  %v3680 = vsub.s32 0, %v3679
  %v3681 = vrot.slane %v3676, %v3680
  %v3683 = vadd.f32 %v3675, %v3681
  %v3684 = vmax.f32 %v3683, 0.0
  %3685 = vst [vmem:[#allocation2 + $0x28] sm:$0xff] %v3684
  %v3686 = vld [vmem:[%s0 + $0x60] sm:$0xff]
  %v3687 = vld [vmem:[%s0 + $0x68] sm:$0xff]
  %v3688 = vld [vmem:[%s0 + $0x70] sm:$0xff]
  %v3689 = vld [vmem:[%s0 + $0x78] sm:$0xff]
  %v3690 = vld [vmem:[%s0 + $0x80] sm:$0xff]
  %v3691 = vld [vmem:[%s1] sm:$0xff]
  %v3692 = vld [vmem:[%s1 + $0x8] sm:$0xff]
  %v3693 = vld [vmem:[%s1 + $0x10] sm:$0xff]
  %v3694 = vld [vmem:[%s1 + $0x18] sm:$0xff]
  %v3695 = vld [vmem:[%s1 + $0x20] sm:$0xff]
  %v3696 = vld [vmem:[%s1 + $0x28] sm:$0xff]
  %v3697 = vld [vmem:[%s1 + $0x30] sm:$0xff]
  %v3698 = vld [vmem:[%s1 + $0x38] sm:$0xff]
  %v3699 = vld [vmem:[%s1 + $0x40] sm:$0xff]
  %v3700 = vld [vmem:[%s1 + $0x48] sm:$0xff]
  %v3701 = vld [vmem:[%s1 + $0x50] sm:$0xff]
  %v3702 = vld [vmem:[%s1 + $0x58] sm:$0xff]
  %v3703 = vld [vmem:[%s1 + $0x60] sm:$0xff]
  %v3704 = vld [vmem:[%s1 + $0x68] sm:$0xff]
  %v3705 = vld [vmem:[%s1 + $0x70] sm:$0xff]
  %v3706 = vld [vmem:[%s1 + $0x78] sm:$0xff]
  %v3707 = vld [vmem:[%s1 + $0x80] sm:$0xff]
  %v3708 = vld [vmem:[%s1 + $0x88] sm:$0xff]
  %v3709 = vld [vmem:[%s1 + $0x90] sm:$0xff]
  %v3710 = vld [vmem:[%s1 + $0x98] sm:$0xff]
  %v3711 = vld [vmem:[%s1 + $0xa0] sm:$0xff]
  %v3712 = vld [vmem:[%s1 + $0xa8] sm:$0xff]
  %v3713 = vld [vmem:[%s1 + $0xb0] sm:$0xff]
  %v3714 = vld [vmem:[%s1 + $0xb8] sm:$0xff]
  %v3715 = vld [vmem:[%s1 + $0xc0] sm:$0xff]
  %v3716 = vld [vmem:[%s1 + $0xc8] sm:$0xff]
  %v3717 = vld [vmem:[%s1 + $0xd0] sm:$0xff]
  %v3718 = vld [vmem:[%s1 + $0xd8] sm:$0xff]
  %v3719 = vld [vmem:[%s1 + $0xe0] sm:$0xff]
  %v3720 = vld [vmem:[%s1 + $0xe8] sm:$0xff]
  %v3721 = vld [vmem:[%s1 + $0xf0] sm:$0xff]
  %v3722 = vld [vmem:[%s1 + $0xf8] sm:$0xff]
  %v3723 = vld [vmem:[%s1 + $0x100] sm:$0xff]
  %v3724 = vld [vmem:[%s1 + $0x108] sm:$0xff]
  %v3725 = vld [vmem:[%s1 + $0x110] sm:$0xff]
  %v3726 = vld [vmem:[%s1 + $0x118] sm:$0xff]
  %v3727 = vld [vmem:[%s1 + $0x120] sm:$0xff]
  %v3728 = vld [vmem:[%s1 + $0x128] sm:$0xff]
  %v3729 = vld [vmem:[%s1 + $0x130] sm:$0xff]
  %v3730 = vld [vmem:[%s1 + $0x138] sm:$0xff]
  %v3731 = vld [vmem:[%s1 + $0x140] sm:$0xff]
  %v3732 = vld [vmem:[%s1 + $0x148] sm:$0xff]
  %v3733 = vld [vmem:[%s1 + $0x150] sm:$0xff]
  %v3734 = vld [vmem:[%s1 + $0x158] sm:$0xff]
  %v3735 = vld [vmem:[%s1 + $0x160] sm:$0xff]
  %v3736 = vld [vmem:[%s1 + $0x168] sm:$0xff]
  %v3737 = vld [vmem:[%s1 + $0x170] sm:$0xff]
  %v3738 = vld [vmem:[%s1 + $0x178] sm:$0xff]
  %v3739 = vld [vmem:[%s1 + $0x180] sm:$0xff]
  %v3740 = vld [vmem:[%s1 + $0x188] sm:$0xff]
  %v3741 = vld [vmem:[%s1 + $0x190] sm:$0xff]
  %v3742 = vld [vmem:[%s1 + $0x198] sm:$0xff]
  %v3743 = vld [vmem:[%s1 + $0x1a0] sm:$0xff]
  %v3744 = vld [vmem:[%s1 + $0x1a8] sm:$0xff]
  %v3745 = vld [vmem:[%s1 + $0x1b0] sm:$0xff]
  %v3746 = vld [vmem:[%s1 + $0x1b8] sm:$0xff]
  %v3747 = vld [vmem:[%s1 + $0x1c0] sm:$0xff]
  %v3748 = vld [vmem:[%s1 + $0x1c8] sm:$0xff]
  %v3749 = vld [vmem:[%s1 + $0x1d0] sm:$0xff]
  %v3750 = vld [vmem:[%s1 + $0x1d8] sm:$0xff]
  %v3751 = vld [vmem:[%s1 + $0x1e0] sm:$0xff]
  %v3752 = vld [vmem:[%s1 + $0x1e8] sm:$0xff]
  %v3753 = vld [vmem:[%s1 + $0x1f0] sm:$0xff]
  %v3754 = vld [vmem:[%s1 + $0x1f8] sm:$0xff]
  %v3755 = vld [vmem:[%s1 + $0x200] sm:$0xff]
  %v3756 = vld [vmem:[%s1 + $0x208] sm:$0xff]
  %v3757 = vld [vmem:[%s1 + $0x210] sm:$0xff]
  %v3758 = vld [vmem:[%s1 + $0x218] sm:$0xff]
  %v3759 = vld [vmem:[%s1 + $0x220] sm:$0xff]
  %v3760 = vld [vmem:[%s1 + $0x228] sm:$0xff]
  %v3761 = vld [vmem:[%s1 + $0x230] sm:$0xff]
  %v3762 = vld [vmem:[%s1 + $0x238] sm:$0xff]
  %v3763 = vld [vmem:[%s1 + $0x240] sm:$0xff]
  %v3764 = vld [vmem:[%s1 + $0x248] sm:$0xff]
  %v3765 = vld [vmem:[%s1 + $0x250] sm:$0xff]
  %v3766 = vld [vmem:[%s1 + $0x258] sm:$0xff]
  %v3767 = vld [vmem:[%s1 + $0x260] sm:$0xff]
  %v3768 = vld [vmem:[%s1 + $0x268] sm:$0xff]
  %v3769 = vld [vmem:[%s1 + $0x270] sm:$0xff]
  %v3770 = vld [vmem:[%s1 + $0x278] sm:$0xff]
  %v3771 = vld [vmem:[%s1 + $0x280] sm:$0xff]
  %v3772 = vld [vmem:[%s1 + $0x288] sm:$0xff]
  %v3773 = vld [vmem:[%s1 + $0x290] sm:$0xff]
  %v3774 = vld [vmem:[%s1 + $0x298] sm:$0xff]
  %v3775 = vld [vmem:[%s1 + $0x2a0] sm:$0xff]
  %v3776 = vld [vmem:[%s1 + $0x2a8] sm:$0xff]
  %v3777 = vld [vmem:[%s1 + $0x2b0] sm:$0xff]
  %v3778 = vld [vmem:[%s1 + $0x2b8] sm:$0xff]
  %v3779 = vld [vmem:[%s1 + $0x2c0] sm:$0xff]
  %v3780 = vld [vmem:[%s1 + $0x2c8] sm:$0xff]
  %v3781 = vld [vmem:[%s1 + $0x2d0] sm:$0xff]
  %v3782 = vld [vmem:[%s1 + $0x2d8] sm:$0xff]
  %v3783 = vld [vmem:[%s1 + $0x2e0] sm:$0xff]
  %v3784 = vld [vmem:[%s1 + $0x2e8] sm:$0xff]
  %v3785 = vld [vmem:[%s1 + $0x2f0] sm:$0xff]
  %v3786 = vld [vmem:[%s1 + $0x2f8] sm:$0xff]
  %v3787 = vld [vmem:[%s1 + $0x300] sm:$0xff]
  %v3788 = vld [vmem:[%s1 + $0x308] sm:$0xff]
  %v3789 = vld [vmem:[%s1 + $0x310] sm:$0xff]
  %v3790 = vld [vmem:[%s1 + $0x318] sm:$0xff]
  %v3791 = vld [vmem:[%s1 + $0x320] sm:$0xff]
  %v3792 = vld [vmem:[%s1 + $0x328] sm:$0xff]
  %v3793 = vld [vmem:[%s1 + $0x330] sm:$0xff]
  %v3794 = vld [vmem:[%s1 + $0x338] sm:$0xff]
  %v3795 = vld [vmem:[%s1 + $0x340] sm:$0xff]
  %v3796 = vld [vmem:[%s1 + $0x348] sm:$0xff]
  %v3797 = vld [vmem:[%s1 + $0x350] sm:$0xff]
  %v3798 = vld [vmem:[%s1 + $0x358] sm:$0xff]
  %v3799 = vld [vmem:[%s1 + $0x360] sm:$0xff]
  %v3800 = vld [vmem:[%s1 + $0x368] sm:$0xff]
  %v3801 = vld [vmem:[%s1 + $0x370] sm:$0xff]
  %v3802 = vld [vmem:[%s1 + $0x378] sm:$0xff]
  %v3803 = vld [vmem:[%s1 + $0x380] sm:$0xff]
  %v3804 = vld [vmem:[%s1 + $0x388] sm:$0xff]
  %v3805 = vld [vmem:[%s1 + $0x390] sm:$0xff]
  %v3806 = vld [vmem:[%s1 + $0x398] sm:$0xff]
  %v3807 = vld [vmem:[%s1 + $0x3a0] sm:$0xff]
  %v3808 = vld [vmem:[%s1 + $0x3a8] sm:$0xff]
  %v3809 = vld [vmem:[%s1 + $0x3b0] sm:$0xff]
  %v3810 = vld [vmem:[%s1 + $0x3b8] sm:$0xff]
  %v3811 = vld [vmem:[%s1 + $0x3c0] sm:$0xff]
  %v3812 = vld [vmem:[%s1 + $0x3c8] sm:$0xff]
  %v3813 = vld [vmem:[%s1 + $0x3d0] sm:$0xff]
  %v3814 = vld [vmem:[%s1 + $0x3d8] sm:$0xff]
  %v3815 = vld [vmem:[%s1 + $0x3e0] sm:$0xff]
  %v3816 = vld [vmem:[%s1 + $0x3e8] sm:$0xff]
  %v3817 = vld [vmem:[%s1 + $0x3f0] sm:$0xff]
  %v3818 = vld [vmem:[%s1 + $0x3f8] sm:$0xff]
  %v3819 = vld [vmem:[%s1 + $0x400] sm:$0xff]
  %v3820 = vld [vmem:[%s1 + $0x408] sm:$0xff]
  %v3821 = vld [vmem:[%s1 + $0x410] sm:$0xff]
  %v3822 = vld [vmem:[%s1 + $0x418] sm:$0xff]
  %v3823 = vld [vmem:[%s1 + $0x420] sm:$0xff]
  %v3824 = vld [vmem:[%s1 + $0x428] sm:$0xff]
  %v3825 = vld [vmem:[%s1 + $0x430] sm:$0xff]
  %v3826 = vld [vmem:[%s1 + $0x438] sm:$0xff]
  %v3827 = vld [vmem:[%s1 + $0x440] sm:$0xff]
  %v3828 = vld [vmem:[%s1 + $0x448] sm:$0xff]
  %v3829 = vld [vmem:[%s1 + $0x450] sm:$0xff]
  %v3830 = vld [vmem:[%s1 + $0x458] sm:$0xff]
  %v3831 = vld [vmem:[%s1 + $0x460] sm:$0xff]
  %v3832 = vld [vmem:[%s1 + $0x468] sm:$0xff]
  %v3833 = vld [vmem:[%s1 + $0x470] sm:$0xff]
  %v3834 = vld [vmem:[%s1 + $0x478] sm:$0xff]
  %v3835 = vld [vmem:[%s1 + $0x480] sm:$0xff]
  %v3836 = vld [vmem:[%s1 + $0x488] sm:$0xff]
  %v3837 = vld [vmem:[%s1 + $0x490] sm:$0xff]
  %v3838 = vld [vmem:[%s1 + $0x498] sm:$0xff]
  %v3839 = vld [vmem:[%s1 + $0x4a0] sm:$0xff]
  %v3840 = vld [vmem:[%s1 + $0x4a8] sm:$0xff]
  %v3841 = vld [vmem:[%s1 + $0x4b0] sm:$0xff]
  %v3842 = vld [vmem:[%s1 + $0x4b8] sm:$0xff]
  %v3843 = vld [vmem:[%s1 + $0x4c0] sm:$0xff]
  %v3844 = vld [vmem:[%s1 + $0x4c8] sm:$0xff]
  %v3845 = vld [vmem:[%s1 + $0x4d0] sm:$0xff]
  %v3846 = vld [vmem:[%s1 + $0x4d8] sm:$0xff]
  %v3847 = vld [vmem:[%s1 + $0x4e0] sm:$0xff]
  %v3848 = vld [vmem:[%s1 + $0x4e8] sm:$0xff]
  %v3849 = vld [vmem:[%s1 + $0x4f0] sm:$0xff]
  %v3850 = vld [vmem:[%s1 + $0x4f8] sm:$0xff]
  %3851 = vmatprep.subr.mxu0 %v3692
  %3852 = vmatpush1.msra.mxu0 %v3691
  %3853 = vmatprep.subr.mxu0 %v3694
  %3854 = vmatpush1.msra.mxu0 %v3693
  %3855 = vmatprep.subr.mxu0 %v3696
  %3856 = vmatpush1.msra.mxu0 %v3695
  %3857 = vmatprep.subr.mxu0 %v3698
  %3858 = vmatpush1.msra.mxu0 %v3697
  %3859 = vmatprep.subr.mxu0 %v3700
  %3860 = vmatpush1.msra.mxu0 %v3699
  %3861 = vmatprep.subr.mxu0 %v3702
  %3862 = vmatpush1.msra.mxu0 %v3701
  %3863 = vmatprep.subr.mxu0 %v3704
  %3864 = vmatpush1.msra.mxu0 %v3703
  %3865 = vmatprep.subr.mxu0 %v3706
  %3866 = vmatpush1.msra.mxu0 %v3705
  %3867 = vmatprep.subr.mxu0 %v3708
  %3868 = vmatpush1.msra.mxu0 %v3707
  %3869 = vmatprep.subr.mxu0 %v3710
  %3870 = vmatpush1.msra.mxu0 %v3709
  %3871 = vmatprep.subr.mxu0 %v3712
  %3872 = vmatpush1.msra.mxu0 %v3711
  %3873 = vmatprep.subr.mxu0 %v3714
  %3874 = vmatpush1.msra.mxu0 %v3713
  %3875 = vmatprep.subr.mxu0 %v3716
  %3876 = vmatpush1.msra.mxu0 %v3715
  %3877 = vmatprep.subr.mxu0 %v3718
  %3878 = vmatpush1.msra.mxu0 %v3717
  %3879 = vmatprep.subr.mxu0 %v3720
  %3880 = vmatpush1.msra.mxu0 %v3719
  %3881 = vmatprep.subr.mxu0 %v3722
  %3882 = vmatpush1.msra.mxu0 %v3721
  %3883 = vmatprep.subr.mxu0 %v3724
  %3884 = vmatpush1.msra.mxu0 %v3723
  %3885 = vmatprep.subr.mxu0 %v3726
  %3886 = vmatpush1.msra.mxu0 %v3725
  %3887 = vmatprep.subr.mxu0 %v3728
  %3888 = vmatpush1.msra.mxu0 %v3727
  %3889 = vmatprep.subr.mxu0 %v3730
  %3890 = vmatpush1.msra.mxu0 %v3729
  %3891 = vmatprep.subr.mxu0 %v3732
  %3892 = vmatpush1.msra.mxu0 %v3731
  %3893 = vmatprep.subr.mxu0 %v3734
  %3894 = vmatpush1.msra.mxu0 %v3733
  %3895 = vmatprep.subr.mxu0 %v3736
  %3896 = vmatpush1.msra.mxu0 %v3735
  %3897 = vmatprep.subr.mxu0 %v3738
  %3898 = vmatpush1.msra.mxu0 %v3737
  %3899 = vmatprep.subr.mxu0 %v3740
  %3900 = vmatpush1.msra.mxu0 %v3739
  %3901 = vmatprep.subr.mxu0 %v3742
  %3902 = vmatpush1.msra.mxu0 %v3741
  %3903 = vmatprep.subr.mxu0 %v3744
  %3904 = vmatpush1.msra.mxu0 %v3743
  %3905 = vmatprep.subr.mxu0 %v3746
  %3906 = vmatpush1.msra.mxu0 %v3745
  %3907 = vmatprep.subr.mxu0 %v3748
  %3908 = vmatpush1.msra.mxu0 %v3747
  %3909 = vmatprep.subr.mxu0 %v3750
  %3910 = vmatpush1.msra.mxu0 %v3749
  %3911 = vmatprep.subr.mxu0 %v3752
  %3912 = vmatpush1.msra.mxu0 %v3751
  %3913 = vmatprep.subr.mxu0 %v3754
  %3914 = vmatpush1.msra.mxu0 %v3753
  %3915 = vmatprep.mubr.f32.mxu0 %v3687
  %3916 = vmatmul.mubr.f32.gmra.mrb[0].mxu0 %v3686
  %v3917 = vpop.f32.mrb[0].mxu0
  %v3918 = vadd.f32 0.0, %v3917
  %v3919 = vpop.f32.mrb[0].mxu0
  %v3920 = vadd.f32 0.0, %v3919
  %3921 = vdwg.mxu0
  %3922 = vmatprep.subr.mxu0 %v3756
  %3923 = vmatpush1.msra.mxu0 %v3755
  %3924 = vmatprep.subr.mxu0 %v3758
  %3925 = vmatpush1.msra.mxu0 %v3757
  %3926 = vmatprep.subr.mxu0 %v3760
  %3927 = vmatpush1.msra.mxu0 %v3759
  %3928 = vmatprep.subr.mxu0 %v3762
  %3929 = vmatpush1.msra.mxu0 %v3761
  %3930 = vmatprep.subr.mxu0 %v3764
  %3931 = vmatpush1.msra.mxu0 %v3763
  %3932 = vmatprep.subr.mxu0 %v3766
  %3933 = vmatpush1.msra.mxu0 %v3765
  %3934 = vmatprep.subr.mxu0 %v3768
  %3935 = vmatpush1.msra.mxu0 %v3767
  %3936 = vmatprep.subr.mxu0 %v3770
  %3937 = vmatpush1.msra.mxu0 %v3769
  %3938 = vmatprep.subr.mxu0 %v3772
  %3939 = vmatpush1.msra.mxu0 %v3771
  %3940 = vmatprep.subr.mxu0 %v3774
  %3941 = vmatpush1.msra.mxu0 %v3773
  %3942 = vmatprep.subr.mxu0 %v3776
  %3943 = vmatpush1.msra.mxu0 %v3775
  %3944 = vmatprep.subr.mxu0 %v3778
  %3945 = vmatpush1.msra.mxu0 %v3777
  %3946 = vmatprep.subr.mxu0 %v3780
  %3947 = vmatpush1.msra.mxu0 %v3779
  %3948 = vmatprep.subr.mxu0 %v3782
  %3949 = vmatpush1.msra.mxu0 %v3781
  %3950 = vmatprep.subr.mxu0 %v3784
  %3951 = vmatpush1.msra.mxu0 %v3783
  %3952 = vmatprep.subr.mxu0 %v3786
  %3953 = vmatpush1.msra.mxu0 %v3785
  %3954 = vmatprep.subr.mxu0 %v3788
  %3955 = vmatpush1.msra.mxu0 %v3787
  %3956 = vmatprep.subr.mxu0 %v3790
  %3957 = vmatpush1.msra.mxu0 %v3789
  %3958 = vmatprep.subr.mxu0 %v3792
  %3959 = vmatpush1.msra.mxu0 %v3791
  %3960 = vmatprep.subr.mxu0 %v3794
  %3961 = vmatpush1.msra.mxu0 %v3793
  %3962 = vmatprep.subr.mxu0 %v3796
  %3963 = vmatpush1.msra.mxu0 %v3795
  %3964 = vmatprep.subr.mxu0 %v3798
  %3965 = vmatpush1.msra.mxu0 %v3797
  %3966 = vmatprep.subr.mxu0 %v3800
  %3967 = vmatpush1.msra.mxu0 %v3799
  %3968 = vmatprep.subr.mxu0 %v3802
  %3969 = vmatpush1.msra.mxu0 %v3801
  %3970 = vmatprep.subr.mxu0 %v3804
  %3971 = vmatpush1.msra.mxu0 %v3803
  %3972 = vmatprep.subr.mxu0 %v3806
  %3973 = vmatpush1.msra.mxu0 %v3805
  %3974 = vmatprep.subr.mxu0 %v3808
  %3975 = vmatpush1.msra.mxu0 %v3807
  %3976 = vmatprep.subr.mxu0 %v3810
  %3977 = vmatpush1.msra.mxu0 %v3809
  %3978 = vmatprep.subr.mxu0 %v3812
  %3979 = vmatpush1.msra.mxu0 %v3811
  %3980 = vmatprep.subr.mxu0 %v3814
  %3981 = vmatpush1.msra.mxu0 %v3813
  %3982 = vmatprep.subr.mxu0 %v3816
  %3983 = vmatpush1.msra.mxu0 %v3815
  %3984 = vmatprep.subr.mxu0 %v3818
  %3985 = vmatpush1.msra.mxu0 %v3817
  %3986 = vmatprep.mubr.f32.mxu0 %v3689
  %3987 = vmatmul.mubr.f32.gmra.mrb[0].mxu0 %v3688
  %v3988 = vpop.f32.mrb[0].mxu0
  %v3989 = vadd.f32 %v3918, %v3988
  %v3990 = vpop.f32.mrb[0].mxu0
  %v3991 = vadd.f32 %v3920, %v3990
  %3992 = vdwg.mxu0
  %3993 = vmatprep.subr.mxu0 %v3820
  %3994 = vmatpush1.msra.mxu0 %v3819
  %3995 = vmatprep.subr.mxu0 %v3822
  %3996 = vmatpush1.msra.mxu0 %v3821
  %3997 = vmatprep.subr.mxu0 %v3824
  %3998 = vmatpush1.msra.mxu0 %v3823
  %3999 = vmatprep.subr.mxu0 %v3826
  %4000 = vmatpush1.msra.mxu0 %v3825
  %4001 = vmatprep.subr.mxu0 %v3828
  %4002 = vmatpush1.msra.mxu0 %v3827
  %4003 = vmatprep.subr.mxu0 %v3830
  %4004 = vmatpush1.msra.mxu0 %v3829
  %4005 = vmatprep.subr.mxu0 %v3832
  %4006 = vmatpush1.msra.mxu0 %v3831
  %4007 = vmatprep.subr.mxu0 %v3834
  %4008 = vmatpush1.msra.mxu0 %v3833
  %4009 = vmatprep.subr.mxu0 %v3836
  %4010 = vmatpush1.msra.mxu0 %v3835
  %4011 = vmatprep.subr.mxu0 %v3838
  %4012 = vmatpush1.msra.mxu0 %v3837
  %4013 = vmatprep.subr.mxu0 %v3840
  %4014 = vmatpush1.msra.mxu0 %v3839
  %4015 = vmatprep.subr.mxu0 %v3842
  %4016 = vmatpush1.msra.mxu0 %v3841
  %4017 = vmatprep.subr.mxu0 %v3844
  %4018 = vmatpush1.msra.mxu0 %v3843
  %4019 = vmatprep.subr.mxu0 %v3846
  %4020 = vmatpush1.msra.mxu0 %v3845
  %4021 = vmatprep.subr.mxu0 %v3848
  %4022 = vmatpush1.msra.mxu0 %v3847
  %4023 = vmatprep.subr.mxu0 %v3850
  %4024 = vmatpush1.msra.mxu0 %v3849
  %4025 = vmatprep.subr.mxu0 0.0
  %4026 = vmatpush1.msra.mxu0 0.0
  %4027 = vmatprep.subr.mxu0 0.0
  %4028 = vmatpush1.msra.mxu0 0.0
  %4029 = vmatprep.subr.mxu0 0.0
  %4030 = vmatpush1.msra.mxu0 0.0
  %4031 = vmatprep.subr.mxu0 0.0
  %4032 = vmatpush1.msra.mxu0 0.0
  %4033 = vmatprep.subr.mxu0 0.0
  %4034 = vmatpush1.msra.mxu0 0.0
  %4035 = vmatprep.subr.mxu0 0.0
  %4036 = vmatpush1.msra.mxu0 0.0
  %4037 = vmatprep.subr.mxu0 0.0
  %4038 = vmatpush1.msra.mxu0 0.0
  %4039 = vmatprep.subr.mxu0 0.0
  %4040 = vmatpush1.msra.mxu0 0.0
  %4041 = vmatprep.subr.mxu0 0.0
  %4042 = vmatpush1.msra.mxu0 0.0
  %4043 = vmatprep.subr.mxu0 0.0
  %4044 = vmatpush1.msra.mxu0 0.0
  %4045 = vmatprep.subr.mxu0 0.0
  %4046 = vmatpush1.msra.mxu0 0.0
  %4047 = vmatprep.subr.mxu0 0.0
  %4048 = vmatpush1.msra.mxu0 0.0
  %4049 = vmatprep.subr.mxu0 0.0
  %4050 = vmatpush1.msra.mxu0 0.0
  %4051 = vmatprep.subr.mxu0 0.0
  %4052 = vmatpush1.msra.mxu0 0.0
  %4053 = vmatprep.subr.mxu0 0.0
  %4054 = vmatpush1.msra.mxu0 0.0
  %4055 = vmatprep.subr.mxu0 0.0
  %4056 = vmatpush1.msra.mxu0 0.0
  %4057 = vmatprep.mubr.f32.mxu0 0.0
  %4058 = vmatmul.mubr.f32.gmra.mrb[0].mxu0 %v3690
  %v4059 = vpop.f32.mrb[0].mxu0
  %v4060 = vadd.f32 %v3989, %v4059
  %v4061 = vpop.f32.mrb[0].mxu0
  %v4062 = vadd.f32 %v3991, %v4061
  %4063 = vdwg.mxu0
  %v4064 = vld [vmem:[%s0 + $0x68] sm:$0xff]
  %v4065 = vld [vmem:[%s0 + $0x70] sm:$0xff]
  %v4066 = vld [vmem:[%s0 + $0x78] sm:$0xff]
  %v4067 = vld [vmem:[%s0 + $0x80] sm:$0xff]
  %v4068 = vld [vmem:[%s0 + $0x88] sm:$0xff]
  %4069 = vmatprep.subr.mxu0 %v3692
  %4070 = vmatpush1.msra.mxu0 %v3691
  %4071 = vmatprep.subr.mxu0 %v3694
  %4072 = vmatpush1.msra.mxu0 %v3693
  %4073 = vmatprep.subr.mxu0 %v3696
  %4074 = vmatpush1.msra.mxu0 %v3695
  %4075 = vmatprep.subr.mxu0 %v3698
  %4076 = vmatpush1.msra.mxu0 %v3697
  %4077 = vmatprep.subr.mxu0 %v3700
  %4078 = vmatpush1.msra.mxu0 %v3699
  %4079 = vmatprep.subr.mxu0 %v3702
  %4080 = vmatpush1.msra.mxu0 %v3701
  %4081 = vmatprep.subr.mxu0 %v3704
  %4082 = vmatpush1.msra.mxu0 %v3703
  %4083 = vmatprep.subr.mxu0 %v3706
  %4084 = vmatpush1.msra.mxu0 %v3705
  %4085 = vmatprep.subr.mxu0 %v3708
  %4086 = vmatpush1.msra.mxu0 %v3707
  %4087 = vmatprep.subr.mxu0 %v3710
  %4088 = vmatpush1.msra.mxu0 %v3709
  %4089 = vmatprep.subr.mxu0 %v3712
  %4090 = vmatpush1.msra.mxu0 %v3711
  %4091 = vmatprep.subr.mxu0 %v3714
  %4092 = vmatpush1.msra.mxu0 %v3713
  %4093 = vmatprep.subr.mxu0 %v3716
  %4094 = vmatpush1.msra.mxu0 %v3715
  %4095 = vmatprep.subr.mxu0 %v3718
  %4096 = vmatpush1.msra.mxu0 %v3717
  %4097 = vmatprep.subr.mxu0 %v3720
  %4098 = vmatpush1.msra.mxu0 %v3719
  %4099 = vmatprep.subr.mxu0 %v3722
  %4100 = vmatpush1.msra.mxu0 %v3721
  %4101 = vmatprep.subr.mxu0 %v3724
  %4102 = vmatpush1.msra.mxu0 %v3723
  %4103 = vmatprep.subr.mxu0 %v3726
  %4104 = vmatpush1.msra.mxu0 %v3725
  %4105 = vmatprep.subr.mxu0 %v3728
  %4106 = vmatpush1.msra.mxu0 %v3727
  %4107 = vmatprep.subr.mxu0 %v3730
  %4108 = vmatpush1.msra.mxu0 %v3729
  %4109 = vmatprep.subr.mxu0 %v3732
  %4110 = vmatpush1.msra.mxu0 %v3731
  %4111 = vmatprep.subr.mxu0 %v3734
  %4112 = vmatpush1.msra.mxu0 %v3733
  %4113 = vmatprep.subr.mxu0 %v3736
  %4114 = vmatpush1.msra.mxu0 %v3735
  %4115 = vmatprep.subr.mxu0 %v3738
  %4116 = vmatpush1.msra.mxu0 %v3737
  %4117 = vmatprep.subr.mxu0 %v3740
  %4118 = vmatpush1.msra.mxu0 %v3739
  %4119 = vmatprep.subr.mxu0 %v3742
  %4120 = vmatpush1.msra.mxu0 %v3741
  %4121 = vmatprep.subr.mxu0 %v3744
  %4122 = vmatpush1.msra.mxu0 %v3743
  %4123 = vmatprep.subr.mxu0 %v3746
  %4124 = vmatpush1.msra.mxu0 %v3745
  %4125 = vmatprep.subr.mxu0 %v3748
  %4126 = vmatpush1.msra.mxu0 %v3747
  %4127 = vmatprep.subr.mxu0 %v3750
  %4128 = vmatpush1.msra.mxu0 %v3749
  %4129 = vmatprep.subr.mxu0 %v3752
  %4130 = vmatpush1.msra.mxu0 %v3751
  %4131 = vmatprep.subr.mxu0 %v3754
  %4132 = vmatpush1.msra.mxu0 %v3753
  %4133 = vmatprep.mubr.f32.mxu0 %v4065
  %4134 = vmatmul.mubr.f32.gmra.mrb[0].mxu0 %v4064
  %v4135 = vpop.f32.mrb[0].mxu0
  %v4136 = vadd.f32 0.0, %v4135
  %v4137 = vpop.f32.mrb[0].mxu0
  %v4138 = vadd.f32 0.0, %v4137
  %4139 = vdwg.mxu0
  %4140 = vmatprep.subr.mxu0 %v3756
  %4141 = vmatpush1.msra.mxu0 %v3755
  %4142 = vmatprep.subr.mxu0 %v3758
  %4143 = vmatpush1.msra.mxu0 %v3757
  %4144 = vmatprep.subr.mxu0 %v3760
  %4145 = vmatpush1.msra.mxu0 %v3759
  %4146 = vmatprep.subr.mxu0 %v3762
  %4147 = vmatpush1.msra.mxu0 %v3761
  %4148 = vmatprep.subr.mxu0 %v3764
  %4149 = vmatpush1.msra.mxu0 %v3763
  %4150 = vmatprep.subr.mxu0 %v3766
  %4151 = vmatpush1.msra.mxu0 %v3765
  %4152 = vmatprep.subr.mxu0 %v3768
  %4153 = vmatpush1.msra.mxu0 %v3767
  %4154 = vmatprep.subr.mxu0 %v3770
  %4155 = vmatpush1.msra.mxu0 %v3769
  %4156 = vmatprep.subr.mxu0 %v3772
  %4157 = vmatpush1.msra.mxu0 %v3771
  %4158 = vmatprep.subr.mxu0 %v3774
  %4159 = vmatpush1.msra.mxu0 %v3773
  %4160 = vmatprep.subr.mxu0 %v3776
  %4161 = vmatpush1.msra.mxu0 %v3775
  %4162 = vmatprep.subr.mxu0 %v3778
  %4163 = vmatpush1.msra.mxu0 %v3777
  %4164 = vmatprep.subr.mxu0 %v3780
  %4165 = vmatpush1.msra.mxu0 %v3779
  %4166 = vmatprep.subr.mxu0 %v3782
  %4167 = vmatpush1.msra.mxu0 %v3781
  %4168 = vmatprep.subr.mxu0 %v3784
  %4169 = vmatpush1.msra.mxu0 %v3783
  %4170 = vmatprep.subr.mxu0 %v3786
  %4171 = vmatpush1.msra.mxu0 %v3785
  %4172 = vmatprep.subr.mxu0 %v3788
  %4173 = vmatpush1.msra.mxu0 %v3787
  %4174 = vmatprep.subr.mxu0 %v3790
  %4175 = vmatpush1.msra.mxu0 %v3789
  %4176 = vmatprep.subr.mxu0 %v3792
  %4177 = vmatpush1.msra.mxu0 %v3791
  %4178 = vmatprep.subr.mxu0 %v3794
  %4179 = vmatpush1.msra.mxu0 %v3793
  %4180 = vmatprep.subr.mxu0 %v3796
  %4181 = vmatpush1.msra.mxu0 %v3795
  %4182 = vmatprep.subr.mxu0 %v3798
  %4183 = vmatpush1.msra.mxu0 %v3797
  %4184 = vmatprep.subr.mxu0 %v3800
  %4185 = vmatpush1.msra.mxu0 %v3799
  %4186 = vmatprep.subr.mxu0 %v3802
  %4187 = vmatpush1.msra.mxu0 %v3801
  %4188 = vmatprep.subr.mxu0 %v3804
  %4189 = vmatpush1.msra.mxu0 %v3803
  %4190 = vmatprep.subr.mxu0 %v3806
  %4191 = vmatpush1.msra.mxu0 %v3805
  %4192 = vmatprep.subr.mxu0 %v3808
  %4193 = vmatpush1.msra.mxu0 %v3807
  %4194 = vmatprep.subr.mxu0 %v3810
  %4195 = vmatpush1.msra.mxu0 %v3809
  %4196 = vmatprep.subr.mxu0 %v3812
  %4197 = vmatpush1.msra.mxu0 %v3811
  %4198 = vmatprep.subr.mxu0 %v3814
  %4199 = vmatpush1.msra.mxu0 %v3813
  %4200 = vmatprep.subr.mxu0 %v3816
  %4201 = vmatpush1.msra.mxu0 %v3815
  %4202 = vmatprep.subr.mxu0 %v3818
  %4203 = vmatpush1.msra.mxu0 %v3817
  %4204 = vmatprep.mubr.f32.mxu0 %v4067
  %4205 = vmatmul.mubr.f32.gmra.mrb[0].mxu0 %v4066
  %v4206 = vpop.f32.mrb[0].mxu0
  %v4207 = vadd.f32 %v4136, %v4206
  %v4208 = vpop.f32.mrb[0].mxu0
  %v4209 = vadd.f32 %v4138, %v4208
  %4210 = vdwg.mxu0
  %4211 = vmatprep.subr.mxu0 %v3820
  %4212 = vmatpush1.msra.mxu0 %v3819
  %4213 = vmatprep.subr.mxu0 %v3822
  %4214 = vmatpush1.msra.mxu0 %v3821
  %4215 = vmatprep.subr.mxu0 %v3824
  %4216 = vmatpush1.msra.mxu0 %v3823
  %4217 = vmatprep.subr.mxu0 %v3826
  %4218 = vmatpush1.msra.mxu0 %v3825
  %4219 = vmatprep.subr.mxu0 %v3828
  %4220 = vmatpush1.msra.mxu0 %v3827
  %4221 = vmatprep.subr.mxu0 %v3830
  %4222 = vmatpush1.msra.mxu0 %v3829
  %4223 = vmatprep.subr.mxu0 %v3832
  %4224 = vmatpush1.msra.mxu0 %v3831
  %4225 = vmatprep.subr.mxu0 %v3834
  %4226 = vmatpush1.msra.mxu0 %v3833
  %4227 = vmatprep.subr.mxu0 %v3836
  %4228 = vmatpush1.msra.mxu0 %v3835
  %4229 = vmatprep.subr.mxu0 %v3838
  %4230 = vmatpush1.msra.mxu0 %v3837
  %4231 = vmatprep.subr.mxu0 %v3840
  %4232 = vmatpush1.msra.mxu0 %v3839
  %4233 = vmatprep.subr.mxu0 %v3842
  %4234 = vmatpush1.msra.mxu0 %v3841
  %4235 = vmatprep.subr.mxu0 %v3844
  %4236 = vmatpush1.msra.mxu0 %v3843
  %4237 = vmatprep.subr.mxu0 %v3846
  %4238 = vmatpush1.msra.mxu0 %v3845
  %4239 = vmatprep.subr.mxu0 %v3848
  %4240 = vmatpush1.msra.mxu0 %v3847
  %4241 = vmatprep.subr.mxu0 %v3850
  %4242 = vmatpush1.msra.mxu0 %v3849
  %4243 = vmatprep.subr.mxu0 0.0
  %4244 = vmatpush1.msra.mxu0 0.0
  %4245 = vmatprep.subr.mxu0 0.0
  %4246 = vmatpush1.msra.mxu0 0.0
  %4247 = vmatprep.subr.mxu0 0.0
  %4248 = vmatpush1.msra.mxu0 0.0
  %4249 = vmatprep.subr.mxu0 0.0
  %4250 = vmatpush1.msra.mxu0 0.0
  %4251 = vmatprep.subr.mxu0 0.0
  %4252 = vmatpush1.msra.mxu0 0.0
  %4253 = vmatprep.subr.mxu0 0.0
  %4254 = vmatpush1.msra.mxu0 0.0
  %4255 = vmatprep.subr.mxu0 0.0
  %4256 = vmatpush1.msra.mxu0 0.0
  %4257 = vmatprep.subr.mxu0 0.0
  %4258 = vmatpush1.msra.mxu0 0.0
  %4259 = vmatprep.subr.mxu0 0.0
  %4260 = vmatpush1.msra.mxu0 0.0
  %4261 = vmatprep.subr.mxu0 0.0
  %4262 = vmatpush1.msra.mxu0 0.0
  %4263 = vmatprep.subr.mxu0 0.0
  %4264 = vmatpush1.msra.mxu0 0.0
  %4265 = vmatprep.subr.mxu0 0.0
  %4266 = vmatpush1.msra.mxu0 0.0
  %4267 = vmatprep.subr.mxu0 0.0
  %4268 = vmatpush1.msra.mxu0 0.0
  %4269 = vmatprep.subr.mxu0 0.0
  %4270 = vmatpush1.msra.mxu0 0.0
  %4271 = vmatprep.subr.mxu0 0.0
  %4272 = vmatpush1.msra.mxu0 0.0
  %4273 = vmatprep.subr.mxu0 0.0
  %4274 = vmatpush1.msra.mxu0 0.0
  %4275 = vmatprep.mubr.f32.mxu0 0.0
  %4276 = vmatmul.mubr.f32.gmra.mrb[0].mxu0 %v4068
  %v4277 = vpop.f32.mrb[0].mxu0
  %v4278 = vadd.f32 %v4207, %v4277
  %v4279 = vpop.f32.mrb[0].mxu0
  %v4280 = vadd.f32 %v4209, %v4279
  %4281 = vdwg.mxu0
  %v4282 = vmax.f32 %v4060, %v4278
  %v4283 = vmax.f32 %v4062, %v4280
  %v4284 = vmax.f32 %v4282, %v4283
  %v4285 = vld [vmem:[%s2] sm:$0x1]
  %v4287 = vlaneseq
  %v4288 = vshrl.u32 %v4287, 7
  %v4289 = vsub.s32 0, %v4288
  %v4290 = vrot.slane %v4285, %v4289
  %v4292 = vadd.f32 %v4284, %v4290
  %v4293 = vmax.f32 %v4292, 0.0
  %4294 = vst [vmem:[#allocation2 + $0x30] sm:$0xff] %v4293
  %v4295 = vld [vmem:[%s0 + $0x70] sm:$0xff]
  %v4296 = vld [vmem:[%s0 + $0x78] sm:$0xff]
  %v4297 = vld [vmem:[%s0 + $0x80] sm:$0xff]
  %v4298 = vld [vmem:[%s0 + $0x88] sm:$0xff]
  %v4299 = vld [vmem:[%s0 + $0x90] sm:$0xff]
  %v4300 = vld [vmem:[%s1] sm:$0xff]
  %v4301 = vld [vmem:[%s1 + $0x8] sm:$0xff]
  %v4302 = vld [vmem:[%s1 + $0x10] sm:$0xff]
  %v4303 = vld [vmem:[%s1 + $0x18] sm:$0xff]
  %v4304 = vld [vmem:[%s1 + $0x20] sm:$0xff]
  %v4305 = vld [vmem:[%s1 + $0x28] sm:$0xff]
  %v4306 = vld [vmem:[%s1 + $0x30] sm:$0xff]
  %v4307 = vld [vmem:[%s1 + $0x38] sm:$0xff]
  %v4308 = vld [vmem:[%s1 + $0x40] sm:$0xff]
  %v4309 = vld [vmem:[%s1 + $0x48] sm:$0xff]
  %v4310 = vld [vmem:[%s1 + $0x50] sm:$0xff]
  %v4311 = vld [vmem:[%s1 + $0x58] sm:$0xff]
  %v4312 = vld [vmem:[%s1 + $0x60] sm:$0xff]
  %v4313 = vld [vmem:[%s1 + $0x68] sm:$0xff]
  %v4314 = vld [vmem:[%s1 + $0x70] sm:$0xff]
  %v4315 = vld [vmem:[%s1 + $0x78] sm:$0xff]
  %v4316 = vld [vmem:[%s1 + $0x80] sm:$0xff]
  %v4317 = vld [vmem:[%s1 + $0x88] sm:$0xff]
  %v4318 = vld [vmem:[%s1 + $0x90] sm:$0xff]
  %v4319 = vld [vmem:[%s1 + $0x98] sm:$0xff]
  %v4320 = vld [vmem:[%s1 + $0xa0] sm:$0xff]
  %v4321 = vld [vmem:[%s1 + $0xa8] sm:$0xff]
  %v4322 = vld [vmem:[%s1 + $0xb0] sm:$0xff]
  %v4323 = vld [vmem:[%s1 + $0xb8] sm:$0xff]
  %v4324 = vld [vmem:[%s1 + $0xc0] sm:$0xff]
  %v4325 = vld [vmem:[%s1 + $0xc8] sm:$0xff]
  %v4326 = vld [vmem:[%s1 + $0xd0] sm:$0xff]
  %v4327 = vld [vmem:[%s1 + $0xd8] sm:$0xff]
  %v4328 = vld [vmem:[%s1 + $0xe0] sm:$0xff]
  %v4329 = vld [vmem:[%s1 + $0xe8] sm:$0xff]
  %v4330 = vld [vmem:[%s1 + $0xf0] sm:$0xff]
  %v4331 = vld [vmem:[%s1 + $0xf8] sm:$0xff]
  %v4332 = vld [vmem:[%s1 + $0x100] sm:$0xff]
  %v4333 = vld [vmem:[%s1 + $0x108] sm:$0xff]
  %v4334 = vld [vmem:[%s1 + $0x110] sm:$0xff]
  %v4335 = vld [vmem:[%s1 + $0x118] sm:$0xff]
  %v4336 = vld [vmem:[%s1 + $0x120] sm:$0xff]
  %v4337 = vld [vmem:[%s1 + $0x128] sm:$0xff]
  %v4338 = vld [vmem:[%s1 + $0x130] sm:$0xff]
  %v4339 = vld [vmem:[%s1 + $0x138] sm:$0xff]
  %v4340 = vld [vmem:[%s1 + $0x140] sm:$0xff]
  %v4341 = vld [vmem:[%s1 + $0x148] sm:$0xff]
  %v4342 = vld [vmem:[%s1 + $0x150] sm:$0xff]
  %v4343 = vld [vmem:[%s1 + $0x158] sm:$0xff]
  %v4344 = vld [vmem:[%s1 + $0x160] sm:$0xff]
  %v4345 = vld [vmem:[%s1 + $0x168] sm:$0xff]
  %v4346 = vld [vmem:[%s1 + $0x170] sm:$0xff]
  %v4347 = vld [vmem:[%s1 + $0x178] sm:$0xff]
  %v4348 = vld [vmem:[%s1 + $0x180] sm:$0xff]
  %v4349 = vld [vmem:[%s1 + $0x188] sm:$0xff]
  %v4350 = vld [vmem:[%s1 + $0x190] sm:$0xff]
  %v4351 = vld [vmem:[%s1 + $0x198] sm:$0xff]
  %v4352 = vld [vmem:[%s1 + $0x1a0] sm:$0xff]
  %v4353 = vld [vmem:[%s1 + $0x1a8] sm:$0xff]
  %v4354 = vld [vmem:[%s1 + $0x1b0] sm:$0xff]
  %v4355 = vld [vmem:[%s1 + $0x1b8] sm:$0xff]
  %v4356 = vld [vmem:[%s1 + $0x1c0] sm:$0xff]
  %v4357 = vld [vmem:[%s1 + $0x1c8] sm:$0xff]
  %v4358 = vld [vmem:[%s1 + $0x1d0] sm:$0xff]
  %v4359 = vld [vmem:[%s1 + $0x1d8] sm:$0xff]
  %v4360 = vld [vmem:[%s1 + $0x1e0] sm:$0xff]
  %v4361 = vld [vmem:[%s1 + $0x1e8] sm:$0xff]
  %v4362 = vld [vmem:[%s1 + $0x1f0] sm:$0xff]
  %v4363 = vld [vmem:[%s1 + $0x1f8] sm:$0xff]
  %v4364 = vld [vmem:[%s1 + $0x200] sm:$0xff]
  %v4365 = vld [vmem:[%s1 + $0x208] sm:$0xff]
  %v4366 = vld [vmem:[%s1 + $0x210] sm:$0xff]
  %v4367 = vld [vmem:[%s1 + $0x218] sm:$0xff]
  %v4368 = vld [vmem:[%s1 + $0x220] sm:$0xff]
  %v4369 = vld [vmem:[%s1 + $0x228] sm:$0xff]
  %v4370 = vld [vmem:[%s1 + $0x230] sm:$0xff]
  %v4371 = vld [vmem:[%s1 + $0x238] sm:$0xff]
  %v4372 = vld [vmem:[%s1 + $0x240] sm:$0xff]
  %v4373 = vld [vmem:[%s1 + $0x248] sm:$0xff]
  %v4374 = vld [vmem:[%s1 + $0x250] sm:$0xff]
  %v4375 = vld [vmem:[%s1 + $0x258] sm:$0xff]
  %v4376 = vld [vmem:[%s1 + $0x260] sm:$0xff]
  %v4377 = vld [vmem:[%s1 + $0x268] sm:$0xff]
  %v4378 = vld [vmem:[%s1 + $0x270] sm:$0xff]
  %v4379 = vld [vmem:[%s1 + $0x278] sm:$0xff]
  %v4380 = vld [vmem:[%s1 + $0x280] sm:$0xff]
  %v4381 = vld [vmem:[%s1 + $0x288] sm:$0xff]
  %v4382 = vld [vmem:[%s1 + $0x290] sm:$0xff]
  %v4383 = vld [vmem:[%s1 + $0x298] sm:$0xff]
  %v4384 = vld [vmem:[%s1 + $0x2a0] sm:$0xff]
  %v4385 = vld [vmem:[%s1 + $0x2a8] sm:$0xff]
  %v4386 = vld [vmem:[%s1 + $0x2b0] sm:$0xff]
  %v4387 = vld [vmem:[%s1 + $0x2b8] sm:$0xff]
  %v4388 = vld [vmem:[%s1 + $0x2c0] sm:$0xff]
  %v4389 = vld [vmem:[%s1 + $0x2c8] sm:$0xff]
  %v4390 = vld [vmem:[%s1 + $0x2d0] sm:$0xff]
  %v4391 = vld [vmem:[%s1 + $0x2d8] sm:$0xff]
  %v4392 = vld [vmem:[%s1 + $0x2e0] sm:$0xff]
  %v4393 = vld [vmem:[%s1 + $0x2e8] sm:$0xff]
  %v4394 = vld [vmem:[%s1 + $0x2f0] sm:$0xff]
  %v4395 = vld [vmem:[%s1 + $0x2f8] sm:$0xff]
  %v4396 = vld [vmem:[%s1 + $0x300] sm:$0xff]
  %v4397 = vld [vmem:[%s1 + $0x308] sm:$0xff]
  %v4398 = vld [vmem:[%s1 + $0x310] sm:$0xff]
  %v4399 = vld [vmem:[%s1 + $0x318] sm:$0xff]
  %v4400 = vld [vmem:[%s1 + $0x320] sm:$0xff]
  %v4401 = vld [vmem:[%s1 + $0x328] sm:$0xff]
  %v4402 = vld [vmem:[%s1 + $0x330] sm:$0xff]
  %v4403 = vld [vmem:[%s1 + $0x338] sm:$0xff]
  %v4404 = vld [vmem:[%s1 + $0x340] sm:$0xff]
  %v4405 = vld [vmem:[%s1 + $0x348] sm:$0xff]
  %v4406 = vld [vmem:[%s1 + $0x350] sm:$0xff]
  %v4407 = vld [vmem:[%s1 + $0x358] sm:$0xff]
  %v4408 = vld [vmem:[%s1 + $0x360] sm:$0xff]
  %v4409 = vld [vmem:[%s1 + $0x368] sm:$0xff]
  %v4410 = vld [vmem:[%s1 + $0x370] sm:$0xff]
  %v4411 = vld [vmem:[%s1 + $0x378] sm:$0xff]
  %v4412 = vld [vmem:[%s1 + $0x380] sm:$0xff]
  %v4413 = vld [vmem:[%s1 + $0x388] sm:$0xff]
  %v4414 = vld [vmem:[%s1 + $0x390] sm:$0xff]
  %v4415 = vld [vmem:[%s1 + $0x398] sm:$0xff]
  %v4416 = vld [vmem:[%s1 + $0x3a0] sm:$0xff]
  %v4417 = vld [vmem:[%s1 + $0x3a8] sm:$0xff]
  %v4418 = vld [vmem:[%s1 + $0x3b0] sm:$0xff]
  %v4419 = vld [vmem:[%s1 + $0x3b8] sm:$0xff]
  %v4420 = vld [vmem:[%s1 + $0x3c0] sm:$0xff]
  %v4421 = vld [vmem:[%s1 + $0x3c8] sm:$0xff]
  %v4422 = vld [vmem:[%s1 + $0x3d0] sm:$0xff]
  %v4423 = vld [vmem:[%s1 + $0x3d8] sm:$0xff]
  %v4424 = vld [vmem:[%s1 + $0x3e0] sm:$0xff]
  %v4425 = vld [vmem:[%s1 + $0x3e8] sm:$0xff]
  %v4426 = vld [vmem:[%s1 + $0x3f0] sm:$0xff]
  %v4427 = vld [vmem:[%s1 + $0x3f8] sm:$0xff]
  %v4428 = vld [vmem:[%s1 + $0x400] sm:$0xff]
  %v4429 = vld [vmem:[%s1 + $0x408] sm:$0xff]
  %v4430 = vld [vmem:[%s1 + $0x410] sm:$0xff]
  %v4431 = vld [vmem:[%s1 + $0x418] sm:$0xff]
  %v4432 = vld [vmem:[%s1 + $0x420] sm:$0xff]
  %v4433 = vld [vmem:[%s1 + $0x428] sm:$0xff]
  %v4434 = vld [vmem:[%s1 + $0x430] sm:$0xff]
  %v4435 = vld [vmem:[%s1 + $0x438] sm:$0xff]
  %v4436 = vld [vmem:[%s1 + $0x440] sm:$0xff]
  %v4437 = vld [vmem:[%s1 + $0x448] sm:$0xff]
  %v4438 = vld [vmem:[%s1 + $0x450] sm:$0xff]
  %v4439 = vld [vmem:[%s1 + $0x458] sm:$0xff]
  %v4440 = vld [vmem:[%s1 + $0x460] sm:$0xff]
  %v4441 = vld [vmem:[%s1 + $0x468] sm:$0xff]
  %v4442 = vld [vmem:[%s1 + $0x470] sm:$0xff]
  %v4443 = vld [vmem:[%s1 + $0x478] sm:$0xff]
  %v4444 = vld [vmem:[%s1 + $0x480] sm:$0xff]
  %v4445 = vld [vmem:[%s1 + $0x488] sm:$0xff]
  %v4446 = vld [vmem:[%s1 + $0x490] sm:$0xff]
  %v4447 = vld [vmem:[%s1 + $0x498] sm:$0xff]
  %v4448 = vld [vmem:[%s1 + $0x4a0] sm:$0xff]
  %v4449 = vld [vmem:[%s1 + $0x4a8] sm:$0xff]
  %v4450 = vld [vmem:[%s1 + $0x4b0] sm:$0xff]
  %v4451 = vld [vmem:[%s1 + $0x4b8] sm:$0xff]
  %v4452 = vld [vmem:[%s1 + $0x4c0] sm:$0xff]
  %v4453 = vld [vmem:[%s1 + $0x4c8] sm:$0xff]
  %v4454 = vld [vmem:[%s1 + $0x4d0] sm:$0xff]
  %v4455 = vld [vmem:[%s1 + $0x4d8] sm:$0xff]
  %v4456 = vld [vmem:[%s1 + $0x4e0] sm:$0xff]
  %v4457 = vld [vmem:[%s1 + $0x4e8] sm:$0xff]
  %v4458 = vld [vmem:[%s1 + $0x4f0] sm:$0xff]
  %v4459 = vld [vmem:[%s1 + $0x4f8] sm:$0xff]
  %4460 = vmatprep.subr.mxu0 %v4301
  %4461 = vmatpush1.msra.mxu0 %v4300
  %4462 = vmatprep.subr.mxu0 %v4303
  %4463 = vmatpush1.msra.mxu0 %v4302
  %4464 = vmatprep.subr.mxu0 %v4305
  %4465 = vmatpush1.msra.mxu0 %v4304
  %4466 = vmatprep.subr.mxu0 %v4307
  %4467 = vmatpush1.msra.mxu0 %v4306
  %4468 = vmatprep.subr.mxu0 %v4309
  %4469 = vmatpush1.msra.mxu0 %v4308
  %4470 = vmatprep.subr.mxu0 %v4311
  %4471 = vmatpush1.msra.mxu0 %v4310
  %4472 = vmatprep.subr.mxu0 %v4313
  %4473 = vmatpush1.msra.mxu0 %v4312
  %4474 = vmatprep.subr.mxu0 %v4315
  %4475 = vmatpush1.msra.mxu0 %v4314
  %4476 = vmatprep.subr.mxu0 %v4317
  %4477 = vmatpush1.msra.mxu0 %v4316
  %4478 = vmatprep.subr.mxu0 %v4319
  %4479 = vmatpush1.msra.mxu0 %v4318
  %4480 = vmatprep.subr.mxu0 %v4321
  %4481 = vmatpush1.msra.mxu0 %v4320
  %4482 = vmatprep.subr.mxu0 %v4323
  %4483 = vmatpush1.msra.mxu0 %v4322
  %4484 = vmatprep.subr.mxu0 %v4325
  %4485 = vmatpush1.msra.mxu0 %v4324
  %4486 = vmatprep.subr.mxu0 %v4327
  %4487 = vmatpush1.msra.mxu0 %v4326
  %4488 = vmatprep.subr.mxu0 %v4329
  %4489 = vmatpush1.msra.mxu0 %v4328
  %4490 = vmatprep.subr.mxu0 %v4331
  %4491 = vmatpush1.msra.mxu0 %v4330
  %4492 = vmatprep.subr.mxu0 %v4333
  %4493 = vmatpush1.msra.mxu0 %v4332
  %4494 = vmatprep.subr.mxu0 %v4335
  %4495 = vmatpush1.msra.mxu0 %v4334
  %4496 = vmatprep.subr.mxu0 %v4337
  %4497 = vmatpush1.msra.mxu0 %v4336
  %4498 = vmatprep.subr.mxu0 %v4339
  %4499 = vmatpush1.msra.mxu0 %v4338
  %4500 = vmatprep.subr.mxu0 %v4341
  %4501 = vmatpush1.msra.mxu0 %v4340
  %4502 = vmatprep.subr.mxu0 %v4343
  %4503 = vmatpush1.msra.mxu0 %v4342
  %4504 = vmatprep.subr.mxu0 %v4345
  %4505 = vmatpush1.msra.mxu0 %v4344
  %4506 = vmatprep.subr.mxu0 %v4347
  %4507 = vmatpush1.msra.mxu0 %v4346
  %4508 = vmatprep.subr.mxu0 %v4349
  %4509 = vmatpush1.msra.mxu0 %v4348
  %4510 = vmatprep.subr.mxu0 %v4351
  %4511 = vmatpush1.msra.mxu0 %v4350
  %4512 = vmatprep.subr.mxu0 %v4353
  %4513 = vmatpush1.msra.mxu0 %v4352
  %4514 = vmatprep.subr.mxu0 %v4355
  %4515 = vmatpush1.msra.mxu0 %v4354
  %4516 = vmatprep.subr.mxu0 %v4357
  %4517 = vmatpush1.msra.mxu0 %v4356
  %4518 = vmatprep.subr.mxu0 %v4359
  %4519 = vmatpush1.msra.mxu0 %v4358
  %4520 = vmatprep.subr.mxu0 %v4361
  %4521 = vmatpush1.msra.mxu0 %v4360
  %4522 = vmatprep.subr.mxu0 %v4363
  %4523 = vmatpush1.msra.mxu0 %v4362
  %4524 = vmatprep.mubr.f32.mxu0 %v4296
  %4525 = vmatmul.mubr.f32.gmra.mrb[0].mxu0 %v4295
  %v4526 = vpop.f32.mrb[0].mxu0
  %v4527 = vadd.f32 0.0, %v4526
  %v4528 = vpop.f32.mrb[0].mxu0
  %v4529 = vadd.f32 0.0, %v4528
  %4530 = vdwg.mxu0
  %4531 = vmatprep.subr.mxu0 %v4365
  %4532 = vmatpush1.msra.mxu0 %v4364
  %4533 = vmatprep.subr.mxu0 %v4367
  %4534 = vmatpush1.msra.mxu0 %v4366
  %4535 = vmatprep.subr.mxu0 %v4369
  %4536 = vmatpush1.msra.mxu0 %v4368
  %4537 = vmatprep.subr.mxu0 %v4371
  %4538 = vmatpush1.msra.mxu0 %v4370
  %4539 = vmatprep.subr.mxu0 %v4373
  %4540 = vmatpush1.msra.mxu0 %v4372
  %4541 = vmatprep.subr.mxu0 %v4375
  %4542 = vmatpush1.msra.mxu0 %v4374
  %4543 = vmatprep.subr.mxu0 %v4377
  %4544 = vmatpush1.msra.mxu0 %v4376
  %4545 = vmatprep.subr.mxu0 %v4379
  %4546 = vmatpush1.msra.mxu0 %v4378
  %4547 = vmatprep.subr.mxu0 %v4381
  %4548 = vmatpush1.msra.mxu0 %v4380
  %4549 = vmatprep.subr.mxu0 %v4383
  %4550 = vmatpush1.msra.mxu0 %v4382
  %4551 = vmatprep.subr.mxu0 %v4385
  %4552 = vmatpush1.msra.mxu0 %v4384
  %4553 = vmatprep.subr.mxu0 %v4387
  %4554 = vmatpush1.msra.mxu0 %v4386
  %4555 = vmatprep.subr.mxu0 %v4389
  %4556 = vmatpush1.msra.mxu0 %v4388
  %4557 = vmatprep.subr.mxu0 %v4391
  %4558 = vmatpush1.msra.mxu0 %v4390
  %4559 = vmatprep.subr.mxu0 %v4393
  %4560 = vmatpush1.msra.mxu0 %v4392
  %4561 = vmatprep.subr.mxu0 %v4395
  %4562 = vmatpush1.msra.mxu0 %v4394
  %4563 = vmatprep.subr.mxu0 %v4397
  %4564 = vmatpush1.msra.mxu0 %v4396
  %4565 = vmatprep.subr.mxu0 %v4399
  %4566 = vmatpush1.msra.mxu0 %v4398
  %4567 = vmatprep.subr.mxu0 %v4401
  %4568 = vmatpush1.msra.mxu0 %v4400
  %4569 = vmatprep.subr.mxu0 %v4403
  %4570 = vmatpush1.msra.mxu0 %v4402
  %4571 = vmatprep.subr.mxu0 %v4405
  %4572 = vmatpush1.msra.mxu0 %v4404
  %4573 = vmatprep.subr.mxu0 %v4407
  %4574 = vmatpush1.msra.mxu0 %v4406
  %4575 = vmatprep.subr.mxu0 %v4409
  %4576 = vmatpush1.msra.mxu0 %v4408
  %4577 = vmatprep.subr.mxu0 %v4411
  %4578 = vmatpush1.msra.mxu0 %v4410
  %4579 = vmatprep.subr.mxu0 %v4413
  %4580 = vmatpush1.msra.mxu0 %v4412
  %4581 = vmatprep.subr.mxu0 %v4415
  %4582 = vmatpush1.msra.mxu0 %v4414
  %4583 = vmatprep.subr.mxu0 %v4417
  %4584 = vmatpush1.msra.mxu0 %v4416
  %4585 = vmatprep.subr.mxu0 %v4419
  %4586 = vmatpush1.msra.mxu0 %v4418
  %4587 = vmatprep.subr.mxu0 %v4421
  %4588 = vmatpush1.msra.mxu0 %v4420
  %4589 = vmatprep.subr.mxu0 %v4423
  %4590 = vmatpush1.msra.mxu0 %v4422
  %4591 = vmatprep.subr.mxu0 %v4425
  %4592 = vmatpush1.msra.mxu0 %v4424
  %4593 = vmatprep.subr.mxu0 %v4427
  %4594 = vmatpush1.msra.mxu0 %v4426
  %4595 = vmatprep.mubr.f32.mxu0 %v4298
  %4596 = vmatmul.mubr.f32.gmra.mrb[0].mxu0 %v4297
  %v4597 = vpop.f32.mrb[0].mxu0
  %v4598 = vadd.f32 %v4527, %v4597
  %v4599 = vpop.f32.mrb[0].mxu0
  %v4600 = vadd.f32 %v4529, %v4599
  %4601 = vdwg.mxu0
  %4602 = vmatprep.subr.mxu0 %v4429
  %4603 = vmatpush1.msra.mxu0 %v4428
  %4604 = vmatprep.subr.mxu0 %v4431
  %4605 = vmatpush1.msra.mxu0 %v4430
  %4606 = vmatprep.subr.mxu0 %v4433
  %4607 = vmatpush1.msra.mxu0 %v4432
  %4608 = vmatprep.subr.mxu0 %v4435
  %4609 = vmatpush1.msra.mxu0 %v4434
  %4610 = vmatprep.subr.mxu0 %v4437
  %4611 = vmatpush1.msra.mxu0 %v4436
  %4612 = vmatprep.subr.mxu0 %v4439
  %4613 = vmatpush1.msra.mxu0 %v4438
  %4614 = vmatprep.subr.mxu0 %v4441
  %4615 = vmatpush1.msra.mxu0 %v4440
  %4616 = vmatprep.subr.mxu0 %v4443
  %4617 = vmatpush1.msra.mxu0 %v4442
  %4618 = vmatprep.subr.mxu0 %v4445
  %4619 = vmatpush1.msra.mxu0 %v4444
  %4620 = vmatprep.subr.mxu0 %v4447
  %4621 = vmatpush1.msra.mxu0 %v4446
  %4622 = vmatprep.subr.mxu0 %v4449
  %4623 = vmatpush1.msra.mxu0 %v4448
  %4624 = vmatprep.subr.mxu0 %v4451
  %4625 = vmatpush1.msra.mxu0 %v4450
  %4626 = vmatprep.subr.mxu0 %v4453
  %4627 = vmatpush1.msra.mxu0 %v4452
  %4628 = vmatprep.subr.mxu0 %v4455
  %4629 = vmatpush1.msra.mxu0 %v4454
  %4630 = vmatprep.subr.mxu0 %v4457
  %4631 = vmatpush1.msra.mxu0 %v4456
  %4632 = vmatprep.subr.mxu0 %v4459
  %4633 = vmatpush1.msra.mxu0 %v4458
  %4634 = vmatprep.subr.mxu0 0.0
  %4635 = vmatpush1.msra.mxu0 0.0
  %4636 = vmatprep.subr.mxu0 0.0
  %4637 = vmatpush1.msra.mxu0 0.0
  %4638 = vmatprep.subr.mxu0 0.0
  %4639 = vmatpush1.msra.mxu0 0.0
  %4640 = vmatprep.subr.mxu0 0.0
  %4641 = vmatpush1.msra.mxu0 0.0
  %4642 = vmatprep.subr.mxu0 0.0
  %4643 = vmatpush1.msra.mxu0 0.0
  %4644 = vmatprep.subr.mxu0 0.0
  %4645 = vmatpush1.msra.mxu0 0.0
  %4646 = vmatprep.subr.mxu0 0.0
  %4647 = vmatpush1.msra.mxu0 0.0
  %4648 = vmatprep.subr.mxu0 0.0
  %4649 = vmatpush1.msra.mxu0 0.0
  %4650 = vmatprep.subr.mxu0 0.0
  %4651 = vmatpush1.msra.mxu0 0.0
  %4652 = vmatprep.subr.mxu0 0.0
  %4653 = vmatpush1.msra.mxu0 0.0
  %4654 = vmatprep.subr.mxu0 0.0
  %4655 = vmatpush1.msra.mxu0 0.0
  %4656 = vmatprep.subr.mxu0 0.0
  %4657 = vmatpush1.msra.mxu0 0.0
  %4658 = vmatprep.subr.mxu0 0.0
  %4659 = vmatpush1.msra.mxu0 0.0
  %4660 = vmatprep.subr.mxu0 0.0
  %4661 = vmatpush1.msra.mxu0 0.0
  %4662 = vmatprep.subr.mxu0 0.0
  %4663 = vmatpush1.msra.mxu0 0.0
  %4664 = vmatprep.subr.mxu0 0.0
  %4665 = vmatpush1.msra.mxu0 0.0
  %4666 = vmatprep.mubr.f32.mxu0 0.0
  %4667 = vmatmul.mubr.f32.gmra.mrb[0].mxu0 %v4299
  %v4668 = vpop.f32.mrb[0].mxu0
  %v4669 = vadd.f32 %v4598, %v4668
  %v4670 = vpop.f32.mrb[0].mxu0
  %v4671 = vadd.f32 %v4600, %v4670
  %4672 = vdwg.mxu0
  %v4673 = vld [vmem:[%s0 + $0x78] sm:$0xff]
  %v4674 = vld [vmem:[%s0 + $0x80] sm:$0xff]
  %v4675 = vld [vmem:[%s0 + $0x88] sm:$0xff]
  %v4676 = vld [vmem:[%s0 + $0x90] sm:$0xff]
  %v4677 = vld [vmem:[%s0 + $0x98] sm:$0xff]
  %4678 = vmatprep.subr.mxu0 %v4301
  %4679 = vmatpush1.msra.mxu0 %v4300
  %4680 = vmatprep.subr.mxu0 %v4303
  %4681 = vmatpush1.msra.mxu0 %v4302
  %4682 = vmatprep.subr.mxu0 %v4305
  %4683 = vmatpush1.msra.mxu0 %v4304
  %4684 = vmatprep.subr.mxu0 %v4307
  %4685 = vmatpush1.msra.mxu0 %v4306
  %4686 = vmatprep.subr.mxu0 %v4309
  %4687 = vmatpush1.msra.mxu0 %v4308
  %4688 = vmatprep.subr.mxu0 %v4311
  %4689 = vmatpush1.msra.mxu0 %v4310
  %4690 = vmatprep.subr.mxu0 %v4313
  %4691 = vmatpush1.msra.mxu0 %v4312
  %4692 = vmatprep.subr.mxu0 %v4315
  %4693 = vmatpush1.msra.mxu0 %v4314
  %4694 = vmatprep.subr.mxu0 %v4317
  %4695 = vmatpush1.msra.mxu0 %v4316
  %4696 = vmatprep.subr.mxu0 %v4319
  %4697 = vmatpush1.msra.mxu0 %v4318
  %4698 = vmatprep.subr.mxu0 %v4321
  %4699 = vmatpush1.msra.mxu0 %v4320
  %4700 = vmatprep.subr.mxu0 %v4323
  %4701 = vmatpush1.msra.mxu0 %v4322
  %4702 = vmatprep.subr.mxu0 %v4325
  %4703 = vmatpush1.msra.mxu0 %v4324
  %4704 = vmatprep.subr.mxu0 %v4327
  %4705 = vmatpush1.msra.mxu0 %v4326
  %4706 = vmatprep.subr.mxu0 %v4329
  %4707 = vmatpush1.msra.mxu0 %v4328
  %4708 = vmatprep.subr.mxu0 %v4331
  %4709 = vmatpush1.msra.mxu0 %v4330
  %4710 = vmatprep.subr.mxu0 %v4333
  %4711 = vmatpush1.msra.mxu0 %v4332
  %4712 = vmatprep.subr.mxu0 %v4335
  %4713 = vmatpush1.msra.mxu0 %v4334
  %4714 = vmatprep.subr.mxu0 %v4337
  %4715 = vmatpush1.msra.mxu0 %v4336
  %4716 = vmatprep.subr.mxu0 %v4339
  %4717 = vmatpush1.msra.mxu0 %v4338
  %4718 = vmatprep.subr.mxu0 %v4341
  %4719 = vmatpush1.msra.mxu0 %v4340
  %4720 = vmatprep.subr.mxu0 %v4343
  %4721 = vmatpush1.msra.mxu0 %v4342
  %4722 = vmatprep.subr.mxu0 %v4345
  %4723 = vmatpush1.msra.mxu0 %v4344
  %4724 = vmatprep.subr.mxu0 %v4347
  %4725 = vmatpush1.msra.mxu0 %v4346
  %4726 = vmatprep.subr.mxu0 %v4349
  %4727 = vmatpush1.msra.mxu0 %v4348
  %4728 = vmatprep.subr.mxu0 %v4351
  %4729 = vmatpush1.msra.mxu0 %v4350
  %4730 = vmatprep.subr.mxu0 %v4353
  %4731 = vmatpush1.msra.mxu0 %v4352
  %4732 = vmatprep.subr.mxu0 %v4355
  %4733 = vmatpush1.msra.mxu0 %v4354
  %4734 = vmatprep.subr.mxu0 %v4357
  %4735 = vmatpush1.msra.mxu0 %v4356
  %4736 = vmatprep.subr.mxu0 %v4359
  %4737 = vmatpush1.msra.mxu0 %v4358
  %4738 = vmatprep.subr.mxu0 %v4361
  %4739 = vmatpush1.msra.mxu0 %v4360
  %4740 = vmatprep.subr.mxu0 %v4363
  %4741 = vmatpush1.msra.mxu0 %v4362
  %4742 = vmatprep.mubr.f32.mxu0 %v4674
  %4743 = vmatmul.mubr.f32.gmra.mrb[0].mxu0 %v4673
  %v4744 = vpop.f32.mrb[0].mxu0
  %v4745 = vadd.f32 0.0, %v4744
  %v4746 = vpop.f32.mrb[0].mxu0
  %v4747 = vadd.f32 0.0, %v4746
  %4748 = vdwg.mxu0
  %4749 = vmatprep.subr.mxu0 %v4365
  %4750 = vmatpush1.msra.mxu0 %v4364
  %4751 = vmatprep.subr.mxu0 %v4367
  %4752 = vmatpush1.msra.mxu0 %v4366
  %4753 = vmatprep.subr.mxu0 %v4369
  %4754 = vmatpush1.msra.mxu0 %v4368
  %4755 = vmatprep.subr.mxu0 %v4371
  %4756 = vmatpush1.msra.mxu0 %v4370
  %4757 = vmatprep.subr.mxu0 %v4373
  %4758 = vmatpush1.msra.mxu0 %v4372
  %4759 = vmatprep.subr.mxu0 %v4375
  %4760 = vmatpush1.msra.mxu0 %v4374
  %4761 = vmatprep.subr.mxu0 %v4377
  %4762 = vmatpush1.msra.mxu0 %v4376
  %4763 = vmatprep.subr.mxu0 %v4379
  %4764 = vmatpush1.msra.mxu0 %v4378
  %4765 = vmatprep.subr.mxu0 %v4381
  %4766 = vmatpush1.msra.mxu0 %v4380
  %4767 = vmatprep.subr.mxu0 %v4383
  %4768 = vmatpush1.msra.mxu0 %v4382
  %4769 = vmatprep.subr.mxu0 %v4385
  %4770 = vmatpush1.msra.mxu0 %v4384
  %4771 = vmatprep.subr.mxu0 %v4387
  %4772 = vmatpush1.msra.mxu0 %v4386
  %4773 = vmatprep.subr.mxu0 %v4389
  %4774 = vmatpush1.msra.mxu0 %v4388
  %4775 = vmatprep.subr.mxu0 %v4391
  %4776 = vmatpush1.msra.mxu0 %v4390
  %4777 = vmatprep.subr.mxu0 %v4393
  %4778 = vmatpush1.msra.mxu0 %v4392
  %4779 = vmatprep.subr.mxu0 %v4395
  %4780 = vmatpush1.msra.mxu0 %v4394
  %4781 = vmatprep.subr.mxu0 %v4397
  %4782 = vmatpush1.msra.mxu0 %v4396
  %4783 = vmatprep.subr.mxu0 %v4399
  %4784 = vmatpush1.msra.mxu0 %v4398
  %4785 = vmatprep.subr.mxu0 %v4401
  %4786 = vmatpush1.msra.mxu0 %v4400
  %4787 = vmatprep.subr.mxu0 %v4403
  %4788 = vmatpush1.msra.mxu0 %v4402
  %4789 = vmatprep.subr.mxu0 %v4405
  %4790 = vmatpush1.msra.mxu0 %v4404
  %4791 = vmatprep.subr.mxu0 %v4407
  %4792 = vmatpush1.msra.mxu0 %v4406
  %4793 = vmatprep.subr.mxu0 %v4409
  %4794 = vmatpush1.msra.mxu0 %v4408
  %4795 = vmatprep.subr.mxu0 %v4411
  %4796 = vmatpush1.msra.mxu0 %v4410
  %4797 = vmatprep.subr.mxu0 %v4413
  %4798 = vmatpush1.msra.mxu0 %v4412
  %4799 = vmatprep.subr.mxu0 %v4415
  %4800 = vmatpush1.msra.mxu0 %v4414
  %4801 = vmatprep.subr.mxu0 %v4417
  %4802 = vmatpush1.msra.mxu0 %v4416
  %4803 = vmatprep.subr.mxu0 %v4419
  %4804 = vmatpush1.msra.mxu0 %v4418
  %4805 = vmatprep.subr.mxu0 %v4421
  %4806 = vmatpush1.msra.mxu0 %v4420
  %4807 = vmatprep.subr.mxu0 %v4423
  %4808 = vmatpush1.msra.mxu0 %v4422
  %4809 = vmatprep.subr.mxu0 %v4425
  %4810 = vmatpush1.msra.mxu0 %v4424
  %4811 = vmatprep.subr.mxu0 %v4427
  %4812 = vmatpush1.msra.mxu0 %v4426
  %4813 = vmatprep.mubr.f32.mxu0 %v4676
  %4814 = vmatmul.mubr.f32.gmra.mrb[0].mxu0 %v4675
  %v4815 = vpop.f32.mrb[0].mxu0
  %v4816 = vadd.f32 %v4745, %v4815
  %v4817 = vpop.f32.mrb[0].mxu0
  %v4818 = vadd.f32 %v4747, %v4817
  %4819 = vdwg.mxu0
  %4820 = vmatprep.subr.mxu0 %v4429
  %4821 = vmatpush1.msra.mxu0 %v4428
  %4822 = vmatprep.subr.mxu0 %v4431
  %4823 = vmatpush1.msra.mxu0 %v4430
  %4824 = vmatprep.subr.mxu0 %v4433
  %4825 = vmatpush1.msra.mxu0 %v4432
  %4826 = vmatprep.subr.mxu0 %v4435
  %4827 = vmatpush1.msra.mxu0 %v4434
  %4828 = vmatprep.subr.mxu0 %v4437
  %4829 = vmatpush1.msra.mxu0 %v4436
  %4830 = vmatprep.subr.mxu0 %v4439
  %4831 = vmatpush1.msra.mxu0 %v4438
  %4832 = vmatprep.subr.mxu0 %v4441
  %4833 = vmatpush1.msra.mxu0 %v4440
  %4834 = vmatprep.subr.mxu0 %v4443
  %4835 = vmatpush1.msra.mxu0 %v4442
  %4836 = vmatprep.subr.mxu0 %v4445
  %4837 = vmatpush1.msra.mxu0 %v4444
  %4838 = vmatprep.subr.mxu0 %v4447
  %4839 = vmatpush1.msra.mxu0 %v4446
  %4840 = vmatprep.subr.mxu0 %v4449
  %4841 = vmatpush1.msra.mxu0 %v4448
  %4842 = vmatprep.subr.mxu0 %v4451
  %4843 = vmatpush1.msra.mxu0 %v4450
  %4844 = vmatprep.subr.mxu0 %v4453
  %4845 = vmatpush1.msra.mxu0 %v4452
  %4846 = vmatprep.subr.mxu0 %v4455
  %4847 = vmatpush1.msra.mxu0 %v4454
  %4848 = vmatprep.subr.mxu0 %v4457
  %4849 = vmatpush1.msra.mxu0 %v4456
  %4850 = vmatprep.subr.mxu0 %v4459
  %4851 = vmatpush1.msra.mxu0 %v4458
  %4852 = vmatprep.subr.mxu0 0.0
  %4853 = vmatpush1.msra.mxu0 0.0
  %4854 = vmatprep.subr.mxu0 0.0
  %4855 = vmatpush1.msra.mxu0 0.0
  %4856 = vmatprep.subr.mxu0 0.0
  %4857 = vmatpush1.msra.mxu0 0.0
  %4858 = vmatprep.subr.mxu0 0.0
  %4859 = vmatpush1.msra.mxu0 0.0
  %4860 = vmatprep.subr.mxu0 0.0
  %4861 = vmatpush1.msra.mxu0 0.0
  %4862 = vmatprep.subr.mxu0 0.0
  %4863 = vmatpush1.msra.mxu0 0.0
  %4864 = vmatprep.subr.mxu0 0.0
  %4865 = vmatpush1.msra.mxu0 0.0
  %4866 = vmatprep.subr.mxu0 0.0
  %4867 = vmatpush1.msra.mxu0 0.0
  %4868 = vmatprep.subr.mxu0 0.0
  %4869 = vmatpush1.msra.mxu0 0.0
  %4870 = vmatprep.subr.mxu0 0.0
  %4871 = vmatpush1.msra.mxu0 0.0
  %4872 = vmatprep.subr.mxu0 0.0
  %4873 = vmatpush1.msra.mxu0 0.0
  %4874 = vmatprep.subr.mxu0 0.0
  %4875 = vmatpush1.msra.mxu0 0.0
  %4876 = vmatprep.subr.mxu0 0.0
  %4877 = vmatpush1.msra.mxu0 0.0
  %4878 = vmatprep.subr.mxu0 0.0
  %4879 = vmatpush1.msra.mxu0 0.0
  %4880 = vmatprep.subr.mxu0 0.0
  %4881 = vmatpush1.msra.mxu0 0.0
  %4882 = vmatprep.subr.mxu0 0.0
  %4883 = vmatpush1.msra.mxu0 0.0
  %4884 = vmatprep.mubr.f32.mxu0 0.0
  %4885 = vmatmul.mubr.f32.gmra.mrb[0].mxu0 %v4677
  %v4886 = vpop.f32.mrb[0].mxu0
  %v4887 = vadd.f32 %v4816, %v4886
  %v4888 = vpop.f32.mrb[0].mxu0
  %v4889 = vadd.f32 %v4818, %v4888
  %4890 = vdwg.mxu0
  %v4891 = vmax.f32 %v4669, %v4887
  %v4892 = vmax.f32 %v4671, %v4889
  %v4893 = vmax.f32 %v4891, %v4892
  %v4894 = vld [vmem:[%s2] sm:$0x1]
  %v4896 = vlaneseq
  %v4897 = vshrl.u32 %v4896, 7
  %v4898 = vsub.s32 0, %v4897
  %v4899 = vrot.slane %v4894, %v4898
  %v4901 = vadd.f32 %v4893, %v4899
  %v4902 = vmax.f32 %v4901, 0.0
  %4903 = vst [vmem:[#allocation2 + $0x38] sm:$0xff] %v4902
  %v4904 = vld [vmem:[%s0 + $0x80] sm:$0xff]
  %v4905 = vld [vmem:[%s0 + $0x88] sm:$0xff]
  %v4906 = vld [vmem:[%s0 + $0x90] sm:$0xff]
  %v4907 = vld [vmem:[%s0 + $0x98] sm:$0xff]
  %v4908 = vld [vmem:[%s0 + $0xa0] sm:$0xff]
  %v4909 = vld [vmem:[%s1] sm:$0xff]
  %v4910 = vld [vmem:[%s1 + $0x8] sm:$0xff]
  %v4911 = vld [vmem:[%s1 + $0x10] sm:$0xff]
  %v4912 = vld [vmem:[%s1 + $0x18] sm:$0xff]
  %v4913 = vld [vmem:[%s1 + $0x20] sm:$0xff]
  %v4914 = vld [vmem:[%s1 + $0x28] sm:$0xff]
  %v4915 = vld [vmem:[%s1 + $0x30] sm:$0xff]
  %v4916 = vld [vmem:[%s1 + $0x38] sm:$0xff]
  %v4917 = vld [vmem:[%s1 + $0x40] sm:$0xff]
  %v4918 = vld [vmem:[%s1 + $0x48] sm:$0xff]
  %v4919 = vld [vmem:[%s1 + $0x50] sm:$0xff]
  %v4920 = vld [vmem:[%s1 + $0x58] sm:$0xff]
  %v4921 = vld [vmem:[%s1 + $0x60] sm:$0xff]
  %v4922 = vld [vmem:[%s1 + $0x68] sm:$0xff]
  %v4923 = vld [vmem:[%s1 + $0x70] sm:$0xff]
  %v4924 = vld [vmem:[%s1 + $0x78] sm:$0xff]
  %v4925 = vld [vmem:[%s1 + $0x80] sm:$0xff]
  %v4926 = vld [vmem:[%s1 + $0x88] sm:$0xff]
  %v4927 = vld [vmem:[%s1 + $0x90] sm:$0xff]
  %v4928 = vld [vmem:[%s1 + $0x98] sm:$0xff]
  %v4929 = vld [vmem:[%s1 + $0xa0] sm:$0xff]
  %v4930 = vld [vmem:[%s1 + $0xa8] sm:$0xff]
  %v4931 = vld [vmem:[%s1 + $0xb0] sm:$0xff]
  %v4932 = vld [vmem:[%s1 + $0xb8] sm:$0xff]
  %v4933 = vld [vmem:[%s1 + $0xc0] sm:$0xff]
  %v4934 = vld [vmem:[%s1 + $0xc8] sm:$0xff]
  %v4935 = vld [vmem:[%s1 + $0xd0] sm:$0xff]
  %v4936 = vld [vmem:[%s1 + $0xd8] sm:$0xff]
  %v4937 = vld [vmem:[%s1 + $0xe0] sm:$0xff]
  %v4938 = vld [vmem:[%s1 + $0xe8] sm:$0xff]
  %v4939 = vld [vmem:[%s1 + $0xf0] sm:$0xff]
  %v4940 = vld [vmem:[%s1 + $0xf8] sm:$0xff]
  %v4941 = vld [vmem:[%s1 + $0x100] sm:$0xff]
  %v4942 = vld [vmem:[%s1 + $0x108] sm:$0xff]
  %v4943 = vld [vmem:[%s1 + $0x110] sm:$0xff]
  %v4944 = vld [vmem:[%s1 + $0x118] sm:$0xff]
  %v4945 = vld [vmem:[%s1 + $0x120] sm:$0xff]
  %v4946 = vld [vmem:[%s1 + $0x128] sm:$0xff]
  %v4947 = vld [vmem:[%s1 + $0x130] sm:$0xff]
  %v4948 = vld [vmem:[%s1 + $0x138] sm:$0xff]
  %v4949 = vld [vmem:[%s1 + $0x140] sm:$0xff]
  %v4950 = vld [vmem:[%s1 + $0x148] sm:$0xff]
  %v4951 = vld [vmem:[%s1 + $0x150] sm:$0xff]
  %v4952 = vld [vmem:[%s1 + $0x158] sm:$0xff]
  %v4953 = vld [vmem:[%s1 + $0x160] sm:$0xff]
  %v4954 = vld [vmem:[%s1 + $0x168] sm:$0xff]
  %v4955 = vld [vmem:[%s1 + $0x170] sm:$0xff]
  %v4956 = vld [vmem:[%s1 + $0x178] sm:$0xff]
  %v4957 = vld [vmem:[%s1 + $0x180] sm:$0xff]
  %v4958 = vld [vmem:[%s1 + $0x188] sm:$0xff]
  %v4959 = vld [vmem:[%s1 + $0x190] sm:$0xff]
  %v4960 = vld [vmem:[%s1 + $0x198] sm:$0xff]
  %v4961 = vld [vmem:[%s1 + $0x1a0] sm:$0xff]
  %v4962 = vld [vmem:[%s1 + $0x1a8] sm:$0xff]
  %v4963 = vld [vmem:[%s1 + $0x1b0] sm:$0xff]
  %v4964 = vld [vmem:[%s1 + $0x1b8] sm:$0xff]
  %v4965 = vld [vmem:[%s1 + $0x1c0] sm:$0xff]
  %v4966 = vld [vmem:[%s1 + $0x1c8] sm:$0xff]
  %v4967 = vld [vmem:[%s1 + $0x1d0] sm:$0xff]
  %v4968 = vld [vmem:[%s1 + $0x1d8] sm:$0xff]
  %v4969 = vld [vmem:[%s1 + $0x1e0] sm:$0xff]
  %v4970 = vld [vmem:[%s1 + $0x1e8] sm:$0xff]
  %v4971 = vld [vmem:[%s1 + $0x1f0] sm:$0xff]
  %v4972 = vld [vmem:[%s1 + $0x1f8] sm:$0xff]
  %v4973 = vld [vmem:[%s1 + $0x200] sm:$0xff]
  %v4974 = vld [vmem:[%s1 + $0x208] sm:$0xff]
  %v4975 = vld [vmem:[%s1 + $0x210] sm:$0xff]
  %v4976 = vld [vmem:[%s1 + $0x218] sm:$0xff]
  %v4977 = vld [vmem:[%s1 + $0x220] sm:$0xff]
  %v4978 = vld [vmem:[%s1 + $0x228] sm:$0xff]
  %v4979 = vld [vmem:[%s1 + $0x230] sm:$0xff]
  %v4980 = vld [vmem:[%s1 + $0x238] sm:$0xff]
  %v4981 = vld [vmem:[%s1 + $0x240] sm:$0xff]
  %v4982 = vld [vmem:[%s1 + $0x248] sm:$0xff]
  %v4983 = vld [vmem:[%s1 + $0x250] sm:$0xff]
  %v4984 = vld [vmem:[%s1 + $0x258] sm:$0xff]
  %v4985 = vld [vmem:[%s1 + $0x260] sm:$0xff]
  %v4986 = vld [vmem:[%s1 + $0x268] sm:$0xff]
  %v4987 = vld [vmem:[%s1 + $0x270] sm:$0xff]
  %v4988 = vld [vmem:[%s1 + $0x278] sm:$0xff]
  %v4989 = vld [vmem:[%s1 + $0x280] sm:$0xff]
  %v4990 = vld [vmem:[%s1 + $0x288] sm:$0xff]
  %v4991 = vld [vmem:[%s1 + $0x290] sm:$0xff]
  %v4992 = vld [vmem:[%s1 + $0x298] sm:$0xff]
  %v4993 = vld [vmem:[%s1 + $0x2a0] sm:$0xff]
  %v4994 = vld [vmem:[%s1 + $0x2a8] sm:$0xff]
  %v4995 = vld [vmem:[%s1 + $0x2b0] sm:$0xff]
  %v4996 = vld [vmem:[%s1 + $0x2b8] sm:$0xff]
  %v4997 = vld [vmem:[%s1 + $0x2c0] sm:$0xff]
  %v4998 = vld [vmem:[%s1 + $0x2c8] sm:$0xff]
  %v4999 = vld [vmem:[%s1 + $0x2d0] sm:$0xff]
  %v5000 = vld [vmem:[%s1 + $0x2d8] sm:$0xff]
  %v5001 = vld [vmem:[%s1 + $0x2e0] sm:$0xff]
  %v5002 = vld [vmem:[%s1 + $0x2e8] sm:$0xff]
  %v5003 = vld [vmem:[%s1 + $0x2f0] sm:$0xff]
  %v5004 = vld [vmem:[%s1 + $0x2f8] sm:$0xff]
  %v5005 = vld [vmem:[%s1 + $0x300] sm:$0xff]
  %v5006 = vld [vmem:[%s1 + $0x308] sm:$0xff]
  %v5007 = vld [vmem:[%s1 + $0x310] sm:$0xff]
  %v5008 = vld [vmem:[%s1 + $0x318] sm:$0xff]
  %v5009 = vld [vmem:[%s1 + $0x320] sm:$0xff]
  %v5010 = vld [vmem:[%s1 + $0x328] sm:$0xff]
  %v5011 = vld [vmem:[%s1 + $0x330] sm:$0xff]
  %v5012 = vld [vmem:[%s1 + $0x338] sm:$0xff]
  %v5013 = vld [vmem:[%s1 + $0x340] sm:$0xff]
  %v5014 = vld [vmem:[%s1 + $0x348] sm:$0xff]
  %v5015 = vld [vmem:[%s1 + $0x350] sm:$0xff]
  %v5016 = vld [vmem:[%s1 + $0x358] sm:$0xff]
  %v5017 = vld [vmem:[%s1 + $0x360] sm:$0xff]
  %v5018 = vld [vmem:[%s1 + $0x368] sm:$0xff]
  %v5019 = vld [vmem:[%s1 + $0x370] sm:$0xff]
  %v5020 = vld [vmem:[%s1 + $0x378] sm:$0xff]
  %v5021 = vld [vmem:[%s1 + $0x380] sm:$0xff]
  %v5022 = vld [vmem:[%s1 + $0x388] sm:$0xff]
  %v5023 = vld [vmem:[%s1 + $0x390] sm:$0xff]
  %v5024 = vld [vmem:[%s1 + $0x398] sm:$0xff]
  %v5025 = vld [vmem:[%s1 + $0x3a0] sm:$0xff]
  %v5026 = vld [vmem:[%s1 + $0x3a8] sm:$0xff]
  %v5027 = vld [vmem:[%s1 + $0x3b0] sm:$0xff]
  %v5028 = vld [vmem:[%s1 + $0x3b8] sm:$0xff]
  %v5029 = vld [vmem:[%s1 + $0x3c0] sm:$0xff]
  %v5030 = vld [vmem:[%s1 + $0x3c8] sm:$0xff]
  %v5031 = vld [vmem:[%s1 + $0x3d0] sm:$0xff]
  %v5032 = vld [vmem:[%s1 + $0x3d8] sm:$0xff]
  %v5033 = vld [vmem:[%s1 + $0x3e0] sm:$0xff]
  %v5034 = vld [vmem:[%s1 + $0x3e8] sm:$0xff]
  %v5035 = vld [vmem:[%s1 + $0x3f0] sm:$0xff]
  %v5036 = vld [vmem:[%s1 + $0x3f8] sm:$0xff]
  %v5037 = vld [vmem:[%s1 + $0x400] sm:$0xff]
  %v5038 = vld [vmem:[%s1 + $0x408] sm:$0xff]
  %v5039 = vld [vmem:[%s1 + $0x410] sm:$0xff]
  %v5040 = vld [vmem:[%s1 + $0x418] sm:$0xff]
  %v5041 = vld [vmem:[%s1 + $0x420] sm:$0xff]
  %v5042 = vld [vmem:[%s1 + $0x428] sm:$0xff]
  %v5043 = vld [vmem:[%s1 + $0x430] sm:$0xff]
  %v5044 = vld [vmem:[%s1 + $0x438] sm:$0xff]
  %v5045 = vld [vmem:[%s1 + $0x440] sm:$0xff]
  %v5046 = vld [vmem:[%s1 + $0x448] sm:$0xff]
  %v5047 = vld [vmem:[%s1 + $0x450] sm:$0xff]
  %v5048 = vld [vmem:[%s1 + $0x458] sm:$0xff]
  %v5049 = vld [vmem:[%s1 + $0x460] sm:$0xff]
  %v5050 = vld [vmem:[%s1 + $0x468] sm:$0xff]
  %v5051 = vld [vmem:[%s1 + $0x470] sm:$0xff]
  %v5052 = vld [vmem:[%s1 + $0x478] sm:$0xff]
  %v5053 = vld [vmem:[%s1 + $0x480] sm:$0xff]
  %v5054 = vld [vmem:[%s1 + $0x488] sm:$0xff]
  %v5055 = vld [vmem:[%s1 + $0x490] sm:$0xff]
  %v5056 = vld [vmem:[%s1 + $0x498] sm:$0xff]
  %v5057 = vld [vmem:[%s1 + $0x4a0] sm:$0xff]
  %v5058 = vld [vmem:[%s1 + $0x4a8] sm:$0xff]
  %v5059 = vld [vmem:[%s1 + $0x4b0] sm:$0xff]
  %v5060 = vld [vmem:[%s1 + $0x4b8] sm:$0xff]
  %v5061 = vld [vmem:[%s1 + $0x4c0] sm:$0xff]
  %v5062 = vld [vmem:[%s1 + $0x4c8] sm:$0xff]
  %v5063 = vld [vmem:[%s1 + $0x4d0] sm:$0xff]
  %v5064 = vld [vmem:[%s1 + $0x4d8] sm:$0xff]
  %v5065 = vld [vmem:[%s1 + $0x4e0] sm:$0xff]
  %v5066 = vld [vmem:[%s1 + $0x4e8] sm:$0xff]
  %v5067 = vld [vmem:[%s1 + $0x4f0] sm:$0xff]
  %v5068 = vld [vmem:[%s1 + $0x4f8] sm:$0xff]
  %5069 = vmatprep.subr.mxu0 %v4910
  %5070 = vmatpush1.msra.mxu0 %v4909
  %5071 = vmatprep.subr.mxu0 %v4912
  %5072 = vmatpush1.msra.mxu0 %v4911
  %5073 = vmatprep.subr.mxu0 %v4914
  %5074 = vmatpush1.msra.mxu0 %v4913
  %5075 = vmatprep.subr.mxu0 %v4916
  %5076 = vmatpush1.msra.mxu0 %v4915
  %5077 = vmatprep.subr.mxu0 %v4918
  %5078 = vmatpush1.msra.mxu0 %v4917
  %5079 = vmatprep.subr.mxu0 %v4920
  %5080 = vmatpush1.msra.mxu0 %v4919
  %5081 = vmatprep.subr.mxu0 %v4922
  %5082 = vmatpush1.msra.mxu0 %v4921
  %5083 = vmatprep.subr.mxu0 %v4924
  %5084 = vmatpush1.msra.mxu0 %v4923
  %5085 = vmatprep.subr.mxu0 %v4926
  %5086 = vmatpush1.msra.mxu0 %v4925
  %5087 = vmatprep.subr.mxu0 %v4928
  %5088 = vmatpush1.msra.mxu0 %v4927
  %5089 = vmatprep.subr.mxu0 %v4930
  %5090 = vmatpush1.msra.mxu0 %v4929
  %5091 = vmatprep.subr.mxu0 %v4932
  %5092 = vmatpush1.msra.mxu0 %v4931
  %5093 = vmatprep.subr.mxu0 %v4934
  %5094 = vmatpush1.msra.mxu0 %v4933
  %5095 = vmatprep.subr.mxu0 %v4936
  %5096 = vmatpush1.msra.mxu0 %v4935
  %5097 = vmatprep.subr.mxu0 %v4938
  %5098 = vmatpush1.msra.mxu0 %v4937
  %5099 = vmatprep.subr.mxu0 %v4940
  %5100 = vmatpush1.msra.mxu0 %v4939
  %5101 = vmatprep.subr.mxu0 %v4942
  %5102 = vmatpush1.msra.mxu0 %v4941
  %5103 = vmatprep.subr.mxu0 %v4944
  %5104 = vmatpush1.msra.mxu0 %v4943
  %5105 = vmatprep.subr.mxu0 %v4946
  %5106 = vmatpush1.msra.mxu0 %v4945
  %5107 = vmatprep.subr.mxu0 %v4948
  %5108 = vmatpush1.msra.mxu0 %v4947
  %5109 = vmatprep.subr.mxu0 %v4950
  %5110 = vmatpush1.msra.mxu0 %v4949
  %5111 = vmatprep.subr.mxu0 %v4952
  %5112 = vmatpush1.msra.mxu0 %v4951
  %5113 = vmatprep.subr.mxu0 %v4954
  %5114 = vmatpush1.msra.mxu0 %v4953
  %5115 = vmatprep.subr.mxu0 %v4956
  %5116 = vmatpush1.msra.mxu0 %v4955
  %5117 = vmatprep.subr.mxu0 %v4958
  %5118 = vmatpush1.msra.mxu0 %v4957
  %5119 = vmatprep.subr.mxu0 %v4960
  %5120 = vmatpush1.msra.mxu0 %v4959
  %5121 = vmatprep.subr.mxu0 %v4962
  %5122 = vmatpush1.msra.mxu0 %v4961
  %5123 = vmatprep.subr.mxu0 %v4964
  %5124 = vmatpush1.msra.mxu0 %v4963
  %5125 = vmatprep.subr.mxu0 %v4966
  %5126 = vmatpush1.msra.mxu0 %v4965
  %5127 = vmatprep.subr.mxu0 %v4968
  %5128 = vmatpush1.msra.mxu0 %v4967
  %5129 = vmatprep.subr.mxu0 %v4970
  %5130 = vmatpush1.msra.mxu0 %v4969
  %5131 = vmatprep.subr.mxu0 %v4972
  %5132 = vmatpush1.msra.mxu0 %v4971
  %5133 = vmatprep.mubr.f32.mxu0 %v4905
  %5134 = vmatmul.mubr.f32.gmra.mrb[0].mxu0 %v4904
  %v5135 = vpop.f32.mrb[0].mxu0
  %v5136 = vadd.f32 0.0, %v5135
  %v5137 = vpop.f32.mrb[0].mxu0
  %v5138 = vadd.f32 0.0, %v5137
  %5139 = vdwg.mxu0
  %5140 = vmatprep.subr.mxu0 %v4974
  %5141 = vmatpush1.msra.mxu0 %v4973
  %5142 = vmatprep.subr.mxu0 %v4976
  %5143 = vmatpush1.msra.mxu0 %v4975
  %5144 = vmatprep.subr.mxu0 %v4978
  %5145 = vmatpush1.msra.mxu0 %v4977
  %5146 = vmatprep.subr.mxu0 %v4980
  %5147 = vmatpush1.msra.mxu0 %v4979
  %5148 = vmatprep.subr.mxu0 %v4982
  %5149 = vmatpush1.msra.mxu0 %v4981
  %5150 = vmatprep.subr.mxu0 %v4984
  %5151 = vmatpush1.msra.mxu0 %v4983
  %5152 = vmatprep.subr.mxu0 %v4986
  %5153 = vmatpush1.msra.mxu0 %v4985
  %5154 = vmatprep.subr.mxu0 %v4988
  %5155 = vmatpush1.msra.mxu0 %v4987
  %5156 = vmatprep.subr.mxu0 %v4990
  %5157 = vmatpush1.msra.mxu0 %v4989
  %5158 = vmatprep.subr.mxu0 %v4992
  %5159 = vmatpush1.msra.mxu0 %v4991
  %5160 = vmatprep.subr.mxu0 %v4994
  %5161 = vmatpush1.msra.mxu0 %v4993
  %5162 = vmatprep.subr.mxu0 %v4996
  %5163 = vmatpush1.msra.mxu0 %v4995
  %5164 = vmatprep.subr.mxu0 %v4998
  %5165 = vmatpush1.msra.mxu0 %v4997
  %5166 = vmatprep.subr.mxu0 %v5000
  %5167 = vmatpush1.msra.mxu0 %v4999
  %5168 = vmatprep.subr.mxu0 %v5002
  %5169 = vmatpush1.msra.mxu0 %v5001
  %5170 = vmatprep.subr.mxu0 %v5004
  %5171 = vmatpush1.msra.mxu0 %v5003
  %5172 = vmatprep.subr.mxu0 %v5006
  %5173 = vmatpush1.msra.mxu0 %v5005
  %5174 = vmatprep.subr.mxu0 %v5008
  %5175 = vmatpush1.msra.mxu0 %v5007
  %5176 = vmatprep.subr.mxu0 %v5010
  %5177 = vmatpush1.msra.mxu0 %v5009
  %5178 = vmatprep.subr.mxu0 %v5012
  %5179 = vmatpush1.msra.mxu0 %v5011
  %5180 = vmatprep.subr.mxu0 %v5014
  %5181 = vmatpush1.msra.mxu0 %v5013
  %5182 = vmatprep.subr.mxu0 %v5016
  %5183 = vmatpush1.msra.mxu0 %v5015
  %5184 = vmatprep.subr.mxu0 %v5018
  %5185 = vmatpush1.msra.mxu0 %v5017
  %5186 = vmatprep.subr.mxu0 %v5020
  %5187 = vmatpush1.msra.mxu0 %v5019
  %5188 = vmatprep.subr.mxu0 %v5022
  %5189 = vmatpush1.msra.mxu0 %v5021
  %5190 = vmatprep.subr.mxu0 %v5024
  %5191 = vmatpush1.msra.mxu0 %v5023
  %5192 = vmatprep.subr.mxu0 %v5026
  %5193 = vmatpush1.msra.mxu0 %v5025
  %5194 = vmatprep.subr.mxu0 %v5028
  %5195 = vmatpush1.msra.mxu0 %v5027
  %5196 = vmatprep.subr.mxu0 %v5030
  %5197 = vmatpush1.msra.mxu0 %v5029
  %5198 = vmatprep.subr.mxu0 %v5032
  %5199 = vmatpush1.msra.mxu0 %v5031
  %5200 = vmatprep.subr.mxu0 %v5034
  %5201 = vmatpush1.msra.mxu0 %v5033
  %5202 = vmatprep.subr.mxu0 %v5036
  %5203 = vmatpush1.msra.mxu0 %v5035
  %5204 = vmatprep.mubr.f32.mxu0 %v4907
  %5205 = vmatmul.mubr.f32.gmra.mrb[0].mxu0 %v4906
  %v5206 = vpop.f32.mrb[0].mxu0
  %v5207 = vadd.f32 %v5136, %v5206
  %v5208 = vpop.f32.mrb[0].mxu0
  %v5209 = vadd.f32 %v5138, %v5208
  %5210 = vdwg.mxu0
  %5211 = vmatprep.subr.mxu0 %v5038
  %5212 = vmatpush1.msra.mxu0 %v5037
  %5213 = vmatprep.subr.mxu0 %v5040
  %5214 = vmatpush1.msra.mxu0 %v5039
  %5215 = vmatprep.subr.mxu0 %v5042
  %5216 = vmatpush1.msra.mxu0 %v5041
  %5217 = vmatprep.subr.mxu0 %v5044
  %5218 = vmatpush1.msra.mxu0 %v5043
  %5219 = vmatprep.subr.mxu0 %v5046
  %5220 = vmatpush1.msra.mxu0 %v5045
  %5221 = vmatprep.subr.mxu0 %v5048
  %5222 = vmatpush1.msra.mxu0 %v5047
  %5223 = vmatprep.subr.mxu0 %v5050
  %5224 = vmatpush1.msra.mxu0 %v5049
  %5225 = vmatprep.subr.mxu0 %v5052
  %5226 = vmatpush1.msra.mxu0 %v5051
  %5227 = vmatprep.subr.mxu0 %v5054
  %5228 = vmatpush1.msra.mxu0 %v5053
  %5229 = vmatprep.subr.mxu0 %v5056
  %5230 = vmatpush1.msra.mxu0 %v5055
  %5231 = vmatprep.subr.mxu0 %v5058
  %5232 = vmatpush1.msra.mxu0 %v5057
  %5233 = vmatprep.subr.mxu0 %v5060
  %5234 = vmatpush1.msra.mxu0 %v5059
  %5235 = vmatprep.subr.mxu0 %v5062
  %5236 = vmatpush1.msra.mxu0 %v5061
  %5237 = vmatprep.subr.mxu0 %v5064
  %5238 = vmatpush1.msra.mxu0 %v5063
  %5239 = vmatprep.subr.mxu0 %v5066
  %5240 = vmatpush1.msra.mxu0 %v5065
  %5241 = vmatprep.subr.mxu0 %v5068
  %5242 = vmatpush1.msra.mxu0 %v5067
  %5243 = vmatprep.subr.mxu0 0.0
  %5244 = vmatpush1.msra.mxu0 0.0
  %5245 = vmatprep.subr.mxu0 0.0
  %5246 = vmatpush1.msra.mxu0 0.0
  %5247 = vmatprep.subr.mxu0 0.0
  %5248 = vmatpush1.msra.mxu0 0.0
  %5249 = vmatprep.subr.mxu0 0.0
  %5250 = vmatpush1.msra.mxu0 0.0
  %5251 = vmatprep.subr.mxu0 0.0
  %5252 = vmatpush1.msra.mxu0 0.0
  %5253 = vmatprep.subr.mxu0 0.0
  %5254 = vmatpush1.msra.mxu0 0.0
  %5255 = vmatprep.subr.mxu0 0.0
  %5256 = vmatpush1.msra.mxu0 0.0
  %5257 = vmatprep.subr.mxu0 0.0
  %5258 = vmatpush1.msra.mxu0 0.0
  %5259 = vmatprep.subr.mxu0 0.0
  %5260 = vmatpush1.msra.mxu0 0.0
  %5261 = vmatprep.subr.mxu0 0.0
  %5262 = vmatpush1.msra.mxu0 0.0
  %5263 = vmatprep.subr.mxu0 0.0
  %5264 = vmatpush1.msra.mxu0 0.0
  %5265 = vmatprep.subr.mxu0 0.0
  %5266 = vmatpush1.msra.mxu0 0.0
  %5267 = vmatprep.subr.mxu0 0.0
  %5268 = vmatpush1.msra.mxu0 0.0
  %5269 = vmatprep.subr.mxu0 0.0
  %5270 = vmatpush1.msra.mxu0 0.0
  %5271 = vmatprep.subr.mxu0 0.0
  %5272 = vmatpush1.msra.mxu0 0.0
  %5273 = vmatprep.subr.mxu0 0.0
  %5274 = vmatpush1.msra.mxu0 0.0
  %5275 = vmatprep.mubr.f32.mxu0 0.0
  %5276 = vmatmul.mubr.f32.gmra.mrb[0].mxu0 %v4908
  %v5277 = vpop.f32.mrb[0].mxu0
  %v5278 = vadd.f32 %v5207, %v5277
  %v5279 = vpop.f32.mrb[0].mxu0
  %v5280 = vadd.f32 %v5209, %v5279
  %5281 = vdwg.mxu0
  %v5282 = vld [vmem:[%s0 + $0x88] sm:$0xff]
  %v5283 = vld [vmem:[%s0 + $0x90] sm:$0xff]
  %v5284 = vld [vmem:[%s0 + $0x98] sm:$0xff]
  %v5285 = vld [vmem:[%s0 + $0xa0] sm:$0xff]
  %v5286 = vld [vmem:[%s0 + $0xa8] sm:$0xff]
  %5287 = vmatprep.subr.mxu0 %v4910
  %5288 = vmatpush1.msra.mxu0 %v4909
  %5289 = vmatprep.subr.mxu0 %v4912
  %5290 = vmatpush1.msra.mxu0 %v4911
  %5291 = vmatprep.subr.mxu0 %v4914
  %5292 = vmatpush1.msra.mxu0 %v4913
  %5293 = vmatprep.subr.mxu0 %v4916
  %5294 = vmatpush1.msra.mxu0 %v4915
  %5295 = vmatprep.subr.mxu0 %v4918
  %5296 = vmatpush1.msra.mxu0 %v4917
  %5297 = vmatprep.subr.mxu0 %v4920
  %5298 = vmatpush1.msra.mxu0 %v4919
  %5299 = vmatprep.subr.mxu0 %v4922
  %5300 = vmatpush1.msra.mxu0 %v4921
  %5301 = vmatprep.subr.mxu0 %v4924
  %5302 = vmatpush1.msra.mxu0 %v4923
  %5303 = vmatprep.subr.mxu0 %v4926
  %5304 = vmatpush1.msra.mxu0 %v4925
  %5305 = vmatprep.subr.mxu0 %v4928
  %5306 = vmatpush1.msra.mxu0 %v4927
  %5307 = vmatprep.subr.mxu0 %v4930
  %5308 = vmatpush1.msra.mxu0 %v4929
  %5309 = vmatprep.subr.mxu0 %v4932
  %5310 = vmatpush1.msra.mxu0 %v4931
  %5311 = vmatprep.subr.mxu0 %v4934
  %5312 = vmatpush1.msra.mxu0 %v4933
  %5313 = vmatprep.subr.mxu0 %v4936
  %5314 = vmatpush1.msra.mxu0 %v4935
  %5315 = vmatprep.subr.mxu0 %v4938
  %5316 = vmatpush1.msra.mxu0 %v4937
  %5317 = vmatprep.subr.mxu0 %v4940
  %5318 = vmatpush1.msra.mxu0 %v4939
  %5319 = vmatprep.subr.mxu0 %v4942
  %5320 = vmatpush1.msra.mxu0 %v4941
  %5321 = vmatprep.subr.mxu0 %v4944
  %5322 = vmatpush1.msra.mxu0 %v4943
  %5323 = vmatprep.subr.mxu0 %v4946
  %5324 = vmatpush1.msra.mxu0 %v4945
  %5325 = vmatprep.subr.mxu0 %v4948
  %5326 = vmatpush1.msra.mxu0 %v4947
  %5327 = vmatprep.subr.mxu0 %v4950
  %5328 = vmatpush1.msra.mxu0 %v4949
  %5329 = vmatprep.subr.mxu0 %v4952
  %5330 = vmatpush1.msra.mxu0 %v4951
  %5331 = vmatprep.subr.mxu0 %v4954
  %5332 = vmatpush1.msra.mxu0 %v4953
  %5333 = vmatprep.subr.mxu0 %v4956
  %5334 = vmatpush1.msra.mxu0 %v4955
  %5335 = vmatprep.subr.mxu0 %v4958
  %5336 = vmatpush1.msra.mxu0 %v4957
  %5337 = vmatprep.subr.mxu0 %v4960
  %5338 = vmatpush1.msra.mxu0 %v4959
  %5339 = vmatprep.subr.mxu0 %v4962
  %5340 = vmatpush1.msra.mxu0 %v4961
  %5341 = vmatprep.subr.mxu0 %v4964
  %5342 = vmatpush1.msra.mxu0 %v4963
  %5343 = vmatprep.subr.mxu0 %v4966
  %5344 = vmatpush1.msra.mxu0 %v4965
  %5345 = vmatprep.subr.mxu0 %v4968
  %5346 = vmatpush1.msra.mxu0 %v4967
  %5347 = vmatprep.subr.mxu0 %v4970
  %5348 = vmatpush1.msra.mxu0 %v4969
  %5349 = vmatprep.subr.mxu0 %v4972
  %5350 = vmatpush1.msra.mxu0 %v4971
  %5351 = vmatprep.mubr.f32.mxu0 %v5283
  %5352 = vmatmul.mubr.f32.gmra.mrb[0].mxu0 %v5282
  %v5353 = vpop.f32.mrb[0].mxu0
  %v5354 = vadd.f32 0.0, %v5353
  %v5355 = vpop.f32.mrb[0].mxu0
  %v5356 = vadd.f32 0.0, %v5355
  %5357 = vdwg.mxu0
  %5358 = vmatprep.subr.mxu0 %v4974
  %5359 = vmatpush1.msra.mxu0 %v4973
  %5360 = vmatprep.subr.mxu0 %v4976
  %5361 = vmatpush1.msra.mxu0 %v4975
  %5362 = vmatprep.subr.mxu0 %v4978
  %5363 = vmatpush1.msra.mxu0 %v4977
  %5364 = vmatprep.subr.mxu0 %v4980
  %5365 = vmatpush1.msra.mxu0 %v4979
  %5366 = vmatprep.subr.mxu0 %v4982
  %5367 = vmatpush1.msra.mxu0 %v4981
  %5368 = vmatprep.subr.mxu0 %v4984
  %5369 = vmatpush1.msra.mxu0 %v4983
  %5370 = vmatprep.subr.mxu0 %v4986
  %5371 = vmatpush1.msra.mxu0 %v4985
  %5372 = vmatprep.subr.mxu0 %v4988
  %5373 = vmatpush1.msra.mxu0 %v4987
  %5374 = vmatprep.subr.mxu0 %v4990
  %5375 = vmatpush1.msra.mxu0 %v4989
  %5376 = vmatprep.subr.mxu0 %v4992
  %5377 = vmatpush1.msra.mxu0 %v4991
  %5378 = vmatprep.subr.mxu0 %v4994
  %5379 = vmatpush1.msra.mxu0 %v4993
  %5380 = vmatprep.subr.mxu0 %v4996
  %5381 = vmatpush1.msra.mxu0 %v4995
  %5382 = vmatprep.subr.mxu0 %v4998
  %5383 = vmatpush1.msra.mxu0 %v4997
  %5384 = vmatprep.subr.mxu0 %v5000
  %5385 = vmatpush1.msra.mxu0 %v4999
  %5386 = vmatprep.subr.mxu0 %v5002
  %5387 = vmatpush1.msra.mxu0 %v5001
  %5388 = vmatprep.subr.mxu0 %v5004
  %5389 = vmatpush1.msra.mxu0 %v5003
  %5390 = vmatprep.subr.mxu0 %v5006
  %5391 = vmatpush1.msra.mxu0 %v5005
  %5392 = vmatprep.subr.mxu0 %v5008
  %5393 = vmatpush1.msra.mxu0 %v5007
  %5394 = vmatprep.subr.mxu0 %v5010
  %5395 = vmatpush1.msra.mxu0 %v5009
  %5396 = vmatprep.subr.mxu0 %v5012
  %5397 = vmatpush1.msra.mxu0 %v5011
  %5398 = vmatprep.subr.mxu0 %v5014
  %5399 = vmatpush1.msra.mxu0 %v5013
  %5400 = vmatprep.subr.mxu0 %v5016
  %5401 = vmatpush1.msra.mxu0 %v5015
  %5402 = vmatprep.subr.mxu0 %v5018
  %5403 = vmatpush1.msra.mxu0 %v5017
  %5404 = vmatprep.subr.mxu0 %v5020
  %5405 = vmatpush1.msra.mxu0 %v5019
  %5406 = vmatprep.subr.mxu0 %v5022
  %5407 = vmatpush1.msra.mxu0 %v5021
  %5408 = vmatprep.subr.mxu0 %v5024
  %5409 = vmatpush1.msra.mxu0 %v5023
  %5410 = vmatprep.subr.mxu0 %v5026
  %5411 = vmatpush1.msra.mxu0 %v5025
  %5412 = vmatprep.subr.mxu0 %v5028
  %5413 = vmatpush1.msra.mxu0 %v5027
  %5414 = vmatprep.subr.mxu0 %v5030
  %5415 = vmatpush1.msra.mxu0 %v5029
  %5416 = vmatprep.subr.mxu0 %v5032
  %5417 = vmatpush1.msra.mxu0 %v5031
  %5418 = vmatprep.subr.mxu0 %v5034
  %5419 = vmatpush1.msra.mxu0 %v5033
  %5420 = vmatprep.subr.mxu0 %v5036
  %5421 = vmatpush1.msra.mxu0 %v5035
  %5422 = vmatprep.mubr.f32.mxu0 %v5285
  %5423 = vmatmul.mubr.f32.gmra.mrb[0].mxu0 %v5284
  %v5424 = vpop.f32.mrb[0].mxu0
  %v5425 = vadd.f32 %v5354, %v5424
  %v5426 = vpop.f32.mrb[0].mxu0
  %v5427 = vadd.f32 %v5356, %v5426
  %5428 = vdwg.mxu0
  %5429 = vmatprep.subr.mxu0 %v5038
  %5430 = vmatpush1.msra.mxu0 %v5037
  %5431 = vmatprep.subr.mxu0 %v5040
  %5432 = vmatpush1.msra.mxu0 %v5039
  %5433 = vmatprep.subr.mxu0 %v5042
  %5434 = vmatpush1.msra.mxu0 %v5041
  %5435 = vmatprep.subr.mxu0 %v5044
  %5436 = vmatpush1.msra.mxu0 %v5043
  %5437 = vmatprep.subr.mxu0 %v5046
  %5438 = vmatpush1.msra.mxu0 %v5045
  %5439 = vmatprep.subr.mxu0 %v5048
  %5440 = vmatpush1.msra.mxu0 %v5047
  %5441 = vmatprep.subr.mxu0 %v5050
  %5442 = vmatpush1.msra.mxu0 %v5049
  %5443 = vmatprep.subr.mxu0 %v5052
  %5444 = vmatpush1.msra.mxu0 %v5051
  %5445 = vmatprep.subr.mxu0 %v5054
  %5446 = vmatpush1.msra.mxu0 %v5053
  %5447 = vmatprep.subr.mxu0 %v5056
  %5448 = vmatpush1.msra.mxu0 %v5055
  %5449 = vmatprep.subr.mxu0 %v5058
  %5450 = vmatpush1.msra.mxu0 %v5057
  %5451 = vmatprep.subr.mxu0 %v5060
  %5452 = vmatpush1.msra.mxu0 %v5059
  %5453 = vmatprep.subr.mxu0 %v5062
  %5454 = vmatpush1.msra.mxu0 %v5061
  %5455 = vmatprep.subr.mxu0 %v5064
  %5456 = vmatpush1.msra.mxu0 %v5063
  %5457 = vmatprep.subr.mxu0 %v5066
  %5458 = vmatpush1.msra.mxu0 %v5065
  %5459 = vmatprep.subr.mxu0 %v5068
  %5460 = vmatpush1.msra.mxu0 %v5067
  %5461 = vmatprep.subr.mxu0 0.0
  %5462 = vmatpush1.msra.mxu0 0.0
  %5463 = vmatprep.subr.mxu0 0.0
  %5464 = vmatpush1.msra.mxu0 0.0
  %5465 = vmatprep.subr.mxu0 0.0
  %5466 = vmatpush1.msra.mxu0 0.0
  %5467 = vmatprep.subr.mxu0 0.0
  %5468 = vmatpush1.msra.mxu0 0.0
  %5469 = vmatprep.subr.mxu0 0.0
  %5470 = vmatpush1.msra.mxu0 0.0
  %5471 = vmatprep.subr.mxu0 0.0
  %5472 = vmatpush1.msra.mxu0 0.0
  %5473 = vmatprep.subr.mxu0 0.0
  %5474 = vmatpush1.msra.mxu0 0.0
  %5475 = vmatprep.subr.mxu0 0.0
  %5476 = vmatpush1.msra.mxu0 0.0
  %5477 = vmatprep.subr.mxu0 0.0
  %5478 = vmatpush1.msra.mxu0 0.0
  %5479 = vmatprep.subr.mxu0 0.0
  %5480 = vmatpush1.msra.mxu0 0.0
  %5481 = vmatprep.subr.mxu0 0.0
  %5482 = vmatpush1.msra.mxu0 0.0
  %5483 = vmatprep.subr.mxu0 0.0
  %5484 = vmatpush1.msra.mxu0 0.0
  %5485 = vmatprep.subr.mxu0 0.0
  %5486 = vmatpush1.msra.mxu0 0.0
  %5487 = vmatprep.subr.mxu0 0.0
  %5488 = vmatpush1.msra.mxu0 0.0
  %5489 = vmatprep.subr.mxu0 0.0
  %5490 = vmatpush1.msra.mxu0 0.0
  %5491 = vmatprep.subr.mxu0 0.0
  %5492 = vmatpush1.msra.mxu0 0.0
  %5493 = vmatprep.mubr.f32.mxu0 0.0
  %5494 = vmatmul.mubr.f32.gmra.mrb[0].mxu0 %v5286
  %v5495 = vpop.f32.mrb[0].mxu0
  %v5496 = vadd.f32 %v5425, %v5495
  %v5497 = vpop.f32.mrb[0].mxu0
  %v5498 = vadd.f32 %v5427, %v5497
  %5499 = vdwg.mxu0
  %v5500 = vmax.f32 %v5278, %v5496
  %v5501 = vmax.f32 %v5280, %v5498
  %v5502 = vmax.f32 %v5500, %v5501
  %v5503 = vld [vmem:[%s2] sm:$0x1]
  %v5505 = vlaneseq
  %v5506 = vshrl.u32 %v5505, 7
  %v5507 = vsub.s32 0, %v5506
  %v5508 = vrot.slane %v5503, %v5507
  %v5510 = vadd.f32 %v5502, %v5508
  %v5511 = vmax.f32 %v5510, 0.0
  %5512 = vst [vmem:[#allocation2 + $0x40] sm:$0xff] %v5511
  %v5513 = vld [vmem:[%s0 + $0x90] sm:$0xff]
  %v5514 = vld [vmem:[%s0 + $0x98] sm:$0xff]
  %v5515 = vld [vmem:[%s0 + $0xa0] sm:$0xff]
  %v5516 = vld [vmem:[%s0 + $0xa8] sm:$0xff]
  %v5517 = vld [vmem:[%s0 + $0xb0] sm:$0xff]
  %v5518 = vld [vmem:[%s1] sm:$0xff]
  %v5519 = vld [vmem:[%s1 + $0x8] sm:$0xff]
  %v5520 = vld [vmem:[%s1 + $0x10] sm:$0xff]
  %v5521 = vld [vmem:[%s1 + $0x18] sm:$0xff]
  %v5522 = vld [vmem:[%s1 + $0x20] sm:$0xff]
  %v5523 = vld [vmem:[%s1 + $0x28] sm:$0xff]
  %v5524 = vld [vmem:[%s1 + $0x30] sm:$0xff]
  %v5525 = vld [vmem:[%s1 + $0x38] sm:$0xff]
  %v5526 = vld [vmem:[%s1 + $0x40] sm:$0xff]
  %v5527 = vld [vmem:[%s1 + $0x48] sm:$0xff]
  %v5528 = vld [vmem:[%s1 + $0x50] sm:$0xff]
  %v5529 = vld [vmem:[%s1 + $0x58] sm:$0xff]
  %v5530 = vld [vmem:[%s1 + $0x60] sm:$0xff]
  %v5531 = vld [vmem:[%s1 + $0x68] sm:$0xff]
  %v5532 = vld [vmem:[%s1 + $0x70] sm:$0xff]
  %v5533 = vld [vmem:[%s1 + $0x78] sm:$0xff]
  %v5534 = vld [vmem:[%s1 + $0x80] sm:$0xff]
  %v5535 = vld [vmem:[%s1 + $0x88] sm:$0xff]
  %v5536 = vld [vmem:[%s1 + $0x90] sm:$0xff]
  %v5537 = vld [vmem:[%s1 + $0x98] sm:$0xff]
  %v5538 = vld [vmem:[%s1 + $0xa0] sm:$0xff]
  %v5539 = vld [vmem:[%s1 + $0xa8] sm:$0xff]
  %v5540 = vld [vmem:[%s1 + $0xb0] sm:$0xff]
  %v5541 = vld [vmem:[%s1 + $0xb8] sm:$0xff]
  %v5542 = vld [vmem:[%s1 + $0xc0] sm:$0xff]
  %v5543 = vld [vmem:[%s1 + $0xc8] sm:$0xff]
  %v5544 = vld [vmem:[%s1 + $0xd0] sm:$0xff]
  %v5545 = vld [vmem:[%s1 + $0xd8] sm:$0xff]
  %v5546 = vld [vmem:[%s1 + $0xe0] sm:$0xff]
  %v5547 = vld [vmem:[%s1 + $0xe8] sm:$0xff]
  %v5548 = vld [vmem:[%s1 + $0xf0] sm:$0xff]
  %v5549 = vld [vmem:[%s1 + $0xf8] sm:$0xff]
  %v5550 = vld [vmem:[%s1 + $0x100] sm:$0xff]
  %v5551 = vld [vmem:[%s1 + $0x108] sm:$0xff]
  %v5552 = vld [vmem:[%s1 + $0x110] sm:$0xff]
  %v5553 = vld [vmem:[%s1 + $0x118] sm:$0xff]
  %v5554 = vld [vmem:[%s1 + $0x120] sm:$0xff]
  %v5555 = vld [vmem:[%s1 + $0x128] sm:$0xff]
  %v5556 = vld [vmem:[%s1 + $0x130] sm:$0xff]
  %v5557 = vld [vmem:[%s1 + $0x138] sm:$0xff]
  %v5558 = vld [vmem:[%s1 + $0x140] sm:$0xff]
  %v5559 = vld [vmem:[%s1 + $0x148] sm:$0xff]
  %v5560 = vld [vmem:[%s1 + $0x150] sm:$0xff]
  %v5561 = vld [vmem:[%s1 + $0x158] sm:$0xff]
  %v5562 = vld [vmem:[%s1 + $0x160] sm:$0xff]
  %v5563 = vld [vmem:[%s1 + $0x168] sm:$0xff]
  %v5564 = vld [vmem:[%s1 + $0x170] sm:$0xff]
  %v5565 = vld [vmem:[%s1 + $0x178] sm:$0xff]
  %v5566 = vld [vmem:[%s1 + $0x180] sm:$0xff]
  %v5567 = vld [vmem:[%s1 + $0x188] sm:$0xff]
  %v5568 = vld [vmem:[%s1 + $0x190] sm:$0xff]
  %v5569 = vld [vmem:[%s1 + $0x198] sm:$0xff]
  %v5570 = vld [vmem:[%s1 + $0x1a0] sm:$0xff]
  %v5571 = vld [vmem:[%s1 + $0x1a8] sm:$0xff]
  %v5572 = vld [vmem:[%s1 + $0x1b0] sm:$0xff]
  %v5573 = vld [vmem:[%s1 + $0x1b8] sm:$0xff]
  %v5574 = vld [vmem:[%s1 + $0x1c0] sm:$0xff]
  %v5575 = vld [vmem:[%s1 + $0x1c8] sm:$0xff]
  %v5576 = vld [vmem:[%s1 + $0x1d0] sm:$0xff]
  %v5577 = vld [vmem:[%s1 + $0x1d8] sm:$0xff]
  %v5578 = vld [vmem:[%s1 + $0x1e0] sm:$0xff]
  %v5579 = vld [vmem:[%s1 + $0x1e8] sm:$0xff]
  %v5580 = vld [vmem:[%s1 + $0x1f0] sm:$0xff]
  %v5581 = vld [vmem:[%s1 + $0x1f8] sm:$0xff]
  %v5582 = vld [vmem:[%s1 + $0x200] sm:$0xff]
  %v5583 = vld [vmem:[%s1 + $0x208] sm:$0xff]
  %v5584 = vld [vmem:[%s1 + $0x210] sm:$0xff]
  %v5585 = vld [vmem:[%s1 + $0x218] sm:$0xff]
  %v5586 = vld [vmem:[%s1 + $0x220] sm:$0xff]
  %v5587 = vld [vmem:[%s1 + $0x228] sm:$0xff]
  %v5588 = vld [vmem:[%s1 + $0x230] sm:$0xff]
  %v5589 = vld [vmem:[%s1 + $0x238] sm:$0xff]
  %v5590 = vld [vmem:[%s1 + $0x240] sm:$0xff]
  %v5591 = vld [vmem:[%s1 + $0x248] sm:$0xff]
  %v5592 = vld [vmem:[%s1 + $0x250] sm:$0xff]
  %v5593 = vld [vmem:[%s1 + $0x258] sm:$0xff]
  %v5594 = vld [vmem:[%s1 + $0x260] sm:$0xff]
  %v5595 = vld [vmem:[%s1 + $0x268] sm:$0xff]
  %v5596 = vld [vmem:[%s1 + $0x270] sm:$0xff]
  %v5597 = vld [vmem:[%s1 + $0x278] sm:$0xff]
  %v5598 = vld [vmem:[%s1 + $0x280] sm:$0xff]
  %v5599 = vld [vmem:[%s1 + $0x288] sm:$0xff]
  %v5600 = vld [vmem:[%s1 + $0x290] sm:$0xff]
  %v5601 = vld [vmem:[%s1 + $0x298] sm:$0xff]
  %v5602 = vld [vmem:[%s1 + $0x2a0] sm:$0xff]
  %v5603 = vld [vmem:[%s1 + $0x2a8] sm:$0xff]
  %v5604 = vld [vmem:[%s1 + $0x2b0] sm:$0xff]
  %v5605 = vld [vmem:[%s1 + $0x2b8] sm:$0xff]
  %v5606 = vld [vmem:[%s1 + $0x2c0] sm:$0xff]
  %v5607 = vld [vmem:[%s1 + $0x2c8] sm:$0xff]
  %v5608 = vld [vmem:[%s1 + $0x2d0] sm:$0xff]
  %v5609 = vld [vmem:[%s1 + $0x2d8] sm:$0xff]
  %v5610 = vld [vmem:[%s1 + $0x2e0] sm:$0xff]
  %v5611 = vld [vmem:[%s1 + $0x2e8] sm:$0xff]
  %v5612 = vld [vmem:[%s1 + $0x2f0] sm:$0xff]
  %v5613 = vld [vmem:[%s1 + $0x2f8] sm:$0xff]
  %v5614 = vld [vmem:[%s1 + $0x300] sm:$0xff]
  %v5615 = vld [vmem:[%s1 + $0x308] sm:$0xff]
  %v5616 = vld [vmem:[%s1 + $0x310] sm:$0xff]
  %v5617 = vld [vmem:[%s1 + $0x318] sm:$0xff]
  %v5618 = vld [vmem:[%s1 + $0x320] sm:$0xff]
  %v5619 = vld [vmem:[%s1 + $0x328] sm:$0xff]
  %v5620 = vld [vmem:[%s1 + $0x330] sm:$0xff]
  %v5621 = vld [vmem:[%s1 + $0x338] sm:$0xff]
  %v5622 = vld [vmem:[%s1 + $0x340] sm:$0xff]
  %v5623 = vld [vmem:[%s1 + $0x348] sm:$0xff]
  %v5624 = vld [vmem:[%s1 + $0x350] sm:$0xff]
  %v5625 = vld [vmem:[%s1 + $0x358] sm:$0xff]
  %v5626 = vld [vmem:[%s1 + $0x360] sm:$0xff]
  %v5627 = vld [vmem:[%s1 + $0x368] sm:$0xff]
  %v5628 = vld [vmem:[%s1 + $0x370] sm:$0xff]
  %v5629 = vld [vmem:[%s1 + $0x378] sm:$0xff]
  %v5630 = vld [vmem:[%s1 + $0x380] sm:$0xff]
  %v5631 = vld [vmem:[%s1 + $0x388] sm:$0xff]
  %v5632 = vld [vmem:[%s1 + $0x390] sm:$0xff]
  %v5633 = vld [vmem:[%s1 + $0x398] sm:$0xff]
  %v5634 = vld [vmem:[%s1 + $0x3a0] sm:$0xff]
  %v5635 = vld [vmem:[%s1 + $0x3a8] sm:$0xff]
  %v5636 = vld [vmem:[%s1 + $0x3b0] sm:$0xff]
  %v5637 = vld [vmem:[%s1 + $0x3b8] sm:$0xff]
  %v5638 = vld [vmem:[%s1 + $0x3c0] sm:$0xff]
  %v5639 = vld [vmem:[%s1 + $0x3c8] sm:$0xff]
  %v5640 = vld [vmem:[%s1 + $0x3d0] sm:$0xff]
  %v5641 = vld [vmem:[%s1 + $0x3d8] sm:$0xff]
  %v5642 = vld [vmem:[%s1 + $0x3e0] sm:$0xff]
  %v5643 = vld [vmem:[%s1 + $0x3e8] sm:$0xff]
  %v5644 = vld [vmem:[%s1 + $0x3f0] sm:$0xff]
  %v5645 = vld [vmem:[%s1 + $0x3f8] sm:$0xff]
  %v5646 = vld [vmem:[%s1 + $0x400] sm:$0xff]
  %v5647 = vld [vmem:[%s1 + $0x408] sm:$0xff]
  %v5648 = vld [vmem:[%s1 + $0x410] sm:$0xff]
  %v5649 = vld [vmem:[%s1 + $0x418] sm:$0xff]
  %v5650 = vld [vmem:[%s1 + $0x420] sm:$0xff]
  %v5651 = vld [vmem:[%s1 + $0x428] sm:$0xff]
  %v5652 = vld [vmem:[%s1 + $0x430] sm:$0xff]
  %v5653 = vld [vmem:[%s1 + $0x438] sm:$0xff]
  %v5654 = vld [vmem:[%s1 + $0x440] sm:$0xff]
  %v5655 = vld [vmem:[%s1 + $0x448] sm:$0xff]
  %v5656 = vld [vmem:[%s1 + $0x450] sm:$0xff]
  %v5657 = vld [vmem:[%s1 + $0x458] sm:$0xff]
  %v5658 = vld [vmem:[%s1 + $0x460] sm:$0xff]
  %v5659 = vld [vmem:[%s1 + $0x468] sm:$0xff]
  %v5660 = vld [vmem:[%s1 + $0x470] sm:$0xff]
  %v5661 = vld [vmem:[%s1 + $0x478] sm:$0xff]
  %v5662 = vld [vmem:[%s1 + $0x480] sm:$0xff]
  %v5663 = vld [vmem:[%s1 + $0x488] sm:$0xff]
  %v5664 = vld [vmem:[%s1 + $0x490] sm:$0xff]
  %v5665 = vld [vmem:[%s1 + $0x498] sm:$0xff]
  %v5666 = vld [vmem:[%s1 + $0x4a0] sm:$0xff]
  %v5667 = vld [vmem:[%s1 + $0x4a8] sm:$0xff]
  %v5668 = vld [vmem:[%s1 + $0x4b0] sm:$0xff]
  %v5669 = vld [vmem:[%s1 + $0x4b8] sm:$0xff]
  %v5670 = vld [vmem:[%s1 + $0x4c0] sm:$0xff]
  %v5671 = vld [vmem:[%s1 + $0x4c8] sm:$0xff]
  %v5672 = vld [vmem:[%s1 + $0x4d0] sm:$0xff]
  %v5673 = vld [vmem:[%s1 + $0x4d8] sm:$0xff]
  %v5674 = vld [vmem:[%s1 + $0x4e0] sm:$0xff]
  %v5675 = vld [vmem:[%s1 + $0x4e8] sm:$0xff]
  %v5676 = vld [vmem:[%s1 + $0x4f0] sm:$0xff]
  %v5677 = vld [vmem:[%s1 + $0x4f8] sm:$0xff]
  %5678 = vmatprep.subr.mxu0 %v5519
  %5679 = vmatpush1.msra.mxu0 %v5518
  %5680 = vmatprep.subr.mxu0 %v5521
  %5681 = vmatpush1.msra.mxu0 %v5520
  %5682 = vmatprep.subr.mxu0 %v5523
  %5683 = vmatpush1.msra.mxu0 %v5522
  %5684 = vmatprep.subr.mxu0 %v5525
  %5685 = vmatpush1.msra.mxu0 %v5524
  %5686 = vmatprep.subr.mxu0 %v5527
  %5687 = vmatpush1.msra.mxu0 %v5526
  %5688 = vmatprep.subr.mxu0 %v5529
  %5689 = vmatpush1.msra.mxu0 %v5528
  %5690 = vmatprep.subr.mxu0 %v5531
  %5691 = vmatpush1.msra.mxu0 %v5530
  %5692 = vmatprep.subr.mxu0 %v5533
  %5693 = vmatpush1.msra.mxu0 %v5532
  %5694 = vmatprep.subr.mxu0 %v5535
  %5695 = vmatpush1.msra.mxu0 %v5534
  %5696 = vmatprep.subr.mxu0 %v5537
  %5697 = vmatpush1.msra.mxu0 %v5536
  %5698 = vmatprep.subr.mxu0 %v5539
  %5699 = vmatpush1.msra.mxu0 %v5538
  %5700 = vmatprep.subr.mxu0 %v5541
  %5701 = vmatpush1.msra.mxu0 %v5540
  %5702 = vmatprep.subr.mxu0 %v5543
  %5703 = vmatpush1.msra.mxu0 %v5542
  %5704 = vmatprep.subr.mxu0 %v5545
  %5705 = vmatpush1.msra.mxu0 %v5544
  %5706 = vmatprep.subr.mxu0 %v5547
  %5707 = vmatpush1.msra.mxu0 %v5546
  %5708 = vmatprep.subr.mxu0 %v5549
  %5709 = vmatpush1.msra.mxu0 %v5548
  %5710 = vmatprep.subr.mxu0 %v5551
  %5711 = vmatpush1.msra.mxu0 %v5550
  %5712 = vmatprep.subr.mxu0 %v5553
  %5713 = vmatpush1.msra.mxu0 %v5552
  %5714 = vmatprep.subr.mxu0 %v5555
  %5715 = vmatpush1.msra.mxu0 %v5554
  %5716 = vmatprep.subr.mxu0 %v5557
  %5717 = vmatpush1.msra.mxu0 %v5556
  %5718 = vmatprep.subr.mxu0 %v5559
  %5719 = vmatpush1.msra.mxu0 %v5558
  %5720 = vmatprep.subr.mxu0 %v5561
  %5721 = vmatpush1.msra.mxu0 %v5560
  %5722 = vmatprep.subr.mxu0 %v5563
  %5723 = vmatpush1.msra.mxu0 %v5562
  %5724 = vmatprep.subr.mxu0 %v5565
  %5725 = vmatpush1.msra.mxu0 %v5564
  %5726 = vmatprep.subr.mxu0 %v5567
  %5727 = vmatpush1.msra.mxu0 %v5566
  %5728 = vmatprep.subr.mxu0 %v5569
  %5729 = vmatpush1.msra.mxu0 %v5568
  %5730 = vmatprep.subr.mxu0 %v5571
  %5731 = vmatpush1.msra.mxu0 %v5570
  %5732 = vmatprep.subr.mxu0 %v5573
  %5733 = vmatpush1.msra.mxu0 %v5572
  %5734 = vmatprep.subr.mxu0 %v5575
  %5735 = vmatpush1.msra.mxu0 %v5574
  %5736 = vmatprep.subr.mxu0 %v5577
  %5737 = vmatpush1.msra.mxu0 %v5576
  %5738 = vmatprep.subr.mxu0 %v5579
  %5739 = vmatpush1.msra.mxu0 %v5578
  %5740 = vmatprep.subr.mxu0 %v5581
  %5741 = vmatpush1.msra.mxu0 %v5580
  %5742 = vmatprep.mubr.f32.mxu0 %v5514
  %5743 = vmatmul.mubr.f32.gmra.mrb[0].mxu0 %v5513
  %v5744 = vpop.f32.mrb[0].mxu0
  %v5745 = vadd.f32 0.0, %v5744
  %v5746 = vpop.f32.mrb[0].mxu0
  %v5747 = vadd.f32 0.0, %v5746
  %5748 = vdwg.mxu0
  %5749 = vmatprep.subr.mxu0 %v5583
  %5750 = vmatpush1.msra.mxu0 %v5582
  %5751 = vmatprep.subr.mxu0 %v5585
  %5752 = vmatpush1.msra.mxu0 %v5584
  %5753 = vmatprep.subr.mxu0 %v5587
  %5754 = vmatpush1.msra.mxu0 %v5586
  %5755 = vmatprep.subr.mxu0 %v5589
  %5756 = vmatpush1.msra.mxu0 %v5588
  %5757 = vmatprep.subr.mxu0 %v5591
  %5758 = vmatpush1.msra.mxu0 %v5590
  %5759 = vmatprep.subr.mxu0 %v5593
  %5760 = vmatpush1.msra.mxu0 %v5592
  %5761 = vmatprep.subr.mxu0 %v5595
  %5762 = vmatpush1.msra.mxu0 %v5594
  %5763 = vmatprep.subr.mxu0 %v5597
  %5764 = vmatpush1.msra.mxu0 %v5596
  %5765 = vmatprep.subr.mxu0 %v5599
  %5766 = vmatpush1.msra.mxu0 %v5598
  %5767 = vmatprep.subr.mxu0 %v5601
  %5768 = vmatpush1.msra.mxu0 %v5600
  %5769 = vmatprep.subr.mxu0 %v5603
  %5770 = vmatpush1.msra.mxu0 %v5602
  %5771 = vmatprep.subr.mxu0 %v5605
  %5772 = vmatpush1.msra.mxu0 %v5604
  %5773 = vmatprep.subr.mxu0 %v5607
  %5774 = vmatpush1.msra.mxu0 %v5606
  %5775 = vmatprep.subr.mxu0 %v5609
  %5776 = vmatpush1.msra.mxu0 %v5608
  %5777 = vmatprep.subr.mxu0 %v5611
  %5778 = vmatpush1.msra.mxu0 %v5610
  %5779 = vmatprep.subr.mxu0 %v5613
  %5780 = vmatpush1.msra.mxu0 %v5612
  %5781 = vmatprep.subr.mxu0 %v5615
  %5782 = vmatpush1.msra.mxu0 %v5614
  %5783 = vmatprep.subr.mxu0 %v5617
  %5784 = vmatpush1.msra.mxu0 %v5616
  %5785 = vmatprep.subr.mxu0 %v5619
  %5786 = vmatpush1.msra.mxu0 %v5618
  %5787 = vmatprep.subr.mxu0 %v5621
  %5788 = vmatpush1.msra.mxu0 %v5620
  %5789 = vmatprep.subr.mxu0 %v5623
  %5790 = vmatpush1.msra.mxu0 %v5622
  %5791 = vmatprep.subr.mxu0 %v5625
  %5792 = vmatpush1.msra.mxu0 %v5624
  %5793 = vmatprep.subr.mxu0 %v5627
  %5794 = vmatpush1.msra.mxu0 %v5626
  %5795 = vmatprep.subr.mxu0 %v5629
  %5796 = vmatpush1.msra.mxu0 %v5628
  %5797 = vmatprep.subr.mxu0 %v5631
  %5798 = vmatpush1.msra.mxu0 %v5630
  %5799 = vmatprep.subr.mxu0 %v5633
  %5800 = vmatpush1.msra.mxu0 %v5632
  %5801 = vmatprep.subr.mxu0 %v5635
  %5802 = vmatpush1.msra.mxu0 %v5634
  %5803 = vmatprep.subr.mxu0 %v5637
  %5804 = vmatpush1.msra.mxu0 %v5636
  %5805 = vmatprep.subr.mxu0 %v5639
  %5806 = vmatpush1.msra.mxu0 %v5638
  %5807 = vmatprep.subr.mxu0 %v5641
  %5808 = vmatpush1.msra.mxu0 %v5640
  %5809 = vmatprep.subr.mxu0 %v5643
  %5810 = vmatpush1.msra.mxu0 %v5642
  %5811 = vmatprep.subr.mxu0 %v5645
  %5812 = vmatpush1.msra.mxu0 %v5644
  %5813 = vmatprep.mubr.f32.mxu0 %v5516
  %5814 = vmatmul.mubr.f32.gmra.mrb[0].mxu0 %v5515
  %v5815 = vpop.f32.mrb[0].mxu0
  %v5816 = vadd.f32 %v5745, %v5815
  %v5817 = vpop.f32.mrb[0].mxu0
  %v5818 = vadd.f32 %v5747, %v5817
  %5819 = vdwg.mxu0
  %5820 = vmatprep.subr.mxu0 %v5647
  %5821 = vmatpush1.msra.mxu0 %v5646
  %5822 = vmatprep.subr.mxu0 %v5649
  %5823 = vmatpush1.msra.mxu0 %v5648
  %5824 = vmatprep.subr.mxu0 %v5651
  %5825 = vmatpush1.msra.mxu0 %v5650
  %5826 = vmatprep.subr.mxu0 %v5653
  %5827 = vmatpush1.msra.mxu0 %v5652
  %5828 = vmatprep.subr.mxu0 %v5655
  %5829 = vmatpush1.msra.mxu0 %v5654
  %5830 = vmatprep.subr.mxu0 %v5657
  %5831 = vmatpush1.msra.mxu0 %v5656
  %5832 = vmatprep.subr.mxu0 %v5659
  %5833 = vmatpush1.msra.mxu0 %v5658
  %5834 = vmatprep.subr.mxu0 %v5661
  %5835 = vmatpush1.msra.mxu0 %v5660
  %5836 = vmatprep.subr.mxu0 %v5663
  %5837 = vmatpush1.msra.mxu0 %v5662
  %5838 = vmatprep.subr.mxu0 %v5665
  %5839 = vmatpush1.msra.mxu0 %v5664
  %5840 = vmatprep.subr.mxu0 %v5667
  %5841 = vmatpush1.msra.mxu0 %v5666
  %5842 = vmatprep.subr.mxu0 %v5669
  %5843 = vmatpush1.msra.mxu0 %v5668
  %5844 = vmatprep.subr.mxu0 %v5671
  %5845 = vmatpush1.msra.mxu0 %v5670
  %5846 = vmatprep.subr.mxu0 %v5673
  %5847 = vmatpush1.msra.mxu0 %v5672
  %5848 = vmatprep.subr.mxu0 %v5675
  %5849 = vmatpush1.msra.mxu0 %v5674
  %5850 = vmatprep.subr.mxu0 %v5677
  %5851 = vmatpush1.msra.mxu0 %v5676
  %5852 = vmatprep.subr.mxu0 0.0
  %5853 = vmatpush1.msra.mxu0 0.0
  %5854 = vmatprep.subr.mxu0 0.0
  %5855 = vmatpush1.msra.mxu0 0.0
  %5856 = vmatprep.subr.mxu0 0.0
  %5857 = vmatpush1.msra.mxu0 0.0
  %5858 = vmatprep.subr.mxu0 0.0
  %5859 = vmatpush1.msra.mxu0 0.0
  %5860 = vmatprep.subr.mxu0 0.0
  %5861 = vmatpush1.msra.mxu0 0.0
  %5862 = vmatprep.subr.mxu0 0.0
  %5863 = vmatpush1.msra.mxu0 0.0
  %5864 = vmatprep.subr.mxu0 0.0
  %5865 = vmatpush1.msra.mxu0 0.0
  %5866 = vmatprep.subr.mxu0 0.0
  %5867 = vmatpush1.msra.mxu0 0.0
  %5868 = vmatprep.subr.mxu0 0.0
  %5869 = vmatpush1.msra.mxu0 0.0
  %5870 = vmatprep.subr.mxu0 0.0
  %5871 = vmatpush1.msra.mxu0 0.0
  %5872 = vmatprep.subr.mxu0 0.0
  %5873 = vmatpush1.msra.mxu0 0.0
  %5874 = vmatprep.subr.mxu0 0.0
  %5875 = vmatpush1.msra.mxu0 0.0
  %5876 = vmatprep.subr.mxu0 0.0
  %5877 = vmatpush1.msra.mxu0 0.0
  %5878 = vmatprep.subr.mxu0 0.0
  %5879 = vmatpush1.msra.mxu0 0.0
  %5880 = vmatprep.subr.mxu0 0.0
  %5881 = vmatpush1.msra.mxu0 0.0
  %5882 = vmatprep.subr.mxu0 0.0
  %5883 = vmatpush1.msra.mxu0 0.0
  %5884 = vmatprep.mubr.f32.mxu0 0.0
  %5885 = vmatmul.mubr.f32.gmra.mrb[0].mxu0 %v5517
  %v5886 = vpop.f32.mrb[0].mxu0
  %v5887 = vadd.f32 %v5816, %v5886
  %v5888 = vpop.f32.mrb[0].mxu0
  %v5889 = vadd.f32 %v5818, %v5888
  %5890 = vdwg.mxu0
  %v5891 = vld [vmem:[%s0 + $0x98] sm:$0xff]
  %v5892 = vld [vmem:[%s0 + $0xa0] sm:$0xff]
  %v5893 = vld [vmem:[%s0 + $0xa8] sm:$0xff]
  %v5894 = vld [vmem:[%s0 + $0xb0] sm:$0xff]
  %v5895 = vld [vmem:[%s0 + $0xb8] sm:$0xff]
  %5896 = vmatprep.subr.mxu0 %v5519
  %5897 = vmatpush1.msra.mxu0 %v5518
  %5898 = vmatprep.subr.mxu0 %v5521
  %5899 = vmatpush1.msra.mxu0 %v5520
  %5900 = vmatprep.subr.mxu0 %v5523
  %5901 = vmatpush1.msra.mxu0 %v5522
  %5902 = vmatprep.subr.mxu0 %v5525
  %5903 = vmatpush1.msra.mxu0 %v5524
  %5904 = vmatprep.subr.mxu0 %v5527
  %5905 = vmatpush1.msra.mxu0 %v5526
  %5906 = vmatprep.subr.mxu0 %v5529
  %5907 = vmatpush1.msra.mxu0 %v5528
  %5908 = vmatprep.subr.mxu0 %v5531
  %5909 = vmatpush1.msra.mxu0 %v5530
  %5910 = vmatprep.subr.mxu0 %v5533
  %5911 = vmatpush1.msra.mxu0 %v5532
  %5912 = vmatprep.subr.mxu0 %v5535
  %5913 = vmatpush1.msra.mxu0 %v5534
  %5914 = vmatprep.subr.mxu0 %v5537
  %5915 = vmatpush1.msra.mxu0 %v5536
  %5916 = vmatprep.subr.mxu0 %v5539
  %5917 = vmatpush1.msra.mxu0 %v5538
  %5918 = vmatprep.subr.mxu0 %v5541
  %5919 = vmatpush1.msra.mxu0 %v5540
  %5920 = vmatprep.subr.mxu0 %v5543
  %5921 = vmatpush1.msra.mxu0 %v5542
  %5922 = vmatprep.subr.mxu0 %v5545
  %5923 = vmatpush1.msra.mxu0 %v5544
  %5924 = vmatprep.subr.mxu0 %v5547
  %5925 = vmatpush1.msra.mxu0 %v5546
  %5926 = vmatprep.subr.mxu0 %v5549
  %5927 = vmatpush1.msra.mxu0 %v5548
  %5928 = vmatprep.subr.mxu0 %v5551
  %5929 = vmatpush1.msra.mxu0 %v5550
  %5930 = vmatprep.subr.mxu0 %v5553
  %5931 = vmatpush1.msra.mxu0 %v5552
  %5932 = vmatprep.subr.mxu0 %v5555
  %5933 = vmatpush1.msra.mxu0 %v5554
  %5934 = vmatprep.subr.mxu0 %v5557
  %5935 = vmatpush1.msra.mxu0 %v5556
  %5936 = vmatprep.subr.mxu0 %v5559
  %5937 = vmatpush1.msra.mxu0 %v5558
  %5938 = vmatprep.subr.mxu0 %v5561
  %5939 = vmatpush1.msra.mxu0 %v5560
  %5940 = vmatprep.subr.mxu0 %v5563
  %5941 = vmatpush1.msra.mxu0 %v5562
  %5942 = vmatprep.subr.mxu0 %v5565
  %5943 = vmatpush1.msra.mxu0 %v5564
  %5944 = vmatprep.subr.mxu0 %v5567
  %5945 = vmatpush1.msra.mxu0 %v5566
  %5946 = vmatprep.subr.mxu0 %v5569
  %5947 = vmatpush1.msra.mxu0 %v5568
  %5948 = vmatprep.subr.mxu0 %v5571
  %5949 = vmatpush1.msra.mxu0 %v5570
  %5950 = vmatprep.subr.mxu0 %v5573
  %5951 = vmatpush1.msra.mxu0 %v5572
  %5952 = vmatprep.subr.mxu0 %v5575
  %5953 = vmatpush1.msra.mxu0 %v5574
  %5954 = vmatprep.subr.mxu0 %v5577
  %5955 = vmatpush1.msra.mxu0 %v5576
  %5956 = vmatprep.subr.mxu0 %v5579
  %5957 = vmatpush1.msra.mxu0 %v5578
  %5958 = vmatprep.subr.mxu0 %v5581
  %5959 = vmatpush1.msra.mxu0 %v5580
  %5960 = vmatprep.mubr.f32.mxu0 %v5892
  %5961 = vmatmul.mubr.f32.gmra.mrb[0].mxu0 %v5891
  %v5962 = vpop.f32.mrb[0].mxu0
  %v5963 = vadd.f32 0.0, %v5962
  %v5964 = vpop.f32.mrb[0].mxu0
  %v5965 = vadd.f32 0.0, %v5964
  %5966 = vdwg.mxu0
  %5967 = vmatprep.subr.mxu0 %v5583
  %5968 = vmatpush1.msra.mxu0 %v5582
  %5969 = vmatprep.subr.mxu0 %v5585
  %5970 = vmatpush1.msra.mxu0 %v5584
  %5971 = vmatprep.subr.mxu0 %v5587
  %5972 = vmatpush1.msra.mxu0 %v5586
  %5973 = vmatprep.subr.mxu0 %v5589
  %5974 = vmatpush1.msra.mxu0 %v5588
  %5975 = vmatprep.subr.mxu0 %v5591
  %5976 = vmatpush1.msra.mxu0 %v5590
  %5977 = vmatprep.subr.mxu0 %v5593
  %5978 = vmatpush1.msra.mxu0 %v5592
  %5979 = vmatprep.subr.mxu0 %v5595
  %5980 = vmatpush1.msra.mxu0 %v5594
  %5981 = vmatprep.subr.mxu0 %v5597
  %5982 = vmatpush1.msra.mxu0 %v5596
  %5983 = vmatprep.subr.mxu0 %v5599
  %5984 = vmatpush1.msra.mxu0 %v5598
  %5985 = vmatprep.subr.mxu0 %v5601
  %5986 = vmatpush1.msra.mxu0 %v5600
  %5987 = vmatprep.subr.mxu0 %v5603
  %5988 = vmatpush1.msra.mxu0 %v5602
  %5989 = vmatprep.subr.mxu0 %v5605
  %5990 = vmatpush1.msra.mxu0 %v5604
  %5991 = vmatprep.subr.mxu0 %v5607
  %5992 = vmatpush1.msra.mxu0 %v5606
  %5993 = vmatprep.subr.mxu0 %v5609
  %5994 = vmatpush1.msra.mxu0 %v5608
  %5995 = vmatprep.subr.mxu0 %v5611
  %5996 = vmatpush1.msra.mxu0 %v5610
  %5997 = vmatprep.subr.mxu0 %v5613
  %5998 = vmatpush1.msra.mxu0 %v5612
  %5999 = vmatprep.subr.mxu0 %v5615
  %6000 = vmatpush1.msra.mxu0 %v5614
  %6001 = vmatprep.subr.mxu0 %v5617
  %6002 = vmatpush1.msra.mxu0 %v5616
  %6003 = vmatprep.subr.mxu0 %v5619
  %6004 = vmatpush1.msra.mxu0 %v5618
  %6005 = vmatprep.subr.mxu0 %v5621
  %6006 = vmatpush1.msra.mxu0 %v5620
  %6007 = vmatprep.subr.mxu0 %v5623
  %6008 = vmatpush1.msra.mxu0 %v5622
  %6009 = vmatprep.subr.mxu0 %v5625
  %6010 = vmatpush1.msra.mxu0 %v5624
  %6011 = vmatprep.subr.mxu0 %v5627
  %6012 = vmatpush1.msra.mxu0 %v5626
  %6013 = vmatprep.subr.mxu0 %v5629
  %6014 = vmatpush1.msra.mxu0 %v5628
  %6015 = vmatprep.subr.mxu0 %v5631
  %6016 = vmatpush1.msra.mxu0 %v5630
  %6017 = vmatprep.subr.mxu0 %v5633
  %6018 = vmatpush1.msra.mxu0 %v5632
  %6019 = vmatprep.subr.mxu0 %v5635
  %6020 = vmatpush1.msra.mxu0 %v5634
  %6021 = vmatprep.subr.mxu0 %v5637
  %6022 = vmatpush1.msra.mxu0 %v5636
  %6023 = vmatprep.subr.mxu0 %v5639
  %6024 = vmatpush1.msra.mxu0 %v5638
  %6025 = vmatprep.subr.mxu0 %v5641
  %6026 = vmatpush1.msra.mxu0 %v5640
  %6027 = vmatprep.subr.mxu0 %v5643
  %6028 = vmatpush1.msra.mxu0 %v5642
  %6029 = vmatprep.subr.mxu0 %v5645
  %6030 = vmatpush1.msra.mxu0 %v5644
  %6031 = vmatprep.mubr.f32.mxu0 %v5894
  %6032 = vmatmul.mubr.f32.gmra.mrb[0].mxu0 %v5893
  %v6033 = vpop.f32.mrb[0].mxu0
  %v6034 = vadd.f32 %v5963, %v6033
  %v6035 = vpop.f32.mrb[0].mxu0
  %v6036 = vadd.f32 %v5965, %v6035
  %6037 = vdwg.mxu0
  %6038 = vmatprep.subr.mxu0 %v5647
  %6039 = vmatpush1.msra.mxu0 %v5646
  %6040 = vmatprep.subr.mxu0 %v5649
  %6041 = vmatpush1.msra.mxu0 %v5648
  %6042 = vmatprep.subr.mxu0 %v5651
  %6043 = vmatpush1.msra.mxu0 %v5650
  %6044 = vmatprep.subr.mxu0 %v5653
  %6045 = vmatpush1.msra.mxu0 %v5652
  %6046 = vmatprep.subr.mxu0 %v5655
  %6047 = vmatpush1.msra.mxu0 %v5654
  %6048 = vmatprep.subr.mxu0 %v5657
  %6049 = vmatpush1.msra.mxu0 %v5656
  %6050 = vmatprep.subr.mxu0 %v5659
  %6051 = vmatpush1.msra.mxu0 %v5658
  %6052 = vmatprep.subr.mxu0 %v5661
  %6053 = vmatpush1.msra.mxu0 %v5660
  %6054 = vmatprep.subr.mxu0 %v5663
  %6055 = vmatpush1.msra.mxu0 %v5662
  %6056 = vmatprep.subr.mxu0 %v5665
  %6057 = vmatpush1.msra.mxu0 %v5664
  %6058 = vmatprep.subr.mxu0 %v5667
  %6059 = vmatpush1.msra.mxu0 %v5666
  %6060 = vmatprep.subr.mxu0 %v5669
  %6061 = vmatpush1.msra.mxu0 %v5668
  %6062 = vmatprep.subr.mxu0 %v5671
  %6063 = vmatpush1.msra.mxu0 %v5670
  %6064 = vmatprep.subr.mxu0 %v5673
  %6065 = vmatpush1.msra.mxu0 %v5672
  %6066 = vmatprep.subr.mxu0 %v5675
  %6067 = vmatpush1.msra.mxu0 %v5674
  %6068 = vmatprep.subr.mxu0 %v5677
  %6069 = vmatpush1.msra.mxu0 %v5676
  %6070 = vmatprep.subr.mxu0 0.0
  %6071 = vmatpush1.msra.mxu0 0.0
  %6072 = vmatprep.subr.mxu0 0.0
  %6073 = vmatpush1.msra.mxu0 0.0
  %6074 = vmatprep.subr.mxu0 0.0
  %6075 = vmatpush1.msra.mxu0 0.0
  %6076 = vmatprep.subr.mxu0 0.0
  %6077 = vmatpush1.msra.mxu0 0.0
  %6078 = vmatprep.subr.mxu0 0.0
  %6079 = vmatpush1.msra.mxu0 0.0
  %6080 = vmatprep.subr.mxu0 0.0
  %6081 = vmatpush1.msra.mxu0 0.0
  %6082 = vmatprep.subr.mxu0 0.0
  %6083 = vmatpush1.msra.mxu0 0.0
  %6084 = vmatprep.subr.mxu0 0.0
  %6085 = vmatpush1.msra.mxu0 0.0
  %6086 = vmatprep.subr.mxu0 0.0
  %6087 = vmatpush1.msra.mxu0 0.0
  %6088 = vmatprep.subr.mxu0 0.0
  %6089 = vmatpush1.msra.mxu0 0.0
  %6090 = vmatprep.subr.mxu0 0.0
  %6091 = vmatpush1.msra.mxu0 0.0
  %6092 = vmatprep.subr.mxu0 0.0
  %6093 = vmatpush1.msra.mxu0 0.0
  %6094 = vmatprep.subr.mxu0 0.0
  %6095 = vmatpush1.msra.mxu0 0.0
  %6096 = vmatprep.subr.mxu0 0.0
  %6097 = vmatpush1.msra.mxu0 0.0
  %6098 = vmatprep.subr.mxu0 0.0
  %6099 = vmatpush1.msra.mxu0 0.0
  %6100 = vmatprep.subr.mxu0 0.0
  %6101 = vmatpush1.msra.mxu0 0.0
  %6102 = vmatprep.mubr.f32.mxu0 0.0
  %6103 = vmatmul.mubr.f32.gmra.mrb[0].mxu0 %v5895
  %v6104 = vpop.f32.mrb[0].mxu0
  %v6105 = vadd.f32 %v6034, %v6104
  %v6106 = vpop.f32.mrb[0].mxu0
  %v6107 = vadd.f32 %v6036, %v6106
  %6108 = vdwg.mxu0
  %v6109 = vmax.f32 %v5887, %v6105
  %v6110 = vmax.f32 %v5889, %v6107
  %v6111 = vmax.f32 %v6109, %v6110
  %v6112 = vld [vmem:[%s2] sm:$0x1]
  %v6114 = vlaneseq
  %v6115 = vshrl.u32 %v6114, 7
  %v6116 = vsub.s32 0, %v6115
  %v6117 = vrot.slane %v6112, %v6116
  %v6119 = vadd.f32 %v6111, %v6117
  %v6120 = vmax.f32 %v6119, 0.0
  %6121 = vst [vmem:[#allocation2 + $0x48] sm:$0xff] %v6120
  %v6122 = vld [vmem:[%s0 + $0xa0] sm:$0xff]
  %v6123 = vld [vmem:[%s0 + $0xa8] sm:$0xff]
  %v6124 = vld [vmem:[%s0 + $0xb0] sm:$0xff]
  %v6125 = vld [vmem:[%s0 + $0xb8] sm:$0xff]
  %v6126 = vld [vmem:[%s0 + $0xc0] sm:$0xff]
  %v6127 = vld [vmem:[%s1] sm:$0xff]
  %v6128 = vld [vmem:[%s1 + $0x8] sm:$0xff]
  %v6129 = vld [vmem:[%s1 + $0x10] sm:$0xff]
  %v6130 = vld [vmem:[%s1 + $0x18] sm:$0xff]
  %v6131 = vld [vmem:[%s1 + $0x20] sm:$0xff]
  %v6132 = vld [vmem:[%s1 + $0x28] sm:$0xff]
  %v6133 = vld [vmem:[%s1 + $0x30] sm:$0xff]
  %v6134 = vld [vmem:[%s1 + $0x38] sm:$0xff]
  %v6135 = vld [vmem:[%s1 + $0x40] sm:$0xff]
  %v6136 = vld [vmem:[%s1 + $0x48] sm:$0xff]
  %v6137 = vld [vmem:[%s1 + $0x50] sm:$0xff]
  %v6138 = vld [vmem:[%s1 + $0x58] sm:$0xff]
  %v6139 = vld [vmem:[%s1 + $0x60] sm:$0xff]
  %v6140 = vld [vmem:[%s1 + $0x68] sm:$0xff]
  %v6141 = vld [vmem:[%s1 + $0x70] sm:$0xff]
  %v6142 = vld [vmem:[%s1 + $0x78] sm:$0xff]
  %v6143 = vld [vmem:[%s1 + $0x80] sm:$0xff]
  %v6144 = vld [vmem:[%s1 + $0x88] sm:$0xff]
  %v6145 = vld [vmem:[%s1 + $0x90] sm:$0xff]
  %v6146 = vld [vmem:[%s1 + $0x98] sm:$0xff]
  %v6147 = vld [vmem:[%s1 + $0xa0] sm:$0xff]
  %v6148 = vld [vmem:[%s1 + $0xa8] sm:$0xff]
  %v6149 = vld [vmem:[%s1 + $0xb0] sm:$0xff]
  %v6150 = vld [vmem:[%s1 + $0xb8] sm:$0xff]
  %v6151 = vld [vmem:[%s1 + $0xc0] sm:$0xff]
  %v6152 = vld [vmem:[%s1 + $0xc8] sm:$0xff]
  %v6153 = vld [vmem:[%s1 + $0xd0] sm:$0xff]
  %v6154 = vld [vmem:[%s1 + $0xd8] sm:$0xff]
  %v6155 = vld [vmem:[%s1 + $0xe0] sm:$0xff]
  %v6156 = vld [vmem:[%s1 + $0xe8] sm:$0xff]
  %v6157 = vld [vmem:[%s1 + $0xf0] sm:$0xff]
  %v6158 = vld [vmem:[%s1 + $0xf8] sm:$0xff]
  %v6159 = vld [vmem:[%s1 + $0x100] sm:$0xff]
  %v6160 = vld [vmem:[%s1 + $0x108] sm:$0xff]
  %v6161 = vld [vmem:[%s1 + $0x110] sm:$0xff]
  %v6162 = vld [vmem:[%s1 + $0x118] sm:$0xff]
  %v6163 = vld [vmem:[%s1 + $0x120] sm:$0xff]
  %v6164 = vld [vmem:[%s1 + $0x128] sm:$0xff]
  %v6165 = vld [vmem:[%s1 + $0x130] sm:$0xff]
  %v6166 = vld [vmem:[%s1 + $0x138] sm:$0xff]
  %v6167 = vld [vmem:[%s1 + $0x140] sm:$0xff]
  %v6168 = vld [vmem:[%s1 + $0x148] sm:$0xff]
  %v6169 = vld [vmem:[%s1 + $0x150] sm:$0xff]
  %v6170 = vld [vmem:[%s1 + $0x158] sm:$0xff]
  %v6171 = vld [vmem:[%s1 + $0x160] sm:$0xff]
  %v6172 = vld [vmem:[%s1 + $0x168] sm:$0xff]
  %v6173 = vld [vmem:[%s1 + $0x170] sm:$0xff]
  %v6174 = vld [vmem:[%s1 + $0x178] sm:$0xff]
  %v6175 = vld [vmem:[%s1 + $0x180] sm:$0xff]
  %v6176 = vld [vmem:[%s1 + $0x188] sm:$0xff]
  %v6177 = vld [vmem:[%s1 + $0x190] sm:$0xff]
  %v6178 = vld [vmem:[%s1 + $0x198] sm:$0xff]
  %v6179 = vld [vmem:[%s1 + $0x1a0] sm:$0xff]
  %v6180 = vld [vmem:[%s1 + $0x1a8] sm:$0xff]
  %v6181 = vld [vmem:[%s1 + $0x1b0] sm:$0xff]
  %v6182 = vld [vmem:[%s1 + $0x1b8] sm:$0xff]
  %v6183 = vld [vmem:[%s1 + $0x1c0] sm:$0xff]
  %v6184 = vld [vmem:[%s1 + $0x1c8] sm:$0xff]
  %v6185 = vld [vmem:[%s1 + $0x1d0] sm:$0xff]
  %v6186 = vld [vmem:[%s1 + $0x1d8] sm:$0xff]
  %v6187 = vld [vmem:[%s1 + $0x1e0] sm:$0xff]
  %v6188 = vld [vmem:[%s1 + $0x1e8] sm:$0xff]
  %v6189 = vld [vmem:[%s1 + $0x1f0] sm:$0xff]
  %v6190 = vld [vmem:[%s1 + $0x1f8] sm:$0xff]
  %v6191 = vld [vmem:[%s1 + $0x200] sm:$0xff]
  %v6192 = vld [vmem:[%s1 + $0x208] sm:$0xff]
  %v6193 = vld [vmem:[%s1 + $0x210] sm:$0xff]
  %v6194 = vld [vmem:[%s1 + $0x218] sm:$0xff]
  %v6195 = vld [vmem:[%s1 + $0x220] sm:$0xff]
  %v6196 = vld [vmem:[%s1 + $0x228] sm:$0xff]
  %v6197 = vld [vmem:[%s1 + $0x230] sm:$0xff]
  %v6198 = vld [vmem:[%s1 + $0x238] sm:$0xff]
  %v6199 = vld [vmem:[%s1 + $0x240] sm:$0xff]
  %v6200 = vld [vmem:[%s1 + $0x248] sm:$0xff]
  %v6201 = vld [vmem:[%s1 + $0x250] sm:$0xff]
  %v6202 = vld [vmem:[%s1 + $0x258] sm:$0xff]
  %v6203 = vld [vmem:[%s1 + $0x260] sm:$0xff]
  %v6204 = vld [vmem:[%s1 + $0x268] sm:$0xff]
  %v6205 = vld [vmem:[%s1 + $0x270] sm:$0xff]
  %v6206 = vld [vmem:[%s1 + $0x278] sm:$0xff]
  %v6207 = vld [vmem:[%s1 + $0x280] sm:$0xff]
  %v6208 = vld [vmem:[%s1 + $0x288] sm:$0xff]
  %v6209 = vld [vmem:[%s1 + $0x290] sm:$0xff]
  %v6210 = vld [vmem:[%s1 + $0x298] sm:$0xff]
  %v6211 = vld [vmem:[%s1 + $0x2a0] sm:$0xff]
  %v6212 = vld [vmem:[%s1 + $0x2a8] sm:$0xff]
  %v6213 = vld [vmem:[%s1 + $0x2b0] sm:$0xff]
  %v6214 = vld [vmem:[%s1 + $0x2b8] sm:$0xff]
  %v6215 = vld [vmem:[%s1 + $0x2c0] sm:$0xff]
  %v6216 = vld [vmem:[%s1 + $0x2c8] sm:$0xff]
  %v6217 = vld [vmem:[%s1 + $0x2d0] sm:$0xff]
  %v6218 = vld [vmem:[%s1 + $0x2d8] sm:$0xff]
  %v6219 = vld [vmem:[%s1 + $0x2e0] sm:$0xff]
  %v6220 = vld [vmem:[%s1 + $0x2e8] sm:$0xff]
  %v6221 = vld [vmem:[%s1 + $0x2f0] sm:$0xff]
  %v6222 = vld [vmem:[%s1 + $0x2f8] sm:$0xff]
  %v6223 = vld [vmem:[%s1 + $0x300] sm:$0xff]
  %v6224 = vld [vmem:[%s1 + $0x308] sm:$0xff]
  %v6225 = vld [vmem:[%s1 + $0x310] sm:$0xff]
  %v6226 = vld [vmem:[%s1 + $0x318] sm:$0xff]
  %v6227 = vld [vmem:[%s1 + $0x320] sm:$0xff]
  %v6228 = vld [vmem:[%s1 + $0x328] sm:$0xff]
  %v6229 = vld [vmem:[%s1 + $0x330] sm:$0xff]
  %v6230 = vld [vmem:[%s1 + $0x338] sm:$0xff]
  %v6231 = vld [vmem:[%s1 + $0x340] sm:$0xff]
  %v6232 = vld [vmem:[%s1 + $0x348] sm:$0xff]
  %v6233 = vld [vmem:[%s1 + $0x350] sm:$0xff]
  %v6234 = vld [vmem:[%s1 + $0x358] sm:$0xff]
  %v6235 = vld [vmem:[%s1 + $0x360] sm:$0xff]
  %v6236 = vld [vmem:[%s1 + $0x368] sm:$0xff]
  %v6237 = vld [vmem:[%s1 + $0x370] sm:$0xff]
  %v6238 = vld [vmem:[%s1 + $0x378] sm:$0xff]
  %v6239 = vld [vmem:[%s1 + $0x380] sm:$0xff]
  %v6240 = vld [vmem:[%s1 + $0x388] sm:$0xff]
  %v6241 = vld [vmem:[%s1 + $0x390] sm:$0xff]
  %v6242 = vld [vmem:[%s1 + $0x398] sm:$0xff]
  %v6243 = vld [vmem:[%s1 + $0x3a0] sm:$0xff]
  %v6244 = vld [vmem:[%s1 + $0x3a8] sm:$0xff]
  %v6245 = vld [vmem:[%s1 + $0x3b0] sm:$0xff]
  %v6246 = vld [vmem:[%s1 + $0x3b8] sm:$0xff]
  %v6247 = vld [vmem:[%s1 + $0x3c0] sm:$0xff]
  %v6248 = vld [vmem:[%s1 + $0x3c8] sm:$0xff]
  %v6249 = vld [vmem:[%s1 + $0x3d0] sm:$0xff]
  %v6250 = vld [vmem:[%s1 + $0x3d8] sm:$0xff]
  %v6251 = vld [vmem:[%s1 + $0x3e0] sm:$0xff]
  %v6252 = vld [vmem:[%s1 + $0x3e8] sm:$0xff]
  %v6253 = vld [vmem:[%s1 + $0x3f0] sm:$0xff]
  %v6254 = vld [vmem:[%s1 + $0x3f8] sm:$0xff]
  %v6255 = vld [vmem:[%s1 + $0x400] sm:$0xff]
  %v6256 = vld [vmem:[%s1 + $0x408] sm:$0xff]
  %v6257 = vld [vmem:[%s1 + $0x410] sm:$0xff]
  %v6258 = vld [vmem:[%s1 + $0x418] sm:$0xff]
  %v6259 = vld [vmem:[%s1 + $0x420] sm:$0xff]
  %v6260 = vld [vmem:[%s1 + $0x428] sm:$0xff]
  %v6261 = vld [vmem:[%s1 + $0x430] sm:$0xff]
  %v6262 = vld [vmem:[%s1 + $0x438] sm:$0xff]
  %v6263 = vld [vmem:[%s1 + $0x440] sm:$0xff]
  %v6264 = vld [vmem:[%s1 + $0x448] sm:$0xff]
  %v6265 = vld [vmem:[%s1 + $0x450] sm:$0xff]
  %v6266 = vld [vmem:[%s1 + $0x458] sm:$0xff]
  %v6267 = vld [vmem:[%s1 + $0x460] sm:$0xff]
  %v6268 = vld [vmem:[%s1 + $0x468] sm:$0xff]
  %v6269 = vld [vmem:[%s1 + $0x470] sm:$0xff]
  %v6270 = vld [vmem:[%s1 + $0x478] sm:$0xff]
  %v6271 = vld [vmem:[%s1 + $0x480] sm:$0xff]
  %v6272 = vld [vmem:[%s1 + $0x488] sm:$0xff]
  %v6273 = vld [vmem:[%s1 + $0x490] sm:$0xff]
  %v6274 = vld [vmem:[%s1 + $0x498] sm:$0xff]
  %v6275 = vld [vmem:[%s1 + $0x4a0] sm:$0xff]
  %v6276 = vld [vmem:[%s1 + $0x4a8] sm:$0xff]
  %v6277 = vld [vmem:[%s1 + $0x4b0] sm:$0xff]
  %v6278 = vld [vmem:[%s1 + $0x4b8] sm:$0xff]
  %v6279 = vld [vmem:[%s1 + $0x4c0] sm:$0xff]
  %v6280 = vld [vmem:[%s1 + $0x4c8] sm:$0xff]
  %v6281 = vld [vmem:[%s1 + $0x4d0] sm:$0xff]
  %v6282 = vld [vmem:[%s1 + $0x4d8] sm:$0xff]
  %v6283 = vld [vmem:[%s1 + $0x4e0] sm:$0xff]
  %v6284 = vld [vmem:[%s1 + $0x4e8] sm:$0xff]
  %v6285 = vld [vmem:[%s1 + $0x4f0] sm:$0xff]
  %v6286 = vld [vmem:[%s1 + $0x4f8] sm:$0xff]
  %6287 = vmatprep.subr.mxu0 %v6128
  %6288 = vmatpush1.msra.mxu0 %v6127
  %6289 = vmatprep.subr.mxu0 %v6130
  %6290 = vmatpush1.msra.mxu0 %v6129
  %6291 = vmatprep.subr.mxu0 %v6132
  %6292 = vmatpush1.msra.mxu0 %v6131
  %6293 = vmatprep.subr.mxu0 %v6134
  %6294 = vmatpush1.msra.mxu0 %v6133
  %6295 = vmatprep.subr.mxu0 %v6136
  %6296 = vmatpush1.msra.mxu0 %v6135
  %6297 = vmatprep.subr.mxu0 %v6138
  %6298 = vmatpush1.msra.mxu0 %v6137
  %6299 = vmatprep.subr.mxu0 %v6140
  %6300 = vmatpush1.msra.mxu0 %v6139
  %6301 = vmatprep.subr.mxu0 %v6142
  %6302 = vmatpush1.msra.mxu0 %v6141
  %6303 = vmatprep.subr.mxu0 %v6144
  %6304 = vmatpush1.msra.mxu0 %v6143
  %6305 = vmatprep.subr.mxu0 %v6146
  %6306 = vmatpush1.msra.mxu0 %v6145
  %6307 = vmatprep.subr.mxu0 %v6148
  %6308 = vmatpush1.msra.mxu0 %v6147
  %6309 = vmatprep.subr.mxu0 %v6150
  %6310 = vmatpush1.msra.mxu0 %v6149
  %6311 = vmatprep.subr.mxu0 %v6152
  %6312 = vmatpush1.msra.mxu0 %v6151
  %6313 = vmatprep.subr.mxu0 %v6154
  %6314 = vmatpush1.msra.mxu0 %v6153
  %6315 = vmatprep.subr.mxu0 %v6156
  %6316 = vmatpush1.msra.mxu0 %v6155
  %6317 = vmatprep.subr.mxu0 %v6158
  %6318 = vmatpush1.msra.mxu0 %v6157
  %6319 = vmatprep.subr.mxu0 %v6160
  %6320 = vmatpush1.msra.mxu0 %v6159
  %6321 = vmatprep.subr.mxu0 %v6162
  %6322 = vmatpush1.msra.mxu0 %v6161
  %6323 = vmatprep.subr.mxu0 %v6164
  %6324 = vmatpush1.msra.mxu0 %v6163
  %6325 = vmatprep.subr.mxu0 %v6166
  %6326 = vmatpush1.msra.mxu0 %v6165
  %6327 = vmatprep.subr.mxu0 %v6168
  %6328 = vmatpush1.msra.mxu0 %v6167
  %6329 = vmatprep.subr.mxu0 %v6170
  %6330 = vmatpush1.msra.mxu0 %v6169
  %6331 = vmatprep.subr.mxu0 %v6172
  %6332 = vmatpush1.msra.mxu0 %v6171
  %6333 = vmatprep.subr.mxu0 %v6174
  %6334 = vmatpush1.msra.mxu0 %v6173
  %6335 = vmatprep.subr.mxu0 %v6176
  %6336 = vmatpush1.msra.mxu0 %v6175
  %6337 = vmatprep.subr.mxu0 %v6178
  %6338 = vmatpush1.msra.mxu0 %v6177
  %6339 = vmatprep.subr.mxu0 %v6180
  %6340 = vmatpush1.msra.mxu0 %v6179
  %6341 = vmatprep.subr.mxu0 %v6182
  %6342 = vmatpush1.msra.mxu0 %v6181
  %6343 = vmatprep.subr.mxu0 %v6184
  %6344 = vmatpush1.msra.mxu0 %v6183
  %6345 = vmatprep.subr.mxu0 %v6186
  %6346 = vmatpush1.msra.mxu0 %v6185
  %6347 = vmatprep.subr.mxu0 %v6188
  %6348 = vmatpush1.msra.mxu0 %v6187
  %6349 = vmatprep.subr.mxu0 %v6190
  %6350 = vmatpush1.msra.mxu0 %v6189
  %6351 = vmatprep.mubr.f32.mxu0 %v6123
  %6352 = vmatmul.mubr.f32.gmra.mrb[0].mxu0 %v6122
  %v6353 = vpop.f32.mrb[0].mxu0
  %v6354 = vadd.f32 0.0, %v6353
  %v6355 = vpop.f32.mrb[0].mxu0
  %v6356 = vadd.f32 0.0, %v6355
  %6357 = vdwg.mxu0
  %6358 = vmatprep.subr.mxu0 %v6192
  %6359 = vmatpush1.msra.mxu0 %v6191
  %6360 = vmatprep.subr.mxu0 %v6194
  %6361 = vmatpush1.msra.mxu0 %v6193
  %6362 = vmatprep.subr.mxu0 %v6196
  %6363 = vmatpush1.msra.mxu0 %v6195
  %6364 = vmatprep.subr.mxu0 %v6198
  %6365 = vmatpush1.msra.mxu0 %v6197
  %6366 = vmatprep.subr.mxu0 %v6200
  %6367 = vmatpush1.msra.mxu0 %v6199
  %6368 = vmatprep.subr.mxu0 %v6202
  %6369 = vmatpush1.msra.mxu0 %v6201
  %6370 = vmatprep.subr.mxu0 %v6204
  %6371 = vmatpush1.msra.mxu0 %v6203
  %6372 = vmatprep.subr.mxu0 %v6206
  %6373 = vmatpush1.msra.mxu0 %v6205
  %6374 = vmatprep.subr.mxu0 %v6208
  %6375 = vmatpush1.msra.mxu0 %v6207
  %6376 = vmatprep.subr.mxu0 %v6210
  %6377 = vmatpush1.msra.mxu0 %v6209
  %6378 = vmatprep.subr.mxu0 %v6212
  %6379 = vmatpush1.msra.mxu0 %v6211
  %6380 = vmatprep.subr.mxu0 %v6214
  %6381 = vmatpush1.msra.mxu0 %v6213
  %6382 = vmatprep.subr.mxu0 %v6216
  %6383 = vmatpush1.msra.mxu0 %v6215
  %6384 = vmatprep.subr.mxu0 %v6218
  %6385 = vmatpush1.msra.mxu0 %v6217
  %6386 = vmatprep.subr.mxu0 %v6220
  %6387 = vmatpush1.msra.mxu0 %v6219
  %6388 = vmatprep.subr.mxu0 %v6222
  %6389 = vmatpush1.msra.mxu0 %v6221
  %6390 = vmatprep.subr.mxu0 %v6224
  %6391 = vmatpush1.msra.mxu0 %v6223
  %6392 = vmatprep.subr.mxu0 %v6226
  %6393 = vmatpush1.msra.mxu0 %v6225
  %6394 = vmatprep.subr.mxu0 %v6228
  %6395 = vmatpush1.msra.mxu0 %v6227
  %6396 = vmatprep.subr.mxu0 %v6230
  %6397 = vmatpush1.msra.mxu0 %v6229
  %6398 = vmatprep.subr.mxu0 %v6232
  %6399 = vmatpush1.msra.mxu0 %v6231
  %6400 = vmatprep.subr.mxu0 %v6234
  %6401 = vmatpush1.msra.mxu0 %v6233
  %6402 = vmatprep.subr.mxu0 %v6236
  %6403 = vmatpush1.msra.mxu0 %v6235
  %6404 = vmatprep.subr.mxu0 %v6238
  %6405 = vmatpush1.msra.mxu0 %v6237
  %6406 = vmatprep.subr.mxu0 %v6240
  %6407 = vmatpush1.msra.mxu0 %v6239
  %6408 = vmatprep.subr.mxu0 %v6242
  %6409 = vmatpush1.msra.mxu0 %v6241
  %6410 = vmatprep.subr.mxu0 %v6244
  %6411 = vmatpush1.msra.mxu0 %v6243
  %6412 = vmatprep.subr.mxu0 %v6246
  %6413 = vmatpush1.msra.mxu0 %v6245
  %6414 = vmatprep.subr.mxu0 %v6248
  %6415 = vmatpush1.msra.mxu0 %v6247
  %6416 = vmatprep.subr.mxu0 %v6250
  %6417 = vmatpush1.msra.mxu0 %v6249
  %6418 = vmatprep.subr.mxu0 %v6252
  %6419 = vmatpush1.msra.mxu0 %v6251
  %6420 = vmatprep.subr.mxu0 %v6254
  %6421 = vmatpush1.msra.mxu0 %v6253
  %6422 = vmatprep.mubr.f32.mxu0 %v6125
  %6423 = vmatmul.mubr.f32.gmra.mrb[0].mxu0 %v6124
  %v6424 = vpop.f32.mrb[0].mxu0
  %v6425 = vadd.f32 %v6354, %v6424
  %v6426 = vpop.f32.mrb[0].mxu0
  %v6427 = vadd.f32 %v6356, %v6426
  %6428 = vdwg.mxu0
  %6429 = vmatprep.subr.mxu0 %v6256
  %6430 = vmatpush1.msra.mxu0 %v6255
  %6431 = vmatprep.subr.mxu0 %v6258
  %6432 = vmatpush1.msra.mxu0 %v6257
  %6433 = vmatprep.subr.mxu0 %v6260
  %6434 = vmatpush1.msra.mxu0 %v6259
  %6435 = vmatprep.subr.mxu0 %v6262
  %6436 = vmatpush1.msra.mxu0 %v6261
  %6437 = vmatprep.subr.mxu0 %v6264
  %6438 = vmatpush1.msra.mxu0 %v6263
  %6439 = vmatprep.subr.mxu0 %v6266
  %6440 = vmatpush1.msra.mxu0 %v6265
  %6441 = vmatprep.subr.mxu0 %v6268
  %6442 = vmatpush1.msra.mxu0 %v6267
  %6443 = vmatprep.subr.mxu0 %v6270
  %6444 = vmatpush1.msra.mxu0 %v6269
  %6445 = vmatprep.subr.mxu0 %v6272
  %6446 = vmatpush1.msra.mxu0 %v6271
  %6447 = vmatprep.subr.mxu0 %v6274
  %6448 = vmatpush1.msra.mxu0 %v6273
  %6449 = vmatprep.subr.mxu0 %v6276
  %6450 = vmatpush1.msra.mxu0 %v6275
  %6451 = vmatprep.subr.mxu0 %v6278
  %6452 = vmatpush1.msra.mxu0 %v6277
  %6453 = vmatprep.subr.mxu0 %v6280
  %6454 = vmatpush1.msra.mxu0 %v6279
  %6455 = vmatprep.subr.mxu0 %v6282
  %6456 = vmatpush1.msra.mxu0 %v6281
  %6457 = vmatprep.subr.mxu0 %v6284
  %6458 = vmatpush1.msra.mxu0 %v6283
  %6459 = vmatprep.subr.mxu0 %v6286
  %6460 = vmatpush1.msra.mxu0 %v6285
  %6461 = vmatprep.subr.mxu0 0.0
  %6462 = vmatpush1.msra.mxu0 0.0
  %6463 = vmatprep.subr.mxu0 0.0
  %6464 = vmatpush1.msra.mxu0 0.0
  %6465 = vmatprep.subr.mxu0 0.0
  %6466 = vmatpush1.msra.mxu0 0.0
  %6467 = vmatprep.subr.mxu0 0.0
  %6468 = vmatpush1.msra.mxu0 0.0
  %6469 = vmatprep.subr.mxu0 0.0
  %6470 = vmatpush1.msra.mxu0 0.0
  %6471 = vmatprep.subr.mxu0 0.0
  %6472 = vmatpush1.msra.mxu0 0.0
  %6473 = vmatprep.subr.mxu0 0.0
  %6474 = vmatpush1.msra.mxu0 0.0
  %6475 = vmatprep.subr.mxu0 0.0
  %6476 = vmatpush1.msra.mxu0 0.0
  %6477 = vmatprep.subr.mxu0 0.0
  %6478 = vmatpush1.msra.mxu0 0.0
  %6479 = vmatprep.subr.mxu0 0.0
  %6480 = vmatpush1.msra.mxu0 0.0
  %6481 = vmatprep.subr.mxu0 0.0
  %6482 = vmatpush1.msra.mxu0 0.0
  %6483 = vmatprep.subr.mxu0 0.0
  %6484 = vmatpush1.msra.mxu0 0.0
  %6485 = vmatprep.subr.mxu0 0.0
  %6486 = vmatpush1.msra.mxu0 0.0
  %6487 = vmatprep.subr.mxu0 0.0
  %6488 = vmatpush1.msra.mxu0 0.0
  %6489 = vmatprep.subr.mxu0 0.0
  %6490 = vmatpush1.msra.mxu0 0.0
  %6491 = vmatprep.subr.mxu0 0.0
  %6492 = vmatpush1.msra.mxu0 0.0
  %6493 = vmatprep.mubr.f32.mxu0 0.0
  %6494 = vmatmul.mubr.f32.gmra.mrb[0].mxu0 %v6126
  %v6495 = vpop.f32.mrb[0].mxu0
  %v6496 = vadd.f32 %v6425, %v6495
  %v6497 = vpop.f32.mrb[0].mxu0
  %v6498 = vadd.f32 %v6427, %v6497
  %6499 = vdwg.mxu0
  %v6500 = vld [vmem:[%s0 + $0xa8] sm:$0xff]
  %v6501 = vld [vmem:[%s0 + $0xb0] sm:$0xff]
  %v6502 = vld [vmem:[%s0 + $0xb8] sm:$0xff]
  %v6503 = vld [vmem:[%s0 + $0xc0] sm:$0xff]
  %v6504 = vld [vmem:[%s0 + $0xc8] sm:$0xff]
  %6505 = vmatprep.subr.mxu0 %v6128
  %6506 = vmatpush1.msra.mxu0 %v6127
  %6507 = vmatprep.subr.mxu0 %v6130
  %6508 = vmatpush1.msra.mxu0 %v6129
  %6509 = vmatprep.subr.mxu0 %v6132
  %6510 = vmatpush1.msra.mxu0 %v6131
  %6511 = vmatprep.subr.mxu0 %v6134
  %6512 = vmatpush1.msra.mxu0 %v6133
  %6513 = vmatprep.subr.mxu0 %v6136
  %6514 = vmatpush1.msra.mxu0 %v6135
  %6515 = vmatprep.subr.mxu0 %v6138
  %6516 = vmatpush1.msra.mxu0 %v6137
  %6517 = vmatprep.subr.mxu0 %v6140
  %6518 = vmatpush1.msra.mxu0 %v6139
  %6519 = vmatprep.subr.mxu0 %v6142
  %6520 = vmatpush1.msra.mxu0 %v6141
  %6521 = vmatprep.subr.mxu0 %v6144
  %6522 = vmatpush1.msra.mxu0 %v6143
  %6523 = vmatprep.subr.mxu0 %v6146
  %6524 = vmatpush1.msra.mxu0 %v6145
  %6525 = vmatprep.subr.mxu0 %v6148
  %6526 = vmatpush1.msra.mxu0 %v6147
  %6527 = vmatprep.subr.mxu0 %v6150
  %6528 = vmatpush1.msra.mxu0 %v6149
  %6529 = vmatprep.subr.mxu0 %v6152
  %6530 = vmatpush1.msra.mxu0 %v6151
  %6531 = vmatprep.subr.mxu0 %v6154
  %6532 = vmatpush1.msra.mxu0 %v6153
  %6533 = vmatprep.subr.mxu0 %v6156
  %6534 = vmatpush1.msra.mxu0 %v6155
  %6535 = vmatprep.subr.mxu0 %v6158
  %6536 = vmatpush1.msra.mxu0 %v6157
  %6537 = vmatprep.subr.mxu0 %v6160
  %6538 = vmatpush1.msra.mxu0 %v6159
  %6539 = vmatprep.subr.mxu0 %v6162
  %6540 = vmatpush1.msra.mxu0 %v6161
  %6541 = vmatprep.subr.mxu0 %v6164
  %6542 = vmatpush1.msra.mxu0 %v6163
  %6543 = vmatprep.subr.mxu0 %v6166
  %6544 = vmatpush1.msra.mxu0 %v6165
  %6545 = vmatprep.subr.mxu0 %v6168
  %6546 = vmatpush1.msra.mxu0 %v6167
  %6547 = vmatprep.subr.mxu0 %v6170
  %6548 = vmatpush1.msra.mxu0 %v6169
  %6549 = vmatprep.subr.mxu0 %v6172
  %6550 = vmatpush1.msra.mxu0 %v6171
  %6551 = vmatprep.subr.mxu0 %v6174
  %6552 = vmatpush1.msra.mxu0 %v6173
  %6553 = vmatprep.subr.mxu0 %v6176
  %6554 = vmatpush1.msra.mxu0 %v6175
  %6555 = vmatprep.subr.mxu0 %v6178
  %6556 = vmatpush1.msra.mxu0 %v6177
  %6557 = vmatprep.subr.mxu0 %v6180
  %6558 = vmatpush1.msra.mxu0 %v6179
  %6559 = vmatprep.subr.mxu0 %v6182
  %6560 = vmatpush1.msra.mxu0 %v6181
  %6561 = vmatprep.subr.mxu0 %v6184
  %6562 = vmatpush1.msra.mxu0 %v6183
  %6563 = vmatprep.subr.mxu0 %v6186
  %6564 = vmatpush1.msra.mxu0 %v6185
  %6565 = vmatprep.subr.mxu0 %v6188
  %6566 = vmatpush1.msra.mxu0 %v6187
  %6567 = vmatprep.subr.mxu0 %v6190
  %6568 = vmatpush1.msra.mxu0 %v6189
  %6569 = vmatprep.mubr.f32.mxu0 %v6501
  %6570 = vmatmul.mubr.f32.gmra.mrb[0].mxu0 %v6500
  %v6571 = vpop.f32.mrb[0].mxu0
  %v6572 = vadd.f32 0.0, %v6571
  %v6573 = vpop.f32.mrb[0].mxu0
  %v6574 = vadd.f32 0.0, %v6573
  %6575 = vdwg.mxu0
  %6576 = vmatprep.subr.mxu0 %v6192
  %6577 = vmatpush1.msra.mxu0 %v6191
  %6578 = vmatprep.subr.mxu0 %v6194
  %6579 = vmatpush1.msra.mxu0 %v6193
  %6580 = vmatprep.subr.mxu0 %v6196
  %6581 = vmatpush1.msra.mxu0 %v6195
  %6582 = vmatprep.subr.mxu0 %v6198
  %6583 = vmatpush1.msra.mxu0 %v6197
  %6584 = vmatprep.subr.mxu0 %v6200
  %6585 = vmatpush1.msra.mxu0 %v6199
  %6586 = vmatprep.subr.mxu0 %v6202
  %6587 = vmatpush1.msra.mxu0 %v6201
  %6588 = vmatprep.subr.mxu0 %v6204
  %6589 = vmatpush1.msra.mxu0 %v6203
  %6590 = vmatprep.subr.mxu0 %v6206
  %6591 = vmatpush1.msra.mxu0 %v6205
  %6592 = vmatprep.subr.mxu0 %v6208
  %6593 = vmatpush1.msra.mxu0 %v6207
  %6594 = vmatprep.subr.mxu0 %v6210
  %6595 = vmatpush1.msra.mxu0 %v6209
  %6596 = vmatprep.subr.mxu0 %v6212
  %6597 = vmatpush1.msra.mxu0 %v6211
  %6598 = vmatprep.subr.mxu0 %v6214
  %6599 = vmatpush1.msra.mxu0 %v6213
  %6600 = vmatprep.subr.mxu0 %v6216
  %6601 = vmatpush1.msra.mxu0 %v6215
  %6602 = vmatprep.subr.mxu0 %v6218
  %6603 = vmatpush1.msra.mxu0 %v6217
  %6604 = vmatprep.subr.mxu0 %v6220
  %6605 = vmatpush1.msra.mxu0 %v6219
  %6606 = vmatprep.subr.mxu0 %v6222
  %6607 = vmatpush1.msra.mxu0 %v6221
  %6608 = vmatprep.subr.mxu0 %v6224
  %6609 = vmatpush1.msra.mxu0 %v6223
  %6610 = vmatprep.subr.mxu0 %v6226
  %6611 = vmatpush1.msra.mxu0 %v6225
  %6612 = vmatprep.subr.mxu0 %v6228
  %6613 = vmatpush1.msra.mxu0 %v6227
  %6614 = vmatprep.subr.mxu0 %v6230
  %6615 = vmatpush1.msra.mxu0 %v6229
  %6616 = vmatprep.subr.mxu0 %v6232
  %6617 = vmatpush1.msra.mxu0 %v6231
  %6618 = vmatprep.subr.mxu0 %v6234
  %6619 = vmatpush1.msra.mxu0 %v6233
  %6620 = vmatprep.subr.mxu0 %v6236
  %6621 = vmatpush1.msra.mxu0 %v6235
  %6622 = vmatprep.subr.mxu0 %v6238
  %6623 = vmatpush1.msra.mxu0 %v6237
  %6624 = vmatprep.subr.mxu0 %v6240
  %6625 = vmatpush1.msra.mxu0 %v6239
  %6626 = vmatprep.subr.mxu0 %v6242
  %6627 = vmatpush1.msra.mxu0 %v6241
  %6628 = vmatprep.subr.mxu0 %v6244
  %6629 = vmatpush1.msra.mxu0 %v6243
  %6630 = vmatprep.subr.mxu0 %v6246
  %6631 = vmatpush1.msra.mxu0 %v6245
  %6632 = vmatprep.subr.mxu0 %v6248
  %6633 = vmatpush1.msra.mxu0 %v6247
  %6634 = vmatprep.subr.mxu0 %v6250
  %6635 = vmatpush1.msra.mxu0 %v6249
  %6636 = vmatprep.subr.mxu0 %v6252
  %6637 = vmatpush1.msra.mxu0 %v6251
  %6638 = vmatprep.subr.mxu0 %v6254
  %6639 = vmatpush1.msra.mxu0 %v6253
  %6640 = vmatprep.mubr.f32.mxu0 %v6503
  %6641 = vmatmul.mubr.f32.gmra.mrb[0].mxu0 %v6502
  %v6642 = vpop.f32.mrb[0].mxu0
  %v6643 = vadd.f32 %v6572, %v6642
  %v6644 = vpop.f32.mrb[0].mxu0
  %v6645 = vadd.f32 %v6574, %v6644
  %6646 = vdwg.mxu0
  %6647 = vmatprep.subr.mxu0 %v6256
  %6648 = vmatpush1.msra.mxu0 %v6255
  %6649 = vmatprep.subr.mxu0 %v6258
  %6650 = vmatpush1.msra.mxu0 %v6257
  %6651 = vmatprep.subr.mxu0 %v6260
  %6652 = vmatpush1.msra.mxu0 %v6259
  %6653 = vmatprep.subr.mxu0 %v6262
  %6654 = vmatpush1.msra.mxu0 %v6261
  %6655 = vmatprep.subr.mxu0 %v6264
  %6656 = vmatpush1.msra.mxu0 %v6263
  %6657 = vmatprep.subr.mxu0 %v6266
  %6658 = vmatpush1.msra.mxu0 %v6265
  %6659 = vmatprep.subr.mxu0 %v6268
  %6660 = vmatpush1.msra.mxu0 %v6267
  %6661 = vmatprep.subr.mxu0 %v6270
  %6662 = vmatpush1.msra.mxu0 %v6269
  %6663 = vmatprep.subr.mxu0 %v6272
  %6664 = vmatpush1.msra.mxu0 %v6271
  %6665 = vmatprep.subr.mxu0 %v6274
  %6666 = vmatpush1.msra.mxu0 %v6273
  %6667 = vmatprep.subr.mxu0 %v6276
  %6668 = vmatpush1.msra.mxu0 %v6275
  %6669 = vmatprep.subr.mxu0 %v6278
  %6670 = vmatpush1.msra.mxu0 %v6277
  %6671 = vmatprep.subr.mxu0 %v6280
  %6672 = vmatpush1.msra.mxu0 %v6279
  %6673 = vmatprep.subr.mxu0 %v6282
  %6674 = vmatpush1.msra.mxu0 %v6281
  %6675 = vmatprep.subr.mxu0 %v6284
  %6676 = vmatpush1.msra.mxu0 %v6283
  %6677 = vmatprep.subr.mxu0 %v6286
  %6678 = vmatpush1.msra.mxu0 %v6285
  %6679 = vmatprep.subr.mxu0 0.0
  %6680 = vmatpush1.msra.mxu0 0.0
  %6681 = vmatprep.subr.mxu0 0.0
  %6682 = vmatpush1.msra.mxu0 0.0
  %6683 = vmatprep.subr.mxu0 0.0
  %6684 = vmatpush1.msra.mxu0 0.0
  %6685 = vmatprep.subr.mxu0 0.0
  %6686 = vmatpush1.msra.mxu0 0.0
  %6687 = vmatprep.subr.mxu0 0.0
  %6688 = vmatpush1.msra.mxu0 0.0
  %6689 = vmatprep.subr.mxu0 0.0
  %6690 = vmatpush1.msra.mxu0 0.0
  %6691 = vmatprep.subr.mxu0 0.0
  %6692 = vmatpush1.msra.mxu0 0.0
  %6693 = vmatprep.subr.mxu0 0.0
  %6694 = vmatpush1.msra.mxu0 0.0
  %6695 = vmatprep.subr.mxu0 0.0
  %6696 = vmatpush1.msra.mxu0 0.0
  %6697 = vmatprep.subr.mxu0 0.0
  %6698 = vmatpush1.msra.mxu0 0.0
  %6699 = vmatprep.subr.mxu0 0.0
  %6700 = vmatpush1.msra.mxu0 0.0
  %6701 = vmatprep.subr.mxu0 0.0
  %6702 = vmatpush1.msra.mxu0 0.0
  %6703 = vmatprep.subr.mxu0 0.0
  %6704 = vmatpush1.msra.mxu0 0.0
  %6705 = vmatprep.subr.mxu0 0.0
  %6706 = vmatpush1.msra.mxu0 0.0
  %6707 = vmatprep.subr.mxu0 0.0
  %6708 = vmatpush1.msra.mxu0 0.0
  %6709 = vmatprep.subr.mxu0 0.0
  %6710 = vmatpush1.msra.mxu0 0.0
  %6711 = vmatprep.mubr.f32.mxu0 0.0
  %6712 = vmatmul.mubr.f32.gmra.mrb[0].mxu0 %v6504
  %v6713 = vpop.f32.mrb[0].mxu0
  %v6714 = vadd.f32 %v6643, %v6713
  %v6715 = vpop.f32.mrb[0].mxu0
  %v6716 = vadd.f32 %v6645, %v6715
  %6717 = vdwg.mxu0
  %v6718 = vmax.f32 %v6496, %v6714
  %v6719 = vmax.f32 %v6498, %v6716
  %v6720 = vmax.f32 %v6718, %v6719
  %v6721 = vld [vmem:[%s2] sm:$0x1]
  %v6723 = vlaneseq
  %v6724 = vshrl.u32 %v6723, 7
  %v6725 = vsub.s32 0, %v6724
  %v6726 = vrot.slane %v6721, %v6725
  %v6728 = vadd.f32 %v6720, %v6726
  %v6729 = vmax.f32 %v6728, 0.0
  %6730 = vst [vmem:[#allocation2 + $0x50] sm:$0xff] %v6729
  %v6731 = vld [vmem:[%s0 + $0xb0] sm:$0xff]
  %v6732 = vld [vmem:[%s0 + $0xb8] sm:$0xff]
  %v6733 = vld [vmem:[%s0 + $0xc0] sm:$0xff]
  %v6734 = vld [vmem:[%s0 + $0xc8] sm:$0xff]
  %v6735 = vld [vmem:[%s0 + $0xd0] sm:$0xff]
  %v6736 = vld [vmem:[%s1] sm:$0xff]
  %v6737 = vld [vmem:[%s1 + $0x8] sm:$0xff]
  %v6738 = vld [vmem:[%s1 + $0x10] sm:$0xff]
  %v6739 = vld [vmem:[%s1 + $0x18] sm:$0xff]
  %v6740 = vld [vmem:[%s1 + $0x20] sm:$0xff]
  %v6741 = vld [vmem:[%s1 + $0x28] sm:$0xff]
  %v6742 = vld [vmem:[%s1 + $0x30] sm:$0xff]
  %v6743 = vld [vmem:[%s1 + $0x38] sm:$0xff]
  %v6744 = vld [vmem:[%s1 + $0x40] sm:$0xff]
  %v6745 = vld [vmem:[%s1 + $0x48] sm:$0xff]
  %v6746 = vld [vmem:[%s1 + $0x50] sm:$0xff]
  %v6747 = vld [vmem:[%s1 + $0x58] sm:$0xff]
  %v6748 = vld [vmem:[%s1 + $0x60] sm:$0xff]
  %v6749 = vld [vmem:[%s1 + $0x68] sm:$0xff]
  %v6750 = vld [vmem:[%s1 + $0x70] sm:$0xff]
  %v6751 = vld [vmem:[%s1 + $0x78] sm:$0xff]
  %v6752 = vld [vmem:[%s1 + $0x80] sm:$0xff]
  %v6753 = vld [vmem:[%s1 + $0x88] sm:$0xff]
  %v6754 = vld [vmem:[%s1 + $0x90] sm:$0xff]
  %v6755 = vld [vmem:[%s1 + $0x98] sm:$0xff]
  %v6756 = vld [vmem:[%s1 + $0xa0] sm:$0xff]
  %v6757 = vld [vmem:[%s1 + $0xa8] sm:$0xff]
  %v6758 = vld [vmem:[%s1 + $0xb0] sm:$0xff]
  %v6759 = vld [vmem:[%s1 + $0xb8] sm:$0xff]
  %v6760 = vld [vmem:[%s1 + $0xc0] sm:$0xff]
  %v6761 = vld [vmem:[%s1 + $0xc8] sm:$0xff]
  %v6762 = vld [vmem:[%s1 + $0xd0] sm:$0xff]
  %v6763 = vld [vmem:[%s1 + $0xd8] sm:$0xff]
  %v6764 = vld [vmem:[%s1 + $0xe0] sm:$0xff]
  %v6765 = vld [vmem:[%s1 + $0xe8] sm:$0xff]
  %v6766 = vld [vmem:[%s1 + $0xf0] sm:$0xff]
  %v6767 = vld [vmem:[%s1 + $0xf8] sm:$0xff]
  %v6768 = vld [vmem:[%s1 + $0x100] sm:$0xff]
  %v6769 = vld [vmem:[%s1 + $0x108] sm:$0xff]
  %v6770 = vld [vmem:[%s1 + $0x110] sm:$0xff]
  %v6771 = vld [vmem:[%s1 + $0x118] sm:$0xff]
  %v6772 = vld [vmem:[%s1 + $0x120] sm:$0xff]
  %v6773 = vld [vmem:[%s1 + $0x128] sm:$0xff]
  %v6774 = vld [vmem:[%s1 + $0x130] sm:$0xff]
  %v6775 = vld [vmem:[%s1 + $0x138] sm:$0xff]
  %v6776 = vld [vmem:[%s1 + $0x140] sm:$0xff]
  %v6777 = vld [vmem:[%s1 + $0x148] sm:$0xff]
  %v6778 = vld [vmem:[%s1 + $0x150] sm:$0xff]
  %v6779 = vld [vmem:[%s1 + $0x158] sm:$0xff]
  %v6780 = vld [vmem:[%s1 + $0x160] sm:$0xff]
  %v6781 = vld [vmem:[%s1 + $0x168] sm:$0xff]
  %v6782 = vld [vmem:[%s1 + $0x170] sm:$0xff]
  %v6783 = vld [vmem:[%s1 + $0x178] sm:$0xff]
  %v6784 = vld [vmem:[%s1 + $0x180] sm:$0xff]
  %v6785 = vld [vmem:[%s1 + $0x188] sm:$0xff]
  %v6786 = vld [vmem:[%s1 + $0x190] sm:$0xff]
  %v6787 = vld [vmem:[%s1 + $0x198] sm:$0xff]
  %v6788 = vld [vmem:[%s1 + $0x1a0] sm:$0xff]
  %v6789 = vld [vmem:[%s1 + $0x1a8] sm:$0xff]
  %v6790 = vld [vmem:[%s1 + $0x1b0] sm:$0xff]
  %v6791 = vld [vmem:[%s1 + $0x1b8] sm:$0xff]
  %v6792 = vld [vmem:[%s1 + $0x1c0] sm:$0xff]
  %v6793 = vld [vmem:[%s1 + $0x1c8] sm:$0xff]
  %v6794 = vld [vmem:[%s1 + $0x1d0] sm:$0xff]
  %v6795 = vld [vmem:[%s1 + $0x1d8] sm:$0xff]
  %v6796 = vld [vmem:[%s1 + $0x1e0] sm:$0xff]
  %v6797 = vld [vmem:[%s1 + $0x1e8] sm:$0xff]
  %v6798 = vld [vmem:[%s1 + $0x1f0] sm:$0xff]
  %v6799 = vld [vmem:[%s1 + $0x1f8] sm:$0xff]
  %v6800 = vld [vmem:[%s1 + $0x200] sm:$0xff]
  %v6801 = vld [vmem:[%s1 + $0x208] sm:$0xff]
  %v6802 = vld [vmem:[%s1 + $0x210] sm:$0xff]
  %v6803 = vld [vmem:[%s1 + $0x218] sm:$0xff]
  %v6804 = vld [vmem:[%s1 + $0x220] sm:$0xff]
  %v6805 = vld [vmem:[%s1 + $0x228] sm:$0xff]
  %v6806 = vld [vmem:[%s1 + $0x230] sm:$0xff]
  %v6807 = vld [vmem:[%s1 + $0x238] sm:$0xff]
  %v6808 = vld [vmem:[%s1 + $0x240] sm:$0xff]
  %v6809 = vld [vmem:[%s1 + $0x248] sm:$0xff]
  %v6810 = vld [vmem:[%s1 + $0x250] sm:$0xff]
  %v6811 = vld [vmem:[%s1 + $0x258] sm:$0xff]
  %v6812 = vld [vmem:[%s1 + $0x260] sm:$0xff]
  %v6813 = vld [vmem:[%s1 + $0x268] sm:$0xff]
  %v6814 = vld [vmem:[%s1 + $0x270] sm:$0xff]
  %v6815 = vld [vmem:[%s1 + $0x278] sm:$0xff]
  %v6816 = vld [vmem:[%s1 + $0x280] sm:$0xff]
  %v6817 = vld [vmem:[%s1 + $0x288] sm:$0xff]
  %v6818 = vld [vmem:[%s1 + $0x290] sm:$0xff]
  %v6819 = vld [vmem:[%s1 + $0x298] sm:$0xff]
  %v6820 = vld [vmem:[%s1 + $0x2a0] sm:$0xff]
  %v6821 = vld [vmem:[%s1 + $0x2a8] sm:$0xff]
  %v6822 = vld [vmem:[%s1 + $0x2b0] sm:$0xff]
  %v6823 = vld [vmem:[%s1 + $0x2b8] sm:$0xff]
  %v6824 = vld [vmem:[%s1 + $0x2c0] sm:$0xff]
  %v6825 = vld [vmem:[%s1 + $0x2c8] sm:$0xff]
  %v6826 = vld [vmem:[%s1 + $0x2d0] sm:$0xff]
  %v6827 = vld [vmem:[%s1 + $0x2d8] sm:$0xff]
  %v6828 = vld [vmem:[%s1 + $0x2e0] sm:$0xff]
  %v6829 = vld [vmem:[%s1 + $0x2e8] sm:$0xff]
  %v6830 = vld [vmem:[%s1 + $0x2f0] sm:$0xff]
  %v6831 = vld [vmem:[%s1 + $0x2f8] sm:$0xff]
  %v6832 = vld [vmem:[%s1 + $0x300] sm:$0xff]
  %v6833 = vld [vmem:[%s1 + $0x308] sm:$0xff]
  %v6834 = vld [vmem:[%s1 + $0x310] sm:$0xff]
  %v6835 = vld [vmem:[%s1 + $0x318] sm:$0xff]
  %v6836 = vld [vmem:[%s1 + $0x320] sm:$0xff]
  %v6837 = vld [vmem:[%s1 + $0x328] sm:$0xff]
  %v6838 = vld [vmem:[%s1 + $0x330] sm:$0xff]
  %v6839 = vld [vmem:[%s1 + $0x338] sm:$0xff]
  %v6840 = vld [vmem:[%s1 + $0x340] sm:$0xff]
  %v6841 = vld [vmem:[%s1 + $0x348] sm:$0xff]
  %v6842 = vld [vmem:[%s1 + $0x350] sm:$0xff]
  %v6843 = vld [vmem:[%s1 + $0x358] sm:$0xff]
  %v6844 = vld [vmem:[%s1 + $0x360] sm:$0xff]
  %v6845 = vld [vmem:[%s1 + $0x368] sm:$0xff]
  %v6846 = vld [vmem:[%s1 + $0x370] sm:$0xff]
  %v6847 = vld [vmem:[%s1 + $0x378] sm:$0xff]
  %v6848 = vld [vmem:[%s1 + $0x380] sm:$0xff]
  %v6849 = vld [vmem:[%s1 + $0x388] sm:$0xff]
  %v6850 = vld [vmem:[%s1 + $0x390] sm:$0xff]
  %v6851 = vld [vmem:[%s1 + $0x398] sm:$0xff]
  %v6852 = vld [vmem:[%s1 + $0x3a0] sm:$0xff]
  %v6853 = vld [vmem:[%s1 + $0x3a8] sm:$0xff]
  %v6854 = vld [vmem:[%s1 + $0x3b0] sm:$0xff]
  %v6855 = vld [vmem:[%s1 + $0x3b8] sm:$0xff]
  %v6856 = vld [vmem:[%s1 + $0x3c0] sm:$0xff]
  %v6857 = vld [vmem:[%s1 + $0x3c8] sm:$0xff]
  %v6858 = vld [vmem:[%s1 + $0x3d0] sm:$0xff]
  %v6859 = vld [vmem:[%s1 + $0x3d8] sm:$0xff]
  %v6860 = vld [vmem:[%s1 + $0x3e0] sm:$0xff]
  %v6861 = vld [vmem:[%s1 + $0x3e8] sm:$0xff]
  %v6862 = vld [vmem:[%s1 + $0x3f0] sm:$0xff]
  %v6863 = vld [vmem:[%s1 + $0x3f8] sm:$0xff]
  %v6864 = vld [vmem:[%s1 + $0x400] sm:$0xff]
  %v6865 = vld [vmem:[%s1 + $0x408] sm:$0xff]
  %v6866 = vld [vmem:[%s1 + $0x410] sm:$0xff]
  %v6867 = vld [vmem:[%s1 + $0x418] sm:$0xff]
  %v6868 = vld [vmem:[%s1 + $0x420] sm:$0xff]
  %v6869 = vld [vmem:[%s1 + $0x428] sm:$0xff]
  %v6870 = vld [vmem:[%s1 + $0x430] sm:$0xff]
  %v6871 = vld [vmem:[%s1 + $0x438] sm:$0xff]
  %v6872 = vld [vmem:[%s1 + $0x440] sm:$0xff]
  %v6873 = vld [vmem:[%s1 + $0x448] sm:$0xff]
  %v6874 = vld [vmem:[%s1 + $0x450] sm:$0xff]
  %v6875 = vld [vmem:[%s1 + $0x458] sm:$0xff]
  %v6876 = vld [vmem:[%s1 + $0x460] sm:$0xff]
  %v6877 = vld [vmem:[%s1 + $0x468] sm:$0xff]
  %v6878 = vld [vmem:[%s1 + $0x470] sm:$0xff]
  %v6879 = vld [vmem:[%s1 + $0x478] sm:$0xff]
  %v6880 = vld [vmem:[%s1 + $0x480] sm:$0xff]
  %v6881 = vld [vmem:[%s1 + $0x488] sm:$0xff]
  %v6882 = vld [vmem:[%s1 + $0x490] sm:$0xff]
  %v6883 = vld [vmem:[%s1 + $0x498] sm:$0xff]
  %v6884 = vld [vmem:[%s1 + $0x4a0] sm:$0xff]
  %v6885 = vld [vmem:[%s1 + $0x4a8] sm:$0xff]
  %v6886 = vld [vmem:[%s1 + $0x4b0] sm:$0xff]
  %v6887 = vld [vmem:[%s1 + $0x4b8] sm:$0xff]
  %v6888 = vld [vmem:[%s1 + $0x4c0] sm:$0xff]
  %v6889 = vld [vmem:[%s1 + $0x4c8] sm:$0xff]
  %v6890 = vld [vmem:[%s1 + $0x4d0] sm:$0xff]
  %v6891 = vld [vmem:[%s1 + $0x4d8] sm:$0xff]
  %v6892 = vld [vmem:[%s1 + $0x4e0] sm:$0xff]
  %v6893 = vld [vmem:[%s1 + $0x4e8] sm:$0xff]
  %v6894 = vld [vmem:[%s1 + $0x4f0] sm:$0xff]
  %v6895 = vld [vmem:[%s1 + $0x4f8] sm:$0xff]
  %6896 = vmatprep.subr.mxu0 %v6737
  %6897 = vmatpush1.msra.mxu0 %v6736
  %6898 = vmatprep.subr.mxu0 %v6739
  %6899 = vmatpush1.msra.mxu0 %v6738
  %6900 = vmatprep.subr.mxu0 %v6741
  %6901 = vmatpush1.msra.mxu0 %v6740
  %6902 = vmatprep.subr.mxu0 %v6743
  %6903 = vmatpush1.msra.mxu0 %v6742
  %6904 = vmatprep.subr.mxu0 %v6745
  %6905 = vmatpush1.msra.mxu0 %v6744
  %6906 = vmatprep.subr.mxu0 %v6747
  %6907 = vmatpush1.msra.mxu0 %v6746
  %6908 = vmatprep.subr.mxu0 %v6749
  %6909 = vmatpush1.msra.mxu0 %v6748
  %6910 = vmatprep.subr.mxu0 %v6751
  %6911 = vmatpush1.msra.mxu0 %v6750
  %6912 = vmatprep.subr.mxu0 %v6753
  %6913 = vmatpush1.msra.mxu0 %v6752
  %6914 = vmatprep.subr.mxu0 %v6755
  %6915 = vmatpush1.msra.mxu0 %v6754
  %6916 = vmatprep.subr.mxu0 %v6757
  %6917 = vmatpush1.msra.mxu0 %v6756
  %6918 = vmatprep.subr.mxu0 %v6759
  %6919 = vmatpush1.msra.mxu0 %v6758
  %6920 = vmatprep.subr.mxu0 %v6761
  %6921 = vmatpush1.msra.mxu0 %v6760
  %6922 = vmatprep.subr.mxu0 %v6763
  %6923 = vmatpush1.msra.mxu0 %v6762
  %6924 = vmatprep.subr.mxu0 %v6765
  %6925 = vmatpush1.msra.mxu0 %v6764
  %6926 = vmatprep.subr.mxu0 %v6767
  %6927 = vmatpush1.msra.mxu0 %v6766
  %6928 = vmatprep.subr.mxu0 %v6769
  %6929 = vmatpush1.msra.mxu0 %v6768
  %6930 = vmatprep.subr.mxu0 %v6771
  %6931 = vmatpush1.msra.mxu0 %v6770
  %6932 = vmatprep.subr.mxu0 %v6773
  %6933 = vmatpush1.msra.mxu0 %v6772
  %6934 = vmatprep.subr.mxu0 %v6775
  %6935 = vmatpush1.msra.mxu0 %v6774
  %6936 = vmatprep.subr.mxu0 %v6777
  %6937 = vmatpush1.msra.mxu0 %v6776
  %6938 = vmatprep.subr.mxu0 %v6779
  %6939 = vmatpush1.msra.mxu0 %v6778
  %6940 = vmatprep.subr.mxu0 %v6781
  %6941 = vmatpush1.msra.mxu0 %v6780
  %6942 = vmatprep.subr.mxu0 %v6783
  %6943 = vmatpush1.msra.mxu0 %v6782
  %6944 = vmatprep.subr.mxu0 %v6785
  %6945 = vmatpush1.msra.mxu0 %v6784
  %6946 = vmatprep.subr.mxu0 %v6787
  %6947 = vmatpush1.msra.mxu0 %v6786
  %6948 = vmatprep.subr.mxu0 %v6789
  %6949 = vmatpush1.msra.mxu0 %v6788
  %6950 = vmatprep.subr.mxu0 %v6791
  %6951 = vmatpush1.msra.mxu0 %v6790
  %6952 = vmatprep.subr.mxu0 %v6793
  %6953 = vmatpush1.msra.mxu0 %v6792
  %6954 = vmatprep.subr.mxu0 %v6795
  %6955 = vmatpush1.msra.mxu0 %v6794
  %6956 = vmatprep.subr.mxu0 %v6797
  %6957 = vmatpush1.msra.mxu0 %v6796
  %6958 = vmatprep.subr.mxu0 %v6799
  %6959 = vmatpush1.msra.mxu0 %v6798
  %6960 = vmatprep.mubr.f32.mxu0 %v6732
  %6961 = vmatmul.mubr.f32.gmra.mrb[0].mxu0 %v6731
  %v6962 = vpop.f32.mrb[0].mxu0
  %v6963 = vadd.f32 0.0, %v6962
  %v6964 = vpop.f32.mrb[0].mxu0
  %v6965 = vadd.f32 0.0, %v6964
  %6966 = vdwg.mxu0
  %6967 = vmatprep.subr.mxu0 %v6801
  %6968 = vmatpush1.msra.mxu0 %v6800
  %6969 = vmatprep.subr.mxu0 %v6803
  %6970 = vmatpush1.msra.mxu0 %v6802
  %6971 = vmatprep.subr.mxu0 %v6805
  %6972 = vmatpush1.msra.mxu0 %v6804
  %6973 = vmatprep.subr.mxu0 %v6807
  %6974 = vmatpush1.msra.mxu0 %v6806
  %6975 = vmatprep.subr.mxu0 %v6809
  %6976 = vmatpush1.msra.mxu0 %v6808
  %6977 = vmatprep.subr.mxu0 %v6811
  %6978 = vmatpush1.msra.mxu0 %v6810
  %6979 = vmatprep.subr.mxu0 %v6813
  %6980 = vmatpush1.msra.mxu0 %v6812
  %6981 = vmatprep.subr.mxu0 %v6815
  %6982 = vmatpush1.msra.mxu0 %v6814
  %6983 = vmatprep.subr.mxu0 %v6817
  %6984 = vmatpush1.msra.mxu0 %v6816
  %6985 = vmatprep.subr.mxu0 %v6819
  %6986 = vmatpush1.msra.mxu0 %v6818
  %6987 = vmatprep.subr.mxu0 %v6821
  %6988 = vmatpush1.msra.mxu0 %v6820
  %6989 = vmatprep.subr.mxu0 %v6823
  %6990 = vmatpush1.msra.mxu0 %v6822
  %6991 = vmatprep.subr.mxu0 %v6825
  %6992 = vmatpush1.msra.mxu0 %v6824
  %6993 = vmatprep.subr.mxu0 %v6827
  %6994 = vmatpush1.msra.mxu0 %v6826
  %6995 = vmatprep.subr.mxu0 %v6829
  %6996 = vmatpush1.msra.mxu0 %v6828
  %6997 = vmatprep.subr.mxu0 %v6831
  %6998 = vmatpush1.msra.mxu0 %v6830
  %6999 = vmatprep.subr.mxu0 %v6833
  %7000 = vmatpush1.msra.mxu0 %v6832
  %7001 = vmatprep.subr.mxu0 %v6835
  %7002 = vmatpush1.msra.mxu0 %v6834
  %7003 = vmatprep.subr.mxu0 %v6837
  %7004 = vmatpush1.msra.mxu0 %v6836
  %7005 = vmatprep.subr.mxu0 %v6839
  %7006 = vmatpush1.msra.mxu0 %v6838
  %7007 = vmatprep.subr.mxu0 %v6841
  %7008 = vmatpush1.msra.mxu0 %v6840
  %7009 = vmatprep.subr.mxu0 %v6843
  %7010 = vmatpush1.msra.mxu0 %v6842
  %7011 = vmatprep.subr.mxu0 %v6845
  %7012 = vmatpush1.msra.mxu0 %v6844
  %7013 = vmatprep.subr.mxu0 %v6847
  %7014 = vmatpush1.msra.mxu0 %v6846
  %7015 = vmatprep.subr.mxu0 %v6849
  %7016 = vmatpush1.msra.mxu0 %v6848
  %7017 = vmatprep.subr.mxu0 %v6851
  %7018 = vmatpush1.msra.mxu0 %v6850
  %7019 = vmatprep.subr.mxu0 %v6853
  %7020 = vmatpush1.msra.mxu0 %v6852
  %7021 = vmatprep.subr.mxu0 %v6855
  %7022 = vmatpush1.msra.mxu0 %v6854
  %7023 = vmatprep.subr.mxu0 %v6857
  %7024 = vmatpush1.msra.mxu0 %v6856
  %7025 = vmatprep.subr.mxu0 %v6859
  %7026 = vmatpush1.msra.mxu0 %v6858
  %7027 = vmatprep.subr.mxu0 %v6861
  %7028 = vmatpush1.msra.mxu0 %v6860
  %7029 = vmatprep.subr.mxu0 %v6863
  %7030 = vmatpush1.msra.mxu0 %v6862
  %7031 = vmatprep.mubr.f32.mxu0 %v6734
  %7032 = vmatmul.mubr.f32.gmra.mrb[0].mxu0 %v6733
  %v7033 = vpop.f32.mrb[0].mxu0
  %v7034 = vadd.f32 %v6963, %v7033
  %v7035 = vpop.f32.mrb[0].mxu0
  %v7036 = vadd.f32 %v6965, %v7035
  %7037 = vdwg.mxu0
  %7038 = vmatprep.subr.mxu0 %v6865
  %7039 = vmatpush1.msra.mxu0 %v6864
  %7040 = vmatprep.subr.mxu0 %v6867
  %7041 = vmatpush1.msra.mxu0 %v6866
  %7042 = vmatprep.subr.mxu0 %v6869
  %7043 = vmatpush1.msra.mxu0 %v6868
  %7044 = vmatprep.subr.mxu0 %v6871
  %7045 = vmatpush1.msra.mxu0 %v6870
  %7046 = vmatprep.subr.mxu0 %v6873
  %7047 = vmatpush1.msra.mxu0 %v6872
  %7048 = vmatprep.subr.mxu0 %v6875
  %7049 = vmatpush1.msra.mxu0 %v6874
  %7050 = vmatprep.subr.mxu0 %v6877
  %7051 = vmatpush1.msra.mxu0 %v6876
  %7052 = vmatprep.subr.mxu0 %v6879
  %7053 = vmatpush1.msra.mxu0 %v6878
  %7054 = vmatprep.subr.mxu0 %v6881
  %7055 = vmatpush1.msra.mxu0 %v6880
  %7056 = vmatprep.subr.mxu0 %v6883
  %7057 = vmatpush1.msra.mxu0 %v6882
  %7058 = vmatprep.subr.mxu0 %v6885
  %7059 = vmatpush1.msra.mxu0 %v6884
  %7060 = vmatprep.subr.mxu0 %v6887
  %7061 = vmatpush1.msra.mxu0 %v6886
  %7062 = vmatprep.subr.mxu0 %v6889
  %7063 = vmatpush1.msra.mxu0 %v6888
  %7064 = vmatprep.subr.mxu0 %v6891
  %7065 = vmatpush1.msra.mxu0 %v6890
  %7066 = vmatprep.subr.mxu0 %v6893
  %7067 = vmatpush1.msra.mxu0 %v6892
  %7068 = vmatprep.subr.mxu0 %v6895
  %7069 = vmatpush1.msra.mxu0 %v6894
  %7070 = vmatprep.subr.mxu0 0.0
  %7071 = vmatpush1.msra.mxu0 0.0
  %7072 = vmatprep.subr.mxu0 0.0
  %7073 = vmatpush1.msra.mxu0 0.0
  %7074 = vmatprep.subr.mxu0 0.0
  %7075 = vmatpush1.msra.mxu0 0.0
  %7076 = vmatprep.subr.mxu0 0.0
  %7077 = vmatpush1.msra.mxu0 0.0
  %7078 = vmatprep.subr.mxu0 0.0
  %7079 = vmatpush1.msra.mxu0 0.0
  %7080 = vmatprep.subr.mxu0 0.0
  %7081 = vmatpush1.msra.mxu0 0.0
  %7082 = vmatprep.subr.mxu0 0.0
  %7083 = vmatpush1.msra.mxu0 0.0
  %7084 = vmatprep.subr.mxu0 0.0
  %7085 = vmatpush1.msra.mxu0 0.0
  %7086 = vmatprep.subr.mxu0 0.0
  %7087 = vmatpush1.msra.mxu0 0.0
  %7088 = vmatprep.subr.mxu0 0.0
  %7089 = vmatpush1.msra.mxu0 0.0
  %7090 = vmatprep.subr.mxu0 0.0
  %7091 = vmatpush1.msra.mxu0 0.0
  %7092 = vmatprep.subr.mxu0 0.0
  %7093 = vmatpush1.msra.mxu0 0.0
  %7094 = vmatprep.subr.mxu0 0.0
  %7095 = vmatpush1.msra.mxu0 0.0
  %7096 = vmatprep.subr.mxu0 0.0
  %7097 = vmatpush1.msra.mxu0 0.0
  %7098 = vmatprep.subr.mxu0 0.0
  %7099 = vmatpush1.msra.mxu0 0.0
  %7100 = vmatprep.subr.mxu0 0.0
  %7101 = vmatpush1.msra.mxu0 0.0
  %7102 = vmatprep.mubr.f32.mxu0 0.0
  %7103 = vmatmul.mubr.f32.gmra.mrb[0].mxu0 %v6735
  %v7104 = vpop.f32.mrb[0].mxu0
  %v7105 = vadd.f32 %v7034, %v7104
  %v7106 = vpop.f32.mrb[0].mxu0
  %v7107 = vadd.f32 %v7036, %v7106
  %7108 = vdwg.mxu0
  %v7109 = vld [vmem:[%s0 + $0xb8] sm:$0xff]
  %v7110 = vld [vmem:[%s0 + $0xc0] sm:$0xff]
  %v7111 = vld [vmem:[%s0 + $0xc8] sm:$0xff]
  %v7112 = vld [vmem:[%s0 + $0xd0] sm:$0xff]
  %v7113 = vld [vmem:[%s0 + $0xd8] sm:$0xff]
  %7114 = vmatprep.subr.mxu0 %v6737
  %7115 = vmatpush1.msra.mxu0 %v6736
  %7116 = vmatprep.subr.mxu0 %v6739
  %7117 = vmatpush1.msra.mxu0 %v6738
  %7118 = vmatprep.subr.mxu0 %v6741
  %7119 = vmatpush1.msra.mxu0 %v6740
  %7120 = vmatprep.subr.mxu0 %v6743
  %7121 = vmatpush1.msra.mxu0 %v6742
  %7122 = vmatprep.subr.mxu0 %v6745
  %7123 = vmatpush1.msra.mxu0 %v6744
  %7124 = vmatprep.subr.mxu0 %v6747
  %7125 = vmatpush1.msra.mxu0 %v6746
  %7126 = vmatprep.subr.mxu0 %v6749
  %7127 = vmatpush1.msra.mxu0 %v6748
  %7128 = vmatprep.subr.mxu0 %v6751
  %7129 = vmatpush1.msra.mxu0 %v6750
  %7130 = vmatprep.subr.mxu0 %v6753
  %7131 = vmatpush1.msra.mxu0 %v6752
  %7132 = vmatprep.subr.mxu0 %v6755
  %7133 = vmatpush1.msra.mxu0 %v6754
  %7134 = vmatprep.subr.mxu0 %v6757
  %7135 = vmatpush1.msra.mxu0 %v6756
  %7136 = vmatprep.subr.mxu0 %v6759
  %7137 = vmatpush1.msra.mxu0 %v6758
  %7138 = vmatprep.subr.mxu0 %v6761
  %7139 = vmatpush1.msra.mxu0 %v6760
  %7140 = vmatprep.subr.mxu0 %v6763
  %7141 = vmatpush1.msra.mxu0 %v6762
  %7142 = vmatprep.subr.mxu0 %v6765
  %7143 = vmatpush1.msra.mxu0 %v6764
  %7144 = vmatprep.subr.mxu0 %v6767
  %7145 = vmatpush1.msra.mxu0 %v6766
  %7146 = vmatprep.subr.mxu0 %v6769
  %7147 = vmatpush1.msra.mxu0 %v6768
  %7148 = vmatprep.subr.mxu0 %v6771
  %7149 = vmatpush1.msra.mxu0 %v6770
  %7150 = vmatprep.subr.mxu0 %v6773
  %7151 = vmatpush1.msra.mxu0 %v6772
  %7152 = vmatprep.subr.mxu0 %v6775
  %7153 = vmatpush1.msra.mxu0 %v6774
  %7154 = vmatprep.subr.mxu0 %v6777
  %7155 = vmatpush1.msra.mxu0 %v6776
  %7156 = vmatprep.subr.mxu0 %v6779
  %7157 = vmatpush1.msra.mxu0 %v6778
  %7158 = vmatprep.subr.mxu0 %v6781
  %7159 = vmatpush1.msra.mxu0 %v6780
  %7160 = vmatprep.subr.mxu0 %v6783
  %7161 = vmatpush1.msra.mxu0 %v6782
  %7162 = vmatprep.subr.mxu0 %v6785
  %7163 = vmatpush1.msra.mxu0 %v6784
  %7164 = vmatprep.subr.mxu0 %v6787
  %7165 = vmatpush1.msra.mxu0 %v6786
  %7166 = vmatprep.subr.mxu0 %v6789
  %7167 = vmatpush1.msra.mxu0 %v6788
  %7168 = vmatprep.subr.mxu0 %v6791
  %7169 = vmatpush1.msra.mxu0 %v6790
  %7170 = vmatprep.subr.mxu0 %v6793
  %7171 = vmatpush1.msra.mxu0 %v6792
  %7172 = vmatprep.subr.mxu0 %v6795
  %7173 = vmatpush1.msra.mxu0 %v6794
  %7174 = vmatprep.subr.mxu0 %v6797
  %7175 = vmatpush1.msra.mxu0 %v6796
  %7176 = vmatprep.subr.mxu0 %v6799
  %7177 = vmatpush1.msra.mxu0 %v6798
  %7178 = vmatprep.mubr.f32.mxu0 %v7110
  %7179 = vmatmul.mubr.f32.gmra.mrb[0].mxu0 %v7109
  %v7180 = vpop.f32.mrb[0].mxu0
  %v7181 = vadd.f32 0.0, %v7180
  %v7182 = vpop.f32.mrb[0].mxu0
  %v7183 = vadd.f32 0.0, %v7182
  %7184 = vdwg.mxu0
  %7185 = vmatprep.subr.mxu0 %v6801
  %7186 = vmatpush1.msra.mxu0 %v6800
  %7187 = vmatprep.subr.mxu0 %v6803
  %7188 = vmatpush1.msra.mxu0 %v6802
  %7189 = vmatprep.subr.mxu0 %v6805
  %7190 = vmatpush1.msra.mxu0 %v6804
  %7191 = vmatprep.subr.mxu0 %v6807
  %7192 = vmatpush1.msra.mxu0 %v6806
  %7193 = vmatprep.subr.mxu0 %v6809
  %7194 = vmatpush1.msra.mxu0 %v6808
  %7195 = vmatprep.subr.mxu0 %v6811
  %7196 = vmatpush1.msra.mxu0 %v6810
  %7197 = vmatprep.subr.mxu0 %v6813
  %7198 = vmatpush1.msra.mxu0 %v6812
  %7199 = vmatprep.subr.mxu0 %v6815
  %7200 = vmatpush1.msra.mxu0 %v6814
  %7201 = vmatprep.subr.mxu0 %v6817
  %7202 = vmatpush1.msra.mxu0 %v6816
  %7203 = vmatprep.subr.mxu0 %v6819
  %7204 = vmatpush1.msra.mxu0 %v6818
  %7205 = vmatprep.subr.mxu0 %v6821
  %7206 = vmatpush1.msra.mxu0 %v6820
  %7207 = vmatprep.subr.mxu0 %v6823
  %7208 = vmatpush1.msra.mxu0 %v6822
  %7209 = vmatprep.subr.mxu0 %v6825
  %7210 = vmatpush1.msra.mxu0 %v6824
  %7211 = vmatprep.subr.mxu0 %v6827
  %7212 = vmatpush1.msra.mxu0 %v6826
  %7213 = vmatprep.subr.mxu0 %v6829
  %7214 = vmatpush1.msra.mxu0 %v6828
  %7215 = vmatprep.subr.mxu0 %v6831
  %7216 = vmatpush1.msra.mxu0 %v6830
  %7217 = vmatprep.subr.mxu0 %v6833
  %7218 = vmatpush1.msra.mxu0 %v6832
  %7219 = vmatprep.subr.mxu0 %v6835
  %7220 = vmatpush1.msra.mxu0 %v6834
  %7221 = vmatprep.subr.mxu0 %v6837
  %7222 = vmatpush1.msra.mxu0 %v6836
  %7223 = vmatprep.subr.mxu0 %v6839
  %7224 = vmatpush1.msra.mxu0 %v6838
  %7225 = vmatprep.subr.mxu0 %v6841
  %7226 = vmatpush1.msra.mxu0 %v6840
  %7227 = vmatprep.subr.mxu0 %v6843
  %7228 = vmatpush1.msra.mxu0 %v6842
  %7229 = vmatprep.subr.mxu0 %v6845
  %7230 = vmatpush1.msra.mxu0 %v6844
  %7231 = vmatprep.subr.mxu0 %v6847
  %7232 = vmatpush1.msra.mxu0 %v6846
  %7233 = vmatprep.subr.mxu0 %v6849
  %7234 = vmatpush1.msra.mxu0 %v6848
  %7235 = vmatprep.subr.mxu0 %v6851
  %7236 = vmatpush1.msra.mxu0 %v6850
  %7237 = vmatprep.subr.mxu0 %v6853
  %7238 = vmatpush1.msra.mxu0 %v6852
  %7239 = vmatprep.subr.mxu0 %v6855
  %7240 = vmatpush1.msra.mxu0 %v6854
  %7241 = vmatprep.subr.mxu0 %v6857
  %7242 = vmatpush1.msra.mxu0 %v6856
  %7243 = vmatprep.subr.mxu0 %v6859
  %7244 = vmatpush1.msra.mxu0 %v6858
  %7245 = vmatprep.subr.mxu0 %v6861
  %7246 = vmatpush1.msra.mxu0 %v6860
  %7247 = vmatprep.subr.mxu0 %v6863
  %7248 = vmatpush1.msra.mxu0 %v6862
  %7249 = vmatprep.mubr.f32.mxu0 %v7112
  %7250 = vmatmul.mubr.f32.gmra.mrb[0].mxu0 %v7111
  %v7251 = vpop.f32.mrb[0].mxu0
  %v7252 = vadd.f32 %v7181, %v7251
  %v7253 = vpop.f32.mrb[0].mxu0
  %v7254 = vadd.f32 %v7183, %v7253
  %7255 = vdwg.mxu0
  %7256 = vmatprep.subr.mxu0 %v6865
  %7257 = vmatpush1.msra.mxu0 %v6864
  %7258 = vmatprep.subr.mxu0 %v6867
  %7259 = vmatpush1.msra.mxu0 %v6866
  %7260 = vmatprep.subr.mxu0 %v6869
  %7261 = vmatpush1.msra.mxu0 %v6868
  %7262 = vmatprep.subr.mxu0 %v6871
  %7263 = vmatpush1.msra.mxu0 %v6870
  %7264 = vmatprep.subr.mxu0 %v6873
  %7265 = vmatpush1.msra.mxu0 %v6872
  %7266 = vmatprep.subr.mxu0 %v6875
  %7267 = vmatpush1.msra.mxu0 %v6874
  %7268 = vmatprep.subr.mxu0 %v6877
  %7269 = vmatpush1.msra.mxu0 %v6876
  %7270 = vmatprep.subr.mxu0 %v6879
  %7271 = vmatpush1.msra.mxu0 %v6878
  %7272 = vmatprep.subr.mxu0 %v6881
  %7273 = vmatpush1.msra.mxu0 %v6880
  %7274 = vmatprep.subr.mxu0 %v6883
  %7275 = vmatpush1.msra.mxu0 %v6882
  %7276 = vmatprep.subr.mxu0 %v6885
  %7277 = vmatpush1.msra.mxu0 %v6884
  %7278 = vmatprep.subr.mxu0 %v6887
  %7279 = vmatpush1.msra.mxu0 %v6886
  %7280 = vmatprep.subr.mxu0 %v6889
  %7281 = vmatpush1.msra.mxu0 %v6888
  %7282 = vmatprep.subr.mxu0 %v6891
  %7283 = vmatpush1.msra.mxu0 %v6890
  %7284 = vmatprep.subr.mxu0 %v6893
  %7285 = vmatpush1.msra.mxu0 %v6892
  %7286 = vmatprep.subr.mxu0 %v6895
  %7287 = vmatpush1.msra.mxu0 %v6894
  %7288 = vmatprep.subr.mxu0 0.0
  %7289 = vmatpush1.msra.mxu0 0.0
  %7290 = vmatprep.subr.mxu0 0.0
  %7291 = vmatpush1.msra.mxu0 0.0
  %7292 = vmatprep.subr.mxu0 0.0
  %7293 = vmatpush1.msra.mxu0 0.0
  %7294 = vmatprep.subr.mxu0 0.0
  %7295 = vmatpush1.msra.mxu0 0.0
  %7296 = vmatprep.subr.mxu0 0.0
  %7297 = vmatpush1.msra.mxu0 0.0
  %7298 = vmatprep.subr.mxu0 0.0
  %7299 = vmatpush1.msra.mxu0 0.0
  %7300 = vmatprep.subr.mxu0 0.0
  %7301 = vmatpush1.msra.mxu0 0.0
  %7302 = vmatprep.subr.mxu0 0.0
  %7303 = vmatpush1.msra.mxu0 0.0
  %7304 = vmatprep.subr.mxu0 0.0
  %7305 = vmatpush1.msra.mxu0 0.0
  %7306 = vmatprep.subr.mxu0 0.0
  %7307 = vmatpush1.msra.mxu0 0.0
  %7308 = vmatprep.subr.mxu0 0.0
  %7309 = vmatpush1.msra.mxu0 0.0
  %7310 = vmatprep.subr.mxu0 0.0
  %7311 = vmatpush1.msra.mxu0 0.0
  %7312 = vmatprep.subr.mxu0 0.0
  %7313 = vmatpush1.msra.mxu0 0.0
  %7314 = vmatprep.subr.mxu0 0.0
  %7315 = vmatpush1.msra.mxu0 0.0
  %7316 = vmatprep.subr.mxu0 0.0
  %7317 = vmatpush1.msra.mxu0 0.0
  %7318 = vmatprep.subr.mxu0 0.0
  %7319 = vmatpush1.msra.mxu0 0.0
  %7320 = vmatprep.mubr.f32.mxu0 0.0
  %7321 = vmatmul.mubr.f32.gmra.mrb[0].mxu0 %v7113
  %v7322 = vpop.f32.mrb[0].mxu0
  %v7323 = vadd.f32 %v7252, %v7322
  %v7324 = vpop.f32.mrb[0].mxu0
  %v7325 = vadd.f32 %v7254, %v7324
  %7326 = vdwg.mxu0
  %v7327 = vmax.f32 %v7105, %v7323
  %v7328 = vmax.f32 %v7107, %v7325
  %v7329 = vmax.f32 %v7327, %v7328
  %v7330 = vld [vmem:[%s2] sm:$0x1]
  %v7332 = vlaneseq
  %v7333 = vshrl.u32 %v7332, 7
  %v7334 = vsub.s32 0, %v7333
  %v7335 = vrot.slane %v7330, %v7334
  %v7337 = vadd.f32 %v7329, %v7335
  %v7338 = vmax.f32 %v7337, 0.0
  %7339 = vst [vmem:[#allocation2 + $0x58] sm:$0xff] %v7338
  %v7340 = vld [vmem:[#allocation2] sm:$0xff]
  %v7341 = vld [vmem:[#allocation2 + $0x8] sm:$0xff]
  %v7342 = vld [vmem:[#allocation2 + $0x10] sm:$0xff]
  %v7343 = vld [vmem:[#allocation2 + $0x18] sm:$0xff]
  %v7344 = vld [vmem:[#allocation2 + $0x20] sm:$0xff]
  %v7345 = vld [vmem:[%s3] sm:$0xff]
  %v7346 = vld [vmem:[%s3 + $0x8] sm:$0xff]
  %v7347 = vld [vmem:[%s3 + $0x10] sm:$0xff]
  %v7348 = vld [vmem:[%s3 + $0x18] sm:$0xff]
  %v7349 = vld [vmem:[%s3 + $0x20] sm:$0xff]
  %v7350 = vld [vmem:[%s3 + $0x28] sm:$0xff]
  %v7351 = vld [vmem:[%s3 + $0x30] sm:$0xff]
  %v7352 = vld [vmem:[%s3 + $0x38] sm:$0xff]
  %v7353 = vld [vmem:[%s3 + $0x40] sm:$0xff]
  %v7354 = vld [vmem:[%s3 + $0x48] sm:$0xff]
  %v7355 = vld [vmem:[%s3 + $0x50] sm:$0xff]
  %v7356 = vld [vmem:[%s3 + $0x58] sm:$0xff]
  %v7357 = vld [vmem:[%s3 + $0x60] sm:$0xff]
  %v7358 = vld [vmem:[%s3 + $0x68] sm:$0xff]
  %v7359 = vld [vmem:[%s3 + $0x70] sm:$0xff]
  %v7360 = vld [vmem:[%s3 + $0x78] sm:$0xff]
  %v7361 = vld [vmem:[%s3 + $0x80] sm:$0xff]
  %v7362 = vld [vmem:[%s3 + $0x88] sm:$0xff]
  %v7363 = vld [vmem:[%s3 + $0x90] sm:$0xff]
  %v7364 = vld [vmem:[%s3 + $0x98] sm:$0xff]
  %v7365 = vld [vmem:[%s3 + $0xa0] sm:$0xff]
  %v7366 = vld [vmem:[%s3 + $0xa8] sm:$0xff]
  %v7367 = vld [vmem:[%s3 + $0xb0] sm:$0xff]
  %v7368 = vld [vmem:[%s3 + $0xb8] sm:$0xff]
  %v7369 = vld [vmem:[%s3 + $0xc0] sm:$0xff]
  %v7370 = vld [vmem:[%s3 + $0xc8] sm:$0xff]
  %v7371 = vld [vmem:[%s3 + $0xd0] sm:$0xff]
  %v7372 = vld [vmem:[%s3 + $0xd8] sm:$0xff]
  %v7373 = vld [vmem:[%s3 + $0xe0] sm:$0xff]
  %v7374 = vld [vmem:[%s3 + $0xe8] sm:$0xff]
  %v7375 = vld [vmem:[%s3 + $0xf0] sm:$0xff]
  %v7376 = vld [vmem:[%s3 + $0xf8] sm:$0xff]
  %v7377 = vld [vmem:[%s3 + $0x100] sm:$0xff]
  %v7378 = vld [vmem:[%s3 + $0x108] sm:$0xff]
  %v7379 = vld [vmem:[%s3 + $0x110] sm:$0xff]
  %v7380 = vld [vmem:[%s3 + $0x118] sm:$0xff]
  %v7381 = vld [vmem:[%s3 + $0x120] sm:$0xff]
  %v7382 = vld [vmem:[%s3 + $0x128] sm:$0xff]
  %v7383 = vld [vmem:[%s3 + $0x130] sm:$0xff]
  %v7384 = vld [vmem:[%s3 + $0x138] sm:$0xff]
  %v7385 = vld [vmem:[%s3 + $0x140] sm:$0xff]
  %v7386 = vld [vmem:[%s3 + $0x148] sm:$0xff]
  %v7387 = vld [vmem:[%s3 + $0x150] sm:$0xff]
  %v7388 = vld [vmem:[%s3 + $0x158] sm:$0xff]
  %v7389 = vld [vmem:[%s3 + $0x160] sm:$0xff]
  %v7390 = vld [vmem:[%s3 + $0x168] sm:$0xff]
  %v7391 = vld [vmem:[%s3 + $0x170] sm:$0xff]
  %v7392 = vld [vmem:[%s3 + $0x178] sm:$0xff]
  %v7393 = vld [vmem:[%s3 + $0x180] sm:$0xff]
  %v7394 = vld [vmem:[%s3 + $0x188] sm:$0xff]
  %v7395 = vld [vmem:[%s3 + $0x190] sm:$0xff]
  %v7396 = vld [vmem:[%s3 + $0x198] sm:$0xff]
  %v7397 = vld [vmem:[%s3 + $0x1a0] sm:$0xff]
  %v7398 = vld [vmem:[%s3 + $0x1a8] sm:$0xff]
  %v7399 = vld [vmem:[%s3 + $0x1b0] sm:$0xff]
  %v7400 = vld [vmem:[%s3 + $0x1b8] sm:$0xff]
  %v7401 = vld [vmem:[%s3 + $0x1c0] sm:$0xff]
  %v7402 = vld [vmem:[%s3 + $0x1c8] sm:$0xff]
  %v7403 = vld [vmem:[%s3 + $0x1d0] sm:$0xff]
  %v7404 = vld [vmem:[%s3 + $0x1d8] sm:$0xff]
  %v7405 = vld [vmem:[%s3 + $0x1e0] sm:$0xff]
  %v7406 = vld [vmem:[%s3 + $0x1e8] sm:$0xff]
  %v7407 = vld [vmem:[%s3 + $0x1f0] sm:$0xff]
  %v7408 = vld [vmem:[%s3 + $0x1f8] sm:$0xff]
  %v7409 = vld [vmem:[%s3 + $0x200] sm:$0xff]
  %v7410 = vld [vmem:[%s3 + $0x208] sm:$0xff]
  %v7411 = vld [vmem:[%s3 + $0x210] sm:$0xff]
  %v7412 = vld [vmem:[%s3 + $0x218] sm:$0xff]
  %v7413 = vld [vmem:[%s3 + $0x220] sm:$0xff]
  %v7414 = vld [vmem:[%s3 + $0x228] sm:$0xff]
  %v7415 = vld [vmem:[%s3 + $0x230] sm:$0xff]
  %v7416 = vld [vmem:[%s3 + $0x238] sm:$0xff]
  %v7417 = vld [vmem:[%s3 + $0x240] sm:$0xff]
  %v7418 = vld [vmem:[%s3 + $0x248] sm:$0xff]
  %v7419 = vld [vmem:[%s3 + $0x250] sm:$0xff]
  %v7420 = vld [vmem:[%s3 + $0x258] sm:$0xff]
  %v7421 = vld [vmem:[%s3 + $0x260] sm:$0xff]
  %v7422 = vld [vmem:[%s3 + $0x268] sm:$0xff]
  %v7423 = vld [vmem:[%s3 + $0x270] sm:$0xff]
  %v7424 = vld [vmem:[%s3 + $0x278] sm:$0xff]
  %v7425 = vld [vmem:[%s3 + $0x280] sm:$0xff]
  %v7426 = vld [vmem:[%s3 + $0x288] sm:$0xff]
  %v7427 = vld [vmem:[%s3 + $0x290] sm:$0xff]
  %v7428 = vld [vmem:[%s3 + $0x298] sm:$0xff]
  %v7429 = vld [vmem:[%s3 + $0x2a0] sm:$0xff]
  %v7430 = vld [vmem:[%s3 + $0x2a8] sm:$0xff]
  %v7431 = vld [vmem:[%s3 + $0x2b0] sm:$0xff]
  %v7432 = vld [vmem:[%s3 + $0x2b8] sm:$0xff]
  %v7433 = vld [vmem:[%s3 + $0x2c0] sm:$0xff]
  %v7434 = vld [vmem:[%s3 + $0x2c8] sm:$0xff]
  %v7435 = vld [vmem:[%s3 + $0x2d0] sm:$0xff]
  %v7436 = vld [vmem:[%s3 + $0x2d8] sm:$0xff]
  %v7437 = vld [vmem:[%s3 + $0x2e0] sm:$0xff]
  %v7438 = vld [vmem:[%s3 + $0x2e8] sm:$0xff]
  %v7439 = vld [vmem:[%s3 + $0x2f0] sm:$0xff]
  %v7440 = vld [vmem:[%s3 + $0x2f8] sm:$0xff]
  %v7441 = vld [vmem:[%s3 + $0x300] sm:$0xff]
  %v7442 = vld [vmem:[%s3 + $0x308] sm:$0xff]
  %v7443 = vld [vmem:[%s3 + $0x310] sm:$0xff]
  %v7444 = vld [vmem:[%s3 + $0x318] sm:$0xff]
  %v7445 = vld [vmem:[%s3 + $0x320] sm:$0xff]
  %v7446 = vld [vmem:[%s3 + $0x328] sm:$0xff]
  %v7447 = vld [vmem:[%s3 + $0x330] sm:$0xff]
  %v7448 = vld [vmem:[%s3 + $0x338] sm:$0xff]
  %v7449 = vld [vmem:[%s3 + $0x340] sm:$0xff]
  %v7450 = vld [vmem:[%s3 + $0x348] sm:$0xff]
  %v7451 = vld [vmem:[%s3 + $0x350] sm:$0xff]
  %v7452 = vld [vmem:[%s3 + $0x358] sm:$0xff]
  %v7453 = vld [vmem:[%s3 + $0x360] sm:$0xff]
  %v7454 = vld [vmem:[%s3 + $0x368] sm:$0xff]
  %v7455 = vld [vmem:[%s3 + $0x370] sm:$0xff]
  %v7456 = vld [vmem:[%s3 + $0x378] sm:$0xff]
  %v7457 = vld [vmem:[%s3 + $0x380] sm:$0xff]
  %v7458 = vld [vmem:[%s3 + $0x388] sm:$0xff]
  %v7459 = vld [vmem:[%s3 + $0x390] sm:$0xff]
  %v7460 = vld [vmem:[%s3 + $0x398] sm:$0xff]
  %v7461 = vld [vmem:[%s3 + $0x3a0] sm:$0xff]
  %v7462 = vld [vmem:[%s3 + $0x3a8] sm:$0xff]
  %v7463 = vld [vmem:[%s3 + $0x3b0] sm:$0xff]
  %v7464 = vld [vmem:[%s3 + $0x3b8] sm:$0xff]
  %v7465 = vld [vmem:[%s3 + $0x3c0] sm:$0xff]
  %v7466 = vld [vmem:[%s3 + $0x3c8] sm:$0xff]
  %v7467 = vld [vmem:[%s3 + $0x3d0] sm:$0xff]
  %v7468 = vld [vmem:[%s3 + $0x3d8] sm:$0xff]
  %v7469 = vld [vmem:[%s3 + $0x3e0] sm:$0xff]
  %v7470 = vld [vmem:[%s3 + $0x3e8] sm:$0xff]
  %v7471 = vld [vmem:[%s3 + $0x3f0] sm:$0xff]
  %v7472 = vld [vmem:[%s3 + $0x3f8] sm:$0xff]
  %v7473 = vld [vmem:[%s3 + $0x400] sm:$0xff]
  %v7474 = vld [vmem:[%s3 + $0x408] sm:$0xff]
  %v7475 = vld [vmem:[%s3 + $0x410] sm:$0xff]
  %v7476 = vld [vmem:[%s3 + $0x418] sm:$0xff]
  %v7477 = vld [vmem:[%s3 + $0x420] sm:$0xff]
  %v7478 = vld [vmem:[%s3 + $0x428] sm:$0xff]
  %v7479 = vld [vmem:[%s3 + $0x430] sm:$0xff]
  %v7480 = vld [vmem:[%s3 + $0x438] sm:$0xff]
  %v7481 = vld [vmem:[%s3 + $0x440] sm:$0xff]
  %v7482 = vld [vmem:[%s3 + $0x448] sm:$0xff]
  %v7483 = vld [vmem:[%s3 + $0x450] sm:$0xff]
  %v7484 = vld [vmem:[%s3 + $0x458] sm:$0xff]
  %v7485 = vld [vmem:[%s3 + $0x460] sm:$0xff]
  %v7486 = vld [vmem:[%s3 + $0x468] sm:$0xff]
  %v7487 = vld [vmem:[%s3 + $0x470] sm:$0xff]
  %v7488 = vld [vmem:[%s3 + $0x478] sm:$0xff]
  %v7489 = vld [vmem:[%s3 + $0x480] sm:$0xff]
  %v7490 = vld [vmem:[%s3 + $0x488] sm:$0xff]
  %v7491 = vld [vmem:[%s3 + $0x490] sm:$0xff]
  %v7492 = vld [vmem:[%s3 + $0x498] sm:$0xff]
  %v7493 = vld [vmem:[%s3 + $0x4a0] sm:$0xff]
  %v7494 = vld [vmem:[%s3 + $0x4a8] sm:$0xff]
  %v7495 = vld [vmem:[%s3 + $0x4b0] sm:$0xff]
  %v7496 = vld [vmem:[%s3 + $0x4b8] sm:$0xff]
  %v7497 = vld [vmem:[%s3 + $0x4c0] sm:$0xff]
  %v7498 = vld [vmem:[%s3 + $0x4c8] sm:$0xff]
  %v7499 = vld [vmem:[%s3 + $0x4d0] sm:$0xff]
  %v7500 = vld [vmem:[%s3 + $0x4d8] sm:$0xff]
  %v7501 = vld [vmem:[%s3 + $0x4e0] sm:$0xff]
  %v7502 = vld [vmem:[%s3 + $0x4e8] sm:$0xff]
  %v7503 = vld [vmem:[%s3 + $0x4f0] sm:$0xff]
  %v7504 = vld [vmem:[%s3 + $0x4f8] sm:$0xff]
  %7505 = vmatprep.subr.mxu0 %v7346
  %7506 = vmatpush1.msra.mxu0 %v7345
  %7507 = vmatprep.subr.mxu0 %v7348
  %7508 = vmatpush1.msra.mxu0 %v7347
  %7509 = vmatprep.subr.mxu0 %v7350
  %7510 = vmatpush1.msra.mxu0 %v7349
  %7511 = vmatprep.subr.mxu0 %v7352
  %7512 = vmatpush1.msra.mxu0 %v7351
  %7513 = vmatprep.subr.mxu0 %v7354
  %7514 = vmatpush1.msra.mxu0 %v7353
  %7515 = vmatprep.subr.mxu0 %v7356
  %7516 = vmatpush1.msra.mxu0 %v7355
  %7517 = vmatprep.subr.mxu0 %v7358
  %7518 = vmatpush1.msra.mxu0 %v7357
  %7519 = vmatprep.subr.mxu0 %v7360
  %7520 = vmatpush1.msra.mxu0 %v7359
  %7521 = vmatprep.subr.mxu0 %v7362
  %7522 = vmatpush1.msra.mxu0 %v7361
  %7523 = vmatprep.subr.mxu0 %v7364
  %7524 = vmatpush1.msra.mxu0 %v7363
  %7525 = vmatprep.subr.mxu0 %v7366
  %7526 = vmatpush1.msra.mxu0 %v7365
  %7527 = vmatprep.subr.mxu0 %v7368
  %7528 = vmatpush1.msra.mxu0 %v7367
  %7529 = vmatprep.subr.mxu0 %v7370
  %7530 = vmatpush1.msra.mxu0 %v7369
  %7531 = vmatprep.subr.mxu0 %v7372
  %7532 = vmatpush1.msra.mxu0 %v7371
  %7533 = vmatprep.subr.mxu0 %v7374
  %7534 = vmatpush1.msra.mxu0 %v7373
  %7535 = vmatprep.subr.mxu0 %v7376
  %7536 = vmatpush1.msra.mxu0 %v7375
  %7537 = vmatprep.subr.mxu0 %v7378
  %7538 = vmatpush1.msra.mxu0 %v7377
  %7539 = vmatprep.subr.mxu0 %v7380
  %7540 = vmatpush1.msra.mxu0 %v7379
  %7541 = vmatprep.subr.mxu0 %v7382
  %7542 = vmatpush1.msra.mxu0 %v7381
  %7543 = vmatprep.subr.mxu0 %v7384
  %7544 = vmatpush1.msra.mxu0 %v7383
  %7545 = vmatprep.subr.mxu0 %v7386
  %7546 = vmatpush1.msra.mxu0 %v7385
  %7547 = vmatprep.subr.mxu0 %v7388
  %7548 = vmatpush1.msra.mxu0 %v7387
  %7549 = vmatprep.subr.mxu0 %v7390
  %7550 = vmatpush1.msra.mxu0 %v7389
  %7551 = vmatprep.subr.mxu0 %v7392
  %7552 = vmatpush1.msra.mxu0 %v7391
  %7553 = vmatprep.subr.mxu0 %v7394
  %7554 = vmatpush1.msra.mxu0 %v7393
  %7555 = vmatprep.subr.mxu0 %v7396
  %7556 = vmatpush1.msra.mxu0 %v7395
  %7557 = vmatprep.subr.mxu0 %v7398
  %7558 = vmatpush1.msra.mxu0 %v7397
  %7559 = vmatprep.subr.mxu0 %v7400
  %7560 = vmatpush1.msra.mxu0 %v7399
  %7561 = vmatprep.subr.mxu0 %v7402
  %7562 = vmatpush1.msra.mxu0 %v7401
  %7563 = vmatprep.subr.mxu0 %v7404
  %7564 = vmatpush1.msra.mxu0 %v7403
  %7565 = vmatprep.subr.mxu0 %v7406
  %7566 = vmatpush1.msra.mxu0 %v7405
  %7567 = vmatprep.subr.mxu0 %v7408
  %7568 = vmatpush1.msra.mxu0 %v7407
  %7569 = vmatprep.mubr.f32.mxu0 %v7341
  %7570 = vmatmul.mubr.f32.gmra.mrb[0].mxu0 %v7340
  %v7571 = vpop.f32.mrb[0].mxu0
  %v7572 = vadd.f32 0.0, %v7571
  %v7573 = vpop.f32.mrb[0].mxu0
  %v7574 = vadd.f32 0.0, %v7573
  %7575 = vdwg.mxu0
  %7576 = vmatprep.subr.mxu0 %v7410
  %7577 = vmatpush1.msra.mxu0 %v7409
  %7578 = vmatprep.subr.mxu0 %v7412
  %7579 = vmatpush1.msra.mxu0 %v7411
  %7580 = vmatprep.subr.mxu0 %v7414
  %7581 = vmatpush1.msra.mxu0 %v7413
  %7582 = vmatprep.subr.mxu0 %v7416
  %7583 = vmatpush1.msra.mxu0 %v7415
  %7584 = vmatprep.subr.mxu0 %v7418
  %7585 = vmatpush1.msra.mxu0 %v7417
  %7586 = vmatprep.subr.mxu0 %v7420
  %7587 = vmatpush1.msra.mxu0 %v7419
  %7588 = vmatprep.subr.mxu0 %v7422
  %7589 = vmatpush1.msra.mxu0 %v7421
  %7590 = vmatprep.subr.mxu0 %v7424
  %7591 = vmatpush1.msra.mxu0 %v7423
  %7592 = vmatprep.subr.mxu0 %v7426
  %7593 = vmatpush1.msra.mxu0 %v7425
  %7594 = vmatprep.subr.mxu0 %v7428
  %7595 = vmatpush1.msra.mxu0 %v7427
  %7596 = vmatprep.subr.mxu0 %v7430
  %7597 = vmatpush1.msra.mxu0 %v7429
  %7598 = vmatprep.subr.mxu0 %v7432
  %7599 = vmatpush1.msra.mxu0 %v7431
  %7600 = vmatprep.subr.mxu0 %v7434
  %7601 = vmatpush1.msra.mxu0 %v7433
  %7602 = vmatprep.subr.mxu0 %v7436
  %7603 = vmatpush1.msra.mxu0 %v7435
  %7604 = vmatprep.subr.mxu0 %v7438
  %7605 = vmatpush1.msra.mxu0 %v7437
  %7606 = vmatprep.subr.mxu0 %v7440
  %7607 = vmatpush1.msra.mxu0 %v7439
  %7608 = vmatprep.subr.mxu0 %v7442
  %7609 = vmatpush1.msra.mxu0 %v7441
  %7610 = vmatprep.subr.mxu0 %v7444
  %7611 = vmatpush1.msra.mxu0 %v7443
  %7612 = vmatprep.subr.mxu0 %v7446
  %7613 = vmatpush1.msra.mxu0 %v7445
  %7614 = vmatprep.subr.mxu0 %v7448
  %7615 = vmatpush1.msra.mxu0 %v7447
  %7616 = vmatprep.subr.mxu0 %v7450
  %7617 = vmatpush1.msra.mxu0 %v7449
  %7618 = vmatprep.subr.mxu0 %v7452
  %7619 = vmatpush1.msra.mxu0 %v7451
  %7620 = vmatprep.subr.mxu0 %v7454
  %7621 = vmatpush1.msra.mxu0 %v7453
  %7622 = vmatprep.subr.mxu0 %v7456
  %7623 = vmatpush1.msra.mxu0 %v7455
  %7624 = vmatprep.subr.mxu0 %v7458
  %7625 = vmatpush1.msra.mxu0 %v7457
  %7626 = vmatprep.subr.mxu0 %v7460
  %7627 = vmatpush1.msra.mxu0 %v7459
  %7628 = vmatprep.subr.mxu0 %v7462
  %7629 = vmatpush1.msra.mxu0 %v7461
  %7630 = vmatprep.subr.mxu0 %v7464
  %7631 = vmatpush1.msra.mxu0 %v7463
  %7632 = vmatprep.subr.mxu0 %v7466
  %7633 = vmatpush1.msra.mxu0 %v7465
  %7634 = vmatprep.subr.mxu0 %v7468
  %7635 = vmatpush1.msra.mxu0 %v7467
  %7636 = vmatprep.subr.mxu0 %v7470
  %7637 = vmatpush1.msra.mxu0 %v7469
  %7638 = vmatprep.subr.mxu0 %v7472
  %7639 = vmatpush1.msra.mxu0 %v7471
  %7640 = vmatprep.mubr.f32.mxu0 %v7343
  %7641 = vmatmul.mubr.f32.gmra.mrb[0].mxu0 %v7342
  %v7642 = vpop.f32.mrb[0].mxu0
  %v7643 = vadd.f32 %v7572, %v7642
  %v7644 = vpop.f32.mrb[0].mxu0
  %v7645 = vadd.f32 %v7574, %v7644
  %7646 = vdwg.mxu0
  %7647 = vmatprep.subr.mxu0 %v7474
  %7648 = vmatpush1.msra.mxu0 %v7473
  %7649 = vmatprep.subr.mxu0 %v7476
  %7650 = vmatpush1.msra.mxu0 %v7475
  %7651 = vmatprep.subr.mxu0 %v7478
  %7652 = vmatpush1.msra.mxu0 %v7477
  %7653 = vmatprep.subr.mxu0 %v7480
  %7654 = vmatpush1.msra.mxu0 %v7479
  %7655 = vmatprep.subr.mxu0 %v7482
  %7656 = vmatpush1.msra.mxu0 %v7481
  %7657 = vmatprep.subr.mxu0 %v7484
  %7658 = vmatpush1.msra.mxu0 %v7483
  %7659 = vmatprep.subr.mxu0 %v7486
  %7660 = vmatpush1.msra.mxu0 %v7485
  %7661 = vmatprep.subr.mxu0 %v7488
  %7662 = vmatpush1.msra.mxu0 %v7487
  %7663 = vmatprep.subr.mxu0 %v7490
  %7664 = vmatpush1.msra.mxu0 %v7489
  %7665 = vmatprep.subr.mxu0 %v7492
  %7666 = vmatpush1.msra.mxu0 %v7491
  %7667 = vmatprep.subr.mxu0 %v7494
  %7668 = vmatpush1.msra.mxu0 %v7493
  %7669 = vmatprep.subr.mxu0 %v7496
  %7670 = vmatpush1.msra.mxu0 %v7495
  %7671 = vmatprep.subr.mxu0 %v7498
  %7672 = vmatpush1.msra.mxu0 %v7497
  %7673 = vmatprep.subr.mxu0 %v7500
  %7674 = vmatpush1.msra.mxu0 %v7499
  %7675 = vmatprep.subr.mxu0 %v7502
  %7676 = vmatpush1.msra.mxu0 %v7501
  %7677 = vmatprep.subr.mxu0 %v7504
  %7678 = vmatpush1.msra.mxu0 %v7503
  %7679 = vmatprep.subr.mxu0 0.0
  %7680 = vmatpush1.msra.mxu0 0.0
  %7681 = vmatprep.subr.mxu0 0.0
  %7682 = vmatpush1.msra.mxu0 0.0
  %7683 = vmatprep.subr.mxu0 0.0
  %7684 = vmatpush1.msra.mxu0 0.0
  %7685 = vmatprep.subr.mxu0 0.0
  %7686 = vmatpush1.msra.mxu0 0.0
  %7687 = vmatprep.subr.mxu0 0.0
  %7688 = vmatpush1.msra.mxu0 0.0
  %7689 = vmatprep.subr.mxu0 0.0
  %7690 = vmatpush1.msra.mxu0 0.0
  %7691 = vmatprep.subr.mxu0 0.0
  %7692 = vmatpush1.msra.mxu0 0.0
  %7693 = vmatprep.subr.mxu0 0.0
  %7694 = vmatpush1.msra.mxu0 0.0
  %7695 = vmatprep.subr.mxu0 0.0
  %7696 = vmatpush1.msra.mxu0 0.0
  %7697 = vmatprep.subr.mxu0 0.0
  %7698 = vmatpush1.msra.mxu0 0.0
  %7699 = vmatprep.subr.mxu0 0.0
  %7700 = vmatpush1.msra.mxu0 0.0
  %7701 = vmatprep.subr.mxu0 0.0
  %7702 = vmatpush1.msra.mxu0 0.0
  %7703 = vmatprep.subr.mxu0 0.0
  %7704 = vmatpush1.msra.mxu0 0.0
  %7705 = vmatprep.subr.mxu0 0.0
  %7706 = vmatpush1.msra.mxu0 0.0
  %7707 = vmatprep.subr.mxu0 0.0
  %7708 = vmatpush1.msra.mxu0 0.0
  %7709 = vmatprep.subr.mxu0 0.0
  %7710 = vmatpush1.msra.mxu0 0.0
  %7711 = vmatprep.mubr.f32.mxu0 0.0
  %7712 = vmatmul.mubr.f32.gmra.mrb[0].mxu0 %v7344
  %v7713 = vpop.f32.mrb[0].mxu0
  %v7714 = vadd.f32 %v7643, %v7713
  %v7715 = vpop.f32.mrb[0].mxu0
  %v7716 = vadd.f32 %v7645, %v7715
  %7717 = vdwg.mxu0
  %v7718 = vld [vmem:[#allocation2 + $0x8] sm:$0xff]
  %v7719 = vld [vmem:[#allocation2 + $0x10] sm:$0xff]
  %v7720 = vld [vmem:[#allocation2 + $0x18] sm:$0xff]
  %v7721 = vld [vmem:[#allocation2 + $0x20] sm:$0xff]
  %v7722 = vld [vmem:[#allocation2 + $0x28] sm:$0xff]
  %7723 = vmatprep.subr.mxu0 %v7346
  %7724 = vmatpush1.msra.mxu0 %v7345
  %7725 = vmatprep.subr.mxu0 %v7348
  %7726 = vmatpush1.msra.mxu0 %v7347
  %7727 = vmatprep.subr.mxu0 %v7350
  %7728 = vmatpush1.msra.mxu0 %v7349
  %7729 = vmatprep.subr.mxu0 %v7352
  %7730 = vmatpush1.msra.mxu0 %v7351
  %7731 = vmatprep.subr.mxu0 %v7354
  %7732 = vmatpush1.msra.mxu0 %v7353
  %7733 = vmatprep.subr.mxu0 %v7356
  %7734 = vmatpush1.msra.mxu0 %v7355
  %7735 = vmatprep.subr.mxu0 %v7358
  %7736 = vmatpush1.msra.mxu0 %v7357
  %7737 = vmatprep.subr.mxu0 %v7360
  %7738 = vmatpush1.msra.mxu0 %v7359
  %7739 = vmatprep.subr.mxu0 %v7362
  %7740 = vmatpush1.msra.mxu0 %v7361
  %7741 = vmatprep.subr.mxu0 %v7364
  %7742 = vmatpush1.msra.mxu0 %v7363
  %7743 = vmatprep.subr.mxu0 %v7366
  %7744 = vmatpush1.msra.mxu0 %v7365
  %7745 = vmatprep.subr.mxu0 %v7368
  %7746 = vmatpush1.msra.mxu0 %v7367
  %7747 = vmatprep.subr.mxu0 %v7370
  %7748 = vmatpush1.msra.mxu0 %v7369
  %7749 = vmatprep.subr.mxu0 %v7372
  %7750 = vmatpush1.msra.mxu0 %v7371
  %7751 = vmatprep.subr.mxu0 %v7374
  %7752 = vmatpush1.msra.mxu0 %v7373
  %7753 = vmatprep.subr.mxu0 %v7376
  %7754 = vmatpush1.msra.mxu0 %v7375
  %7755 = vmatprep.subr.mxu0 %v7378
  %7756 = vmatpush1.msra.mxu0 %v7377
  %7757 = vmatprep.subr.mxu0 %v7380
  %7758 = vmatpush1.msra.mxu0 %v7379
  %7759 = vmatprep.subr.mxu0 %v7382
  %7760 = vmatpush1.msra.mxu0 %v7381
  %7761 = vmatprep.subr.mxu0 %v7384
  %7762 = vmatpush1.msra.mxu0 %v7383
  %7763 = vmatprep.subr.mxu0 %v7386
  %7764 = vmatpush1.msra.mxu0 %v7385
  %7765 = vmatprep.subr.mxu0 %v7388
  %7766 = vmatpush1.msra.mxu0 %v7387
  %7767 = vmatprep.subr.mxu0 %v7390
  %7768 = vmatpush1.msra.mxu0 %v7389
  %7769 = vmatprep.subr.mxu0 %v7392
  %7770 = vmatpush1.msra.mxu0 %v7391
  %7771 = vmatprep.subr.mxu0 %v7394
  %7772 = vmatpush1.msra.mxu0 %v7393
  %7773 = vmatprep.subr.mxu0 %v7396
  %7774 = vmatpush1.msra.mxu0 %v7395
  %7775 = vmatprep.subr.mxu0 %v7398
  %7776 = vmatpush1.msra.mxu0 %v7397
  %7777 = vmatprep.subr.mxu0 %v7400
  %7778 = vmatpush1.msra.mxu0 %v7399
  %7779 = vmatprep.subr.mxu0 %v7402
  %7780 = vmatpush1.msra.mxu0 %v7401
  %7781 = vmatprep.subr.mxu0 %v7404
  %7782 = vmatpush1.msra.mxu0 %v7403
  %7783 = vmatprep.subr.mxu0 %v7406
  %7784 = vmatpush1.msra.mxu0 %v7405
  %7785 = vmatprep.subr.mxu0 %v7408
  %7786 = vmatpush1.msra.mxu0 %v7407
  %7787 = vmatprep.mubr.f32.mxu0 %v7719
  %7788 = vmatmul.mubr.f32.gmra.mrb[0].mxu0 %v7718
  %v7789 = vpop.f32.mrb[0].mxu0
  %v7790 = vadd.f32 0.0, %v7789
  %v7791 = vpop.f32.mrb[0].mxu0
  %v7792 = vadd.f32 0.0, %v7791
  %7793 = vdwg.mxu0
  %7794 = vmatprep.subr.mxu0 %v7410
  %7795 = vmatpush1.msra.mxu0 %v7409
  %7796 = vmatprep.subr.mxu0 %v7412
  %7797 = vmatpush1.msra.mxu0 %v7411
  %7798 = vmatprep.subr.mxu0 %v7414
  %7799 = vmatpush1.msra.mxu0 %v7413
  %7800 = vmatprep.subr.mxu0 %v7416
  %7801 = vmatpush1.msra.mxu0 %v7415
  %7802 = vmatprep.subr.mxu0 %v7418
  %7803 = vmatpush1.msra.mxu0 %v7417
  %7804 = vmatprep.subr.mxu0 %v7420
  %7805 = vmatpush1.msra.mxu0 %v7419
  %7806 = vmatprep.subr.mxu0 %v7422
  %7807 = vmatpush1.msra.mxu0 %v7421
  %7808 = vmatprep.subr.mxu0 %v7424
  %7809 = vmatpush1.msra.mxu0 %v7423
  %7810 = vmatprep.subr.mxu0 %v7426
  %7811 = vmatpush1.msra.mxu0 %v7425
  %7812 = vmatprep.subr.mxu0 %v7428
  %7813 = vmatpush1.msra.mxu0 %v7427
  %7814 = vmatprep.subr.mxu0 %v7430
  %7815 = vmatpush1.msra.mxu0 %v7429
  %7816 = vmatprep.subr.mxu0 %v7432
  %7817 = vmatpush1.msra.mxu0 %v7431
  %7818 = vmatprep.subr.mxu0 %v7434
  %7819 = vmatpush1.msra.mxu0 %v7433
  %7820 = vmatprep.subr.mxu0 %v7436
  %7821 = vmatpush1.msra.mxu0 %v7435
  %7822 = vmatprep.subr.mxu0 %v7438
  %7823 = vmatpush1.msra.mxu0 %v7437
  %7824 = vmatprep.subr.mxu0 %v7440
  %7825 = vmatpush1.msra.mxu0 %v7439
  %7826 = vmatprep.subr.mxu0 %v7442
  %7827 = vmatpush1.msra.mxu0 %v7441
  %7828 = vmatprep.subr.mxu0 %v7444
  %7829 = vmatpush1.msra.mxu0 %v7443
  %7830 = vmatprep.subr.mxu0 %v7446
  %7831 = vmatpush1.msra.mxu0 %v7445
  %7832 = vmatprep.subr.mxu0 %v7448
  %7833 = vmatpush1.msra.mxu0 %v7447
  %7834 = vmatprep.subr.mxu0 %v7450
  %7835 = vmatpush1.msra.mxu0 %v7449
  %7836 = vmatprep.subr.mxu0 %v7452
  %7837 = vmatpush1.msra.mxu0 %v7451
  %7838 = vmatprep.subr.mxu0 %v7454
  %7839 = vmatpush1.msra.mxu0 %v7453
  %7840 = vmatprep.subr.mxu0 %v7456
  %7841 = vmatpush1.msra.mxu0 %v7455
  %7842 = vmatprep.subr.mxu0 %v7458
  %7843 = vmatpush1.msra.mxu0 %v7457
  %7844 = vmatprep.subr.mxu0 %v7460
  %7845 = vmatpush1.msra.mxu0 %v7459
  %7846 = vmatprep.subr.mxu0 %v7462
  %7847 = vmatpush1.msra.mxu0 %v7461
  %7848 = vmatprep.subr.mxu0 %v7464
  %7849 = vmatpush1.msra.mxu0 %v7463
  %7850 = vmatprep.subr.mxu0 %v7466
  %7851 = vmatpush1.msra.mxu0 %v7465
  %7852 = vmatprep.subr.mxu0 %v7468
  %7853 = vmatpush1.msra.mxu0 %v7467
  %7854 = vmatprep.subr.mxu0 %v7470
  %7855 = vmatpush1.msra.mxu0 %v7469
  %7856 = vmatprep.subr.mxu0 %v7472
  %7857 = vmatpush1.msra.mxu0 %v7471
  %7858 = vmatprep.mubr.f32.mxu0 %v7721
  %7859 = vmatmul.mubr.f32.gmra.mrb[0].mxu0 %v7720
  %v7860 = vpop.f32.mrb[0].mxu0
  %v7861 = vadd.f32 %v7790, %v7860
  %v7862 = vpop.f32.mrb[0].mxu0
  %v7863 = vadd.f32 %v7792, %v7862
  %7864 = vdwg.mxu0
  %7865 = vmatprep.subr.mxu0 %v7474
  %7866 = vmatpush1.msra.mxu0 %v7473
  %7867 = vmatprep.subr.mxu0 %v7476
  %7868 = vmatpush1.msra.mxu0 %v7475
  %7869 = vmatprep.subr.mxu0 %v7478
  %7870 = vmatpush1.msra.mxu0 %v7477
  %7871 = vmatprep.subr.mxu0 %v7480
  %7872 = vmatpush1.msra.mxu0 %v7479
  %7873 = vmatprep.subr.mxu0 %v7482
  %7874 = vmatpush1.msra.mxu0 %v7481
  %7875 = vmatprep.subr.mxu0 %v7484
  %7876 = vmatpush1.msra.mxu0 %v7483
  %7877 = vmatprep.subr.mxu0 %v7486
  %7878 = vmatpush1.msra.mxu0 %v7485
  %7879 = vmatprep.subr.mxu0 %v7488
  %7880 = vmatpush1.msra.mxu0 %v7487
  %7881 = vmatprep.subr.mxu0 %v7490
  %7882 = vmatpush1.msra.mxu0 %v7489
  %7883 = vmatprep.subr.mxu0 %v7492
  %7884 = vmatpush1.msra.mxu0 %v7491
  %7885 = vmatprep.subr.mxu0 %v7494
  %7886 = vmatpush1.msra.mxu0 %v7493
  %7887 = vmatprep.subr.mxu0 %v7496
  %7888 = vmatpush1.msra.mxu0 %v7495
  %7889 = vmatprep.subr.mxu0 %v7498
  %7890 = vmatpush1.msra.mxu0 %v7497
  %7891 = vmatprep.subr.mxu0 %v7500
  %7892 = vmatpush1.msra.mxu0 %v7499
  %7893 = vmatprep.subr.mxu0 %v7502
  %7894 = vmatpush1.msra.mxu0 %v7501
  %7895 = vmatprep.subr.mxu0 %v7504
  %7896 = vmatpush1.msra.mxu0 %v7503
  %7897 = vmatprep.subr.mxu0 0.0
  %7898 = vmatpush1.msra.mxu0 0.0
  %7899 = vmatprep.subr.mxu0 0.0
  %7900 = vmatpush1.msra.mxu0 0.0
  %7901 = vmatprep.subr.mxu0 0.0
  %7902 = vmatpush1.msra.mxu0 0.0
  %7903 = vmatprep.subr.mxu0 0.0
  %7904 = vmatpush1.msra.mxu0 0.0
  %7905 = vmatprep.subr.mxu0 0.0
  %7906 = vmatpush1.msra.mxu0 0.0
  %7907 = vmatprep.subr.mxu0 0.0
  %7908 = vmatpush1.msra.mxu0 0.0
  %7909 = vmatprep.subr.mxu0 0.0
  %7910 = vmatpush1.msra.mxu0 0.0
  %7911 = vmatprep.subr.mxu0 0.0
  %7912 = vmatpush1.msra.mxu0 0.0
  %7913 = vmatprep.subr.mxu0 0.0
  %7914 = vmatpush1.msra.mxu0 0.0
  %7915 = vmatprep.subr.mxu0 0.0
  %7916 = vmatpush1.msra.mxu0 0.0
  %7917 = vmatprep.subr.mxu0 0.0
  %7918 = vmatpush1.msra.mxu0 0.0
  %7919 = vmatprep.subr.mxu0 0.0
  %7920 = vmatpush1.msra.mxu0 0.0
  %7921 = vmatprep.subr.mxu0 0.0
  %7922 = vmatpush1.msra.mxu0 0.0
  %7923 = vmatprep.subr.mxu0 0.0
  %7924 = vmatpush1.msra.mxu0 0.0
  %7925 = vmatprep.subr.mxu0 0.0
  %7926 = vmatpush1.msra.mxu0 0.0
  %7927 = vmatprep.subr.mxu0 0.0
  %7928 = vmatpush1.msra.mxu0 0.0
  %7929 = vmatprep.mubr.f32.mxu0 0.0
  %7930 = vmatmul.mubr.f32.gmra.mrb[0].mxu0 %v7722
  %v7931 = vpop.f32.mrb[0].mxu0
  %v7932 = vadd.f32 %v7861, %v7931
  %v7933 = vpop.f32.mrb[0].mxu0
  %v7934 = vadd.f32 %v7863, %v7933
  %7935 = vdwg.mxu0
  %v7936 = vmax.f32 %v7714, %v7932
  %v7937 = vmax.f32 %v7716, %v7934
  %v7938 = vmax.f32 %v7936, %v7937
  %v7939 = vld [vmem:[%s4] sm:$0x1]
  %v7941 = vlaneseq
  %v7942 = vshrl.u32 %v7941, 7
  %v7943 = vsub.s32 0, %v7942
  %v7944 = vrot.slane %v7939, %v7943
  %v7946 = vadd.f32 %v7938, %v7944
  %v7947 = vmax.f32 %v7946, 0.0
  %7948 = vst [vmem:[#allocation3] sm:$0xff] %v7947
  %v7949 = vld [vmem:[#allocation2 + $0x10] sm:$0xff]
  %v7950 = vld [vmem:[#allocation2 + $0x18] sm:$0xff]
  %v7951 = vld [vmem:[#allocation2 + $0x20] sm:$0xff]
  %v7952 = vld [vmem:[#allocation2 + $0x28] sm:$0xff]
  %v7953 = vld [vmem:[#allocation2 + $0x30] sm:$0xff]
  %v7954 = vld [vmem:[%s3] sm:$0xff]
  %v7955 = vld [vmem:[%s3 + $0x8] sm:$0xff]
  %v7956 = vld [vmem:[%s3 + $0x10] sm:$0xff]
  %v7957 = vld [vmem:[%s3 + $0x18] sm:$0xff]
  %v7958 = vld [vmem:[%s3 + $0x20] sm:$0xff]
  %v7959 = vld [vmem:[%s3 + $0x28] sm:$0xff]
  %v7960 = vld [vmem:[%s3 + $0x30] sm:$0xff]
  %v7961 = vld [vmem:[%s3 + $0x38] sm:$0xff]
  %v7962 = vld [vmem:[%s3 + $0x40] sm:$0xff]
  %v7963 = vld [vmem:[%s3 + $0x48] sm:$0xff]
  %v7964 = vld [vmem:[%s3 + $0x50] sm:$0xff]
  %v7965 = vld [vmem:[%s3 + $0x58] sm:$0xff]
  %v7966 = vld [vmem:[%s3 + $0x60] sm:$0xff]
  %v7967 = vld [vmem:[%s3 + $0x68] sm:$0xff]
  %v7968 = vld [vmem:[%s3 + $0x70] sm:$0xff]
  %v7969 = vld [vmem:[%s3 + $0x78] sm:$0xff]
  %v7970 = vld [vmem:[%s3 + $0x80] sm:$0xff]
  %v7971 = vld [vmem:[%s3 + $0x88] sm:$0xff]
  %v7972 = vld [vmem:[%s3 + $0x90] sm:$0xff]
  %v7973 = vld [vmem:[%s3 + $0x98] sm:$0xff]
  %v7974 = vld [vmem:[%s3 + $0xa0] sm:$0xff]
  %v7975 = vld [vmem:[%s3 + $0xa8] sm:$0xff]
  %v7976 = vld [vmem:[%s3 + $0xb0] sm:$0xff]
  %v7977 = vld [vmem:[%s3 + $0xb8] sm:$0xff]
  %v7978 = vld [vmem:[%s3 + $0xc0] sm:$0xff]
  %v7979 = vld [vmem:[%s3 + $0xc8] sm:$0xff]
  %v7980 = vld [vmem:[%s3 + $0xd0] sm:$0xff]
  %v7981 = vld [vmem:[%s3 + $0xd8] sm:$0xff]
  %v7982 = vld [vmem:[%s3 + $0xe0] sm:$0xff]
  %v7983 = vld [vmem:[%s3 + $0xe8] sm:$0xff]
  %v7984 = vld [vmem:[%s3 + $0xf0] sm:$0xff]
  %v7985 = vld [vmem:[%s3 + $0xf8] sm:$0xff]
  %v7986 = vld [vmem:[%s3 + $0x100] sm:$0xff]
  %v7987 = vld [vmem:[%s3 + $0x108] sm:$0xff]
  %v7988 = vld [vmem:[%s3 + $0x110] sm:$0xff]
  %v7989 = vld [vmem:[%s3 + $0x118] sm:$0xff]
  %v7990 = vld [vmem:[%s3 + $0x120] sm:$0xff]
  %v7991 = vld [vmem:[%s3 + $0x128] sm:$0xff]
  %v7992 = vld [vmem:[%s3 + $0x130] sm:$0xff]
  %v7993 = vld [vmem:[%s3 + $0x138] sm:$0xff]
  %v7994 = vld [vmem:[%s3 + $0x140] sm:$0xff]
  %v7995 = vld [vmem:[%s3 + $0x148] sm:$0xff]
  %v7996 = vld [vmem:[%s3 + $0x150] sm:$0xff]
  %v7997 = vld [vmem:[%s3 + $0x158] sm:$0xff]
  %v7998 = vld [vmem:[%s3 + $0x160] sm:$0xff]
  %v7999 = vld [vmem:[%s3 + $0x168] sm:$0xff]
  %v8000 = vld [vmem:[%s3 + $0x170] sm:$0xff]
  %v8001 = vld [vmem:[%s3 + $0x178] sm:$0xff]
  %v8002 = vld [vmem:[%s3 + $0x180] sm:$0xff]
  %v8003 = vld [vmem:[%s3 + $0x188] sm:$0xff]
  %v8004 = vld [vmem:[%s3 + $0x190] sm:$0xff]
  %v8005 = vld [vmem:[%s3 + $0x198] sm:$0xff]
  %v8006 = vld [vmem:[%s3 + $0x1a0] sm:$0xff]
  %v8007 = vld [vmem:[%s3 + $0x1a8] sm:$0xff]
  %v8008 = vld [vmem:[%s3 + $0x1b0] sm:$0xff]
  %v8009 = vld [vmem:[%s3 + $0x1b8] sm:$0xff]
  %v8010 = vld [vmem:[%s3 + $0x1c0] sm:$0xff]
  %v8011 = vld [vmem:[%s3 + $0x1c8] sm:$0xff]
  %v8012 = vld [vmem:[%s3 + $0x1d0] sm:$0xff]
  %v8013 = vld [vmem:[%s3 + $0x1d8] sm:$0xff]
  %v8014 = vld [vmem:[%s3 + $0x1e0] sm:$0xff]
  %v8015 = vld [vmem:[%s3 + $0x1e8] sm:$0xff]
  %v8016 = vld [vmem:[%s3 + $0x1f0] sm:$0xff]
  %v8017 = vld [vmem:[%s3 + $0x1f8] sm:$0xff]
  %v8018 = vld [vmem:[%s3 + $0x200] sm:$0xff]
  %v8019 = vld [vmem:[%s3 + $0x208] sm:$0xff]
  %v8020 = vld [vmem:[%s3 + $0x210] sm:$0xff]
  %v8021 = vld [vmem:[%s3 + $0x218] sm:$0xff]
  %v8022 = vld [vmem:[%s3 + $0x220] sm:$0xff]
  %v8023 = vld [vmem:[%s3 + $0x228] sm:$0xff]
  %v8024 = vld [vmem:[%s3 + $0x230] sm:$0xff]
  %v8025 = vld [vmem:[%s3 + $0x238] sm:$0xff]
  %v8026 = vld [vmem:[%s3 + $0x240] sm:$0xff]
  %v8027 = vld [vmem:[%s3 + $0x248] sm:$0xff]
  %v8028 = vld [vmem:[%s3 + $0x250] sm:$0xff]
  %v8029 = vld [vmem:[%s3 + $0x258] sm:$0xff]
  %v8030 = vld [vmem:[%s3 + $0x260] sm:$0xff]
  %v8031 = vld [vmem:[%s3 + $0x268] sm:$0xff]
  %v8032 = vld [vmem:[%s3 + $0x270] sm:$0xff]
  %v8033 = vld [vmem:[%s3 + $0x278] sm:$0xff]
  %v8034 = vld [vmem:[%s3 + $0x280] sm:$0xff]
  %v8035 = vld [vmem:[%s3 + $0x288] sm:$0xff]
  %v8036 = vld [vmem:[%s3 + $0x290] sm:$0xff]
  %v8037 = vld [vmem:[%s3 + $0x298] sm:$0xff]
  %v8038 = vld [vmem:[%s3 + $0x2a0] sm:$0xff]
  %v8039 = vld [vmem:[%s3 + $0x2a8] sm:$0xff]
  %v8040 = vld [vmem:[%s3 + $0x2b0] sm:$0xff]
  %v8041 = vld [vmem:[%s3 + $0x2b8] sm:$0xff]
  %v8042 = vld [vmem:[%s3 + $0x2c0] sm:$0xff]
  %v8043 = vld [vmem:[%s3 + $0x2c8] sm:$0xff]
  %v8044 = vld [vmem:[%s3 + $0x2d0] sm:$0xff]
  %v8045 = vld [vmem:[%s3 + $0x2d8] sm:$0xff]
  %v8046 = vld [vmem:[%s3 + $0x2e0] sm:$0xff]
  %v8047 = vld [vmem:[%s3 + $0x2e8] sm:$0xff]
  %v8048 = vld [vmem:[%s3 + $0x2f0] sm:$0xff]
  %v8049 = vld [vmem:[%s3 + $0x2f8] sm:$0xff]
  %v8050 = vld [vmem:[%s3 + $0x300] sm:$0xff]
  %v8051 = vld [vmem:[%s3 + $0x308] sm:$0xff]
  %v8052 = vld [vmem:[%s3 + $0x310] sm:$0xff]
  %v8053 = vld [vmem:[%s3 + $0x318] sm:$0xff]
  %v8054 = vld [vmem:[%s3 + $0x320] sm:$0xff]
  %v8055 = vld [vmem:[%s3 + $0x328] sm:$0xff]
  %v8056 = vld [vmem:[%s3 + $0x330] sm:$0xff]
  %v8057 = vld [vmem:[%s3 + $0x338] sm:$0xff]
  %v8058 = vld [vmem:[%s3 + $0x340] sm:$0xff]
  %v8059 = vld [vmem:[%s3 + $0x348] sm:$0xff]
  %v8060 = vld [vmem:[%s3 + $0x350] sm:$0xff]
  %v8061 = vld [vmem:[%s3 + $0x358] sm:$0xff]
  %v8062 = vld [vmem:[%s3 + $0x360] sm:$0xff]
  %v8063 = vld [vmem:[%s3 + $0x368] sm:$0xff]
  %v8064 = vld [vmem:[%s3 + $0x370] sm:$0xff]
  %v8065 = vld [vmem:[%s3 + $0x378] sm:$0xff]
  %v8066 = vld [vmem:[%s3 + $0x380] sm:$0xff]
  %v8067 = vld [vmem:[%s3 + $0x388] sm:$0xff]
  %v8068 = vld [vmem:[%s3 + $0x390] sm:$0xff]
  %v8069 = vld [vmem:[%s3 + $0x398] sm:$0xff]
  %v8070 = vld [vmem:[%s3 + $0x3a0] sm:$0xff]
  %v8071 = vld [vmem:[%s3 + $0x3a8] sm:$0xff]
  %v8072 = vld [vmem:[%s3 + $0x3b0] sm:$0xff]
  %v8073 = vld [vmem:[%s3 + $0x3b8] sm:$0xff]
  %v8074 = vld [vmem:[%s3 + $0x3c0] sm:$0xff]
  %v8075 = vld [vmem:[%s3 + $0x3c8] sm:$0xff]
  %v8076 = vld [vmem:[%s3 + $0x3d0] sm:$0xff]
  %v8077 = vld [vmem:[%s3 + $0x3d8] sm:$0xff]
  %v8078 = vld [vmem:[%s3 + $0x3e0] sm:$0xff]
  %v8079 = vld [vmem:[%s3 + $0x3e8] sm:$0xff]
  %v8080 = vld [vmem:[%s3 + $0x3f0] sm:$0xff]
  %v8081 = vld [vmem:[%s3 + $0x3f8] sm:$0xff]
  %v8082 = vld [vmem:[%s3 + $0x400] sm:$0xff]
  %v8083 = vld [vmem:[%s3 + $0x408] sm:$0xff]
  %v8084 = vld [vmem:[%s3 + $0x410] sm:$0xff]
  %v8085 = vld [vmem:[%s3 + $0x418] sm:$0xff]
  %v8086 = vld [vmem:[%s3 + $0x420] sm:$0xff]
  %v8087 = vld [vmem:[%s3 + $0x428] sm:$0xff]
  %v8088 = vld [vmem:[%s3 + $0x430] sm:$0xff]
  %v8089 = vld [vmem:[%s3 + $0x438] sm:$0xff]
  %v8090 = vld [vmem:[%s3 + $0x440] sm:$0xff]
  %v8091 = vld [vmem:[%s3 + $0x448] sm:$0xff]
  %v8092 = vld [vmem:[%s3 + $0x450] sm:$0xff]
  %v8093 = vld [vmem:[%s3 + $0x458] sm:$0xff]
  %v8094 = vld [vmem:[%s3 + $0x460] sm:$0xff]
  %v8095 = vld [vmem:[%s3 + $0x468] sm:$0xff]
  %v8096 = vld [vmem:[%s3 + $0x470] sm:$0xff]
  %v8097 = vld [vmem:[%s3 + $0x478] sm:$0xff]
  %v8098 = vld [vmem:[%s3 + $0x480] sm:$0xff]
  %v8099 = vld [vmem:[%s3 + $0x488] sm:$0xff]
  %v8100 = vld [vmem:[%s3 + $0x490] sm:$0xff]
  %v8101 = vld [vmem:[%s3 + $0x498] sm:$0xff]
  %v8102 = vld [vmem:[%s3 + $0x4a0] sm:$0xff]
  %v8103 = vld [vmem:[%s3 + $0x4a8] sm:$0xff]
  %v8104 = vld [vmem:[%s3 + $0x4b0] sm:$0xff]
  %v8105 = vld [vmem:[%s3 + $0x4b8] sm:$0xff]
  %v8106 = vld [vmem:[%s3 + $0x4c0] sm:$0xff]
  %v8107 = vld [vmem:[%s3 + $0x4c8] sm:$0xff]
  %v8108 = vld [vmem:[%s3 + $0x4d0] sm:$0xff]
  %v8109 = vld [vmem:[%s3 + $0x4d8] sm:$0xff]
  %v8110 = vld [vmem:[%s3 + $0x4e0] sm:$0xff]
  %v8111 = vld [vmem:[%s3 + $0x4e8] sm:$0xff]
  %v8112 = vld [vmem:[%s3 + $0x4f0] sm:$0xff]
  %v8113 = vld [vmem:[%s3 + $0x4f8] sm:$0xff]
  %8114 = vmatprep.subr.mxu0 %v7955
  %8115 = vmatpush1.msra.mxu0 %v7954
  %8116 = vmatprep.subr.mxu0 %v7957
  %8117 = vmatpush1.msra.mxu0 %v7956
  %8118 = vmatprep.subr.mxu0 %v7959
  %8119 = vmatpush1.msra.mxu0 %v7958
  %8120 = vmatprep.subr.mxu0 %v7961
  %8121 = vmatpush1.msra.mxu0 %v7960
  %8122 = vmatprep.subr.mxu0 %v7963
  %8123 = vmatpush1.msra.mxu0 %v7962
  %8124 = vmatprep.subr.mxu0 %v7965
  %8125 = vmatpush1.msra.mxu0 %v7964
  %8126 = vmatprep.subr.mxu0 %v7967
  %8127 = vmatpush1.msra.mxu0 %v7966
  %8128 = vmatprep.subr.mxu0 %v7969
  %8129 = vmatpush1.msra.mxu0 %v7968
  %8130 = vmatprep.subr.mxu0 %v7971
  %8131 = vmatpush1.msra.mxu0 %v7970
  %8132 = vmatprep.subr.mxu0 %v7973
  %8133 = vmatpush1.msra.mxu0 %v7972
  %8134 = vmatprep.subr.mxu0 %v7975
  %8135 = vmatpush1.msra.mxu0 %v7974
  %8136 = vmatprep.subr.mxu0 %v7977
  %8137 = vmatpush1.msra.mxu0 %v7976
  %8138 = vmatprep.subr.mxu0 %v7979
  %8139 = vmatpush1.msra.mxu0 %v7978
  %8140 = vmatprep.subr.mxu0 %v7981
  %8141 = vmatpush1.msra.mxu0 %v7980
  %8142 = vmatprep.subr.mxu0 %v7983
  %8143 = vmatpush1.msra.mxu0 %v7982
  %8144 = vmatprep.subr.mxu0 %v7985
  %8145 = vmatpush1.msra.mxu0 %v7984
  %8146 = vmatprep.subr.mxu0 %v7987
  %8147 = vmatpush1.msra.mxu0 %v7986
  %8148 = vmatprep.subr.mxu0 %v7989
  %8149 = vmatpush1.msra.mxu0 %v7988
  %8150 = vmatprep.subr.mxu0 %v7991
  %8151 = vmatpush1.msra.mxu0 %v7990
  %8152 = vmatprep.subr.mxu0 %v7993
  %8153 = vmatpush1.msra.mxu0 %v7992
  %8154 = vmatprep.subr.mxu0 %v7995
  %8155 = vmatpush1.msra.mxu0 %v7994
  %8156 = vmatprep.subr.mxu0 %v7997
  %8157 = vmatpush1.msra.mxu0 %v7996
  %8158 = vmatprep.subr.mxu0 %v7999
  %8159 = vmatpush1.msra.mxu0 %v7998
  %8160 = vmatprep.subr.mxu0 %v8001
  %8161 = vmatpush1.msra.mxu0 %v8000
  %8162 = vmatprep.subr.mxu0 %v8003
  %8163 = vmatpush1.msra.mxu0 %v8002
  %8164 = vmatprep.subr.mxu0 %v8005
  %8165 = vmatpush1.msra.mxu0 %v8004
  %8166 = vmatprep.subr.mxu0 %v8007
  %8167 = vmatpush1.msra.mxu0 %v8006
  %8168 = vmatprep.subr.mxu0 %v8009
  %8169 = vmatpush1.msra.mxu0 %v8008
  %8170 = vmatprep.subr.mxu0 %v8011
  %8171 = vmatpush1.msra.mxu0 %v8010
  %8172 = vmatprep.subr.mxu0 %v8013
  %8173 = vmatpush1.msra.mxu0 %v8012
  %8174 = vmatprep.subr.mxu0 %v8015
  %8175 = vmatpush1.msra.mxu0 %v8014
  %8176 = vmatprep.subr.mxu0 %v8017
  %8177 = vmatpush1.msra.mxu0 %v8016
  %8178 = vmatprep.mubr.f32.mxu0 %v7950
  %8179 = vmatmul.mubr.f32.gmra.mrb[0].mxu0 %v7949
  %v8180 = vpop.f32.mrb[0].mxu0
  %v8181 = vadd.f32 0.0, %v8180
  %v8182 = vpop.f32.mrb[0].mxu0
  %v8183 = vadd.f32 0.0, %v8182
  %8184 = vdwg.mxu0
  %8185 = vmatprep.subr.mxu0 %v8019
  %8186 = vmatpush1.msra.mxu0 %v8018
  %8187 = vmatprep.subr.mxu0 %v8021
  %8188 = vmatpush1.msra.mxu0 %v8020
  %8189 = vmatprep.subr.mxu0 %v8023
  %8190 = vmatpush1.msra.mxu0 %v8022
  %8191 = vmatprep.subr.mxu0 %v8025
  %8192 = vmatpush1.msra.mxu0 %v8024
  %8193 = vmatprep.subr.mxu0 %v8027
  %8194 = vmatpush1.msra.mxu0 %v8026
  %8195 = vmatprep.subr.mxu0 %v8029
  %8196 = vmatpush1.msra.mxu0 %v8028
  %8197 = vmatprep.subr.mxu0 %v8031
  %8198 = vmatpush1.msra.mxu0 %v8030
  %8199 = vmatprep.subr.mxu0 %v8033
  %8200 = vmatpush1.msra.mxu0 %v8032
  %8201 = vmatprep.subr.mxu0 %v8035
  %8202 = vmatpush1.msra.mxu0 %v8034
  %8203 = vmatprep.subr.mxu0 %v8037
  %8204 = vmatpush1.msra.mxu0 %v8036
  %8205 = vmatprep.subr.mxu0 %v8039
  %8206 = vmatpush1.msra.mxu0 %v8038
  %8207 = vmatprep.subr.mxu0 %v8041
  %8208 = vmatpush1.msra.mxu0 %v8040
  %8209 = vmatprep.subr.mxu0 %v8043
  %8210 = vmatpush1.msra.mxu0 %v8042
  %8211 = vmatprep.subr.mxu0 %v8045
  %8212 = vmatpush1.msra.mxu0 %v8044
  %8213 = vmatprep.subr.mxu0 %v8047
  %8214 = vmatpush1.msra.mxu0 %v8046
  %8215 = vmatprep.subr.mxu0 %v8049
  %8216 = vmatpush1.msra.mxu0 %v8048
  %8217 = vmatprep.subr.mxu0 %v8051
  %8218 = vmatpush1.msra.mxu0 %v8050
  %8219 = vmatprep.subr.mxu0 %v8053
  %8220 = vmatpush1.msra.mxu0 %v8052
  %8221 = vmatprep.subr.mxu0 %v8055
  %8222 = vmatpush1.msra.mxu0 %v8054
  %8223 = vmatprep.subr.mxu0 %v8057
  %8224 = vmatpush1.msra.mxu0 %v8056
  %8225 = vmatprep.subr.mxu0 %v8059
  %8226 = vmatpush1.msra.mxu0 %v8058
  %8227 = vmatprep.subr.mxu0 %v8061
  %8228 = vmatpush1.msra.mxu0 %v8060
  %8229 = vmatprep.subr.mxu0 %v8063
  %8230 = vmatpush1.msra.mxu0 %v8062
  %8231 = vmatprep.subr.mxu0 %v8065
  %8232 = vmatpush1.msra.mxu0 %v8064
  %8233 = vmatprep.subr.mxu0 %v8067
  %8234 = vmatpush1.msra.mxu0 %v8066
  %8235 = vmatprep.subr.mxu0 %v8069
  %8236 = vmatpush1.msra.mxu0 %v8068
  %8237 = vmatprep.subr.mxu0 %v8071
  %8238 = vmatpush1.msra.mxu0 %v8070
  %8239 = vmatprep.subr.mxu0 %v8073
  %8240 = vmatpush1.msra.mxu0 %v8072
  %8241 = vmatprep.subr.mxu0 %v8075
  %8242 = vmatpush1.msra.mxu0 %v8074
  %8243 = vmatprep.subr.mxu0 %v8077
  %8244 = vmatpush1.msra.mxu0 %v8076
  %8245 = vmatprep.subr.mxu0 %v8079
  %8246 = vmatpush1.msra.mxu0 %v8078
  %8247 = vmatprep.subr.mxu0 %v8081
  %8248 = vmatpush1.msra.mxu0 %v8080
  %8249 = vmatprep.mubr.f32.mxu0 %v7952
  %8250 = vmatmul.mubr.f32.gmra.mrb[0].mxu0 %v7951
  %v8251 = vpop.f32.mrb[0].mxu0
  %v8252 = vadd.f32 %v8181, %v8251
  %v8253 = vpop.f32.mrb[0].mxu0
  %v8254 = vadd.f32 %v8183, %v8253
  %8255 = vdwg.mxu0
  %8256 = vmatprep.subr.mxu0 %v8083
  %8257 = vmatpush1.msra.mxu0 %v8082
  %8258 = vmatprep.subr.mxu0 %v8085
  %8259 = vmatpush1.msra.mxu0 %v8084
  %8260 = vmatprep.subr.mxu0 %v8087
  %8261 = vmatpush1.msra.mxu0 %v8086
  %8262 = vmatprep.subr.mxu0 %v8089
  %8263 = vmatpush1.msra.mxu0 %v8088
  %8264 = vmatprep.subr.mxu0 %v8091
  %8265 = vmatpush1.msra.mxu0 %v8090
  %8266 = vmatprep.subr.mxu0 %v8093
  %8267 = vmatpush1.msra.mxu0 %v8092
  %8268 = vmatprep.subr.mxu0 %v8095
  %8269 = vmatpush1.msra.mxu0 %v8094
  %8270 = vmatprep.subr.mxu0 %v8097
  %8271 = vmatpush1.msra.mxu0 %v8096
  %8272 = vmatprep.subr.mxu0 %v8099
  %8273 = vmatpush1.msra.mxu0 %v8098
  %8274 = vmatprep.subr.mxu0 %v8101
  %8275 = vmatpush1.msra.mxu0 %v8100
  %8276 = vmatprep.subr.mxu0 %v8103
  %8277 = vmatpush1.msra.mxu0 %v8102
  %8278 = vmatprep.subr.mxu0 %v8105
  %8279 = vmatpush1.msra.mxu0 %v8104
  %8280 = vmatprep.subr.mxu0 %v8107
  %8281 = vmatpush1.msra.mxu0 %v8106
  %8282 = vmatprep.subr.mxu0 %v8109
  %8283 = vmatpush1.msra.mxu0 %v8108
  %8284 = vmatprep.subr.mxu0 %v8111
  %8285 = vmatpush1.msra.mxu0 %v8110
  %8286 = vmatprep.subr.mxu0 %v8113
  %8287 = vmatpush1.msra.mxu0 %v8112
  %8288 = vmatprep.subr.mxu0 0.0
  %8289 = vmatpush1.msra.mxu0 0.0
  %8290 = vmatprep.subr.mxu0 0.0
  %8291 = vmatpush1.msra.mxu0 0.0
  %8292 = vmatprep.subr.mxu0 0.0
  %8293 = vmatpush1.msra.mxu0 0.0
  %8294 = vmatprep.subr.mxu0 0.0
  %8295 = vmatpush1.msra.mxu0 0.0
  %8296 = vmatprep.subr.mxu0 0.0
  %8297 = vmatpush1.msra.mxu0 0.0
  %8298 = vmatprep.subr.mxu0 0.0
  %8299 = vmatpush1.msra.mxu0 0.0
  %8300 = vmatprep.subr.mxu0 0.0
  %8301 = vmatpush1.msra.mxu0 0.0
  %8302 = vmatprep.subr.mxu0 0.0
  %8303 = vmatpush1.msra.mxu0 0.0
  %8304 = vmatprep.subr.mxu0 0.0
  %8305 = vmatpush1.msra.mxu0 0.0
  %8306 = vmatprep.subr.mxu0 0.0
  %8307 = vmatpush1.msra.mxu0 0.0
  %8308 = vmatprep.subr.mxu0 0.0
  %8309 = vmatpush1.msra.mxu0 0.0
  %8310 = vmatprep.subr.mxu0 0.0
  %8311 = vmatpush1.msra.mxu0 0.0
  %8312 = vmatprep.subr.mxu0 0.0
  %8313 = vmatpush1.msra.mxu0 0.0
  %8314 = vmatprep.subr.mxu0 0.0
  %8315 = vmatpush1.msra.mxu0 0.0
  %8316 = vmatprep.subr.mxu0 0.0
  %8317 = vmatpush1.msra.mxu0 0.0
  %8318 = vmatprep.subr.mxu0 0.0
  %8319 = vmatpush1.msra.mxu0 0.0
  %8320 = vmatprep.mubr.f32.mxu0 0.0
  %8321 = vmatmul.mubr.f32.gmra.mrb[0].mxu0 %v7953
  %v8322 = vpop.f32.mrb[0].mxu0
  %v8323 = vadd.f32 %v8252, %v8322
  %v8324 = vpop.f32.mrb[0].mxu0
  %v8325 = vadd.f32 %v8254, %v8324
  %8326 = vdwg.mxu0
  %v8327 = vld [vmem:[#allocation2 + $0x18] sm:$0xff]
  %v8328 = vld [vmem:[#allocation2 + $0x20] sm:$0xff]
  %v8329 = vld [vmem:[#allocation2 + $0x28] sm:$0xff]
  %v8330 = vld [vmem:[#allocation2 + $0x30] sm:$0xff]
  %v8331 = vld [vmem:[#allocation2 + $0x38] sm:$0xff]
  %8332 = vmatprep.subr.mxu0 %v7955
  %8333 = vmatpush1.msra.mxu0 %v7954
  %8334 = vmatprep.subr.mxu0 %v7957
  %8335 = vmatpush1.msra.mxu0 %v7956
  %8336 = vmatprep.subr.mxu0 %v7959
  %8337 = vmatpush1.msra.mxu0 %v7958
  %8338 = vmatprep.subr.mxu0 %v7961
  %8339 = vmatpush1.msra.mxu0 %v7960
  %8340 = vmatprep.subr.mxu0 %v7963
  %8341 = vmatpush1.msra.mxu0 %v7962
  %8342 = vmatprep.subr.mxu0 %v7965
  %8343 = vmatpush1.msra.mxu0 %v7964
  %8344 = vmatprep.subr.mxu0 %v7967
  %8345 = vmatpush1.msra.mxu0 %v7966
  %8346 = vmatprep.subr.mxu0 %v7969
  %8347 = vmatpush1.msra.mxu0 %v7968
  %8348 = vmatprep.subr.mxu0 %v7971
  %8349 = vmatpush1.msra.mxu0 %v7970
  %8350 = vmatprep.subr.mxu0 %v7973
  %8351 = vmatpush1.msra.mxu0 %v7972
  %8352 = vmatprep.subr.mxu0 %v7975
  %8353 = vmatpush1.msra.mxu0 %v7974
  %8354 = vmatprep.subr.mxu0 %v7977
  %8355 = vmatpush1.msra.mxu0 %v7976
  %8356 = vmatprep.subr.mxu0 %v7979
  %8357 = vmatpush1.msra.mxu0 %v7978
  %8358 = vmatprep.subr.mxu0 %v7981
  %8359 = vmatpush1.msra.mxu0 %v7980
  %8360 = vmatprep.subr.mxu0 %v7983
  %8361 = vmatpush1.msra.mxu0 %v7982
  %8362 = vmatprep.subr.mxu0 %v7985
  %8363 = vmatpush1.msra.mxu0 %v7984
  %8364 = vmatprep.subr.mxu0 %v7987
  %8365 = vmatpush1.msra.mxu0 %v7986
  %8366 = vmatprep.subr.mxu0 %v7989
  %8367 = vmatpush1.msra.mxu0 %v7988
  %8368 = vmatprep.subr.mxu0 %v7991
  %8369 = vmatpush1.msra.mxu0 %v7990
  %8370 = vmatprep.subr.mxu0 %v7993
  %8371 = vmatpush1.msra.mxu0 %v7992
  %8372 = vmatprep.subr.mxu0 %v7995
  %8373 = vmatpush1.msra.mxu0 %v7994
  %8374 = vmatprep.subr.mxu0 %v7997
  %8375 = vmatpush1.msra.mxu0 %v7996
  %8376 = vmatprep.subr.mxu0 %v7999
  %8377 = vmatpush1.msra.mxu0 %v7998
  %8378 = vmatprep.subr.mxu0 %v8001
  %8379 = vmatpush1.msra.mxu0 %v8000
  %8380 = vmatprep.subr.mxu0 %v8003
  %8381 = vmatpush1.msra.mxu0 %v8002
  %8382 = vmatprep.subr.mxu0 %v8005
  %8383 = vmatpush1.msra.mxu0 %v8004
  %8384 = vmatprep.subr.mxu0 %v8007
  %8385 = vmatpush1.msra.mxu0 %v8006
  %8386 = vmatprep.subr.mxu0 %v8009
  %8387 = vmatpush1.msra.mxu0 %v8008
  %8388 = vmatprep.subr.mxu0 %v8011
  %8389 = vmatpush1.msra.mxu0 %v8010
  %8390 = vmatprep.subr.mxu0 %v8013
  %8391 = vmatpush1.msra.mxu0 %v8012
  %8392 = vmatprep.subr.mxu0 %v8015
  %8393 = vmatpush1.msra.mxu0 %v8014
  %8394 = vmatprep.subr.mxu0 %v8017
  %8395 = vmatpush1.msra.mxu0 %v8016
  %8396 = vmatprep.mubr.f32.mxu0 %v8328
  %8397 = vmatmul.mubr.f32.gmra.mrb[0].mxu0 %v8327
  %v8398 = vpop.f32.mrb[0].mxu0
  %v8399 = vadd.f32 0.0, %v8398
  %v8400 = vpop.f32.mrb[0].mxu0
  %v8401 = vadd.f32 0.0, %v8400
  %8402 = vdwg.mxu0
  %8403 = vmatprep.subr.mxu0 %v8019
  %8404 = vmatpush1.msra.mxu0 %v8018
  %8405 = vmatprep.subr.mxu0 %v8021
  %8406 = vmatpush1.msra.mxu0 %v8020
  %8407 = vmatprep.subr.mxu0 %v8023
  %8408 = vmatpush1.msra.mxu0 %v8022
  %8409 = vmatprep.subr.mxu0 %v8025
  %8410 = vmatpush1.msra.mxu0 %v8024
  %8411 = vmatprep.subr.mxu0 %v8027
  %8412 = vmatpush1.msra.mxu0 %v8026
  %8413 = vmatprep.subr.mxu0 %v8029
  %8414 = vmatpush1.msra.mxu0 %v8028
  %8415 = vmatprep.subr.mxu0 %v8031
  %8416 = vmatpush1.msra.mxu0 %v8030
  %8417 = vmatprep.subr.mxu0 %v8033
  %8418 = vmatpush1.msra.mxu0 %v8032
  %8419 = vmatprep.subr.mxu0 %v8035
  %8420 = vmatpush1.msra.mxu0 %v8034
  %8421 = vmatprep.subr.mxu0 %v8037
  %8422 = vmatpush1.msra.mxu0 %v8036
  %8423 = vmatprep.subr.mxu0 %v8039
  %8424 = vmatpush1.msra.mxu0 %v8038
  %8425 = vmatprep.subr.mxu0 %v8041
  %8426 = vmatpush1.msra.mxu0 %v8040
  %8427 = vmatprep.subr.mxu0 %v8043
  %8428 = vmatpush1.msra.mxu0 %v8042
  %8429 = vmatprep.subr.mxu0 %v8045
  %8430 = vmatpush1.msra.mxu0 %v8044
  %8431 = vmatprep.subr.mxu0 %v8047
  %8432 = vmatpush1.msra.mxu0 %v8046
  %8433 = vmatprep.subr.mxu0 %v8049
  %8434 = vmatpush1.msra.mxu0 %v8048
  %8435 = vmatprep.subr.mxu0 %v8051
  %8436 = vmatpush1.msra.mxu0 %v8050
  %8437 = vmatprep.subr.mxu0 %v8053
  %8438 = vmatpush1.msra.mxu0 %v8052
  %8439 = vmatprep.subr.mxu0 %v8055
  %8440 = vmatpush1.msra.mxu0 %v8054
  %8441 = vmatprep.subr.mxu0 %v8057
  %8442 = vmatpush1.msra.mxu0 %v8056
  %8443 = vmatprep.subr.mxu0 %v8059
  %8444 = vmatpush1.msra.mxu0 %v8058
  %8445 = vmatprep.subr.mxu0 %v8061
  %8446 = vmatpush1.msra.mxu0 %v8060
  %8447 = vmatprep.subr.mxu0 %v8063
  %8448 = vmatpush1.msra.mxu0 %v8062
  %8449 = vmatprep.subr.mxu0 %v8065
  %8450 = vmatpush1.msra.mxu0 %v8064
  %8451 = vmatprep.subr.mxu0 %v8067
  %8452 = vmatpush1.msra.mxu0 %v8066
  %8453 = vmatprep.subr.mxu0 %v8069
  %8454 = vmatpush1.msra.mxu0 %v8068
  %8455 = vmatprep.subr.mxu0 %v8071
  %8456 = vmatpush1.msra.mxu0 %v8070
  %8457 = vmatprep.subr.mxu0 %v8073
  %8458 = vmatpush1.msra.mxu0 %v8072
  %8459 = vmatprep.subr.mxu0 %v8075
  %8460 = vmatpush1.msra.mxu0 %v8074
  %8461 = vmatprep.subr.mxu0 %v8077
  %8462 = vmatpush1.msra.mxu0 %v8076
  %8463 = vmatprep.subr.mxu0 %v8079
  %8464 = vmatpush1.msra.mxu0 %v8078
  %8465 = vmatprep.subr.mxu0 %v8081
  %8466 = vmatpush1.msra.mxu0 %v8080
  %8467 = vmatprep.mubr.f32.mxu0 %v8330
  %8468 = vmatmul.mubr.f32.gmra.mrb[0].mxu0 %v8329
  %v8469 = vpop.f32.mrb[0].mxu0
  %v8470 = vadd.f32 %v8399, %v8469
  %v8471 = vpop.f32.mrb[0].mxu0
  %v8472 = vadd.f32 %v8401, %v8471
  %8473 = vdwg.mxu0
  %8474 = vmatprep.subr.mxu0 %v8083
  %8475 = vmatpush1.msra.mxu0 %v8082
  %8476 = vmatprep.subr.mxu0 %v8085
  %8477 = vmatpush1.msra.mxu0 %v8084
  %8478 = vmatprep.subr.mxu0 %v8087
  %8479 = vmatpush1.msra.mxu0 %v8086
  %8480 = vmatprep.subr.mxu0 %v8089
  %8481 = vmatpush1.msra.mxu0 %v8088
  %8482 = vmatprep.subr.mxu0 %v8091
  %8483 = vmatpush1.msra.mxu0 %v8090
  %8484 = vmatprep.subr.mxu0 %v8093
  %8485 = vmatpush1.msra.mxu0 %v8092
  %8486 = vmatprep.subr.mxu0 %v8095
  %8487 = vmatpush1.msra.mxu0 %v8094
  %8488 = vmatprep.subr.mxu0 %v8097
  %8489 = vmatpush1.msra.mxu0 %v8096
  %8490 = vmatprep.subr.mxu0 %v8099
  %8491 = vmatpush1.msra.mxu0 %v8098
  %8492 = vmatprep.subr.mxu0 %v8101
  %8493 = vmatpush1.msra.mxu0 %v8100
  %8494 = vmatprep.subr.mxu0 %v8103
  %8495 = vmatpush1.msra.mxu0 %v8102
  %8496 = vmatprep.subr.mxu0 %v8105
  %8497 = vmatpush1.msra.mxu0 %v8104
  %8498 = vmatprep.subr.mxu0 %v8107
  %8499 = vmatpush1.msra.mxu0 %v8106
  %8500 = vmatprep.subr.mxu0 %v8109
  %8501 = vmatpush1.msra.mxu0 %v8108
  %8502 = vmatprep.subr.mxu0 %v8111
  %8503 = vmatpush1.msra.mxu0 %v8110
  %8504 = vmatprep.subr.mxu0 %v8113
  %8505 = vmatpush1.msra.mxu0 %v8112
  %8506 = vmatprep.subr.mxu0 0.0
  %8507 = vmatpush1.msra.mxu0 0.0
  %8508 = vmatprep.subr.mxu0 0.0
  %8509 = vmatpush1.msra.mxu0 0.0
  %8510 = vmatprep.subr.mxu0 0.0
  %8511 = vmatpush1.msra.mxu0 0.0
  %8512 = vmatprep.subr.mxu0 0.0
  %8513 = vmatpush1.msra.mxu0 0.0
  %8514 = vmatprep.subr.mxu0 0.0
  %8515 = vmatpush1.msra.mxu0 0.0
  %8516 = vmatprep.subr.mxu0 0.0
  %8517 = vmatpush1.msra.mxu0 0.0
  %8518 = vmatprep.subr.mxu0 0.0
  %8519 = vmatpush1.msra.mxu0 0.0
  %8520 = vmatprep.subr.mxu0 0.0
  %8521 = vmatpush1.msra.mxu0 0.0
  %8522 = vmatprep.subr.mxu0 0.0
  %8523 = vmatpush1.msra.mxu0 0.0
  %8524 = vmatprep.subr.mxu0 0.0
  %8525 = vmatpush1.msra.mxu0 0.0
  %8526 = vmatprep.subr.mxu0 0.0
  %8527 = vmatpush1.msra.mxu0 0.0
  %8528 = vmatprep.subr.mxu0 0.0
  %8529 = vmatpush1.msra.mxu0 0.0
  %8530 = vmatprep.subr.mxu0 0.0
  %8531 = vmatpush1.msra.mxu0 0.0
  %8532 = vmatprep.subr.mxu0 0.0
  %8533 = vmatpush1.msra.mxu0 0.0
  %8534 = vmatprep.subr.mxu0 0.0
  %8535 = vmatpush1.msra.mxu0 0.0
  %8536 = vmatprep.subr.mxu0 0.0
  %8537 = vmatpush1.msra.mxu0 0.0
  %8538 = vmatprep.mubr.f32.mxu0 0.0
  %8539 = vmatmul.mubr.f32.gmra.mrb[0].mxu0 %v8331
  %v8540 = vpop.f32.mrb[0].mxu0
  %v8541 = vadd.f32 %v8470, %v8540
  %v8542 = vpop.f32.mrb[0].mxu0
  %v8543 = vadd.f32 %v8472, %v8542
  %8544 = vdwg.mxu0
  %v8545 = vmax.f32 %v8323, %v8541
  %v8546 = vmax.f32 %v8325, %v8543
  %v8547 = vmax.f32 %v8545, %v8546
  %v8548 = vld [vmem:[%s4] sm:$0x1]
  %v8550 = vlaneseq
  %v8551 = vshrl.u32 %v8550, 7
  %v8552 = vsub.s32 0, %v8551
  %v8553 = vrot.slane %v8548, %v8552
  %v8555 = vadd.f32 %v8547, %v8553
  %v8556 = vmax.f32 %v8555, 0.0
  %8557 = vst [vmem:[#allocation3 + $0x8] sm:$0xff] %v8556
  %v8558 = vld [vmem:[#allocation2 + $0x20] sm:$0xff]
  %v8559 = vld [vmem:[#allocation2 + $0x28] sm:$0xff]
  %v8560 = vld [vmem:[#allocation2 + $0x30] sm:$0xff]
  %v8561 = vld [vmem:[#allocation2 + $0x38] sm:$0xff]
  %v8562 = vld [vmem:[#allocation2 + $0x40] sm:$0xff]
  %v8563 = vld [vmem:[%s3] sm:$0xff]
  %v8564 = vld [vmem:[%s3 + $0x8] sm:$0xff]
  %v8565 = vld [vmem:[%s3 + $0x10] sm:$0xff]
  %v8566 = vld [vmem:[%s3 + $0x18] sm:$0xff]
  %v8567 = vld [vmem:[%s3 + $0x20] sm:$0xff]
  %v8568 = vld [vmem:[%s3 + $0x28] sm:$0xff]
  %v8569 = vld [vmem:[%s3 + $0x30] sm:$0xff]
  %v8570 = vld [vmem:[%s3 + $0x38] sm:$0xff]
  %v8571 = vld [vmem:[%s3 + $0x40] sm:$0xff]
  %v8572 = vld [vmem:[%s3 + $0x48] sm:$0xff]
  %v8573 = vld [vmem:[%s3 + $0x50] sm:$0xff]
  %v8574 = vld [vmem:[%s3 + $0x58] sm:$0xff]
  %v8575 = vld [vmem:[%s3 + $0x60] sm:$0xff]
  %v8576 = vld [vmem:[%s3 + $0x68] sm:$0xff]
  %v8577 = vld [vmem:[%s3 + $0x70] sm:$0xff]
  %v8578 = vld [vmem:[%s3 + $0x78] sm:$0xff]
  %v8579 = vld [vmem:[%s3 + $0x80] sm:$0xff]
  %v8580 = vld [vmem:[%s3 + $0x88] sm:$0xff]
  %v8581 = vld [vmem:[%s3 + $0x90] sm:$0xff]
  %v8582 = vld [vmem:[%s3 + $0x98] sm:$0xff]
  %v8583 = vld [vmem:[%s3 + $0xa0] sm:$0xff]
  %v8584 = vld [vmem:[%s3 + $0xa8] sm:$0xff]
  %v8585 = vld [vmem:[%s3 + $0xb0] sm:$0xff]
  %v8586 = vld [vmem:[%s3 + $0xb8] sm:$0xff]
  %v8587 = vld [vmem:[%s3 + $0xc0] sm:$0xff]
  %v8588 = vld [vmem:[%s3 + $0xc8] sm:$0xff]
  %v8589 = vld [vmem:[%s3 + $0xd0] sm:$0xff]
  %v8590 = vld [vmem:[%s3 + $0xd8] sm:$0xff]
  %v8591 = vld [vmem:[%s3 + $0xe0] sm:$0xff]
  %v8592 = vld [vmem:[%s3 + $0xe8] sm:$0xff]
  %v8593 = vld [vmem:[%s3 + $0xf0] sm:$0xff]
  %v8594 = vld [vmem:[%s3 + $0xf8] sm:$0xff]
  %v8595 = vld [vmem:[%s3 + $0x100] sm:$0xff]
  %v8596 = vld [vmem:[%s3 + $0x108] sm:$0xff]
  %v8597 = vld [vmem:[%s3 + $0x110] sm:$0xff]
  %v8598 = vld [vmem:[%s3 + $0x118] sm:$0xff]
  %v8599 = vld [vmem:[%s3 + $0x120] sm:$0xff]
  %v8600 = vld [vmem:[%s3 + $0x128] sm:$0xff]
  %v8601 = vld [vmem:[%s3 + $0x130] sm:$0xff]
  %v8602 = vld [vmem:[%s3 + $0x138] sm:$0xff]
  %v8603 = vld [vmem:[%s3 + $0x140] sm:$0xff]
  %v8604 = vld [vmem:[%s3 + $0x148] sm:$0xff]
  %v8605 = vld [vmem:[%s3 + $0x150] sm:$0xff]
  %v8606 = vld [vmem:[%s3 + $0x158] sm:$0xff]
  %v8607 = vld [vmem:[%s3 + $0x160] sm:$0xff]
  %v8608 = vld [vmem:[%s3 + $0x168] sm:$0xff]
  %v8609 = vld [vmem:[%s3 + $0x170] sm:$0xff]
  %v8610 = vld [vmem:[%s3 + $0x178] sm:$0xff]
  %v8611 = vld [vmem:[%s3 + $0x180] sm:$0xff]
  %v8612 = vld [vmem:[%s3 + $0x188] sm:$0xff]
  %v8613 = vld [vmem:[%s3 + $0x190] sm:$0xff]
  %v8614 = vld [vmem:[%s3 + $0x198] sm:$0xff]
  %v8615 = vld [vmem:[%s3 + $0x1a0] sm:$0xff]
  %v8616 = vld [vmem:[%s3 + $0x1a8] sm:$0xff]
  %v8617 = vld [vmem:[%s3 + $0x1b0] sm:$0xff]
  %v8618 = vld [vmem:[%s3 + $0x1b8] sm:$0xff]
  %v8619 = vld [vmem:[%s3 + $0x1c0] sm:$0xff]
  %v8620 = vld [vmem:[%s3 + $0x1c8] sm:$0xff]
  %v8621 = vld [vmem:[%s3 + $0x1d0] sm:$0xff]
  %v8622 = vld [vmem:[%s3 + $0x1d8] sm:$0xff]
  %v8623 = vld [vmem:[%s3 + $0x1e0] sm:$0xff]
  %v8624 = vld [vmem:[%s3 + $0x1e8] sm:$0xff]
  %v8625 = vld [vmem:[%s3 + $0x1f0] sm:$0xff]
  %v8626 = vld [vmem:[%s3 + $0x1f8] sm:$0xff]
  %v8627 = vld [vmem:[%s3 + $0x200] sm:$0xff]
  %v8628 = vld [vmem:[%s3 + $0x208] sm:$0xff]
  %v8629 = vld [vmem:[%s3 + $0x210] sm:$0xff]
  %v8630 = vld [vmem:[%s3 + $0x218] sm:$0xff]
  %v8631 = vld [vmem:[%s3 + $0x220] sm:$0xff]
  %v8632 = vld [vmem:[%s3 + $0x228] sm:$0xff]
  %v8633 = vld [vmem:[%s3 + $0x230] sm:$0xff]
  %v8634 = vld [vmem:[%s3 + $0x238] sm:$0xff]
  %v8635 = vld [vmem:[%s3 + $0x240] sm:$0xff]
  %v8636 = vld [vmem:[%s3 + $0x248] sm:$0xff]
  %v8637 = vld [vmem:[%s3 + $0x250] sm:$0xff]
  %v8638 = vld [vmem:[%s3 + $0x258] sm:$0xff]
  %v8639 = vld [vmem:[%s3 + $0x260] sm:$0xff]
  %v8640 = vld [vmem:[%s3 + $0x268] sm:$0xff]
  %v8641 = vld [vmem:[%s3 + $0x270] sm:$0xff]
  %v8642 = vld [vmem:[%s3 + $0x278] sm:$0xff]
  %v8643 = vld [vmem:[%s3 + $0x280] sm:$0xff]
  %v8644 = vld [vmem:[%s3 + $0x288] sm:$0xff]
  %v8645 = vld [vmem:[%s3 + $0x290] sm:$0xff]
  %v8646 = vld [vmem:[%s3 + $0x298] sm:$0xff]
  %v8647 = vld [vmem:[%s3 + $0x2a0] sm:$0xff]
  %v8648 = vld [vmem:[%s3 + $0x2a8] sm:$0xff]
  %v8649 = vld [vmem:[%s3 + $0x2b0] sm:$0xff]
  %v8650 = vld [vmem:[%s3 + $0x2b8] sm:$0xff]
  %v8651 = vld [vmem:[%s3 + $0x2c0] sm:$0xff]
  %v8652 = vld [vmem:[%s3 + $0x2c8] sm:$0xff]
  %v8653 = vld [vmem:[%s3 + $0x2d0] sm:$0xff]
  %v8654 = vld [vmem:[%s3 + $0x2d8] sm:$0xff]
  %v8655 = vld [vmem:[%s3 + $0x2e0] sm:$0xff]
  %v8656 = vld [vmem:[%s3 + $0x2e8] sm:$0xff]
  %v8657 = vld [vmem:[%s3 + $0x2f0] sm:$0xff]
  %v8658 = vld [vmem:[%s3 + $0x2f8] sm:$0xff]
  %v8659 = vld [vmem:[%s3 + $0x300] sm:$0xff]
  %v8660 = vld [vmem:[%s3 + $0x308] sm:$0xff]
  %v8661 = vld [vmem:[%s3 + $0x310] sm:$0xff]
  %v8662 = vld [vmem:[%s3 + $0x318] sm:$0xff]
  %v8663 = vld [vmem:[%s3 + $0x320] sm:$0xff]
  %v8664 = vld [vmem:[%s3 + $0x328] sm:$0xff]
  %v8665 = vld [vmem:[%s3 + $0x330] sm:$0xff]
  %v8666 = vld [vmem:[%s3 + $0x338] sm:$0xff]
  %v8667 = vld [vmem:[%s3 + $0x340] sm:$0xff]
  %v8668 = vld [vmem:[%s3 + $0x348] sm:$0xff]
  %v8669 = vld [vmem:[%s3 + $0x350] sm:$0xff]
  %v8670 = vld [vmem:[%s3 + $0x358] sm:$0xff]
  %v8671 = vld [vmem:[%s3 + $0x360] sm:$0xff]
  %v8672 = vld [vmem:[%s3 + $0x368] sm:$0xff]
  %v8673 = vld [vmem:[%s3 + $0x370] sm:$0xff]
  %v8674 = vld [vmem:[%s3 + $0x378] sm:$0xff]
  %v8675 = vld [vmem:[%s3 + $0x380] sm:$0xff]
  %v8676 = vld [vmem:[%s3 + $0x388] sm:$0xff]
  %v8677 = vld [vmem:[%s3 + $0x390] sm:$0xff]
  %v8678 = vld [vmem:[%s3 + $0x398] sm:$0xff]
  %v8679 = vld [vmem:[%s3 + $0x3a0] sm:$0xff]
  %v8680 = vld [vmem:[%s3 + $0x3a8] sm:$0xff]
  %v8681 = vld [vmem:[%s3 + $0x3b0] sm:$0xff]
  %v8682 = vld [vmem:[%s3 + $0x3b8] sm:$0xff]
  %v8683 = vld [vmem:[%s3 + $0x3c0] sm:$0xff]
  %v8684 = vld [vmem:[%s3 + $0x3c8] sm:$0xff]
  %v8685 = vld [vmem:[%s3 + $0x3d0] sm:$0xff]
  %v8686 = vld [vmem:[%s3 + $0x3d8] sm:$0xff]
  %v8687 = vld [vmem:[%s3 + $0x3e0] sm:$0xff]
  %v8688 = vld [vmem:[%s3 + $0x3e8] sm:$0xff]
  %v8689 = vld [vmem:[%s3 + $0x3f0] sm:$0xff]
  %v8690 = vld [vmem:[%s3 + $0x3f8] sm:$0xff]
  %v8691 = vld [vmem:[%s3 + $0x400] sm:$0xff]
  %v8692 = vld [vmem:[%s3 + $0x408] sm:$0xff]
  %v8693 = vld [vmem:[%s3 + $0x410] sm:$0xff]
  %v8694 = vld [vmem:[%s3 + $0x418] sm:$0xff]
  %v8695 = vld [vmem:[%s3 + $0x420] sm:$0xff]
  %v8696 = vld [vmem:[%s3 + $0x428] sm:$0xff]
  %v8697 = vld [vmem:[%s3 + $0x430] sm:$0xff]
  %v8698 = vld [vmem:[%s3 + $0x438] sm:$0xff]
  %v8699 = vld [vmem:[%s3 + $0x440] sm:$0xff]
  %v8700 = vld [vmem:[%s3 + $0x448] sm:$0xff]
  %v8701 = vld [vmem:[%s3 + $0x450] sm:$0xff]
  %v8702 = vld [vmem:[%s3 + $0x458] sm:$0xff]
  %v8703 = vld [vmem:[%s3 + $0x460] sm:$0xff]
  %v8704 = vld [vmem:[%s3 + $0x468] sm:$0xff]
  %v8705 = vld [vmem:[%s3 + $0x470] sm:$0xff]
  %v8706 = vld [vmem:[%s3 + $0x478] sm:$0xff]
  %v8707 = vld [vmem:[%s3 + $0x480] sm:$0xff]
  %v8708 = vld [vmem:[%s3 + $0x488] sm:$0xff]
  %v8709 = vld [vmem:[%s3 + $0x490] sm:$0xff]
  %v8710 = vld [vmem:[%s3 + $0x498] sm:$0xff]
  %v8711 = vld [vmem:[%s3 + $0x4a0] sm:$0xff]
  %v8712 = vld [vmem:[%s3 + $0x4a8] sm:$0xff]
  %v8713 = vld [vmem:[%s3 + $0x4b0] sm:$0xff]
  %v8714 = vld [vmem:[%s3 + $0x4b8] sm:$0xff]
  %v8715 = vld [vmem:[%s3 + $0x4c0] sm:$0xff]
  %v8716 = vld [vmem:[%s3 + $0x4c8] sm:$0xff]
  %v8717 = vld [vmem:[%s3 + $0x4d0] sm:$0xff]
  %v8718 = vld [vmem:[%s3 + $0x4d8] sm:$0xff]
  %v8719 = vld [vmem:[%s3 + $0x4e0] sm:$0xff]
  %v8720 = vld [vmem:[%s3 + $0x4e8] sm:$0xff]
  %v8721 = vld [vmem:[%s3 + $0x4f0] sm:$0xff]
  %v8722 = vld [vmem:[%s3 + $0x4f8] sm:$0xff]
  %8723 = vmatprep.subr.mxu0 %v8564
  %8724 = vmatpush1.msra.mxu0 %v8563
  %8725 = vmatprep.subr.mxu0 %v8566
  %8726 = vmatpush1.msra.mxu0 %v8565
  %8727 = vmatprep.subr.mxu0 %v8568
  %8728 = vmatpush1.msra.mxu0 %v8567
  %8729 = vmatprep.subr.mxu0 %v8570
  %8730 = vmatpush1.msra.mxu0 %v8569
  %8731 = vmatprep.subr.mxu0 %v8572
  %8732 = vmatpush1.msra.mxu0 %v8571
  %8733 = vmatprep.subr.mxu0 %v8574
  %8734 = vmatpush1.msra.mxu0 %v8573
  %8735 = vmatprep.subr.mxu0 %v8576
  %8736 = vmatpush1.msra.mxu0 %v8575
  %8737 = vmatprep.subr.mxu0 %v8578
  %8738 = vmatpush1.msra.mxu0 %v8577
  %8739 = vmatprep.subr.mxu0 %v8580
  %8740 = vmatpush1.msra.mxu0 %v8579
  %8741 = vmatprep.subr.mxu0 %v8582
  %8742 = vmatpush1.msra.mxu0 %v8581
  %8743 = vmatprep.subr.mxu0 %v8584
  %8744 = vmatpush1.msra.mxu0 %v8583
  %8745 = vmatprep.subr.mxu0 %v8586
  %8746 = vmatpush1.msra.mxu0 %v8585
  %8747 = vmatprep.subr.mxu0 %v8588
  %8748 = vmatpush1.msra.mxu0 %v8587
  %8749 = vmatprep.subr.mxu0 %v8590
  %8750 = vmatpush1.msra.mxu0 %v8589
  %8751 = vmatprep.subr.mxu0 %v8592
  %8752 = vmatpush1.msra.mxu0 %v8591
  %8753 = vmatprep.subr.mxu0 %v8594
  %8754 = vmatpush1.msra.mxu0 %v8593
  %8755 = vmatprep.subr.mxu0 %v8596
  %8756 = vmatpush1.msra.mxu0 %v8595
  %8757 = vmatprep.subr.mxu0 %v8598
  %8758 = vmatpush1.msra.mxu0 %v8597
  %8759 = vmatprep.subr.mxu0 %v8600
  %8760 = vmatpush1.msra.mxu0 %v8599
  %8761 = vmatprep.subr.mxu0 %v8602
  %8762 = vmatpush1.msra.mxu0 %v8601
  %8763 = vmatprep.subr.mxu0 %v8604
  %8764 = vmatpush1.msra.mxu0 %v8603
  %8765 = vmatprep.subr.mxu0 %v8606
  %8766 = vmatpush1.msra.mxu0 %v8605
  %8767 = vmatprep.subr.mxu0 %v8608
  %8768 = vmatpush1.msra.mxu0 %v8607
  %8769 = vmatprep.subr.mxu0 %v8610
  %8770 = vmatpush1.msra.mxu0 %v8609
  %8771 = vmatprep.subr.mxu0 %v8612
  %8772 = vmatpush1.msra.mxu0 %v8611
  %8773 = vmatprep.subr.mxu0 %v8614
  %8774 = vmatpush1.msra.mxu0 %v8613
  %8775 = vmatprep.subr.mxu0 %v8616
  %8776 = vmatpush1.msra.mxu0 %v8615
  %8777 = vmatprep.subr.mxu0 %v8618
  %8778 = vmatpush1.msra.mxu0 %v8617
  %8779 = vmatprep.subr.mxu0 %v8620
  %8780 = vmatpush1.msra.mxu0 %v8619
  %8781 = vmatprep.subr.mxu0 %v8622
  %8782 = vmatpush1.msra.mxu0 %v8621
  %8783 = vmatprep.subr.mxu0 %v8624
  %8784 = vmatpush1.msra.mxu0 %v8623
  %8785 = vmatprep.subr.mxu0 %v8626
  %8786 = vmatpush1.msra.mxu0 %v8625
  %8787 = vmatprep.mubr.f32.mxu0 %v8559
  %8788 = vmatmul.mubr.f32.gmra.mrb[0].mxu0 %v8558
  %v8789 = vpop.f32.mrb[0].mxu0
  %v8790 = vadd.f32 0.0, %v8789
  %v8791 = vpop.f32.mrb[0].mxu0
  %v8792 = vadd.f32 0.0, %v8791
  %8793 = vdwg.mxu0
  %8794 = vmatprep.subr.mxu0 %v8628
  %8795 = vmatpush1.msra.mxu0 %v8627
  %8796 = vmatprep.subr.mxu0 %v8630
  %8797 = vmatpush1.msra.mxu0 %v8629
  %8798 = vmatprep.subr.mxu0 %v8632
  %8799 = vmatpush1.msra.mxu0 %v8631
  %8800 = vmatprep.subr.mxu0 %v8634
  %8801 = vmatpush1.msra.mxu0 %v8633
  %8802 = vmatprep.subr.mxu0 %v8636
  %8803 = vmatpush1.msra.mxu0 %v8635
  %8804 = vmatprep.subr.mxu0 %v8638
  %8805 = vmatpush1.msra.mxu0 %v8637
  %8806 = vmatprep.subr.mxu0 %v8640
  %8807 = vmatpush1.msra.mxu0 %v8639
  %8808 = vmatprep.subr.mxu0 %v8642
  %8809 = vmatpush1.msra.mxu0 %v8641
  %8810 = vmatprep.subr.mxu0 %v8644
  %8811 = vmatpush1.msra.mxu0 %v8643
  %8812 = vmatprep.subr.mxu0 %v8646
  %8813 = vmatpush1.msra.mxu0 %v8645
  %8814 = vmatprep.subr.mxu0 %v8648
  %8815 = vmatpush1.msra.mxu0 %v8647
  %8816 = vmatprep.subr.mxu0 %v8650
  %8817 = vmatpush1.msra.mxu0 %v8649
  %8818 = vmatprep.subr.mxu0 %v8652
  %8819 = vmatpush1.msra.mxu0 %v8651
  %8820 = vmatprep.subr.mxu0 %v8654
  %8821 = vmatpush1.msra.mxu0 %v8653
  %8822 = vmatprep.subr.mxu0 %v8656
  %8823 = vmatpush1.msra.mxu0 %v8655
  %8824 = vmatprep.subr.mxu0 %v8658
  %8825 = vmatpush1.msra.mxu0 %v8657
  %8826 = vmatprep.subr.mxu0 %v8660
  %8827 = vmatpush1.msra.mxu0 %v8659
  %8828 = vmatprep.subr.mxu0 %v8662
  %8829 = vmatpush1.msra.mxu0 %v8661
  %8830 = vmatprep.subr.mxu0 %v8664
  %8831 = vmatpush1.msra.mxu0 %v8663
  %8832 = vmatprep.subr.mxu0 %v8666
  %8833 = vmatpush1.msra.mxu0 %v8665
  %8834 = vmatprep.subr.mxu0 %v8668
  %8835 = vmatpush1.msra.mxu0 %v8667
  %8836 = vmatprep.subr.mxu0 %v8670
  %8837 = vmatpush1.msra.mxu0 %v8669
  %8838 = vmatprep.subr.mxu0 %v8672
  %8839 = vmatpush1.msra.mxu0 %v8671
  %8840 = vmatprep.subr.mxu0 %v8674
  %8841 = vmatpush1.msra.mxu0 %v8673
  %8842 = vmatprep.subr.mxu0 %v8676
  %8843 = vmatpush1.msra.mxu0 %v8675
  %8844 = vmatprep.subr.mxu0 %v8678
  %8845 = vmatpush1.msra.mxu0 %v8677
  %8846 = vmatprep.subr.mxu0 %v8680
  %8847 = vmatpush1.msra.mxu0 %v8679
  %8848 = vmatprep.subr.mxu0 %v8682
  %8849 = vmatpush1.msra.mxu0 %v8681
  %8850 = vmatprep.subr.mxu0 %v8684
  %8851 = vmatpush1.msra.mxu0 %v8683
  %8852 = vmatprep.subr.mxu0 %v8686
  %8853 = vmatpush1.msra.mxu0 %v8685
  %8854 = vmatprep.subr.mxu0 %v8688
  %8855 = vmatpush1.msra.mxu0 %v8687
  %8856 = vmatprep.subr.mxu0 %v8690
  %8857 = vmatpush1.msra.mxu0 %v8689
  %8858 = vmatprep.mubr.f32.mxu0 %v8561
  %8859 = vmatmul.mubr.f32.gmra.mrb[0].mxu0 %v8560
  %v8860 = vpop.f32.mrb[0].mxu0
  %v8861 = vadd.f32 %v8790, %v8860
  %v8862 = vpop.f32.mrb[0].mxu0
  %v8863 = vadd.f32 %v8792, %v8862
  %8864 = vdwg.mxu0
  %8865 = vmatprep.subr.mxu0 %v8692
  %8866 = vmatpush1.msra.mxu0 %v8691
  %8867 = vmatprep.subr.mxu0 %v8694
  %8868 = vmatpush1.msra.mxu0 %v8693
  %8869 = vmatprep.subr.mxu0 %v8696
  %8870 = vmatpush1.msra.mxu0 %v8695
  %8871 = vmatprep.subr.mxu0 %v8698
  %8872 = vmatpush1.msra.mxu0 %v8697
  %8873 = vmatprep.subr.mxu0 %v8700
  %8874 = vmatpush1.msra.mxu0 %v8699
  %8875 = vmatprep.subr.mxu0 %v8702
  %8876 = vmatpush1.msra.mxu0 %v8701
  %8877 = vmatprep.subr.mxu0 %v8704
  %8878 = vmatpush1.msra.mxu0 %v8703
  %8879 = vmatprep.subr.mxu0 %v8706
  %8880 = vmatpush1.msra.mxu0 %v8705
  %8881 = vmatprep.subr.mxu0 %v8708
  %8882 = vmatpush1.msra.mxu0 %v8707
  %8883 = vmatprep.subr.mxu0 %v8710
  %8884 = vmatpush1.msra.mxu0 %v8709
  %8885 = vmatprep.subr.mxu0 %v8712
  %8886 = vmatpush1.msra.mxu0 %v8711
  %8887 = vmatprep.subr.mxu0 %v8714
  %8888 = vmatpush1.msra.mxu0 %v8713
  %8889 = vmatprep.subr.mxu0 %v8716
  %8890 = vmatpush1.msra.mxu0 %v8715
  %8891 = vmatprep.subr.mxu0 %v8718
  %8892 = vmatpush1.msra.mxu0 %v8717
  %8893 = vmatprep.subr.mxu0 %v8720
  %8894 = vmatpush1.msra.mxu0 %v8719
  %8895 = vmatprep.subr.mxu0 %v8722
  %8896 = vmatpush1.msra.mxu0 %v8721
  %8897 = vmatprep.subr.mxu0 0.0
  %8898 = vmatpush1.msra.mxu0 0.0
  %8899 = vmatprep.subr.mxu0 0.0
  %8900 = vmatpush1.msra.mxu0 0.0
  %8901 = vmatprep.subr.mxu0 0.0
  %8902 = vmatpush1.msra.mxu0 0.0
  %8903 = vmatprep.subr.mxu0 0.0
  %8904 = vmatpush1.msra.mxu0 0.0
  %8905 = vmatprep.subr.mxu0 0.0
  %8906 = vmatpush1.msra.mxu0 0.0
  %8907 = vmatprep.subr.mxu0 0.0
  %8908 = vmatpush1.msra.mxu0 0.0
  %8909 = vmatprep.subr.mxu0 0.0
  %8910 = vmatpush1.msra.mxu0 0.0
  %8911 = vmatprep.subr.mxu0 0.0
  %8912 = vmatpush1.msra.mxu0 0.0
  %8913 = vmatprep.subr.mxu0 0.0
  %8914 = vmatpush1.msra.mxu0 0.0
  %8915 = vmatprep.subr.mxu0 0.0
  %8916 = vmatpush1.msra.mxu0 0.0
  %8917 = vmatprep.subr.mxu0 0.0
  %8918 = vmatpush1.msra.mxu0 0.0
  %8919 = vmatprep.subr.mxu0 0.0
  %8920 = vmatpush1.msra.mxu0 0.0
  %8921 = vmatprep.subr.mxu0 0.0
  %8922 = vmatpush1.msra.mxu0 0.0
  %8923 = vmatprep.subr.mxu0 0.0
  %8924 = vmatpush1.msra.mxu0 0.0
  %8925 = vmatprep.subr.mxu0 0.0
  %8926 = vmatpush1.msra.mxu0 0.0
  %8927 = vmatprep.subr.mxu0 0.0
  %8928 = vmatpush1.msra.mxu0 0.0
  %8929 = vmatprep.mubr.f32.mxu0 0.0
  %8930 = vmatmul.mubr.f32.gmra.mrb[0].mxu0 %v8562
  %v8931 = vpop.f32.mrb[0].mxu0
  %v8932 = vadd.f32 %v8861, %v8931
  %v8933 = vpop.f32.mrb[0].mxu0
  %v8934 = vadd.f32 %v8863, %v8933
  %8935 = vdwg.mxu0
  %v8936 = vld [vmem:[#allocation2 + $0x28] sm:$0xff]
  %v8937 = vld [vmem:[#allocation2 + $0x30] sm:$0xff]
  %v8938 = vld [vmem:[#allocation2 + $0x38] sm:$0xff]
  %v8939 = vld [vmem:[#allocation2 + $0x40] sm:$0xff]
  %v8940 = vld [vmem:[#allocation2 + $0x48] sm:$0xff]
  %8941 = vmatprep.subr.mxu0 %v8564
  %8942 = vmatpush1.msra.mxu0 %v8563
  %8943 = vmatprep.subr.mxu0 %v8566
  %8944 = vmatpush1.msra.mxu0 %v8565
  %8945 = vmatprep.subr.mxu0 %v8568
  %8946 = vmatpush1.msra.mxu0 %v8567
  %8947 = vmatprep.subr.mxu0 %v8570
  %8948 = vmatpush1.msra.mxu0 %v8569
  %8949 = vmatprep.subr.mxu0 %v8572
  %8950 = vmatpush1.msra.mxu0 %v8571
  %8951 = vmatprep.subr.mxu0 %v8574
  %8952 = vmatpush1.msra.mxu0 %v8573
  %8953 = vmatprep.subr.mxu0 %v8576
  %8954 = vmatpush1.msra.mxu0 %v8575
  %8955 = vmatprep.subr.mxu0 %v8578
  %8956 = vmatpush1.msra.mxu0 %v8577
  %8957 = vmatprep.subr.mxu0 %v8580
  %8958 = vmatpush1.msra.mxu0 %v8579
  %8959 = vmatprep.subr.mxu0 %v8582
  %8960 = vmatpush1.msra.mxu0 %v8581
  %8961 = vmatprep.subr.mxu0 %v8584
  %8962 = vmatpush1.msra.mxu0 %v8583
  %8963 = vmatprep.subr.mxu0 %v8586
  %8964 = vmatpush1.msra.mxu0 %v8585
  %8965 = vmatprep.subr.mxu0 %v8588
  %8966 = vmatpush1.msra.mxu0 %v8587
  %8967 = vmatprep.subr.mxu0 %v8590
  %8968 = vmatpush1.msra.mxu0 %v8589
  %8969 = vmatprep.subr.mxu0 %v8592
  %8970 = vmatpush1.msra.mxu0 %v8591
  %8971 = vmatprep.subr.mxu0 %v8594
  %8972 = vmatpush1.msra.mxu0 %v8593
  %8973 = vmatprep.subr.mxu0 %v8596
  %8974 = vmatpush1.msra.mxu0 %v8595
  %8975 = vmatprep.subr.mxu0 %v8598
  %8976 = vmatpush1.msra.mxu0 %v8597
  %8977 = vmatprep.subr.mxu0 %v8600
  %8978 = vmatpush1.msra.mxu0 %v8599
  %8979 = vmatprep.subr.mxu0 %v8602
  %8980 = vmatpush1.msra.mxu0 %v8601
  %8981 = vmatprep.subr.mxu0 %v8604
  %8982 = vmatpush1.msra.mxu0 %v8603
  %8983 = vmatprep.subr.mxu0 %v8606
  %8984 = vmatpush1.msra.mxu0 %v8605
  %8985 = vmatprep.subr.mxu0 %v8608
  %8986 = vmatpush1.msra.mxu0 %v8607
  %8987 = vmatprep.subr.mxu0 %v8610
  %8988 = vmatpush1.msra.mxu0 %v8609
  %8989 = vmatprep.subr.mxu0 %v8612
  %8990 = vmatpush1.msra.mxu0 %v8611
  %8991 = vmatprep.subr.mxu0 %v8614
  %8992 = vmatpush1.msra.mxu0 %v8613
  %8993 = vmatprep.subr.mxu0 %v8616
  %8994 = vmatpush1.msra.mxu0 %v8615
  %8995 = vmatprep.subr.mxu0 %v8618
  %8996 = vmatpush1.msra.mxu0 %v8617
  %8997 = vmatprep.subr.mxu0 %v8620
  %8998 = vmatpush1.msra.mxu0 %v8619
  %8999 = vmatprep.subr.mxu0 %v8622
  %9000 = vmatpush1.msra.mxu0 %v8621
  %9001 = vmatprep.subr.mxu0 %v8624
  %9002 = vmatpush1.msra.mxu0 %v8623
  %9003 = vmatprep.subr.mxu0 %v8626
  %9004 = vmatpush1.msra.mxu0 %v8625
  %9005 = vmatprep.mubr.f32.mxu0 %v8937
  %9006 = vmatmul.mubr.f32.gmra.mrb[0].mxu0 %v8936
  %v9007 = vpop.f32.mrb[0].mxu0
  %v9008 = vadd.f32 0.0, %v9007
  %v9009 = vpop.f32.mrb[0].mxu0
  %v9010 = vadd.f32 0.0, %v9009
  %9011 = vdwg.mxu0
  %9012 = vmatprep.subr.mxu0 %v8628
  %9013 = vmatpush1.msra.mxu0 %v8627
  %9014 = vmatprep.subr.mxu0 %v8630
  %9015 = vmatpush1.msra.mxu0 %v8629
  %9016 = vmatprep.subr.mxu0 %v8632
  %9017 = vmatpush1.msra.mxu0 %v8631
  %9018 = vmatprep.subr.mxu0 %v8634
  %9019 = vmatpush1.msra.mxu0 %v8633
  %9020 = vmatprep.subr.mxu0 %v8636
  %9021 = vmatpush1.msra.mxu0 %v8635
  %9022 = vmatprep.subr.mxu0 %v8638
  %9023 = vmatpush1.msra.mxu0 %v8637
  %9024 = vmatprep.subr.mxu0 %v8640
  %9025 = vmatpush1.msra.mxu0 %v8639
  %9026 = vmatprep.subr.mxu0 %v8642
  %9027 = vmatpush1.msra.mxu0 %v8641
  %9028 = vmatprep.subr.mxu0 %v8644
  %9029 = vmatpush1.msra.mxu0 %v8643
  %9030 = vmatprep.subr.mxu0 %v8646
  %9031 = vmatpush1.msra.mxu0 %v8645
  %9032 = vmatprep.subr.mxu0 %v8648
  %9033 = vmatpush1.msra.mxu0 %v8647
  %9034 = vmatprep.subr.mxu0 %v8650
  %9035 = vmatpush1.msra.mxu0 %v8649
  %9036 = vmatprep.subr.mxu0 %v8652
  %9037 = vmatpush1.msra.mxu0 %v8651
  %9038 = vmatprep.subr.mxu0 %v8654
  %9039 = vmatpush1.msra.mxu0 %v8653
  %9040 = vmatprep.subr.mxu0 %v8656
  %9041 = vmatpush1.msra.mxu0 %v8655
  %9042 = vmatprep.subr.mxu0 %v8658
  %9043 = vmatpush1.msra.mxu0 %v8657
  %9044 = vmatprep.subr.mxu0 %v8660
  %9045 = vmatpush1.msra.mxu0 %v8659
  %9046 = vmatprep.subr.mxu0 %v8662
  %9047 = vmatpush1.msra.mxu0 %v8661
  %9048 = vmatprep.subr.mxu0 %v8664
  %9049 = vmatpush1.msra.mxu0 %v8663
  %9050 = vmatprep.subr.mxu0 %v8666
  %9051 = vmatpush1.msra.mxu0 %v8665
  %9052 = vmatprep.subr.mxu0 %v8668
  %9053 = vmatpush1.msra.mxu0 %v8667
  %9054 = vmatprep.subr.mxu0 %v8670
  %9055 = vmatpush1.msra.mxu0 %v8669
  %9056 = vmatprep.subr.mxu0 %v8672
  %9057 = vmatpush1.msra.mxu0 %v8671
  %9058 = vmatprep.subr.mxu0 %v8674
  %9059 = vmatpush1.msra.mxu0 %v8673
  %9060 = vmatprep.subr.mxu0 %v8676
  %9061 = vmatpush1.msra.mxu0 %v8675
  %9062 = vmatprep.subr.mxu0 %v8678
  %9063 = vmatpush1.msra.mxu0 %v8677
  %9064 = vmatprep.subr.mxu0 %v8680
  %9065 = vmatpush1.msra.mxu0 %v8679
  %9066 = vmatprep.subr.mxu0 %v8682
  %9067 = vmatpush1.msra.mxu0 %v8681
  %9068 = vmatprep.subr.mxu0 %v8684
  %9069 = vmatpush1.msra.mxu0 %v8683
  %9070 = vmatprep.subr.mxu0 %v8686
  %9071 = vmatpush1.msra.mxu0 %v8685
  %9072 = vmatprep.subr.mxu0 %v8688
  %9073 = vmatpush1.msra.mxu0 %v8687
  %9074 = vmatprep.subr.mxu0 %v8690
  %9075 = vmatpush1.msra.mxu0 %v8689
  %9076 = vmatprep.mubr.f32.mxu0 %v8939
  %9077 = vmatmul.mubr.f32.gmra.mrb[0].mxu0 %v8938
  %v9078 = vpop.f32.mrb[0].mxu0
  %v9079 = vadd.f32 %v9008, %v9078
  %v9080 = vpop.f32.mrb[0].mxu0
  %v9081 = vadd.f32 %v9010, %v9080
  %9082 = vdwg.mxu0
  %9083 = vmatprep.subr.mxu0 %v8692
  %9084 = vmatpush1.msra.mxu0 %v8691
  %9085 = vmatprep.subr.mxu0 %v8694
  %9086 = vmatpush1.msra.mxu0 %v8693
  %9087 = vmatprep.subr.mxu0 %v8696
  %9088 = vmatpush1.msra.mxu0 %v8695
  %9089 = vmatprep.subr.mxu0 %v8698
  %9090 = vmatpush1.msra.mxu0 %v8697
  %9091 = vmatprep.subr.mxu0 %v8700
  %9092 = vmatpush1.msra.mxu0 %v8699
  %9093 = vmatprep.subr.mxu0 %v8702
  %9094 = vmatpush1.msra.mxu0 %v8701
  %9095 = vmatprep.subr.mxu0 %v8704
  %9096 = vmatpush1.msra.mxu0 %v8703
  %9097 = vmatprep.subr.mxu0 %v8706
  %9098 = vmatpush1.msra.mxu0 %v8705
  %9099 = vmatprep.subr.mxu0 %v8708
  %9100 = vmatpush1.msra.mxu0 %v8707
  %9101 = vmatprep.subr.mxu0 %v8710
  %9102 = vmatpush1.msra.mxu0 %v8709
  %9103 = vmatprep.subr.mxu0 %v8712
  %9104 = vmatpush1.msra.mxu0 %v8711
  %9105 = vmatprep.subr.mxu0 %v8714
  %9106 = vmatpush1.msra.mxu0 %v8713
  %9107 = vmatprep.subr.mxu0 %v8716
  %9108 = vmatpush1.msra.mxu0 %v8715
  %9109 = vmatprep.subr.mxu0 %v8718
  %9110 = vmatpush1.msra.mxu0 %v8717
  %9111 = vmatprep.subr.mxu0 %v8720
  %9112 = vmatpush1.msra.mxu0 %v8719
  %9113 = vmatprep.subr.mxu0 %v8722
  %9114 = vmatpush1.msra.mxu0 %v8721
  %9115 = vmatprep.subr.mxu0 0.0
  %9116 = vmatpush1.msra.mxu0 0.0
  %9117 = vmatprep.subr.mxu0 0.0
  %9118 = vmatpush1.msra.mxu0 0.0
  %9119 = vmatprep.subr.mxu0 0.0
  %9120 = vmatpush1.msra.mxu0 0.0
  %9121 = vmatprep.subr.mxu0 0.0
  %9122 = vmatpush1.msra.mxu0 0.0
  %9123 = vmatprep.subr.mxu0 0.0
  %9124 = vmatpush1.msra.mxu0 0.0
  %9125 = vmatprep.subr.mxu0 0.0
  %9126 = vmatpush1.msra.mxu0 0.0
  %9127 = vmatprep.subr.mxu0 0.0
  %9128 = vmatpush1.msra.mxu0 0.0
  %9129 = vmatprep.subr.mxu0 0.0
  %9130 = vmatpush1.msra.mxu0 0.0
  %9131 = vmatprep.subr.mxu0 0.0
  %9132 = vmatpush1.msra.mxu0 0.0
  %9133 = vmatprep.subr.mxu0 0.0
  %9134 = vmatpush1.msra.mxu0 0.0
  %9135 = vmatprep.subr.mxu0 0.0
  %9136 = vmatpush1.msra.mxu0 0.0
  %9137 = vmatprep.subr.mxu0 0.0
  %9138 = vmatpush1.msra.mxu0 0.0
  %9139 = vmatprep.subr.mxu0 0.0
  %9140 = vmatpush1.msra.mxu0 0.0
  %9141 = vmatprep.subr.mxu0 0.0
  %9142 = vmatpush1.msra.mxu0 0.0
  %9143 = vmatprep.subr.mxu0 0.0
  %9144 = vmatpush1.msra.mxu0 0.0
  %9145 = vmatprep.subr.mxu0 0.0
  %9146 = vmatpush1.msra.mxu0 0.0
  %9147 = vmatprep.mubr.f32.mxu0 0.0
  %9148 = vmatmul.mubr.f32.gmra.mrb[0].mxu0 %v8940
  %v9149 = vpop.f32.mrb[0].mxu0
  %v9150 = vadd.f32 %v9079, %v9149
  %v9151 = vpop.f32.mrb[0].mxu0
  %v9152 = vadd.f32 %v9081, %v9151
  %9153 = vdwg.mxu0
  %v9154 = vmax.f32 %v8932, %v9150
  %v9155 = vmax.f32 %v8934, %v9152
  %v9156 = vmax.f32 %v9154, %v9155
  %v9157 = vld [vmem:[%s4] sm:$0x1]
  %v9159 = vlaneseq
  %v9160 = vshrl.u32 %v9159, 7
  %v9161 = vsub.s32 0, %v9160
  %v9162 = vrot.slane %v9157, %v9161
  %v9164 = vadd.f32 %v9156, %v9162
  %v9165 = vmax.f32 %v9164, 0.0
  %9166 = vst [vmem:[#allocation3 + $0x10] sm:$0xff] %v9165
  %v9167 = vld [vmem:[#allocation2 + $0x30] sm:$0xff]
  %v9168 = vld [vmem:[#allocation2 + $0x38] sm:$0xff]
  %v9169 = vld [vmem:[#allocation2 + $0x40] sm:$0xff]
  %v9170 = vld [vmem:[#allocation2 + $0x48] sm:$0xff]
  %v9171 = vld [vmem:[#allocation2 + $0x50] sm:$0xff]
  %v9172 = vld [vmem:[%s3] sm:$0xff]
  %v9173 = vld [vmem:[%s3 + $0x8] sm:$0xff]
  %v9174 = vld [vmem:[%s3 + $0x10] sm:$0xff]
  %v9175 = vld [vmem:[%s3 + $0x18] sm:$0xff]
  %v9176 = vld [vmem:[%s3 + $0x20] sm:$0xff]
  %v9177 = vld [vmem:[%s3 + $0x28] sm:$0xff]
  %v9178 = vld [vmem:[%s3 + $0x30] sm:$0xff]
  %v9179 = vld [vmem:[%s3 + $0x38] sm:$0xff]
  %v9180 = vld [vmem:[%s3 + $0x40] sm:$0xff]
  %v9181 = vld [vmem:[%s3 + $0x48] sm:$0xff]
  %v9182 = vld [vmem:[%s3 + $0x50] sm:$0xff]
  %v9183 = vld [vmem:[%s3 + $0x58] sm:$0xff]
  %v9184 = vld [vmem:[%s3 + $0x60] sm:$0xff]
  %v9185 = vld [vmem:[%s3 + $0x68] sm:$0xff]
  %v9186 = vld [vmem:[%s3 + $0x70] sm:$0xff]
  %v9187 = vld [vmem:[%s3 + $0x78] sm:$0xff]
  %v9188 = vld [vmem:[%s3 + $0x80] sm:$0xff]
  %v9189 = vld [vmem:[%s3 + $0x88] sm:$0xff]
  %v9190 = vld [vmem:[%s3 + $0x90] sm:$0xff]
  %v9191 = vld [vmem:[%s3 + $0x98] sm:$0xff]
  %v9192 = vld [vmem:[%s3 + $0xa0] sm:$0xff]
  %v9193 = vld [vmem:[%s3 + $0xa8] sm:$0xff]
  %v9194 = vld [vmem:[%s3 + $0xb0] sm:$0xff]
  %v9195 = vld [vmem:[%s3 + $0xb8] sm:$0xff]
  %v9196 = vld [vmem:[%s3 + $0xc0] sm:$0xff]
  %v9197 = vld [vmem:[%s3 + $0xc8] sm:$0xff]
  %v9198 = vld [vmem:[%s3 + $0xd0] sm:$0xff]
  %v9199 = vld [vmem:[%s3 + $0xd8] sm:$0xff]
  %v9200 = vld [vmem:[%s3 + $0xe0] sm:$0xff]
  %v9201 = vld [vmem:[%s3 + $0xe8] sm:$0xff]
  %v9202 = vld [vmem:[%s3 + $0xf0] sm:$0xff]
  %v9203 = vld [vmem:[%s3 + $0xf8] sm:$0xff]
  %v9204 = vld [vmem:[%s3 + $0x100] sm:$0xff]
  %v9205 = vld [vmem:[%s3 + $0x108] sm:$0xff]
  %v9206 = vld [vmem:[%s3 + $0x110] sm:$0xff]
  %v9207 = vld [vmem:[%s3 + $0x118] sm:$0xff]
  %v9208 = vld [vmem:[%s3 + $0x120] sm:$0xff]
  %v9209 = vld [vmem:[%s3 + $0x128] sm:$0xff]
  %v9210 = vld [vmem:[%s3 + $0x130] sm:$0xff]
  %v9211 = vld [vmem:[%s3 + $0x138] sm:$0xff]
  %v9212 = vld [vmem:[%s3 + $0x140] sm:$0xff]
  %v9213 = vld [vmem:[%s3 + $0x148] sm:$0xff]
  %v9214 = vld [vmem:[%s3 + $0x150] sm:$0xff]
  %v9215 = vld [vmem:[%s3 + $0x158] sm:$0xff]
  %v9216 = vld [vmem:[%s3 + $0x160] sm:$0xff]
  %v9217 = vld [vmem:[%s3 + $0x168] sm:$0xff]
  %v9218 = vld [vmem:[%s3 + $0x170] sm:$0xff]
  %v9219 = vld [vmem:[%s3 + $0x178] sm:$0xff]
  %v9220 = vld [vmem:[%s3 + $0x180] sm:$0xff]
  %v9221 = vld [vmem:[%s3 + $0x188] sm:$0xff]
  %v9222 = vld [vmem:[%s3 + $0x190] sm:$0xff]
  %v9223 = vld [vmem:[%s3 + $0x198] sm:$0xff]
  %v9224 = vld [vmem:[%s3 + $0x1a0] sm:$0xff]
  %v9225 = vld [vmem:[%s3 + $0x1a8] sm:$0xff]
  %v9226 = vld [vmem:[%s3 + $0x1b0] sm:$0xff]
  %v9227 = vld [vmem:[%s3 + $0x1b8] sm:$0xff]
  %v9228 = vld [vmem:[%s3 + $0x1c0] sm:$0xff]
  %v9229 = vld [vmem:[%s3 + $0x1c8] sm:$0xff]
  %v9230 = vld [vmem:[%s3 + $0x1d0] sm:$0xff]
  %v9231 = vld [vmem:[%s3 + $0x1d8] sm:$0xff]
  %v9232 = vld [vmem:[%s3 + $0x1e0] sm:$0xff]
  %v9233 = vld [vmem:[%s3 + $0x1e8] sm:$0xff]
  %v9234 = vld [vmem:[%s3 + $0x1f0] sm:$0xff]
  %v9235 = vld [vmem:[%s3 + $0x1f8] sm:$0xff]
  %v9236 = vld [vmem:[%s3 + $0x200] sm:$0xff]
  %v9237 = vld [vmem:[%s3 + $0x208] sm:$0xff]
  %v9238 = vld [vmem:[%s3 + $0x210] sm:$0xff]
  %v9239 = vld [vmem:[%s3 + $0x218] sm:$0xff]
  %v9240 = vld [vmem:[%s3 + $0x220] sm:$0xff]
  %v9241 = vld [vmem:[%s3 + $0x228] sm:$0xff]
  %v9242 = vld [vmem:[%s3 + $0x230] sm:$0xff]
  %v9243 = vld [vmem:[%s3 + $0x238] sm:$0xff]
  %v9244 = vld [vmem:[%s3 + $0x240] sm:$0xff]
  %v9245 = vld [vmem:[%s3 + $0x248] sm:$0xff]
  %v9246 = vld [vmem:[%s3 + $0x250] sm:$0xff]
  %v9247 = vld [vmem:[%s3 + $0x258] sm:$0xff]
  %v9248 = vld [vmem:[%s3 + $0x260] sm:$0xff]
  %v9249 = vld [vmem:[%s3 + $0x268] sm:$0xff]
  %v9250 = vld [vmem:[%s3 + $0x270] sm:$0xff]
  %v9251 = vld [vmem:[%s3 + $0x278] sm:$0xff]
  %v9252 = vld [vmem:[%s3 + $0x280] sm:$0xff]
  %v9253 = vld [vmem:[%s3 + $0x288] sm:$0xff]
  %v9254 = vld [vmem:[%s3 + $0x290] sm:$0xff]
  %v9255 = vld [vmem:[%s3 + $0x298] sm:$0xff]
  %v9256 = vld [vmem:[%s3 + $0x2a0] sm:$0xff]
  %v9257 = vld [vmem:[%s3 + $0x2a8] sm:$0xff]
  %v9258 = vld [vmem:[%s3 + $0x2b0] sm:$0xff]
  %v9259 = vld [vmem:[%s3 + $0x2b8] sm:$0xff]
  %v9260 = vld [vmem:[%s3 + $0x2c0] sm:$0xff]
  %v9261 = vld [vmem:[%s3 + $0x2c8] sm:$0xff]
  %v9262 = vld [vmem:[%s3 + $0x2d0] sm:$0xff]
  %v9263 = vld [vmem:[%s3 + $0x2d8] sm:$0xff]
  %v9264 = vld [vmem:[%s3 + $0x2e0] sm:$0xff]
  %v9265 = vld [vmem:[%s3 + $0x2e8] sm:$0xff]
  %v9266 = vld [vmem:[%s3 + $0x2f0] sm:$0xff]
  %v9267 = vld [vmem:[%s3 + $0x2f8] sm:$0xff]
  %v9268 = vld [vmem:[%s3 + $0x300] sm:$0xff]
  %v9269 = vld [vmem:[%s3 + $0x308] sm:$0xff]
  %v9270 = vld [vmem:[%s3 + $0x310] sm:$0xff]
  %v9271 = vld [vmem:[%s3 + $0x318] sm:$0xff]
  %v9272 = vld [vmem:[%s3 + $0x320] sm:$0xff]
  %v9273 = vld [vmem:[%s3 + $0x328] sm:$0xff]
  %v9274 = vld [vmem:[%s3 + $0x330] sm:$0xff]
  %v9275 = vld [vmem:[%s3 + $0x338] sm:$0xff]
  %v9276 = vld [vmem:[%s3 + $0x340] sm:$0xff]
  %v9277 = vld [vmem:[%s3 + $0x348] sm:$0xff]
  %v9278 = vld [vmem:[%s3 + $0x350] sm:$0xff]
  %v9279 = vld [vmem:[%s3 + $0x358] sm:$0xff]
  %v9280 = vld [vmem:[%s3 + $0x360] sm:$0xff]
  %v9281 = vld [vmem:[%s3 + $0x368] sm:$0xff]
  %v9282 = vld [vmem:[%s3 + $0x370] sm:$0xff]
  %v9283 = vld [vmem:[%s3 + $0x378] sm:$0xff]
  %v9284 = vld [vmem:[%s3 + $0x380] sm:$0xff]
  %v9285 = vld [vmem:[%s3 + $0x388] sm:$0xff]
  %v9286 = vld [vmem:[%s3 + $0x390] sm:$0xff]
  %v9287 = vld [vmem:[%s3 + $0x398] sm:$0xff]
  %v9288 = vld [vmem:[%s3 + $0x3a0] sm:$0xff]
  %v9289 = vld [vmem:[%s3 + $0x3a8] sm:$0xff]
  %v9290 = vld [vmem:[%s3 + $0x3b0] sm:$0xff]
  %v9291 = vld [vmem:[%s3 + $0x3b8] sm:$0xff]
  %v9292 = vld [vmem:[%s3 + $0x3c0] sm:$0xff]
  %v9293 = vld [vmem:[%s3 + $0x3c8] sm:$0xff]
  %v9294 = vld [vmem:[%s3 + $0x3d0] sm:$0xff]
  %v9295 = vld [vmem:[%s3 + $0x3d8] sm:$0xff]
  %v9296 = vld [vmem:[%s3 + $0x3e0] sm:$0xff]
  %v9297 = vld [vmem:[%s3 + $0x3e8] sm:$0xff]
  %v9298 = vld [vmem:[%s3 + $0x3f0] sm:$0xff]
  %v9299 = vld [vmem:[%s3 + $0x3f8] sm:$0xff]
  %v9300 = vld [vmem:[%s3 + $0x400] sm:$0xff]
  %v9301 = vld [vmem:[%s3 + $0x408] sm:$0xff]
  %v9302 = vld [vmem:[%s3 + $0x410] sm:$0xff]
  %v9303 = vld [vmem:[%s3 + $0x418] sm:$0xff]
  %v9304 = vld [vmem:[%s3 + $0x420] sm:$0xff]
  %v9305 = vld [vmem:[%s3 + $0x428] sm:$0xff]
  %v9306 = vld [vmem:[%s3 + $0x430] sm:$0xff]
  %v9307 = vld [vmem:[%s3 + $0x438] sm:$0xff]
  %v9308 = vld [vmem:[%s3 + $0x440] sm:$0xff]
  %v9309 = vld [vmem:[%s3 + $0x448] sm:$0xff]
  %v9310 = vld [vmem:[%s3 + $0x450] sm:$0xff]
  %v9311 = vld [vmem:[%s3 + $0x458] sm:$0xff]
  %v9312 = vld [vmem:[%s3 + $0x460] sm:$0xff]
  %v9313 = vld [vmem:[%s3 + $0x468] sm:$0xff]
  %v9314 = vld [vmem:[%s3 + $0x470] sm:$0xff]
  %v9315 = vld [vmem:[%s3 + $0x478] sm:$0xff]
  %v9316 = vld [vmem:[%s3 + $0x480] sm:$0xff]
  %v9317 = vld [vmem:[%s3 + $0x488] sm:$0xff]
  %v9318 = vld [vmem:[%s3 + $0x490] sm:$0xff]
  %v9319 = vld [vmem:[%s3 + $0x498] sm:$0xff]
  %v9320 = vld [vmem:[%s3 + $0x4a0] sm:$0xff]
  %v9321 = vld [vmem:[%s3 + $0x4a8] sm:$0xff]
  %v9322 = vld [vmem:[%s3 + $0x4b0] sm:$0xff]
  %v9323 = vld [vmem:[%s3 + $0x4b8] sm:$0xff]
  %v9324 = vld [vmem:[%s3 + $0x4c0] sm:$0xff]
  %v9325 = vld [vmem:[%s3 + $0x4c8] sm:$0xff]
  %v9326 = vld [vmem:[%s3 + $0x4d0] sm:$0xff]
  %v9327 = vld [vmem:[%s3 + $0x4d8] sm:$0xff]
  %v9328 = vld [vmem:[%s3 + $0x4e0] sm:$0xff]
  %v9329 = vld [vmem:[%s3 + $0x4e8] sm:$0xff]
  %v9330 = vld [vmem:[%s3 + $0x4f0] sm:$0xff]
  %v9331 = vld [vmem:[%s3 + $0x4f8] sm:$0xff]
  %9332 = vmatprep.subr.mxu0 %v9173
  %9333 = vmatpush1.msra.mxu0 %v9172
  %9334 = vmatprep.subr.mxu0 %v9175
  %9335 = vmatpush1.msra.mxu0 %v9174
  %9336 = vmatprep.subr.mxu0 %v9177
  %9337 = vmatpush1.msra.mxu0 %v9176
  %9338 = vmatprep.subr.mxu0 %v9179
  %9339 = vmatpush1.msra.mxu0 %v9178
  %9340 = vmatprep.subr.mxu0 %v9181
  %9341 = vmatpush1.msra.mxu0 %v9180
  %9342 = vmatprep.subr.mxu0 %v9183
  %9343 = vmatpush1.msra.mxu0 %v9182
  %9344 = vmatprep.subr.mxu0 %v9185
  %9345 = vmatpush1.msra.mxu0 %v9184
  %9346 = vmatprep.subr.mxu0 %v9187
  %9347 = vmatpush1.msra.mxu0 %v9186
  %9348 = vmatprep.subr.mxu0 %v9189
  %9349 = vmatpush1.msra.mxu0 %v9188
  %9350 = vmatprep.subr.mxu0 %v9191
  %9351 = vmatpush1.msra.mxu0 %v9190
  %9352 = vmatprep.subr.mxu0 %v9193
  %9353 = vmatpush1.msra.mxu0 %v9192
  %9354 = vmatprep.subr.mxu0 %v9195
  %9355 = vmatpush1.msra.mxu0 %v9194
  %9356 = vmatprep.subr.mxu0 %v9197
  %9357 = vmatpush1.msra.mxu0 %v9196
  %9358 = vmatprep.subr.mxu0 %v9199
  %9359 = vmatpush1.msra.mxu0 %v9198
  %9360 = vmatprep.subr.mxu0 %v9201
  %9361 = vmatpush1.msra.mxu0 %v9200
  %9362 = vmatprep.subr.mxu0 %v9203
  %9363 = vmatpush1.msra.mxu0 %v9202
  %9364 = vmatprep.subr.mxu0 %v9205
  %9365 = vmatpush1.msra.mxu0 %v9204
  %9366 = vmatprep.subr.mxu0 %v9207
  %9367 = vmatpush1.msra.mxu0 %v9206
  %9368 = vmatprep.subr.mxu0 %v9209
  %9369 = vmatpush1.msra.mxu0 %v9208
  %9370 = vmatprep.subr.mxu0 %v9211
  %9371 = vmatpush1.msra.mxu0 %v9210
  %9372 = vmatprep.subr.mxu0 %v9213
  %9373 = vmatpush1.msra.mxu0 %v9212
  %9374 = vmatprep.subr.mxu0 %v9215
  %9375 = vmatpush1.msra.mxu0 %v9214
  %9376 = vmatprep.subr.mxu0 %v9217
  %9377 = vmatpush1.msra.mxu0 %v9216
  %9378 = vmatprep.subr.mxu0 %v9219
  %9379 = vmatpush1.msra.mxu0 %v9218
  %9380 = vmatprep.subr.mxu0 %v9221
  %9381 = vmatpush1.msra.mxu0 %v9220
  %9382 = vmatprep.subr.mxu0 %v9223
  %9383 = vmatpush1.msra.mxu0 %v9222
  %9384 = vmatprep.subr.mxu0 %v9225
  %9385 = vmatpush1.msra.mxu0 %v9224
  %9386 = vmatprep.subr.mxu0 %v9227
  %9387 = vmatpush1.msra.mxu0 %v9226
  %9388 = vmatprep.subr.mxu0 %v9229
  %9389 = vmatpush1.msra.mxu0 %v9228
  %9390 = vmatprep.subr.mxu0 %v9231
  %9391 = vmatpush1.msra.mxu0 %v9230
  %9392 = vmatprep.subr.mxu0 %v9233
  %9393 = vmatpush1.msra.mxu0 %v9232
  %9394 = vmatprep.subr.mxu0 %v9235
  %9395 = vmatpush1.msra.mxu0 %v9234
  %9396 = vmatprep.mubr.f32.mxu0 %v9168
  %9397 = vmatmul.mubr.f32.gmra.mrb[0].mxu0 %v9167
  %v9398 = vpop.f32.mrb[0].mxu0
  %v9399 = vadd.f32 0.0, %v9398
  %v9400 = vpop.f32.mrb[0].mxu0
  %v9401 = vadd.f32 0.0, %v9400
  %9402 = vdwg.mxu0
  %9403 = vmatprep.subr.mxu0 %v9237
  %9404 = vmatpush1.msra.mxu0 %v9236
  %9405 = vmatprep.subr.mxu0 %v9239
  %9406 = vmatpush1.msra.mxu0 %v9238
  %9407 = vmatprep.subr.mxu0 %v9241
  %9408 = vmatpush1.msra.mxu0 %v9240
  %9409 = vmatprep.subr.mxu0 %v9243
  %9410 = vmatpush1.msra.mxu0 %v9242
  %9411 = vmatprep.subr.mxu0 %v9245
  %9412 = vmatpush1.msra.mxu0 %v9244
  %9413 = vmatprep.subr.mxu0 %v9247
  %9414 = vmatpush1.msra.mxu0 %v9246
  %9415 = vmatprep.subr.mxu0 %v9249
  %9416 = vmatpush1.msra.mxu0 %v9248
  %9417 = vmatprep.subr.mxu0 %v9251
  %9418 = vmatpush1.msra.mxu0 %v9250
  %9419 = vmatprep.subr.mxu0 %v9253
  %9420 = vmatpush1.msra.mxu0 %v9252
  %9421 = vmatprep.subr.mxu0 %v9255
  %9422 = vmatpush1.msra.mxu0 %v9254
  %9423 = vmatprep.subr.mxu0 %v9257
  %9424 = vmatpush1.msra.mxu0 %v9256
  %9425 = vmatprep.subr.mxu0 %v9259
  %9426 = vmatpush1.msra.mxu0 %v9258
  %9427 = vmatprep.subr.mxu0 %v9261
  %9428 = vmatpush1.msra.mxu0 %v9260
  %9429 = vmatprep.subr.mxu0 %v9263
  %9430 = vmatpush1.msra.mxu0 %v9262
  %9431 = vmatprep.subr.mxu0 %v9265
  %9432 = vmatpush1.msra.mxu0 %v9264
  %9433 = vmatprep.subr.mxu0 %v9267
  %9434 = vmatpush1.msra.mxu0 %v9266
  %9435 = vmatprep.subr.mxu0 %v9269
  %9436 = vmatpush1.msra.mxu0 %v9268
  %9437 = vmatprep.subr.mxu0 %v9271
  %9438 = vmatpush1.msra.mxu0 %v9270
  %9439 = vmatprep.subr.mxu0 %v9273
  %9440 = vmatpush1.msra.mxu0 %v9272
  %9441 = vmatprep.subr.mxu0 %v9275
  %9442 = vmatpush1.msra.mxu0 %v9274
  %9443 = vmatprep.subr.mxu0 %v9277
  %9444 = vmatpush1.msra.mxu0 %v9276
  %9445 = vmatprep.subr.mxu0 %v9279
  %9446 = vmatpush1.msra.mxu0 %v9278
  %9447 = vmatprep.subr.mxu0 %v9281
  %9448 = vmatpush1.msra.mxu0 %v9280
  %9449 = vmatprep.subr.mxu0 %v9283
  %9450 = vmatpush1.msra.mxu0 %v9282
  %9451 = vmatprep.subr.mxu0 %v9285
  %9452 = vmatpush1.msra.mxu0 %v9284
  %9453 = vmatprep.subr.mxu0 %v9287
  %9454 = vmatpush1.msra.mxu0 %v9286
  %9455 = vmatprep.subr.mxu0 %v9289
  %9456 = vmatpush1.msra.mxu0 %v9288
  %9457 = vmatprep.subr.mxu0 %v9291
  %9458 = vmatpush1.msra.mxu0 %v9290
  %9459 = vmatprep.subr.mxu0 %v9293
  %9460 = vmatpush1.msra.mxu0 %v9292
  %9461 = vmatprep.subr.mxu0 %v9295
  %9462 = vmatpush1.msra.mxu0 %v9294
  %9463 = vmatprep.subr.mxu0 %v9297
  %9464 = vmatpush1.msra.mxu0 %v9296
  %9465 = vmatprep.subr.mxu0 %v9299
  %9466 = vmatpush1.msra.mxu0 %v9298
  %9467 = vmatprep.mubr.f32.mxu0 %v9170
  %9468 = vmatmul.mubr.f32.gmra.mrb[0].mxu0 %v9169
  %v9469 = vpop.f32.mrb[0].mxu0
  %v9470 = vadd.f32 %v9399, %v9469
  %v9471 = vpop.f32.mrb[0].mxu0
  %v9472 = vadd.f32 %v9401, %v9471
  %9473 = vdwg.mxu0
  %9474 = vmatprep.subr.mxu0 %v9301
  %9475 = vmatpush1.msra.mxu0 %v9300
  %9476 = vmatprep.subr.mxu0 %v9303
  %9477 = vmatpush1.msra.mxu0 %v9302
  %9478 = vmatprep.subr.mxu0 %v9305
  %9479 = vmatpush1.msra.mxu0 %v9304
  %9480 = vmatprep.subr.mxu0 %v9307
  %9481 = vmatpush1.msra.mxu0 %v9306
  %9482 = vmatprep.subr.mxu0 %v9309
  %9483 = vmatpush1.msra.mxu0 %v9308
  %9484 = vmatprep.subr.mxu0 %v9311
  %9485 = vmatpush1.msra.mxu0 %v9310
  %9486 = vmatprep.subr.mxu0 %v9313
  %9487 = vmatpush1.msra.mxu0 %v9312
  %9488 = vmatprep.subr.mxu0 %v9315
  %9489 = vmatpush1.msra.mxu0 %v9314
  %9490 = vmatprep.subr.mxu0 %v9317
  %9491 = vmatpush1.msra.mxu0 %v9316
  %9492 = vmatprep.subr.mxu0 %v9319
  %9493 = vmatpush1.msra.mxu0 %v9318
  %9494 = vmatprep.subr.mxu0 %v9321
  %9495 = vmatpush1.msra.mxu0 %v9320
  %9496 = vmatprep.subr.mxu0 %v9323
  %9497 = vmatpush1.msra.mxu0 %v9322
  %9498 = vmatprep.subr.mxu0 %v9325
  %9499 = vmatpush1.msra.mxu0 %v9324
  %9500 = vmatprep.subr.mxu0 %v9327
  %9501 = vmatpush1.msra.mxu0 %v9326
  %9502 = vmatprep.subr.mxu0 %v9329
  %9503 = vmatpush1.msra.mxu0 %v9328
  %9504 = vmatprep.subr.mxu0 %v9331
  %9505 = vmatpush1.msra.mxu0 %v9330
  %9506 = vmatprep.subr.mxu0 0.0
  %9507 = vmatpush1.msra.mxu0 0.0
  %9508 = vmatprep.subr.mxu0 0.0
  %9509 = vmatpush1.msra.mxu0 0.0
  %9510 = vmatprep.subr.mxu0 0.0
  %9511 = vmatpush1.msra.mxu0 0.0
  %9512 = vmatprep.subr.mxu0 0.0
  %9513 = vmatpush1.msra.mxu0 0.0
  %9514 = vmatprep.subr.mxu0 0.0
  %9515 = vmatpush1.msra.mxu0 0.0
  %9516 = vmatprep.subr.mxu0 0.0
  %9517 = vmatpush1.msra.mxu0 0.0
  %9518 = vmatprep.subr.mxu0 0.0
  %9519 = vmatpush1.msra.mxu0 0.0
  %9520 = vmatprep.subr.mxu0 0.0
  %9521 = vmatpush1.msra.mxu0 0.0
  %9522 = vmatprep.subr.mxu0 0.0
  %9523 = vmatpush1.msra.mxu0 0.0
  %9524 = vmatprep.subr.mxu0 0.0
  %9525 = vmatpush1.msra.mxu0 0.0
  %9526 = vmatprep.subr.mxu0 0.0
  %9527 = vmatpush1.msra.mxu0 0.0
  %9528 = vmatprep.subr.mxu0 0.0
  %9529 = vmatpush1.msra.mxu0 0.0
  %9530 = vmatprep.subr.mxu0 0.0
  %9531 = vmatpush1.msra.mxu0 0.0
  %9532 = vmatprep.subr.mxu0 0.0
  %9533 = vmatpush1.msra.mxu0 0.0
  %9534 = vmatprep.subr.mxu0 0.0
  %9535 = vmatpush1.msra.mxu0 0.0
  %9536 = vmatprep.subr.mxu0 0.0
  %9537 = vmatpush1.msra.mxu0 0.0
  %9538 = vmatprep.mubr.f32.mxu0 0.0
  %9539 = vmatmul.mubr.f32.gmra.mrb[0].mxu0 %v9171
  %v9540 = vpop.f32.mrb[0].mxu0
  %v9541 = vadd.f32 %v9470, %v9540
  %v9542 = vpop.f32.mrb[0].mxu0
  %v9543 = vadd.f32 %v9472, %v9542
  %9544 = vdwg.mxu0
  %v9545 = vld [vmem:[#allocation2 + $0x38] sm:$0xff]
  %v9546 = vld [vmem:[#allocation2 + $0x40] sm:$0xff]
  %v9547 = vld [vmem:[#allocation2 + $0x48] sm:$0xff]
  %v9548 = vld [vmem:[#allocation2 + $0x50] sm:$0xff]
  %v9549 = vld [vmem:[#allocation2 + $0x58] sm:$0xff]
  %9550 = vmatprep.subr.mxu0 %v9173
  %9551 = vmatpush1.msra.mxu0 %v9172
  %9552 = vmatprep.subr.mxu0 %v9175
  %9553 = vmatpush1.msra.mxu0 %v9174
  %9554 = vmatprep.subr.mxu0 %v9177
  %9555 = vmatpush1.msra.mxu0 %v9176
  %9556 = vmatprep.subr.mxu0 %v9179
  %9557 = vmatpush1.msra.mxu0 %v9178
  %9558 = vmatprep.subr.mxu0 %v9181
  %9559 = vmatpush1.msra.mxu0 %v9180
  %9560 = vmatprep.subr.mxu0 %v9183
  %9561 = vmatpush1.msra.mxu0 %v9182
  %9562 = vmatprep.subr.mxu0 %v9185
  %9563 = vmatpush1.msra.mxu0 %v9184
  %9564 = vmatprep.subr.mxu0 %v9187
  %9565 = vmatpush1.msra.mxu0 %v9186
  %9566 = vmatprep.subr.mxu0 %v9189
  %9567 = vmatpush1.msra.mxu0 %v9188
  %9568 = vmatprep.subr.mxu0 %v9191
  %9569 = vmatpush1.msra.mxu0 %v9190
  %9570 = vmatprep.subr.mxu0 %v9193
  %9571 = vmatpush1.msra.mxu0 %v9192
  %9572 = vmatprep.subr.mxu0 %v9195
  %9573 = vmatpush1.msra.mxu0 %v9194
  %9574 = vmatprep.subr.mxu0 %v9197
  %9575 = vmatpush1.msra.mxu0 %v9196
  %9576 = vmatprep.subr.mxu0 %v9199
  %9577 = vmatpush1.msra.mxu0 %v9198
  %9578 = vmatprep.subr.mxu0 %v9201
  %9579 = vmatpush1.msra.mxu0 %v9200
  %9580 = vmatprep.subr.mxu0 %v9203
  %9581 = vmatpush1.msra.mxu0 %v9202
  %9582 = vmatprep.subr.mxu0 %v9205
  %9583 = vmatpush1.msra.mxu0 %v9204
  %9584 = vmatprep.subr.mxu0 %v9207
  %9585 = vmatpush1.msra.mxu0 %v9206
  %9586 = vmatprep.subr.mxu0 %v9209
  %9587 = vmatpush1.msra.mxu0 %v9208
  %9588 = vmatprep.subr.mxu0 %v9211
  %9589 = vmatpush1.msra.mxu0 %v9210
  %9590 = vmatprep.subr.mxu0 %v9213
  %9591 = vmatpush1.msra.mxu0 %v9212
  %9592 = vmatprep.subr.mxu0 %v9215
  %9593 = vmatpush1.msra.mxu0 %v9214
  %9594 = vmatprep.subr.mxu0 %v9217
  %9595 = vmatpush1.msra.mxu0 %v9216
  %9596 = vmatprep.subr.mxu0 %v9219
  %9597 = vmatpush1.msra.mxu0 %v9218
  %9598 = vmatprep.subr.mxu0 %v9221
  %9599 = vmatpush1.msra.mxu0 %v9220
  %9600 = vmatprep.subr.mxu0 %v9223
  %9601 = vmatpush1.msra.mxu0 %v9222
  %9602 = vmatprep.subr.mxu0 %v9225
  %9603 = vmatpush1.msra.mxu0 %v9224
  %9604 = vmatprep.subr.mxu0 %v9227
  %9605 = vmatpush1.msra.mxu0 %v9226
  %9606 = vmatprep.subr.mxu0 %v9229
  %9607 = vmatpush1.msra.mxu0 %v9228
  %9608 = vmatprep.subr.mxu0 %v9231
  %9609 = vmatpush1.msra.mxu0 %v9230
  %9610 = vmatprep.subr.mxu0 %v9233
  %9611 = vmatpush1.msra.mxu0 %v9232
  %9612 = vmatprep.subr.mxu0 %v9235
  %9613 = vmatpush1.msra.mxu0 %v9234
  %9614 = vmatprep.mubr.f32.mxu0 %v9546
  %9615 = vmatmul.mubr.f32.gmra.mrb[0].mxu0 %v9545
  %v9616 = vpop.f32.mrb[0].mxu0
  %v9617 = vadd.f32 0.0, %v9616
  %v9618 = vpop.f32.mrb[0].mxu0
  %v9619 = vadd.f32 0.0, %v9618
  %9620 = vdwg.mxu0
  %9621 = vmatprep.subr.mxu0 %v9237
  %9622 = vmatpush1.msra.mxu0 %v9236
  %9623 = vmatprep.subr.mxu0 %v9239
  %9624 = vmatpush1.msra.mxu0 %v9238
  %9625 = vmatprep.subr.mxu0 %v9241
  %9626 = vmatpush1.msra.mxu0 %v9240
  %9627 = vmatprep.subr.mxu0 %v9243
  %9628 = vmatpush1.msra.mxu0 %v9242
  %9629 = vmatprep.subr.mxu0 %v9245
  %9630 = vmatpush1.msra.mxu0 %v9244
  %9631 = vmatprep.subr.mxu0 %v9247
  %9632 = vmatpush1.msra.mxu0 %v9246
  %9633 = vmatprep.subr.mxu0 %v9249
  %9634 = vmatpush1.msra.mxu0 %v9248
  %9635 = vmatprep.subr.mxu0 %v9251
  %9636 = vmatpush1.msra.mxu0 %v9250
  %9637 = vmatprep.subr.mxu0 %v9253
  %9638 = vmatpush1.msra.mxu0 %v9252
  %9639 = vmatprep.subr.mxu0 %v9255
  %9640 = vmatpush1.msra.mxu0 %v9254
  %9641 = vmatprep.subr.mxu0 %v9257
  %9642 = vmatpush1.msra.mxu0 %v9256
  %9643 = vmatprep.subr.mxu0 %v9259
  %9644 = vmatpush1.msra.mxu0 %v9258
  %9645 = vmatprep.subr.mxu0 %v9261
  %9646 = vmatpush1.msra.mxu0 %v9260
  %9647 = vmatprep.subr.mxu0 %v9263
  %9648 = vmatpush1.msra.mxu0 %v9262
  %9649 = vmatprep.subr.mxu0 %v9265
  %9650 = vmatpush1.msra.mxu0 %v9264
  %9651 = vmatprep.subr.mxu0 %v9267
  %9652 = vmatpush1.msra.mxu0 %v9266
  %9653 = vmatprep.subr.mxu0 %v9269
  %9654 = vmatpush1.msra.mxu0 %v9268
  %9655 = vmatprep.subr.mxu0 %v9271
  %9656 = vmatpush1.msra.mxu0 %v9270
  %9657 = vmatprep.subr.mxu0 %v9273
  %9658 = vmatpush1.msra.mxu0 %v9272
  %9659 = vmatprep.subr.mxu0 %v9275
  %9660 = vmatpush1.msra.mxu0 %v9274
  %9661 = vmatprep.subr.mxu0 %v9277
  %9662 = vmatpush1.msra.mxu0 %v9276
  %9663 = vmatprep.subr.mxu0 %v9279
  %9664 = vmatpush1.msra.mxu0 %v9278
  %9665 = vmatprep.subr.mxu0 %v9281
  %9666 = vmatpush1.msra.mxu0 %v9280
  %9667 = vmatprep.subr.mxu0 %v9283
  %9668 = vmatpush1.msra.mxu0 %v9282
  %9669 = vmatprep.subr.mxu0 %v9285
  %9670 = vmatpush1.msra.mxu0 %v9284
  %9671 = vmatprep.subr.mxu0 %v9287
  %9672 = vmatpush1.msra.mxu0 %v9286
  %9673 = vmatprep.subr.mxu0 %v9289
  %9674 = vmatpush1.msra.mxu0 %v9288
  %9675 = vmatprep.subr.mxu0 %v9291
  %9676 = vmatpush1.msra.mxu0 %v9290
  %9677 = vmatprep.subr.mxu0 %v9293
  %9678 = vmatpush1.msra.mxu0 %v9292
  %9679 = vmatprep.subr.mxu0 %v9295
  %9680 = vmatpush1.msra.mxu0 %v9294
  %9681 = vmatprep.subr.mxu0 %v9297
  %9682 = vmatpush1.msra.mxu0 %v9296
  %9683 = vmatprep.subr.mxu0 %v9299
  %9684 = vmatpush1.msra.mxu0 %v9298
  %9685 = vmatprep.mubr.f32.mxu0 %v9548
  %9686 = vmatmul.mubr.f32.gmra.mrb[0].mxu0 %v9547
  %v9687 = vpop.f32.mrb[0].mxu0
  %v9688 = vadd.f32 %v9617, %v9687
  %v9689 = vpop.f32.mrb[0].mxu0
  %v9690 = vadd.f32 %v9619, %v9689
  %9691 = vdwg.mxu0
  %9692 = vmatprep.subr.mxu0 %v9301
  %9693 = vmatpush1.msra.mxu0 %v9300
  %9694 = vmatprep.subr.mxu0 %v9303
  %9695 = vmatpush1.msra.mxu0 %v9302
  %9696 = vmatprep.subr.mxu0 %v9305
  %9697 = vmatpush1.msra.mxu0 %v9304
  %9698 = vmatprep.subr.mxu0 %v9307
  %9699 = vmatpush1.msra.mxu0 %v9306
  %9700 = vmatprep.subr.mxu0 %v9309
  %9701 = vmatpush1.msra.mxu0 %v9308
  %9702 = vmatprep.subr.mxu0 %v9311
  %9703 = vmatpush1.msra.mxu0 %v9310
  %9704 = vmatprep.subr.mxu0 %v9313
  %9705 = vmatpush1.msra.mxu0 %v9312
  %9706 = vmatprep.subr.mxu0 %v9315
  %9707 = vmatpush1.msra.mxu0 %v9314
  %9708 = vmatprep.subr.mxu0 %v9317
  %9709 = vmatpush1.msra.mxu0 %v9316
  %9710 = vmatprep.subr.mxu0 %v9319
  %9711 = vmatpush1.msra.mxu0 %v9318
  %9712 = vmatprep.subr.mxu0 %v9321
  %9713 = vmatpush1.msra.mxu0 %v9320
  %9714 = vmatprep.subr.mxu0 %v9323
  %9715 = vmatpush1.msra.mxu0 %v9322
  %9716 = vmatprep.subr.mxu0 %v9325
  %9717 = vmatpush1.msra.mxu0 %v9324
  %9718 = vmatprep.subr.mxu0 %v9327
  %9719 = vmatpush1.msra.mxu0 %v9326
  %9720 = vmatprep.subr.mxu0 %v9329
  %9721 = vmatpush1.msra.mxu0 %v9328
  %9722 = vmatprep.subr.mxu0 %v9331
  %9723 = vmatpush1.msra.mxu0 %v9330
  %9724 = vmatprep.subr.mxu0 0.0
  %9725 = vmatpush1.msra.mxu0 0.0
  %9726 = vmatprep.subr.mxu0 0.0
  %9727 = vmatpush1.msra.mxu0 0.0
  %9728 = vmatprep.subr.mxu0 0.0
  %9729 = vmatpush1.msra.mxu0 0.0
  %9730 = vmatprep.subr.mxu0 0.0
  %9731 = vmatpush1.msra.mxu0 0.0
  %9732 = vmatprep.subr.mxu0 0.0
  %9733 = vmatpush1.msra.mxu0 0.0
  %9734 = vmatprep.subr.mxu0 0.0
  %9735 = vmatpush1.msra.mxu0 0.0
  %9736 = vmatprep.subr.mxu0 0.0
  %9737 = vmatpush1.msra.mxu0 0.0
  %9738 = vmatprep.subr.mxu0 0.0
  %9739 = vmatpush1.msra.mxu0 0.0
  %9740 = vmatprep.subr.mxu0 0.0
  %9741 = vmatpush1.msra.mxu0 0.0
  %9742 = vmatprep.subr.mxu0 0.0
  %9743 = vmatpush1.msra.mxu0 0.0
  %9744 = vmatprep.subr.mxu0 0.0
  %9745 = vmatpush1.msra.mxu0 0.0
  %9746 = vmatprep.subr.mxu0 0.0
  %9747 = vmatpush1.msra.mxu0 0.0
  %9748 = vmatprep.subr.mxu0 0.0
  %9749 = vmatpush1.msra.mxu0 0.0
  %9750 = vmatprep.subr.mxu0 0.0
  %9751 = vmatpush1.msra.mxu0 0.0
  %9752 = vmatprep.subr.mxu0 0.0
  %9753 = vmatpush1.msra.mxu0 0.0
  %9754 = vmatprep.subr.mxu0 0.0
  %9755 = vmatpush1.msra.mxu0 0.0
  %9756 = vmatprep.mubr.f32.mxu0 0.0
  %9757 = vmatmul.mubr.f32.gmra.mrb[0].mxu0 %v9549
  %v9758 = vpop.f32.mrb[0].mxu0
  %v9759 = vadd.f32 %v9688, %v9758
  %v9760 = vpop.f32.mrb[0].mxu0
  %v9761 = vadd.f32 %v9690, %v9760
  %9762 = vdwg.mxu0
  %v9763 = vmax.f32 %v9541, %v9759
  %v9764 = vmax.f32 %v9543, %v9761
  %v9765 = vmax.f32 %v9763, %v9764
  %v9766 = vld [vmem:[%s4] sm:$0x1]
  %v9768 = vlaneseq
  %v9769 = vshrl.u32 %v9768, 7
  %v9770 = vsub.s32 0, %v9769
  %v9771 = vrot.slane %v9766, %v9770
  %v9773 = vadd.f32 %v9765, %v9771
  %v9774 = vmax.f32 %v9773, 0.0
  %9775 = vst [vmem:[#allocation3 + $0x18] sm:$0xff] %v9774
  %v9776 = vld [vmem:[#allocation3] sm:$0xff]
  %v9777 = vld [vmem:[#allocation3 + $0x8] sm:$0xff]
  %v9778 = vld [vmem:[#allocation3 + $0x10] sm:$0xff]
  %v9779 = vld [vmem:[#allocation3 + $0x18] sm:$0xff]
  %v9780 = vld [vmem:[%s5] sm:$0xff]
  %v9781 = vld [vmem:[%s5 + $0x8] sm:$0xff]
  %v9782 = vld [vmem:[%s5 + $0x10] sm:$0xff]
  %v9783 = vld [vmem:[%s5 + $0x18] sm:$0xff]
  %v9784 = vld [vmem:[%s5 + $0x20] sm:$0xff]
  %v9785 = vld [vmem:[%s5 + $0x28] sm:$0xff]
  %v9786 = vld [vmem:[%s5 + $0x30] sm:$0xff]
  %v9787 = vld [vmem:[%s5 + $0x38] sm:$0xff]
  %v9788 = vld [vmem:[%s5 + $0x40] sm:$0xff]
  %v9789 = vld [vmem:[%s5 + $0x48] sm:$0xff]
  %v9790 = vld [vmem:[%s5 + $0x50] sm:$0xff]
  %v9791 = vld [vmem:[%s5 + $0x58] sm:$0xff]
  %v9792 = vld [vmem:[%s5 + $0x60] sm:$0xff]
  %v9793 = vld [vmem:[%s5 + $0x68] sm:$0xff]
  %v9794 = vld [vmem:[%s5 + $0x70] sm:$0xff]
  %v9795 = vld [vmem:[%s5 + $0x78] sm:$0xff]
  %v9796 = vld [vmem:[%s5 + $0x80] sm:$0xff]
  %v9797 = vld [vmem:[%s5 + $0x88] sm:$0xff]
  %v9798 = vld [vmem:[%s5 + $0x90] sm:$0xff]
  %v9799 = vld [vmem:[%s5 + $0x98] sm:$0xff]
  %v9800 = vld [vmem:[%s5 + $0xa0] sm:$0xff]
  %v9801 = vld [vmem:[%s5 + $0xa8] sm:$0xff]
  %v9802 = vld [vmem:[%s5 + $0xb0] sm:$0xff]
  %v9803 = vld [vmem:[%s5 + $0xb8] sm:$0xff]
  %v9804 = vld [vmem:[%s5 + $0xc0] sm:$0xff]
  %v9805 = vld [vmem:[%s5 + $0xc8] sm:$0xff]
  %v9806 = vld [vmem:[%s5 + $0xd0] sm:$0xff]
  %v9807 = vld [vmem:[%s5 + $0xd8] sm:$0xff]
  %v9808 = vld [vmem:[%s5 + $0xe0] sm:$0xff]
  %v9809 = vld [vmem:[%s5 + $0xe8] sm:$0xff]
  %v9810 = vld [vmem:[%s5 + $0xf0] sm:$0xff]
  %v9811 = vld [vmem:[%s5 + $0xf8] sm:$0xff]
  %v9812 = vld [vmem:[%s5 + $0x100] sm:$0xff]
  %v9813 = vld [vmem:[%s5 + $0x108] sm:$0xff]
  %v9814 = vld [vmem:[%s5 + $0x110] sm:$0xff]
  %v9815 = vld [vmem:[%s5 + $0x118] sm:$0xff]
  %v9816 = vld [vmem:[%s5 + $0x120] sm:$0xff]
  %v9817 = vld [vmem:[%s5 + $0x128] sm:$0xff]
  %v9818 = vld [vmem:[%s5 + $0x130] sm:$0xff]
  %v9819 = vld [vmem:[%s5 + $0x138] sm:$0xff]
  %v9820 = vld [vmem:[%s5 + $0x140] sm:$0xff]
  %v9821 = vld [vmem:[%s5 + $0x148] sm:$0xff]
  %v9822 = vld [vmem:[%s5 + $0x150] sm:$0xff]
  %v9823 = vld [vmem:[%s5 + $0x158] sm:$0xff]
  %v9824 = vld [vmem:[%s5 + $0x160] sm:$0xff]
  %v9825 = vld [vmem:[%s5 + $0x168] sm:$0xff]
  %v9826 = vld [vmem:[%s5 + $0x170] sm:$0xff]
  %v9827 = vld [vmem:[%s5 + $0x178] sm:$0xff]
  %v9828 = vld [vmem:[%s5 + $0x180] sm:$0xff]
  %v9829 = vld [vmem:[%s5 + $0x188] sm:$0xff]
  %v9830 = vld [vmem:[%s5 + $0x190] sm:$0xff]
  %v9831 = vld [vmem:[%s5 + $0x198] sm:$0xff]
  %v9832 = vld [vmem:[%s5 + $0x1a0] sm:$0xff]
  %v9833 = vld [vmem:[%s5 + $0x1a8] sm:$0xff]
  %v9834 = vld [vmem:[%s5 + $0x1b0] sm:$0xff]
  %v9835 = vld [vmem:[%s5 + $0x1b8] sm:$0xff]
  %v9836 = vld [vmem:[%s5 + $0x1c0] sm:$0xff]
  %v9837 = vld [vmem:[%s5 + $0x1c8] sm:$0xff]
  %v9838 = vld [vmem:[%s5 + $0x1d0] sm:$0xff]
  %v9839 = vld [vmem:[%s5 + $0x1d8] sm:$0xff]
  %v9840 = vld [vmem:[%s5 + $0x1e0] sm:$0xff]
  %v9841 = vld [vmem:[%s5 + $0x1e8] sm:$0xff]
  %v9842 = vld [vmem:[%s5 + $0x1f0] sm:$0xff]
  %v9843 = vld [vmem:[%s5 + $0x1f8] sm:$0xff]
  %v9844 = vld [vmem:[%s6] sm:$0x1]
  %v9846 = vlaneseq
  %v9847 = vshrl.u32 %v9846, 7
  %v9848 = vsub.s32 0, %v9847
  %v9849 = vrot.slane %v9844, %v9848
  %9851 = vmatprep.subr.mxu0 0.0
  %9852 = vmatpush1.msra.mxu0 %v9780
  %9853 = vmatprep.subr.mxu0 0.0
  %9854 = vmatpush1.msra.mxu0 %v9781
  %9855 = vmatprep.subr.mxu0 0.0
  %9856 = vmatpush1.msra.mxu0 %v9782
  %9857 = vmatprep.subr.mxu0 0.0
  %9858 = vmatpush1.msra.mxu0 %v9783
  %9859 = vmatprep.subr.mxu0 0.0
  %9860 = vmatpush1.msra.mxu0 %v9784
  %9861 = vmatprep.subr.mxu0 0.0
  %9862 = vmatpush1.msra.mxu0 %v9785
  %9863 = vmatprep.subr.mxu0 0.0
  %9864 = vmatpush1.msra.mxu0 %v9786
  %9865 = vmatprep.subr.mxu0 0.0
  %9866 = vmatpush1.msra.mxu0 %v9787
  %9867 = vmatprep.subr.mxu0 0.0
  %9868 = vmatpush1.msra.mxu0 %v9788
  %9869 = vmatprep.subr.mxu0 0.0
  %9870 = vmatpush1.msra.mxu0 %v9789
  %9871 = vmatprep.subr.mxu0 0.0
  %9872 = vmatpush1.msra.mxu0 %v9790
  %9873 = vmatprep.subr.mxu0 0.0
  %9874 = vmatpush1.msra.mxu0 %v9791
  %9875 = vmatprep.subr.mxu0 0.0
  %9876 = vmatpush1.msra.mxu0 %v9792
  %9877 = vmatprep.subr.mxu0 0.0
  %9878 = vmatpush1.msra.mxu0 %v9793
  %9879 = vmatprep.subr.mxu0 0.0
  %9880 = vmatpush1.msra.mxu0 %v9794
  %9881 = vmatprep.subr.mxu0 0.0
  %9882 = vmatpush1.msra.mxu0 %v9795
  %9883 = vmatprep.subr.mxu0 0.0
  %9884 = vmatpush1.msra.mxu0 %v9796
  %9885 = vmatprep.subr.mxu0 0.0
  %9886 = vmatpush1.msra.mxu0 %v9797
  %9887 = vmatprep.subr.mxu0 0.0
  %9888 = vmatpush1.msra.mxu0 %v9798
  %9889 = vmatprep.subr.mxu0 0.0
  %9890 = vmatpush1.msra.mxu0 %v9799
  %9891 = vmatprep.subr.mxu0 0.0
  %9892 = vmatpush1.msra.mxu0 %v9800
  %9893 = vmatprep.subr.mxu0 0.0
  %9894 = vmatpush1.msra.mxu0 %v9801
  %9895 = vmatprep.subr.mxu0 0.0
  %9896 = vmatpush1.msra.mxu0 %v9802
  %9897 = vmatprep.subr.mxu0 0.0
  %9898 = vmatpush1.msra.mxu0 %v9803
  %9899 = vmatprep.subr.mxu0 0.0
  %9900 = vmatpush1.msra.mxu0 %v9804
  %9901 = vmatprep.subr.mxu0 0.0
  %9902 = vmatpush1.msra.mxu0 %v9805
  %9903 = vmatprep.subr.mxu0 0.0
  %9904 = vmatpush1.msra.mxu0 %v9806
  %9905 = vmatprep.subr.mxu0 0.0
  %9906 = vmatpush1.msra.mxu0 %v9807
  %9907 = vmatprep.subr.mxu0 0.0
  %9908 = vmatpush1.msra.mxu0 %v9808
  %9909 = vmatprep.subr.mxu0 0.0
  %9910 = vmatpush1.msra.mxu0 %v9809
  %9911 = vmatprep.subr.mxu0 0.0
  %9912 = vmatpush1.msra.mxu0 %v9810
  %9913 = vmatprep.subr.mxu0 0.0
  %9914 = vmatpush1.msra.mxu0 %v9811
  %9915 = vmatprep.mubr.f32.mxu0 %v9777
  %9916 = vmatmul.mubr.f32.gmra.mrb[0].mxu0 %v9776
  %v9917 = vpop.f32.mrb[0].mxu0
  %v9918 = vadd.f32 %v9849, %v9917
  %v9919 = vpop.f32.mrb[0].mxu0
  %9920 = vdwg.mxu0
  %9921 = vmatprep.subr.mxu0 0.0
  %9922 = vmatpush1.msra.mxu0 %v9812
  %9923 = vmatprep.subr.mxu0 0.0
  %9924 = vmatpush1.msra.mxu0 %v9813
  %9925 = vmatprep.subr.mxu0 0.0
  %9926 = vmatpush1.msra.mxu0 %v9814
  %9927 = vmatprep.subr.mxu0 0.0
  %9928 = vmatpush1.msra.mxu0 %v9815
  %9929 = vmatprep.subr.mxu0 0.0
  %9930 = vmatpush1.msra.mxu0 %v9816
  %9931 = vmatprep.subr.mxu0 0.0
  %9932 = vmatpush1.msra.mxu0 %v9817
  %9933 = vmatprep.subr.mxu0 0.0
  %9934 = vmatpush1.msra.mxu0 %v9818
  %9935 = vmatprep.subr.mxu0 0.0
  %9936 = vmatpush1.msra.mxu0 %v9819
  %9937 = vmatprep.subr.mxu0 0.0
  %9938 = vmatpush1.msra.mxu0 %v9820
  %9939 = vmatprep.subr.mxu0 0.0
  %9940 = vmatpush1.msra.mxu0 %v9821
  %9941 = vmatprep.subr.mxu0 0.0
  %9942 = vmatpush1.msra.mxu0 %v9822
  %9943 = vmatprep.subr.mxu0 0.0
  %9944 = vmatpush1.msra.mxu0 %v9823
  %9945 = vmatprep.subr.mxu0 0.0
  %9946 = vmatpush1.msra.mxu0 %v9824
  %9947 = vmatprep.subr.mxu0 0.0
  %9948 = vmatpush1.msra.mxu0 %v9825
  %9949 = vmatprep.subr.mxu0 0.0
  %9950 = vmatpush1.msra.mxu0 %v9826
  %9951 = vmatprep.subr.mxu0 0.0
  %9952 = vmatpush1.msra.mxu0 %v9827
  %9953 = vmatprep.subr.mxu0 0.0
  %9954 = vmatpush1.msra.mxu0 %v9828
  %9955 = vmatprep.subr.mxu0 0.0
  %9956 = vmatpush1.msra.mxu0 %v9829
  %9957 = vmatprep.subr.mxu0 0.0
  %9958 = vmatpush1.msra.mxu0 %v9830
  %9959 = vmatprep.subr.mxu0 0.0
  %9960 = vmatpush1.msra.mxu0 %v9831
  %9961 = vmatprep.subr.mxu0 0.0
  %9962 = vmatpush1.msra.mxu0 %v9832
  %9963 = vmatprep.subr.mxu0 0.0
  %9964 = vmatpush1.msra.mxu0 %v9833
  %9965 = vmatprep.subr.mxu0 0.0
  %9966 = vmatpush1.msra.mxu0 %v9834
  %9967 = vmatprep.subr.mxu0 0.0
  %9968 = vmatpush1.msra.mxu0 %v9835
  %9969 = vmatprep.subr.mxu0 0.0
  %9970 = vmatpush1.msra.mxu0 %v9836
  %9971 = vmatprep.subr.mxu0 0.0
  %9972 = vmatpush1.msra.mxu0 %v9837
  %9973 = vmatprep.subr.mxu0 0.0
  %9974 = vmatpush1.msra.mxu0 %v9838
  %9975 = vmatprep.subr.mxu0 0.0
  %9976 = vmatpush1.msra.mxu0 %v9839
  %9977 = vmatprep.subr.mxu0 0.0
  %9978 = vmatpush1.msra.mxu0 %v9840
  %9979 = vmatprep.subr.mxu0 0.0
  %9980 = vmatpush1.msra.mxu0 %v9841
  %9981 = vmatprep.subr.mxu0 0.0
  %9982 = vmatpush1.msra.mxu0 %v9842
  %9983 = vmatprep.subr.mxu0 0.0
  %9984 = vmatpush1.msra.mxu0 %v9843
  %9985 = vmatprep.mubr.f32.mxu0 %v9779
  %9986 = vmatmul.mubr.f32.gmra.mrb[0].mxu0 %v9778
  %v9987 = vpop.f32.mrb[0].mxu0
  %v9988 = vadd.f32 %v9918, %v9987
  %v9989 = vpop.f32.mrb[0].mxu0
  %9990 = vdwg.mxu0
  %v9991 = vmax.f32 %v9988, 0.0
  %v9992 = vld [vmem:[%s7] sm:$0xff]
  %v9993 = vld [vmem:[%s7 + $0x8] sm:$0xff]
  %v9994 = vld [vmem:[%s7 + $0x10] sm:$0xff]
  %v9995 = vld [vmem:[%s7 + $0x18] sm:$0xff]
  %v9996 = vld [vmem:[%s7 + $0x20] sm:$0xff]
  %v9997 = vld [vmem:[%s7 + $0x28] sm:$0xff]
  %v9998 = vld [vmem:[%s7 + $0x30] sm:$0xff]
  %v9999 = vld [vmem:[%s7 + $0x38] sm:$0xff]
  %v10000 = vld [vmem:[%s7 + $0x40] sm:$0xff]
  %v10001 = vld [vmem:[%s7 + $0x48] sm:$0xff]
  %v10002 = vld [vmem:[%s7 + $0x50] sm:$0xff]
  %v10003 = vld [vmem:[%s7 + $0x58] sm:$0xff]
  %v10004 = vld [vmem:[%s7 + $0x60] sm:$0xff]
  %v10005 = vld [vmem:[%s7 + $0x68] sm:$0xff]
  %v10006 = vld [vmem:[%s7 + $0x70] sm:$0xff]
  %v10007 = vld [vmem:[%s7 + $0x78] sm:$0xff]
  %v10008 = vld [vmem:[%s8] sm:$0x1]
  %v10010 = vlaneseq
  %v10011 = vshrl.u32 %v10010, 7
  %v10012 = vsub.s32 0, %v10011
  %v10013 = vrot.slane %v10008, %v10012
  %10015 = vmatprep.subr.mxu0 0.0
  %10016 = vmatpush1.msra.mxu0 %v9992
  %10017 = vmatprep.subr.mxu0 0.0
  %10018 = vmatpush1.msra.mxu0 %v9993
  %10019 = vmatprep.subr.mxu0 0.0
  %10020 = vmatpush1.msra.mxu0 %v9994
  %10021 = vmatprep.subr.mxu0 0.0
  %10022 = vmatpush1.msra.mxu0 %v9995
  %10023 = vmatprep.subr.mxu0 0.0
  %10024 = vmatpush1.msra.mxu0 %v9996
  %10025 = vmatprep.subr.mxu0 0.0
  %10026 = vmatpush1.msra.mxu0 %v9997
  %10027 = vmatprep.subr.mxu0 0.0
  %10028 = vmatpush1.msra.mxu0 %v9998
  %10029 = vmatprep.subr.mxu0 0.0
  %10030 = vmatpush1.msra.mxu0 %v9999
  %10031 = vmatprep.subr.mxu0 0.0
  %10032 = vmatpush1.msra.mxu0 %v10000
  %10033 = vmatprep.subr.mxu0 0.0
  %10034 = vmatpush1.msra.mxu0 %v10001
  %10035 = vmatprep.subr.mxu0 0.0
  %10036 = vmatpush1.msra.mxu0 %v10002
  %10037 = vmatprep.subr.mxu0 0.0
  %10038 = vmatpush1.msra.mxu0 %v10003
  %10039 = vmatprep.subr.mxu0 0.0
  %10040 = vmatpush1.msra.mxu0 %v10004
  %10041 = vmatprep.subr.mxu0 0.0
  %10042 = vmatpush1.msra.mxu0 %v10005
  %10043 = vmatprep.subr.mxu0 0.0
  %10044 = vmatpush1.msra.mxu0 %v10006
  %10045 = vmatprep.subr.mxu0 0.0
  %10046 = vmatpush1.msra.mxu0 %v10007
  %10047 = vmatprep.subr.mxu0 0.0
  %10048 = vmatpush1.msra.mxu0 0.0
  %10049 = vmatprep.subr.mxu0 0.0
  %10050 = vmatpush1.msra.mxu0 0.0
  %10051 = vmatprep.subr.mxu0 0.0
  %10052 = vmatpush1.msra.mxu0 0.0
  %10053 = vmatprep.subr.mxu0 0.0
  %10054 = vmatpush1.msra.mxu0 0.0
  %10055 = vmatprep.subr.mxu0 0.0
  %10056 = vmatpush1.msra.mxu0 0.0
  %10057 = vmatprep.subr.mxu0 0.0
  %10058 = vmatpush1.msra.mxu0 0.0
  %10059 = vmatprep.subr.mxu0 0.0
  %10060 = vmatpush1.msra.mxu0 0.0
  %10061 = vmatprep.subr.mxu0 0.0
  %10062 = vmatpush1.msra.mxu0 0.0
  %10063 = vmatprep.subr.mxu0 0.0
  %10064 = vmatpush1.msra.mxu0 0.0
  %10065 = vmatprep.subr.mxu0 0.0
  %10066 = vmatpush1.msra.mxu0 0.0
  %10067 = vmatprep.subr.mxu0 0.0
  %10068 = vmatpush1.msra.mxu0 0.0
  %10069 = vmatprep.subr.mxu0 0.0
  %10070 = vmatpush1.msra.mxu0 0.0
  %10071 = vmatprep.subr.mxu0 0.0
  %10072 = vmatpush1.msra.mxu0 0.0
  %10073 = vmatprep.subr.mxu0 0.0
  %10074 = vmatpush1.msra.mxu0 0.0
  %10075 = vmatprep.subr.mxu0 0.0
  %10076 = vmatpush1.msra.mxu0 0.0
  %10077 = vmatprep.subr.mxu0 0.0
  %10078 = vmatpush1.msra.mxu0 0.0
  %10079 = vmatprep.mubr.f32.mxu0 0.0
  %10080 = vmatmul.mubr.f32.gmra.mrb[0].mxu0 %v9991
  %v10081 = vpop.f32.mrb[0].mxu0
  %v10082 = vadd.f32 %v10013, %v10081
  %v10083 = vpop.f32.mrb[0].mxu0
  %10084 = vdwg.mxu0
  %10085 = vst [vmem:[%s9] sm:$0xff] %v10082
  // Predicated region
  $region38: #{cnn_forward.1} parent=0 // pred_check
    _
  $region39: #{cnn_forward.1} parent=0 // pred_check_branch
    %10087 = sbr.rel (0) target = $region41
  $region40: #{cnn_forward.1} parent=0 // pred_region
    _
  $region41: #{cnn_forward.1} parent=0 // pred_fallthru
    _
  // Predicated region
  $region42: #{cnn_forward.1} parent=0 // pred_check
    _
  $region43: #{cnn_forward.1} parent=0 // pred_check_branch
    %10089 = sbr.rel (0) target = $region45
  $region44: #{cnn_forward.1} parent=0 // pred_region
    _
  $region45: #{cnn_forward.1} parent=0 // pred_fallthru
    _

</llo_original>
